<compile_context>
chip_gen: v7x
topology: tpu7x:2x2x1
jax: 0.10.0
libtpu: 0.0.40
codegen_flags: <defaults>
</compile_context>

<pallas_src>
import functools

import jax
import jax.numpy as jnp
from jax.experimental import pallas as pl
from jax.experimental.pallas import tpu as pltpu


# ------------------------------ fused kernel --------------------------------

def _res2_kernel(x_ref,
                 wb1_ref,
                 w2a_a_ref, w2b_a_ref, w2c_a_ref,
                 w2a_b_ref, w2b_b_ref, w2c_b_ref,
                 w2a_c_ref, w2b_c_ref, w2c_c_ref,
                 out_ref, dbg_ref,
                 pad_ref, res_ref,
                 *, W, HW, M, OFF):
    """One grid step = B_TILE images flattened to M = B_TILE*HW rows."""
    # Geometry-only masks, hoisted once and shared by all three 3x3 convs
    # (JAX does not CSE broadcast_in_dim, so broadcast here, not per tap).
    m_idx = jax.lax.broadcasted_iota(jnp.int32, (M, 1), 0)
    x_col = m_idx % W                  # column inside a spatial row
    p_img = m_idx % HW                 # pixel index inside its own image
    mask_l = jnp.broadcast_to(x_col > 0, (M, 64))            # dx = -1 valid
    mask_r = jnp.broadcast_to(x_col < W - 1, (M, 64))         # dx = +1 valid
    mask_u = jnp.broadcast_to(p_img >= W, (M, 3 * 64))        # dy = -1 valid
    mask_d = jnp.broadcast_to(p_img < HW - W, (M, 3 * 64))    # dy = +1 valid

    def conv3x3(h_bf, w2b_ref):
        # h_bf: (M, 64) bf16.  Single write into the padded scratch; the halo
        # rows are never written and never need to be: every read that lands on
        # them (or leaks across an image boundary) is zeroed by the masks
        # before reaching the MXU, so no per-step memset is required.
        pad_ref[pl.ds(OFF, M), :] = h_bf
        acc = None
        for dy in (-1, 0, 1):
            base = OFF + dy * W
            # dx = -1 / 0 / +1 taps packed along the contraction dim -> K=192.
            # NOTE(synk): with the toy W=8 these shifted reads cannot all be
            # 16-sublane aligned; at real res2 sizes pad each spatial row to a
            # multiple of 16 (or use pltpu.roll) to keep the loads aligned.
            left = jnp.where(mask_l, pad_ref[pl.ds(base - 1, M), :], 0)
            mid = pad_ref[pl.ds(base, M), :]
            right = jnp.where(mask_r, pad_ref[pl.ds(base + 1, M), :], 0)
            patch = jnp.concatenate([left, mid, right], axis=-1)   # (M,192) bf16
            if dy == -1:
                patch = jnp.where(mask_u, patch, 0)
            elif dy == 1:
                patch = jnp.where(mask_d, patch, 0)
            contrib = jnp.dot(patch, w2b_ref[dy + 1],
                              preferred_element_type=jnp.float32)
            acc = contrib if acc is None else acc + contrib        # pure dot chain
        return acc

    def bottleneck(in_bf, w2a_ref, w2b_ref, w2c_ref):
        # 1x1 (2a) + ReLU  -- bf16 MXU operands, f32 accumulation.
        h1 = jnp.maximum(
            jnp.dot(in_bf, w2a_ref[...], preferred_element_type=jnp.float32),
            0.0)
        # 3x3 (2b) + ReLU (in-kernel, packed-tap conv).
        h2 = jnp.maximum(conv3x3(h1.astype(jnp.bfloat16), w2b_ref), 0.0)
        # 1x1 (2c) + residual add; the shortcut lives in the f32 VMEM scratch.
        # (M = 128 here == one "M strip"; at larger M this add would be tiled.)
        return jnp.dot(h2.astype(jnp.bfloat16), w2c_ref[...],
                       preferred_element_type=jnp.float32) + res_ref[...]

    x_bf = x_ref[...]                                          # (M, 64) bf16
    # res2a: projection shortcut (1x1, 64 -> 256) staged in VMEM.
    res_ref[...] = jnp.dot(x_bf, wb1_ref[...],
                           preferred_element_type=jnp.float32)
    pre_a = bottleneck(x_bf, w2a_a_ref, w2b_a_ref, w2c_a_ref)
    res_ref[...] = jnp.maximum(pre_a, 0.0)
    # res2b / res2c: identity shortcuts (input == shortcut == res_ref).
    pre_b = bottleneck(res_ref[...].astype(jnp.bfloat16),
                       w2a_b_ref, w2b_b_ref, w2c_b_ref)
    res_ref[...] = jnp.maximum(pre_b, 0.0)
    pre_c = bottleneck(res_ref[...].astype(jnp.bfloat16),
                       w2a_c_ref, w2b_c_ref, w2c_c_ref)
    # Only res2c's outputs hit HBM (bf16, lane-dense 256).
    out_ref[...] = jnp.maximum(pre_c, 0.0).astype(out_ref.dtype)
    dbg_ref[...] = pre_c.astype(dbg_ref.dtype)


# --------------------------- weight layout helpers ---------------------------

def _w1x1_to_mat(w):
    # (Cout, Cin, 1, 1) -> (Cin, Cout) bf16 for the MXU.
    return jnp.transpose(w[:, :, 0, 0], (1, 0)).astype(jnp.bfloat16)


def _w3x3_to_packed(w):
    # (Cout, Cin, 3, 3) -> (3, 3*Cin, Cout): one (K=192, Cout) matrix per dy
    # row, dx taps stacked along K in the same order as the in-kernel
    # concatenate([left(dx=-1), mid(dx=0), right(dx=+1)]).
    cout, cin = w.shape[0], w.shape[1]
    wt = jnp.transpose(w, (2, 3, 1, 0))            # (ky, kx, Cin, Cout)
    return wt.reshape(3, 3 * cin, cout).astype(jnp.bfloat16)


# -------------------------------- wrapper ------------------------------------

def _pick_b_tile(n, hw, target_m=256):
    """Largest divisor of n with b_tile*hw <= max(target_m, hw).

    -> M >= 128 for the 8x8 demo (both images in one block), while at real
    res2 sizes (hw = 3136) it stays at 1 image/block so the grid keeps >= 2
    "parallel" blocks and both v7x TensorCores stay busy.
    """
    best = 1
    for d in range(1, n + 1):
        if n % d == 0 and d * hw <= max(target_m, hw):
            best = d
    return best


def residual_block2_forward(x_nchw, params, *, out_dtype=jnp.bfloat16):
    n, c, h, w = x_nchw.shape
    assert c == 64, "ResidualBlock2 expects 64 input channels"
    hw = h * w
    b_tile = _pick_b_tile(n, hw)
    m = b_tile * hw
    assert m % 8 == 0
    grid = (n // b_tile,)

    # NCHW -> (N*H*W, C): channels on lanes, pixels/images on sublanes.
    x_rows = (jnp.transpose(x_nchw, (0, 2, 3, 1))
              .reshape(n * hw, c).astype(jnp.bfloat16))

    pa, pb, pc = params["res2a"], params["res2b"], params["res2c"]
    weights = [
        _w1x1_to_mat(pa["w_b1"]),
        _w1x1_to_mat(pa["w_2a"]), _w3x3_to_packed(pa["w_2b"]), _w1x1_to_mat(pa["w_2c"]),
        _w1x1_to_mat(pb["w_2a"]), _w3x3_to_packed(pb["w_2b"]), _w1x1_to_mat(pb["w_2c"]),
        _w1x1_to_mat(pc["w_2a"]), _w3x3_to_packed(pc["w_2b"]), _w1x1_to_mat(pc["w_2c"]),
    ]

    def w_spec(shape):
        nd = len(shape)
        # Constant index_map -> weights stay VMEM-resident across the grid.
        # TODO(synk): at v7x production sizes also pass pipeline_mode=
        # pl.Buffered(1) to drop the unused double buffers (<2 MiB total here).
        return pl.BlockSpec(shape, lambda i, _nd=nd: (0,) * _nd)

    # Conv scratch: M activation rows + OFF halo rows above/below
    # (OFF >= W+1, rounded to the bf16 sublane tile of 16).
    off = max(16, -(-(w + 1) // 16) * 16)
    pad_rows = -(-(m + 2 * off) // 16) * 16

    out, dbg = pl.pallas_call(
        functools.partial(_res2_kernel, W=w, HW=hw, M=m, OFF=off),
        out_shape=(jax.ShapeDtypeStruct((n * hw, 256), out_dtype),
                   jax.ShapeDtypeStruct((n * hw, 256), out_dtype)),
        grid=grid,
        in_specs=[pl.BlockSpec((m, c), lambda i: (i, 0))]
                 + [w_spec(wt.shape) for wt in weights],
        out_specs=(pl.BlockSpec((m, 256), lambda i: (i, 0)),
                   pl.BlockSpec((m, 256), lambda i: (i, 0))),
        scratch_shapes=[pltpu.VMEM((pad_rows, 64), jnp.bfloat16),
                        pltpu.VMEM((m, 256), jnp.float32)],
        # At the 8x8 toy size VMEM use is <2 MiB; for real res2 (56x56) set
        # vmem_limit_bytes explicitly and tile HW into row strips (v7x: 64 MiB).
        compiler_params=pltpu.CompilerParams(
            dimension_semantics=("parallel",)),
    )(x_rows, *weights)

    out = jnp.transpose(out.reshape(n, h, w, 256), (0, 3, 1, 2))   # NHWC->NCHW
    dbg = jnp.transpose(dbg.reshape(n, h, w, 256), (0, 3, 1, 2))
    return out, dbg


# ---------------------------- deterministic params ---------------------------

def init_params(key):
    def conv_w(k, cout, cin, ksize):
        return jax.random.normal(k, (cout, cin, ksize, ksize), jnp.float32) * 0.05

    ks = jax.random.split(key, 10)
    return {
        "res2a": {
            "w_b1": conv_w(ks[0], 256, 64, 1),
            "w_2a": conv_w(ks[1], 64, 64, 1),
            "w_2b": conv_w(ks[2], 64, 64, 3),
            "w_2c": conv_w(ks[3], 256, 64, 1),
        },
        "res2b": {
            "w_2a": conv_w(ks[4], 64, 256, 1),
            "w_2b": conv_w(ks[5], 64, 64, 3),
            "w_2c": conv_w(ks[6], 256, 64, 1),
        },
        "res2c": {
            "w_2a": conv_w(ks[7], 64, 256, 1),
            "w_2b": conv_w(ks[8], 64, 64, 3),
            "w_2c": conv_w(ks[9], 256, 64, 1),
        },
    }


# ------------------------------- JAX reference -------------------------------

def _ref_conv(x_nhwc, w, pad):
    return jax.lax.conv_general_dilated(
        x_nhwc, jnp.transpose(w, (2, 3, 1, 0)), (1, 1),
        [(pad, pad), (pad, pad)],
        dimension_numbers=("NHWC", "HWIO", "NHWC"))


def _ref_block(x, p, with_conv):
    shortcut = _ref_conv(x, p["w_b1"], 0) if with_conv else x
    h = jax.nn.relu(_ref_conv(x, p["w_2a"], 0))
    h = jax.nn.relu(_ref_conv(h, p["w_2b"], 1))
    pre = _ref_conv(h, p["w_2c"], 0) + shortcut
    return jax.nn.relu(pre), pre


def residual_block2_reference(x_nchw, params):
    x = jnp.transpose(x_nchw, (0, 2, 3, 1))
    x, _ = _ref_block(x, params["res2a"], True)
    x, _ = _ref_block(x, params["res2b"], False)
    x, dbg = _ref_block(x, params["res2c"], False)
    return jnp.transpose(x, (0, 3, 1, 2)), jnp.transpose(dbg, (0, 3, 1, 2))


# ----------------------------------- main ------------------------------------

if __name__ == "__main__":
    key = jax.random.PRNGKey(0)
    k_x, k_p = jax.random.split(key)
    x = jax.random.normal(k_x, (2, 64, 8, 8), jnp.float32)   # NCHW, C=64 (module requirement)
    params = init_params(k_p)

    out, dbg = jax.jit(residual_block2_forward)(x, params)
    jax.block_until_ready((out, dbg))

    ref_out, ref_dbg = residual_block2_reference(x, params)
    assert out.shape == (2, 256, 8, 8) and dbg.shape == (2, 256, 8, 8)
    out_f = out.astype(jnp.float32)
    dbg_f = dbg.astype(jnp.float32)
    # bf16 MXU operands + bf16 HBM outputs vs. an all-f32 reference.
    assert jnp.allclose(out_f, ref_out, atol=1e-1, rtol=1e-1), \
        float(jnp.max(jnp.abs(out_f - ref_out)))
    assert jnp.allclose(dbg_f, ref_dbg, atol=1e-1, rtol=1e-1), \
        float(jnp.max(jnp.abs(dbg_f - ref_dbg)))

    print("KERNEL_OK")
</pallas_src>

<mosaic_0001>
module attributes {stable_mosaic.version = 11 : i64} {
  func.func @_res2_kernel(%arg0: i32, %arg1: memref<128x64xbf16, #tpu.memory_space<vmem>>, %arg2: memref<64x256xbf16, #tpu.memory_space<vmem>>, %arg3: memref<64x64xbf16, #tpu.memory_space<vmem>>, %arg4: memref<3x192x64xbf16, #tpu.memory_space<vmem>>, %arg5: memref<64x256xbf16, #tpu.memory_space<vmem>>, %arg6: memref<256x64xbf16, #tpu.memory_space<vmem>>, %arg7: memref<3x192x64xbf16, #tpu.memory_space<vmem>>, %arg8: memref<64x256xbf16, #tpu.memory_space<vmem>>, %arg9: memref<256x64xbf16, #tpu.memory_space<vmem>>, %arg10: memref<3x192x64xbf16, #tpu.memory_space<vmem>>, %arg11: memref<64x256xbf16, #tpu.memory_space<vmem>>, %arg12: memref<128x256xbf16, #tpu.memory_space<vmem>>, %arg13: memref<128x256xbf16, #tpu.memory_space<vmem>>, %arg14: memref<160x64xbf16, #tpu.memory_space<vmem>>, %arg15: memref<128x256xf32, #tpu.memory_space<vmem>>) attributes {dimension_semantics = [#tpu.dimension_semantics<parallel>], iteration_bounds = array<i64: 1>, scalar_prefetch = 0 : i64, scratch_operands = 2 : i64, tpu.core_type = #tpu.core_type<tc>, window_params = [{transform_indices = @transform_0, window_bounds = array<i64: 128, 64>}, {pipeline_mode = #tpu.pipeline_mode<synchronous>, transform_indices = @transform_1, window_bounds = array<i64: 64, 256>}, {pipeline_mode = #tpu.pipeline_mode<synchronous>, transform_indices = @transform_2, window_bounds = array<i64: 64, 64>}, {pipeline_mode = #tpu.pipeline_mode<synchronous>, transform_indices = @transform_3, window_bounds = array<i64: 3, 192, 64>}, {pipeline_mode = #tpu.pipeline_mode<synchronous>, transform_indices = @transform_4, window_bounds = array<i64: 64, 256>}, {pipeline_mode = #tpu.pipeline_mode<synchronous>, transform_indices = @transform_5, window_bounds = array<i64: 256, 64>}, {pipeline_mode = #tpu.pipeline_mode<synchronous>, transform_indices = @transform_6, window_bounds = array<i64: 3, 192, 64>}, {pipeline_mode = #tpu.pipeline_mode<synchronous>, transform_indices = @transform_7, window_bounds = array<i64: 64, 256>}, {pipeline_mode = #tpu.pipeline_mode<synchronous>, transform_indices = @transform_8, window_bounds = array<i64: 256, 64>}, {pipeline_mode = #tpu.pipeline_mode<synchronous>, transform_indices = @transform_9, window_bounds = array<i64: 3, 192, 64>}, {pipeline_mode = #tpu.pipeline_mode<synchronous>, transform_indices = @transform_10, window_bounds = array<i64: 64, 256>}, {transform_indices = @transform_11, window_bounds = array<i64: 128, 256>}, {transform_indices = @transform_12, window_bounds = array<i64: 128, 256>}]} {
    %0 = tpu.iota {dimensions = array<i32: 0>} : vector<128x1xi32>
    %c8_i32 = arith.constant 8 : i32
    %c0_i32 = arith.constant 0 : i32
    %1 = arith.cmpi eq, %c8_i32, %c0_i32 : i32
    %c1_i32 = arith.constant 1 : i32
    %2 = arith.select %1, %c1_i32, %c8_i32 : i32
    %3 = vector.broadcast %2 : i32 to vector<128x1xi32>
    %4 = arith.remsi %0, %3 : vector<128x1xi32>
    %c0_i32_0 = arith.constant 0 : i32
    %5 = vector.broadcast %c0_i32_0 : i32 to vector<128x1xi32>
    %6 = arith.cmpi ne, %4, %5 : vector<128x1xi32>
    %c0_i32_1 = arith.constant 0 : i32
    %7 = vector.broadcast %c0_i32_1 : i32 to vector<128x1xi32>
    %8 = arith.cmpi slt, %4, %7 : vector<128x1xi32>
    %c0_i32_2 = arith.constant 0 : i32
    %9 = arith.cmpi slt, %2, %c0_i32_2 : i32
    %10 = vector.broadcast %9 : i1 to vector<128x1xi1>
    %11 = vector.broadcast %10 : vector<128x1xi1> to vector<128x1xi1>
    %12 = arith.xori %8, %11 : vector<128x1xi1>
    %13 = arith.andi %12, %6 : vector<128x1xi1>
    %14 = vector.broadcast %2 : i32 to vector<128x1xi32>
    %15 = arith.addi %4, %14 : vector<128x1xi32>
    %16 = arith.select %13, %15, %4 : vector<128x1xi1>, vector<128x1xi32>
    %c64_i32 = arith.constant 64 : i32
    %c0_i32_3 = arith.constant 0 : i32
    %17 = arith.cmpi eq, %c64_i32, %c0_i32_3 : i32
    %c1_i32_4 = arith.constant 1 : i32
    %18 = arith.select %17, %c1_i32_4, %c64_i32 : i32
    %19 = vector.broadcast %18 : i32 to vector<128x1xi32>
    %20 = arith.remsi %0, %19 : vector<128x1xi32>
    %c0_i32_5 = arith.constant 0 : i32
    %21 = vector.broadcast %c0_i32_5 : i32 to vector<128x1xi32>
    %22 = arith.cmpi ne, %20, %21 : vector<128x1xi32>
    %c0_i32_6 = arith.constant 0 : i32
    %23 = vector.broadcast %c0_i32_6 : i32 to vector<128x1xi32>
    %24 = arith.cmpi slt, %20, %23 : vector<128x1xi32>
    %c0_i32_7 = arith.constant 0 : i32
    %25 = arith.cmpi slt, %18, %c0_i32_7 : i32
    %26 = vector.broadcast %25 : i1 to vector<128x1xi1>
    %27 = vector.broadcast %26 : vector<128x1xi1> to vector<128x1xi1>
    %28 = arith.xori %24, %27 : vector<128x1xi1>
    %29 = arith.andi %28, %22 : vector<128x1xi1>
    %30 = vector.broadcast %18 : i32 to vector<128x1xi32>
    %31 = arith.addi %20, %30 : vector<128x1xi32>
    %32 = arith.select %29, %31, %20 : vector<128x1xi1>, vector<128x1xi32>
    %c0_i32_8 = arith.constant 0 : i32
    %33 = vector.broadcast %c0_i32_8 : i32 to vector<128x1xi32>
    %34 = arith.cmpi sgt, %16, %33 : vector<128x1xi32>
    %35 = vector.shape_cast %34 : vector<128x1xi1> to vector<128x1xi1>
    %36 = vector.broadcast %35 : vector<128x1xi1> to vector<128x64xi1>
    %c7_i32 = arith.constant 7 : i32
    %37 = vector.broadcast %c7_i32 : i32 to vector<128x1xi32>
    %38 = arith.cmpi slt, %16, %37 : vector<128x1xi32>
    %39 = vector.shape_cast %38 : vector<128x1xi1> to vector<128x1xi1>
    %40 = vector.broadcast %39 : vector<128x1xi1> to vector<128x64xi1>
    %c8_i32_9 = arith.constant 8 : i32
    %41 = vector.broadcast %c8_i32_9 : i32 to vector<128x1xi32>
    %42 = arith.cmpi sge, %32, %41 : vector<128x1xi32>
    %43 = vector.shape_cast %42 : vector<128x1xi1> to vector<128x1xi1>
    %44 = vector.broadcast %43 : vector<128x1xi1> to vector<128x192xi1>
    %c56_i32 = arith.constant 56 : i32
    %45 = vector.broadcast %c56_i32 : i32 to vector<128x1xi32>
    %46 = arith.cmpi slt, %32, %45 : vector<128x1xi32>
    %47 = vector.shape_cast %46 : vector<128x1xi1> to vector<128x1xi1>
    %48 = vector.broadcast %47 : vector<128x1xi1> to vector<128x192xi1>
    %c0 = arith.constant 0 : index
    %c0_10 = arith.constant 0 : index
    %49 = vector.load %arg1[%c0, %c0_10] : memref<128x64xbf16, #tpu.memory_space<vmem>>, vector<128x64xbf16>
    %c0_11 = arith.constant 0 : index
    %c0_12 = arith.constant 0 : index
    %50 = vector.load %arg2[%c0_11, %c0_12] : memref<64x256xbf16, #tpu.memory_space<vmem>>, vector<64x256xbf16>
    %cst = arith.constant dense<0.000000e+00> : vector<128x256xf32>
    %51 = tpu.matmul %49, %50, %cst {dimension_numbers = #tpu.dot_dimension_numbers<[1], [0], [0], [1], [0, 0, 1, 1], [], []>} : vector<128x64xbf16>, vector<64x256xbf16>, vector<128x256xf32> -> vector<128x256xf32>
    %c0_13 = arith.constant 0 : index
    %c0_14 = arith.constant 0 : index
    %52 = vector.load %arg15[%c0_13, %c0_14] : memref<128x256xf32, #tpu.memory_space<vmem>>, vector<128x256xf32>
    tpu.vector_store %arg15[%c0_13, %c0_14], %51 {strides = array<i32>} : memref<128x256xf32, #tpu.memory_space<vmem>>, vector<128x256xf32>,
    %c0_15 = arith.constant 0 : index
    %c0_16 = arith.constant 0 : index
    %53 = vector.load %arg3[%c0_15, %c0_16] : memref<64x64xbf16, #tpu.memory_space<vmem>>, vector<64x64xbf16>
    %cst_17 = arith.constant dense<0.000000e+00> : vector<128x64xf32>
    %54 = tpu.matmul %49, %53, %cst_17 {dimension_numbers = #tpu.dot_dimension_numbers<[1], [0], [0], [1], [0, 0, 1, 1], [], []>} : vector<128x64xbf16>, vector<64x64xbf16>, vector<128x64xf32> -> vector<128x64xf32>
    %cst_18 = arith.constant 0.000000e+00 : f32
    %55 = vector.broadcast %cst_18 : f32 to vector<128x64xf32>
    %56 = arith.maximumf %54, %55 : vector<128x64xf32>
    %57 = arith.truncf %56 : vector<128x64xf32> to vector<128x64xbf16>
    %c16 = arith.constant 16 : index
    %c0_19 = arith.constant 0 : index
    %58 = vector.load %arg14[%c16, %c0_19] : memref<160x64xbf16, #tpu.memory_space<vmem>>, vector<128x64xbf16>
    tpu.vector_store %arg14[%c16, %c0_19], %57 {strides = array<i32>} : memref<160x64xbf16, #tpu.memory_space<vmem>>, vector<128x64xbf16>,
    %c7 = arith.constant 7 : index
    %c0_20 = arith.constant 0 : index
    %59 = vector.load %arg14[%c7, %c0_20] : memref<160x64xbf16, #tpu.memory_space<vmem>>, vector<128x64xbf16>
    %c0_i32_21 = arith.constant 0 : i32
    %60 = arith.sitofp %c0_i32_21 : i32 to bf16
    %61 = vector.broadcast %60 : bf16 to vector<128x64xbf16>
    %62 = arith.select %36, %59, %61 : vector<128x64xi1>, vector<128x64xbf16>
    %c8 = arith.constant 8 : index
    %c0_22 = arith.constant 0 : index
    %63 = vector.load %arg14[%c8, %c0_22] : memref<160x64xbf16, #tpu.memory_space<vmem>>, vector<128x64xbf16>
    %c9 = arith.constant 9 : index
    %c0_23 = arith.constant 0 : index
    %64 = vector.load %arg14[%c9, %c0_23] : memref<160x64xbf16, #tpu.memory_space<vmem>>, vector<128x64xbf16>
    %c0_i32_24 = arith.constant 0 : i32
    %65 = arith.sitofp %c0_i32_24 : i32 to bf16
    %66 = vector.broadcast %65 : bf16 to vector<128x64xbf16>
    %67 = arith.select %40, %64, %66 : vector<128x64xi1>, vector<128x64xbf16>
    %68 = tpu.concatenate %62, %63, %67 in 1 : vector<128x64xbf16>, vector<128x64xbf16>, vector<128x64xbf16> -> vector<128x192xbf16>
    %c0_i32_25 = arith.constant 0 : i32
    %69 = arith.sitofp %c0_i32_25 : i32 to bf16
    %70 = vector.broadcast %69 : bf16 to vector<128x192xbf16>
    %71 = arith.select %44, %68, %70 : vector<128x192xi1>, vector<128x192xbf16>
    %c0_26 = arith.constant 0 : index
    %c0_27 = arith.constant 0 : index
    %c0_28 = arith.constant 0 : index
    %72 = vector.load %arg4[%c0_26, %c0_27, %c0_28] : memref<3x192x64xbf16, #tpu.memory_space<vmem>>, vector<1x192x64xbf16>
    %73 = vector.shape_cast %72 : vector<1x192x64xbf16> to vector<192x64xbf16>
    %cst_29 = arith.constant dense<0.000000e+00> : vector<128x64xf32>
    %74 = tpu.matmul %71, %73, %cst_29 {dimension_numbers = #tpu.dot_dimension_numbers<[1], [0], [0], [1], [0, 0, 1, 1], [], []>} : vector<128x192xbf16>, vector<192x64xbf16>, vector<128x64xf32> -> vector<128x64xf32>
    %c15 = arith.constant 15 : index
    %c0_30 = arith.constant 0 : index
    %75 = vector.load %arg14[%c15, %c0_30] : memref<160x64xbf16, #tpu.memory_space<vmem>>, vector<128x64xbf16>
    %c0_i32_31 = arith.constant 0 : i32
    %76 = arith.sitofp %c0_i32_31 : i32 to bf16
    %77 = vector.broadcast %76 : bf16 to vector<128x64xbf16>
    %78 = arith.select %36, %75, %77 : vector<128x64xi1>, vector<128x64xbf16>
    %c16_32 = arith.constant 16 : index
    %c0_33 = arith.constant 0 : index
    %79 = vector.load %arg14[%c16_32, %c0_33] : memref<160x64xbf16, #tpu.memory_space<vmem>>, vector<128x64xbf16>
    %c17 = arith.constant 17 : index
    %c0_34 = arith.constant 0 : index
    %80 = vector.load %arg14[%c17, %c0_34] : memref<160x64xbf16, #tpu.memory_space<vmem>>, vector<128x64xbf16>
    %c0_i32_35 = arith.constant 0 : i32
    %81 = arith.sitofp %c0_i32_35 : i32 to bf16
    %82 = vector.broadcast %81 : bf16 to vector<128x64xbf16>
    %83 = arith.select %40, %80, %82 : vector<128x64xi1>, vector<128x64xbf16>
    %84 = tpu.concatenate %78, %79, %83 in 1 : vector<128x64xbf16>, vector<128x64xbf16>, vector<128x64xbf16> -> vector<128x192xbf16>
    %c1 = arith.constant 1 : index
    %c0_36 = arith.constant 0 : index
    %c0_37 = arith.constant 0 : index
    %85 = vector.load %arg4[%c1, %c0_36, %c0_37] : memref<3x192x64xbf16, #tpu.memory_space<vmem>>, vector<1x192x64xbf16>
    %86 = vector.shape_cast %85 : vector<1x192x64xbf16> to vector<192x64xbf16>
    %cst_38 = arith.constant dense<0.000000e+00> : vector<128x64xf32>
    %87 = tpu.matmul %84, %86, %cst_38 {dimension_numbers = #tpu.dot_dimension_numbers<[1], [0], [0], [1], [0, 0, 1, 1], [], []>} : vector<128x192xbf16>, vector<192x64xbf16>, vector<128x64xf32> -> vector<128x64xf32>
    %88 = arith.addf %74, %87 : vector<128x64xf32>
    %c23 = arith.constant 23 : index
    %c0_39 = arith.constant 0 : index
    %89 = vector.load %arg14[%c23, %c0_39] : memref<160x64xbf16, #tpu.memory_space<vmem>>, vector<128x64xbf16>
    %c0_i32_40 = arith.constant 0 : i32
    %90 = arith.sitofp %c0_i32_40 : i32 to bf16
    %91 = vector.broadcast %90 : bf16 to vector<128x64xbf16>
    %92 = arith.select %36, %89, %91 : vector<128x64xi1>, vector<128x64xbf16>
    %c24 = arith.constant 24 : index
    %c0_41 = arith.constant 0 : index
    %93 = vector.load %arg14[%c24, %c0_41] : memref<160x64xbf16, #tpu.memory_space<vmem>>, vector<128x64xbf16>
    %c25 = arith.constant 25 : index
    %c0_42 = arith.constant 0 : index
    %94 = vector.load %arg14[%c25, %c0_42] : memref<160x64xbf16, #tpu.memory_space<vmem>>, vector<128x64xbf16>
    %c0_i32_43 = arith.constant 0 : i32
    %95 = arith.sitofp %c0_i32_43 : i32 to bf16
    %96 = vector.broadcast %95 : bf16 to vector<128x64xbf16>
    %97 = arith.select %40, %94, %96 : vector<128x64xi1>, vector<128x64xbf16>
    %98 = tpu.concatenate %92, %93, %97 in 1 : vector<128x64xbf16>, vector<128x64xbf16>, vector<128x64xbf16> -> vector<128x192xbf16>
    %c0_i32_44 = arith.constant 0 : i32
    %99 = arith.sitofp %c0_i32_44 : i32 to bf16
    %100 = vector.broadcast %99 : bf16 to vector<128x192xbf16>
    %101 = arith.select %48, %98, %100 : vector<128x192xi1>, vector<128x192xbf16>
    %c2 = arith.constant 2 : index
    %c0_45 = arith.constant 0 : index
    %c0_46 = arith.constant 0 : index
    %102 = vector.load %arg4[%c2, %c0_45, %c0_46] : memref<3x192x64xbf16, #tpu.memory_space<vmem>>, vector<1x192x64xbf16>
    %103 = vector.shape_cast %102 : vector<1x192x64xbf16> to vector<192x64xbf16>
    %cst_47 = arith.constant dense<0.000000e+00> : vector<128x64xf32>
    %104 = tpu.matmul %101, %103, %cst_47 {dimension_numbers = #tpu.dot_dimension_numbers<[1], [0], [0], [1], [0, 0, 1, 1], [], []>} : vector<128x192xbf16>, vector<192x64xbf16>, vector<128x64xf32> -> vector<128x64xf32>
    %105 = arith.addf %88, %104 : vector<128x64xf32>
    %cst_48 = arith.constant 0.000000e+00 : f32
    %106 = vector.broadcast %cst_48 : f32 to vector<128x64xf32>
    %107 = arith.maximumf %105, %106 : vector<128x64xf32>
    %108 = arith.truncf %107 : vector<128x64xf32> to vector<128x64xbf16>
    %c0_49 = arith.constant 0 : index
    %c0_50 = arith.constant 0 : index
    %109 = vector.load %arg5[%c0_49, %c0_50] : memref<64x256xbf16, #tpu.memory_space<vmem>>, vector<64x256xbf16>
    %cst_51 = arith.constant dense<0.000000e+00> : vector<128x256xf32>
    %110 = tpu.matmul %108, %109, %cst_51 {dimension_numbers = #tpu.dot_dimension_numbers<[1], [0], [0], [1], [0, 0, 1, 1], [], []>} : vector<128x64xbf16>, vector<64x256xbf16>, vector<128x256xf32> -> vector<128x256xf32>
    %c0_52 = arith.constant 0 : index
    %c0_53 = arith.constant 0 : index
    %111 = vector.load %arg15[%c0_52, %c0_53] : memref<128x256xf32, #tpu.memory_space<vmem>>, vector<128x256xf32>
    %112 = arith.addf %110, %111 : vector<128x256xf32>
    %cst_54 = arith.constant 0.000000e+00 : f32
    %113 = vector.broadcast %cst_54 : f32 to vector<128x256xf32>
    %114 = arith.maximumf %112, %113 : vector<128x256xf32>
    %c0_55 = arith.constant 0 : index
    %c0_56 = arith.constant 0 : index
    %115 = vector.load %arg15[%c0_55, %c0_56] : memref<128x256xf32, #tpu.memory_space<vmem>>, vector<128x256xf32>
    tpu.vector_store %arg15[%c0_55, %c0_56], %114 {strides = array<i32>} : memref<128x256xf32, #tpu.memory_space<vmem>>, vector<128x256xf32>,
    %c0_57 = arith.constant 0 : index
    %c0_58 = arith.constant 0 : index
    %116 = vector.load %arg15[%c0_57, %c0_58] : memref<128x256xf32, #tpu.memory_space<vmem>>, vector<128x256xf32>
    %117 = arith.truncf %116 : vector<128x256xf32> to vector<128x256xbf16>
    %c0_59 = arith.constant 0 : index
    %c0_60 = arith.constant 0 : index
    %118 = vector.load %arg6[%c0_59, %c0_60] : memref<256x64xbf16, #tpu.memory_space<vmem>>, vector<256x64xbf16>
    %cst_61 = arith.constant dense<0.000000e+00> : vector<128x64xf32>
    %119 = tpu.matmul %117, %118, %cst_61 {dimension_numbers = #tpu.dot_dimension_numbers<[1], [0], [0], [1], [0, 0, 1, 1], [], []>} : vector<128x256xbf16>, vector<256x64xbf16>, vector<128x64xf32> -> vector<128x64xf32>
    %cst_62 = arith.constant 0.000000e+00 : f32
    %120 = vector.broadcast %cst_62 : f32 to vector<128x64xf32>
    %121 = arith.maximumf %119, %120 : vector<128x64xf32>
    %122 = arith.truncf %121 : vector<128x64xf32> to vector<128x64xbf16>
    %c16_63 = arith.constant 16 : index
    %c0_64 = arith.constant 0 : index
    %123 = vector.load %arg14[%c16_63, %c0_64] : memref<160x64xbf16, #tpu.memory_space<vmem>>, vector<128x64xbf16>
    tpu.vector_store %arg14[%c16_63, %c0_64], %122 {strides = array<i32>} : memref<160x64xbf16, #tpu.memory_space<vmem>>, vector<128x64xbf16>,
    %c7_65 = arith.constant 7 : index
    %c0_66 = arith.constant 0 : index
    %124 = vector.load %arg14[%c7_65, %c0_66] : memref<160x64xbf16, #tpu.memory_space<vmem>>, vector<128x64xbf16>
    %c0_i32_67 = arith.constant 0 : i32
    %125 = arith.sitofp %c0_i32_67 : i32 to bf16
    %126 = vector.broadcast %125 : bf16 to vector<128x64xbf16>
    %127 = arith.select %36, %124, %126 : vector<128x64xi1>, vector<128x64xbf16>
    %c8_68 = arith.constant 8 : index
    %c0_69 = arith.constant 0 : index
    %128 = vector.load %arg14[%c8_68, %c0_69] : memref<160x64xbf16, #tpu.memory_space<vmem>>, vector<128x64xbf16>
    %c9_70 = arith.constant 9 : index
    %c0_71 = arith.constant 0 : index
    %129 = vector.load %arg14[%c9_70, %c0_71] : memref<160x64xbf16, #tpu.memory_space<vmem>>, vector<128x64xbf16>
    %c0_i32_72 = arith.constant 0 : i32
    %130 = arith.sitofp %c0_i32_72 : i32 to bf16
    %131 = vector.broadcast %130 : bf16 to vector<128x64xbf16>
    %132 = arith.select %40, %129, %131 : vector<128x64xi1>, vector<128x64xbf16>
    %133 = tpu.concatenate %127, %128, %132 in 1 : vector<128x64xbf16>, vector<128x64xbf16>, vector<128x64xbf16> -> vector<128x192xbf16>
    %c0_i32_73 = arith.constant 0 : i32
    %134 = arith.sitofp %c0_i32_73 : i32 to bf16
    %135 = vector.broadcast %134 : bf16 to vector<128x192xbf16>
    %136 = arith.select %44, %133, %135 : vector<128x192xi1>, vector<128x192xbf16>
    %c0_74 = arith.constant 0 : index
    %c0_75 = arith.constant 0 : index
    %c0_76 = arith.constant 0 : index
    %137 = vector.load %arg7[%c0_74, %c0_75, %c0_76] : memref<3x192x64xbf16, #tpu.memory_space<vmem>>, vector<1x192x64xbf16>
    %138 = vector.shape_cast %137 : vector<1x192x64xbf16> to vector<192x64xbf16>
    %cst_77 = arith.constant dense<0.000000e+00> : vector<128x64xf32>
    %139 = tpu.matmul %136, %138, %cst_77 {dimension_numbers = #tpu.dot_dimension_numbers<[1], [0], [0], [1], [0, 0, 1, 1], [], []>} : vector<128x192xbf16>, vector<192x64xbf16>, vector<128x64xf32> -> vector<128x64xf32>
    %c15_78 = arith.constant 15 : index
    %c0_79 = arith.constant 0 : index
    %140 = vector.load %arg14[%c15_78, %c0_79] : memref<160x64xbf16, #tpu.memory_space<vmem>>, vector<128x64xbf16>
    %c0_i32_80 = arith.constant 0 : i32
    %141 = arith.sitofp %c0_i32_80 : i32 to bf16
    %142 = vector.broadcast %141 : bf16 to vector<128x64xbf16>
    %143 = arith.select %36, %140, %142 : vector<128x64xi1>, vector<128x64xbf16>
    %c16_81 = arith.constant 16 : index
    %c0_82 = arith.constant 0 : index
    %144 = vector.load %arg14[%c16_81, %c0_82] : memref<160x64xbf16, #tpu.memory_space<vmem>>, vector<128x64xbf16>
    %c17_83 = arith.constant 17 : index
    %c0_84 = arith.constant 0 : index
    %145 = vector.load %arg14[%c17_83, %c0_84] : memref<160x64xbf16, #tpu.memory_space<vmem>>, vector<128x64xbf16>
    %c0_i32_85 = arith.constant 0 : i32
    %146 = arith.sitofp %c0_i32_85 : i32 to bf16
    %147 = vector.broadcast %146 : bf16 to vector<128x64xbf16>
    %148 = arith.select %40, %145, %147 : vector<128x64xi1>, vector<128x64xbf16>
    %149 = tpu.concatenate %143, %144, %148 in 1 : vector<128x64xbf16>, vector<128x64xbf16>, vector<128x64xbf16> -> vector<128x192xbf16>
    %c1_86 = arith.constant 1 : index
    %c0_87 = arith.constant 0 : index
    %c0_88 = arith.constant 0 : index
    %150 = vector.load %arg7[%c1_86, %c0_87, %c0_88] : memref<3x192x64xbf16, #tpu.memory_space<vmem>>, vector<1x192x64xbf16>
    %151 = vector.shape_cast %150 : vector<1x192x64xbf16> to vector<192x64xbf16>
    %cst_89 = arith.constant dense<0.000000e+00> : vector<128x64xf32>
    %152 = tpu.matmul %149, %151, %cst_89 {dimension_numbers = #tpu.dot_dimension_numbers<[1], [0], [0], [1], [0, 0, 1, 1], [], []>} : vector<128x192xbf16>, vector<192x64xbf16>, vector<128x64xf32> -> vector<128x64xf32>
    %153 = arith.addf %139, %152 : vector<128x64xf32>
    %c23_90 = arith.constant 23 : index
    %c0_91 = arith.constant 0 : index
    %154 = vector.load %arg14[%c23_90, %c0_91] : memref<160x64xbf16, #tpu.memory_space<vmem>>, vector<128x64xbf16>
    %c0_i32_92 = arith.constant 0 : i32
    %155 = arith.sitofp %c0_i32_92 : i32 to bf16
    %156 = vector.broadcast %155 : bf16 to vector<128x64xbf16>
    %157 = arith.select %36, %154, %156 : vector<128x64xi1>, vector<128x64xbf16>
    %c24_93 = arith.constant 24 : index
    %c0_94 = arith.constant 0 : index
    %158 = vector.load %arg14[%c24_93, %c0_94] : memref<160x64xbf16, #tpu.memory_space<vmem>>, vector<128x64xbf16>
    %c25_95 = arith.constant 25 : index
    %c0_96 = arith.constant 0 : index
    %159 = vector.load %arg14[%c25_95, %c0_96] : memref<160x64xbf16, #tpu.memory_space<vmem>>, vector<128x64xbf16>
    %c0_i32_97 = arith.constant 0 : i32
    %160 = arith.sitofp %c0_i32_97 : i32 to bf16
    %161 = vector.broadcast %160 : bf16 to vector<128x64xbf16>
    %162 = arith.select %40, %159, %161 : vector<128x64xi1>, vector<128x64xbf16>
    %163 = tpu.concatenate %157, %158, %162 in 1 : vector<128x64xbf16>, vector<128x64xbf16>, vector<128x64xbf16> -> vector<128x192xbf16>
    %c0_i32_98 = arith.constant 0 : i32
    %164 = arith.sitofp %c0_i32_98 : i32 to bf16
    %165 = vector.broadcast %164 : bf16 to vector<128x192xbf16>
    %166 = arith.select %48, %163, %165 : vector<128x192xi1>, vector<128x192xbf16>
    %c2_99 = arith.constant 2 : index
    %c0_100 = arith.constant 0 : index
    %c0_101 = arith.constant 0 : index
    %167 = vector.load %arg7[%c2_99, %c0_100, %c0_101] : memref<3x192x64xbf16, #tpu.memory_space<vmem>>, vector<1x192x64xbf16>
    %168 = vector.shape_cast %167 : vector<1x192x64xbf16> to vector<192x64xbf16>
    %cst_102 = arith.constant dense<0.000000e+00> : vector<128x64xf32>
    %169 = tpu.matmul %166, %168, %cst_102 {dimension_numbers = #tpu.dot_dimension_numbers<[1], [0], [0], [1], [0, 0, 1, 1], [], []>} : vector<128x192xbf16>, vector<192x64xbf16>, vector<128x64xf32> -> vector<128x64xf32>
    %170 = arith.addf %153, %169 : vector<128x64xf32>
    %cst_103 = arith.constant 0.000000e+00 : f32
    %171 = vector.broadcast %cst_103 : f32 to vector<128x64xf32>
    %172 = arith.maximumf %170, %171 : vector<128x64xf32>
    %173 = arith.truncf %172 : vector<128x64xf32> to vector<128x64xbf16>
    %c0_104 = arith.constant 0 : index
    %c0_105 = arith.constant 0 : index
    %174 = vector.load %arg8[%c0_104, %c0_105] : memref<64x256xbf16, #tpu.memory_space<vmem>>, vector<64x256xbf16>
    %cst_106 = arith.constant dense<0.000000e+00> : vector<128x256xf32>
    %175 = tpu.matmul %173, %174, %cst_106 {dimension_numbers = #tpu.dot_dimension_numbers<[1], [0], [0], [1], [0, 0, 1, 1], [], []>} : vector<128x64xbf16>, vector<64x256xbf16>, vector<128x256xf32> -> vector<128x256xf32>
    %c0_107 = arith.constant 0 : index
    %c0_108 = arith.constant 0 : index
    %176 = vector.load %arg15[%c0_107, %c0_108] : memref<128x256xf32, #tpu.memory_space<vmem>>, vector<128x256xf32>
    %177 = arith.addf %175, %176 : vector<128x256xf32>
    %cst_109 = arith.constant 0.000000e+00 : f32
    %178 = vector.broadcast %cst_109 : f32 to vector<128x256xf32>
    %179 = arith.maximumf %177, %178 : vector<128x256xf32>
    %c0_110 = arith.constant 0 : index
    %c0_111 = arith.constant 0 : index
    %180 = vector.load %arg15[%c0_110, %c0_111] : memref<128x256xf32, #tpu.memory_space<vmem>>, vector<128x256xf32>
    tpu.vector_store %arg15[%c0_110, %c0_111], %179 {strides = array<i32>} : memref<128x256xf32, #tpu.memory_space<vmem>>, vector<128x256xf32>,
    %c0_112 = arith.constant 0 : index
    %c0_113 = arith.constant 0 : index
    %181 = vector.load %arg15[%c0_112, %c0_113] : memref<128x256xf32, #tpu.memory_space<vmem>>, vector<128x256xf32>
    %182 = arith.truncf %181 : vector<128x256xf32> to vector<128x256xbf16>
    %c0_114 = arith.constant 0 : index
    %c0_115 = arith.constant 0 : index
    %183 = vector.load %arg9[%c0_114, %c0_115] : memref<256x64xbf16, #tpu.memory_space<vmem>>, vector<256x64xbf16>
    %cst_116 = arith.constant dense<0.000000e+00> : vector<128x64xf32>
    %184 = tpu.matmul %182, %183, %cst_116 {dimension_numbers = #tpu.dot_dimension_numbers<[1], [0], [0], [1], [0, 0, 1, 1], [], []>} : vector<128x256xbf16>, vector<256x64xbf16>, vector<128x64xf32> -> vector<128x64xf32>
    %cst_117 = arith.constant 0.000000e+00 : f32
    %185 = vector.broadcast %cst_117 : f32 to vector<128x64xf32>
    %186 = arith.maximumf %184, %185 : vector<128x64xf32>
    %187 = arith.truncf %186 : vector<128x64xf32> to vector<128x64xbf16>
    %c16_118 = arith.constant 16 : index
    %c0_119 = arith.constant 0 : index
    %188 = vector.load %arg14[%c16_118, %c0_119] : memref<160x64xbf16, #tpu.memory_space<vmem>>, vector<128x64xbf16>
    tpu.vector_store %arg14[%c16_118, %c0_119], %187 {strides = array<i32>} : memref<160x64xbf16, #tpu.memory_space<vmem>>, vector<128x64xbf16>,
    %c7_120 = arith.constant 7 : index
    %c0_121 = arith.constant 0 : index
    %189 = vector.load %arg14[%c7_120, %c0_121] : memref<160x64xbf16, #tpu.memory_space<vmem>>, vector<128x64xbf16>
    %c0_i32_122 = arith.constant 0 : i32
    %190 = arith.sitofp %c0_i32_122 : i32 to bf16
    %191 = vector.broadcast %190 : bf16 to vector<128x64xbf16>
    %192 = arith.select %36, %189, %191 : vector<128x64xi1>, vector<128x64xbf16>
    %c8_123 = arith.constant 8 : index
    %c0_124 = arith.constant 0 : index
    %193 = vector.load %arg14[%c8_123, %c0_124] : memref<160x64xbf16, #tpu.memory_space<vmem>>, vector<128x64xbf16>
    %c9_125 = arith.constant 9 : index
    %c0_126 = arith.constant 0 : index
    %194 = vector.load %arg14[%c9_125, %c0_126] : memref<160x64xbf16, #tpu.memory_space<vmem>>, vector<128x64xbf16>
    %c0_i32_127 = arith.constant 0 : i32
    %195 = arith.sitofp %c0_i32_127 : i32 to bf16
    %196 = vector.broadcast %195 : bf16 to vector<128x64xbf16>
    %197 = arith.select %40, %194, %196 : vector<128x64xi1>, vector<128x64xbf16>
    %198 = tpu.concatenate %192, %193, %197 in 1 : vector<128x64xbf16>, vector<128x64xbf16>, vector<128x64xbf16> -> vector<128x192xbf16>
    %c0_i32_128 = arith.constant 0 : i32
    %199 = arith.sitofp %c0_i32_128 : i32 to bf16
    %200 = vector.broadcast %199 : bf16 to vector<128x192xbf16>
    %201 = arith.select %44, %198, %200 : vector<128x192xi1>, vector<128x192xbf16>
    %c0_129 = arith.constant 0 : index
    %c0_130 = arith.constant 0 : index
    %c0_131 = arith.constant 0 : index
    %202 = vector.load %arg10[%c0_129, %c0_130, %c0_131] : memref<3x192x64xbf16, #tpu.memory_space<vmem>>, vector<1x192x64xbf16>
    %203 = vector.shape_cast %202 : vector<1x192x64xbf16> to vector<192x64xbf16>
    %cst_132 = arith.constant dense<0.000000e+00> : vector<128x64xf32>
    %204 = tpu.matmul %201, %203, %cst_132 {dimension_numbers = #tpu.dot_dimension_numbers<[1], [0], [0], [1], [0, 0, 1, 1], [], []>} : vector<128x192xbf16>, vector<192x64xbf16>, vector<128x64xf32> -> vector<128x64xf32>
    %c15_133 = arith.constant 15 : index
    %c0_134 = arith.constant 0 : index
    %205 = vector.load %arg14[%c15_133, %c0_134] : memref<160x64xbf16, #tpu.memory_space<vmem>>, vector<128x64xbf16>
    %c0_i32_135 = arith.constant 0 : i32
    %206 = arith.sitofp %c0_i32_135 : i32 to bf16
    %207 = vector.broadcast %206 : bf16 to vector<128x64xbf16>
    %208 = arith.select %36, %205, %207 : vector<128x64xi1>, vector<128x64xbf16>
    %c16_136 = arith.constant 16 : index
    %c0_137 = arith.constant 0 : index
    %209 = vector.load %arg14[%c16_136, %c0_137] : memref<160x64xbf16, #tpu.memory_space<vmem>>, vector<128x64xbf16>
    %c17_138 = arith.constant 17 : index
    %c0_139 = arith.constant 0 : index
    %210 = vector.load %arg14[%c17_138, %c0_139] : memref<160x64xbf16, #tpu.memory_space<vmem>>, vector<128x64xbf16>
    %c0_i32_140 = arith.constant 0 : i32
    %211 = arith.sitofp %c0_i32_140 : i32 to bf16
    %212 = vector.broadcast %211 : bf16 to vector<128x64xbf16>
    %213 = arith.select %40, %210, %212 : vector<128x64xi1>, vector<128x64xbf16>
    %214 = tpu.concatenate %208, %209, %213 in 1 : vector<128x64xbf16>, vector<128x64xbf16>, vector<128x64xbf16> -> vector<128x192xbf16>
    %c1_141 = arith.constant 1 : index
    %c0_142 = arith.constant 0 : index
    %c0_143 = arith.constant 0 : index
    %215 = vector.load %arg10[%c1_141, %c0_142, %c0_143] : memref<3x192x64xbf16, #tpu.memory_space<vmem>>, vector<1x192x64xbf16>
    %216 = vector.shape_cast %215 : vector<1x192x64xbf16> to vector<192x64xbf16>
    %cst_144 = arith.constant dense<0.000000e+00> : vector<128x64xf32>
    %217 = tpu.matmul %214, %216, %cst_144 {dimension_numbers = #tpu.dot_dimension_numbers<[1], [0], [0], [1], [0, 0, 1, 1], [], []>} : vector<128x192xbf16>, vector<192x64xbf16>, vector<128x64xf32> -> vector<128x64xf32>
    %218 = arith.addf %204, %217 : vector<128x64xf32>
    %c23_145 = arith.constant 23 : index
    %c0_146 = arith.constant 0 : index
    %219 = vector.load %arg14[%c23_145, %c0_146] : memref<160x64xbf16, #tpu.memory_space<vmem>>, vector<128x64xbf16>
    %c0_i32_147 = arith.constant 0 : i32
    %220 = arith.sitofp %c0_i32_147 : i32 to bf16
    %221 = vector.broadcast %220 : bf16 to vector<128x64xbf16>
    %222 = arith.select %36, %219, %221 : vector<128x64xi1>, vector<128x64xbf16>
    %c24_148 = arith.constant 24 : index
    %c0_149 = arith.constant 0 : index
    %223 = vector.load %arg14[%c24_148, %c0_149] : memref<160x64xbf16, #tpu.memory_space<vmem>>, vector<128x64xbf16>
    %c25_150 = arith.constant 25 : index
    %c0_151 = arith.constant 0 : index
    %224 = vector.load %arg14[%c25_150, %c0_151] : memref<160x64xbf16, #tpu.memory_space<vmem>>, vector<128x64xbf16>
    %c0_i32_152 = arith.constant 0 : i32
    %225 = arith.sitofp %c0_i32_152 : i32 to bf16
    %226 = vector.broadcast %225 : bf16 to vector<128x64xbf16>
    %227 = arith.select %40, %224, %226 : vector<128x64xi1>, vector<128x64xbf16>
    %228 = tpu.concatenate %222, %223, %227 in 1 : vector<128x64xbf16>, vector<128x64xbf16>, vector<128x64xbf16> -> vector<128x192xbf16>
    %c0_i32_153 = arith.constant 0 : i32
    %229 = arith.sitofp %c0_i32_153 : i32 to bf16
    %230 = vector.broadcast %229 : bf16 to vector<128x192xbf16>
    %231 = arith.select %48, %228, %230 : vector<128x192xi1>, vector<128x192xbf16>
    %c2_154 = arith.constant 2 : index
    %c0_155 = arith.constant 0 : index
    %c0_156 = arith.constant 0 : index
    %232 = vector.load %arg10[%c2_154, %c0_155, %c0_156] : memref<3x192x64xbf16, #tpu.memory_space<vmem>>, vector<1x192x64xbf16>
    %233 = vector.shape_cast %232 : vector<1x192x64xbf16> to vector<192x64xbf16>
    %cst_157 = arith.constant dense<0.000000e+00> : vector<128x64xf32>
    %234 = tpu.matmul %231, %233, %cst_157 {dimension_numbers = #tpu.dot_dimension_numbers<[1], [0], [0], [1], [0, 0, 1, 1], [], []>} : vector<128x192xbf16>, vector<192x64xbf16>, vector<128x64xf32> -> vector<128x64xf32>
    %235 = arith.addf %218, %234 : vector<128x64xf32>
    %cst_158 = arith.constant 0.000000e+00 : f32
    %236 = vector.broadcast %cst_158 : f32 to vector<128x64xf32>
    %237 = arith.maximumf %235, %236 : vector<128x64xf32>
    %238 = arith.truncf %237 : vector<128x64xf32> to vector<128x64xbf16>
    %c0_159 = arith.constant 0 : index
    %c0_160 = arith.constant 0 : index
    %239 = vector.load %arg11[%c0_159, %c0_160] : memref<64x256xbf16, #tpu.memory_space<vmem>>, vector<64x256xbf16>
    %cst_161 = arith.constant dense<0.000000e+00> : vector<128x256xf32>
    %240 = tpu.matmul %238, %239, %cst_161 {dimension_numbers = #tpu.dot_dimension_numbers<[1], [0], [0], [1], [0, 0, 1, 1], [], []>} : vector<128x64xbf16>, vector<64x256xbf16>, vector<128x256xf32> -> vector<128x256xf32>
    %c0_162 = arith.constant 0 : index
    %c0_163 = arith.constant 0 : index
    %241 = vector.load %arg15[%c0_162, %c0_163] : memref<128x256xf32, #tpu.memory_space<vmem>>, vector<128x256xf32>
    %242 = arith.addf %240, %241 : vector<128x256xf32>
    %cst_164 = arith.constant 0.000000e+00 : f32
    %243 = vector.broadcast %cst_164 : f32 to vector<128x256xf32>
    %244 = arith.maximumf %242, %243 : vector<128x256xf32>
    %245 = arith.truncf %244 : vector<128x256xf32> to vector<128x256xbf16>
    %c0_165 = arith.constant 0 : index
    %c0_166 = arith.constant 0 : index
    %246 = vector.load %arg12[%c0_165, %c0_166] : memref<128x256xbf16, #tpu.memory_space<vmem>>, vector<128x256xbf16>
    tpu.vector_store %arg12[%c0_165, %c0_166], %245 {strides = array<i32>} : memref<128x256xbf16, #tpu.memory_space<vmem>>, vector<128x256xbf16>,
    %247 = arith.truncf %242 : vector<128x256xf32> to vector<128x256xbf16>
    %c0_167 = arith.constant 0 : index
    %c0_168 = arith.constant 0 : index
    %248 = vector.load %arg13[%c0_167, %c0_168] : memref<128x256xbf16, #tpu.memory_space<vmem>>, vector<128x256xbf16>
    tpu.vector_store %arg13[%c0_167, %c0_168], %247 {strides = array<i32>} : memref<128x256xbf16, #tpu.memory_space<vmem>>, vector<128x256xbf16>,
    return
  }
  func.func @transform_0(%arg0: i32) -> (i32, i32) {
    %c0_i32 = arith.constant 0 : i32
    %c0_i32_0 = arith.constant 0 : i32
    return %arg0, %c0_i32 : i32, i32
  }
  func.func @transform_1(%arg0: i32) -> (i32, i32) {
    %c0_i32 = arith.constant 0 : i32
    %c0_i32_0 = arith.constant 0 : i32
    %c0_i32_1 = arith.constant 0 : i32
    return %c0_i32, %c0_i32_0 : i32, i32
  }
  func.func @transform_2(%arg0: i32) -> (i32, i32) {
    %c0_i32 = arith.constant 0 : i32
    %c0_i32_0 = arith.constant 0 : i32
    %c0_i32_1 = arith.constant 0 : i32
    return %c0_i32, %c0_i32_0 : i32, i32
  }
  func.func @transform_3(%arg0: i32) -> (i32, i32, i32) {
    %c0_i32 = arith.constant 0 : i32
    %c0_i32_0 = arith.constant 0 : i32
    %c0_i32_1 = arith.constant 0 : i32
    %c0_i32_2 = arith.constant 0 : i32
    return %c0_i32, %c0_i32_0, %c0_i32_1 : i32, i32, i32
  }
  func.func @transform_4(%arg0: i32) -> (i32, i32) {
    %c0_i32 = arith.constant 0 : i32
    %c0_i32_0 = arith.constant 0 : i32
    %c0_i32_1 = arith.constant 0 : i32
    return %c0_i32, %c0_i32_0 : i32, i32
  }
  func.func @transform_5(%arg0: i32) -> (i32, i32) {
    %c0_i32 = arith.constant 0 : i32
    %c0_i32_0 = arith.constant 0 : i32
    %c0_i32_1 = arith.constant 0 : i32
    return %c0_i32, %c0_i32_0 : i32, i32
  }
  func.func @transform_6(%arg0: i32) -> (i32, i32, i32) {
    %c0_i32 = arith.constant 0 : i32
    %c0_i32_0 = arith.constant 0 : i32
    %c0_i32_1 = arith.constant 0 : i32
    %c0_i32_2 = arith.constant 0 : i32
    return %c0_i32, %c0_i32_0, %c0_i32_1 : i32, i32, i32
  }
  func.func @transform_7(%arg0: i32) -> (i32, i32) {
    %c0_i32 = arith.constant 0 : i32
    %c0_i32_0 = arith.constant 0 : i32
    %c0_i32_1 = arith.constant 0 : i32
    return %c0_i32, %c0_i32_0 : i32, i32
  }
  func.func @transform_8(%arg0: i32) -> (i32, i32) {
    %c0_i32 = arith.constant 0 : i32
    %c0_i32_0 = arith.constant 0 : i32
    %c0_i32_1 = arith.constant 0 : i32
    return %c0_i32, %c0_i32_0 : i32, i32
  }
  func.func @transform_9(%arg0: i32) -> (i32, i32, i32) {
    %c0_i32 = arith.constant 0 : i32
    %c0_i32_0 = arith.constant 0 : i32
    %c0_i32_1 = arith.constant 0 : i32
    %c0_i32_2 = arith.constant 0 : i32
    return %c0_i32, %c0_i32_0, %c0_i32_1 : i32, i32, i32
  }
  func.func @transform_10(%arg0: i32) -> (i32, i32) {
    %c0_i32 = arith.constant 0 : i32
    %c0_i32_0 = arith.constant 0 : i32
    %c0_i32_1 = arith.constant 0 : i32
    return %c0_i32, %c0_i32_0 : i32, i32
  }
  func.func @transform_11(%arg0: i32) -> (i32, i32) {
    %c0_i32 = arith.constant 0 : i32
    %c0_i32_0 = arith.constant 0 : i32
    return %arg0, %c0_i32 : i32, i32
  }
  func.func @transform_12(%arg0: i32) -> (i32, i32) {
    %c0_i32 = arith.constant 0 : i32
    %c0_i32_0 = arith.constant 0 : i32
    return %arg0, %c0_i32 : i32, i32
  }
}

</mosaic_0001>

<llo_original>
// kernel: residual_block2_forward.1
$region0: #{residual_block2_forward.1}
  #allocation0 [shape = 'u32[]', space=smem, size = 0x4, offset = 0x4, fixed_abs, tag = 'smem constant byte address 0x4 - core index']
  #allocation1 [shape = 'u32[144,128]{1,0:T(1,128)}', space=vmem, size = 0x12000, scoped, tag = 'internal scratch']
  #allocation2 [shape = 'bf16[160,64]{1,0:T(16,128)(2,1)}', space=vmem, size = 0xa000, scoped, tag = 'scratch operand']
  #allocation3 [shape = 'f32[128,256]{1,0:T(8,128)}', space=vmem, size = 0x20000, scoped, tag = 'scratch operand']
  %s0 = inlined_call_operand.vmem [shape: bf16[128,64], index: 0, kind: input, shape index: {}]
  %s1 = inlined_call_operand.vmem [shape: bf16[64,256], index: 1, kind: input, shape index: {}]
  %s2 = inlined_call_operand.vmem [shape: bf16[64,64], index: 2, kind: input, shape index: {}]
  %s3 = inlined_call_operand.vmem [shape: bf16[3,192,64], index: 3, kind: input, shape index: {}]
  %s4 = inlined_call_operand.vmem [shape: bf16[64,256], index: 4, kind: input, shape index: {}]
  %s5 = inlined_call_operand.vmem [shape: bf16[256,64], index: 5, kind: input, shape index: {}]
  %s6 = inlined_call_operand.vmem [shape: bf16[3,192,64], index: 6, kind: input, shape index: {}]
  %s7 = inlined_call_operand.vmem [shape: bf16[64,256], index: 7, kind: input, shape index: {}]
  %s8 = inlined_call_operand.vmem [shape: bf16[256,64], index: 8, kind: input, shape index: {}]
  %s9 = inlined_call_operand.vmem [shape: bf16[3,192,64], index: 9, kind: input, shape index: {}]
  %s10 = inlined_call_operand.vmem [shape: bf16[64,256], index: 10, kind: input, shape index: {}]
  %s11 = inlined_call_operand.hbm [shape: bf16[128,256], index: 11, kind: output, shape index: {0}]
  %s12 = inlined_call_operand.hbm [shape: bf16[128,256], index: 12, kind: output, shape index: {1}]
  %13 = xla_tuple %s11, %s12
  %s14 = sld [smem:[#allocation0]]
  $region62: #{residual_block2_forward.1} parent=0
    _
  %s16 = ssub.s32 1, %s14
  %s17 = scalar_select 0, %s16, %s14
  $region1: #{residual_block2_forward.1} parent=0
    #allocation4 [shape = 'u8[65536]{0}', space=vmem, size = 0x10000, scoped, tag = 'output window, operand 0, single buffered']
    #allocation5 [shape = 's32[1]{0}', space=sflag, size = 0x4, scoped, tag = 'scoped memory for residual_block2_forward.1']
    #allocation6 [shape = 'u8[65536]{0}', space=vmem, size = 0x10000, scoped, tag = 'output window, operand 1, single buffered']
    #allocation7 [shape = 's32[1]{0}', space=sflag, size = 0x4, scoped, tag = 'scoped memory for residual_block2_forward.1']
    %18 = vsyncpa [#allocation5], 0
    %19 = vsyncpa [#allocation7], 0
    // Predicated region
    $region2: #{residual_block2_forward.1} parent=1 // pred_check
      _
    $region3: #{residual_block2_forward.1} parent=1 // pred_check_branch
      %21 = sbr.rel (0) target = $region5
    $region4: #{residual_block2_forward.1} parent=1 // pred_region
      _
    $region5: #{residual_block2_forward.1} parent=1 // pred_fallthru
      _
    // Predicated region
    $region6: #{residual_block2_forward.1} parent=1 // pred_check
      _
    $region7: #{residual_block2_forward.1} parent=1 // pred_check_branch
      %23 = sbr.rel (0) target = $region9
    $region8: #{residual_block2_forward.1} parent=1 // pred_region
      _
    $region9: #{residual_block2_forward.1} parent=1 // pred_fallthru
      _
    // Predicated region
    $region10: #{residual_block2_forward.1} parent=1 // pred_check
      _
    $region11: #{residual_block2_forward.1} parent=1 // pred_check_branch
      %25 = sbr.rel (0) target = $region13
    $region12: #{residual_block2_forward.1} parent=1 // pred_region
      _
    $region13: #{residual_block2_forward.1} parent=1 // pred_fallthru
      _
    // Predicated region
    $region14: #{residual_block2_forward.1} parent=1 // pred_check
      _
    $region15: #{residual_block2_forward.1} parent=1 // pred_check_branch
      %27 = sbr.rel (0) target = $region17
    $region16: #{residual_block2_forward.1} parent=1 // pred_region
      _
    $region17: #{residual_block2_forward.1} parent=1 // pred_fallthru
      _
    // Predicated region
    $region18: #{residual_block2_forward.1} parent=1 // pred_check
      _
    $region19: #{residual_block2_forward.1} parent=1 // pred_check_branch
      %29 = sbr.rel (0) target = $region21
    $region20: #{residual_block2_forward.1} parent=1 // pred_region
      _
    $region21: #{residual_block2_forward.1} parent=1 // pred_fallthru
      _
    // Predicated region
    $region22: #{residual_block2_forward.1} parent=1 // pred_check
      _
    $region23: #{residual_block2_forward.1} parent=1 // pred_check_branch
      %31 = sbr.rel (0) target = $region25
    $region24: #{residual_block2_forward.1} parent=1 // pred_region
      _
    $region25: #{residual_block2_forward.1} parent=1 // pred_fallthru
      _
    // Predicated region
    $region26: #{residual_block2_forward.1} parent=1 // pred_check
      _
    $region27: #{residual_block2_forward.1} parent=1 // pred_check_branch
      %33 = sbr.rel (0) target = $region29
    $region28: #{residual_block2_forward.1} parent=1 // pred_region
      _
    $region29: #{residual_block2_forward.1} parent=1 // pred_fallthru
      _
    // Predicated region
    $region30: #{residual_block2_forward.1} parent=1 // pred_check
      _
    $region31: #{residual_block2_forward.1} parent=1 // pred_check_branch
      %35 = sbr.rel (0) target = $region33
    $region32: #{residual_block2_forward.1} parent=1 // pred_region
      _
    $region33: #{residual_block2_forward.1} parent=1 // pred_fallthru
      _
    // Predicated region
    $region34: #{residual_block2_forward.1} parent=1 // pred_check
      _
    $region35: #{residual_block2_forward.1} parent=1 // pred_check_branch
      %37 = sbr.rel (0) target = $region37
    $region36: #{residual_block2_forward.1} parent=1 // pred_region
      _
    $region37: #{residual_block2_forward.1} parent=1 // pred_fallthru
      _
    // Predicated region
    $region38: #{residual_block2_forward.1} parent=1 // pred_check
      _
    $region39: #{residual_block2_forward.1} parent=1 // pred_check_branch
      %39 = sbr.rel (0) target = $region41
    $region40: #{residual_block2_forward.1} parent=1 // pred_region
      _
    $region41: #{residual_block2_forward.1} parent=1 // pred_fallthru
      _
    // Predicated region
    $region42: #{residual_block2_forward.1} parent=1 // pred_check
      _
    $region43: #{residual_block2_forward.1} parent=1 // pred_check_branch
      %41 = sbr.rel (0) target = $region45
    $region44: #{residual_block2_forward.1} parent=1 // pred_region
      _
    $region45: #{residual_block2_forward.1} parent=1 // pred_fallthru
      _
    %v45 = vlaneseq
    %v46 = vshrl.u32 %v45, 7
    %v47 = vadd.s32 %v46, 8
    %v48 = vadd.s32 %v46, 16
    %v49 = vadd.s32 %v46, 24
    %v50 = vadd.s32 %v46, 32
    %v51 = vadd.s32 %v46, 40
    %v52 = vadd.s32 %v46, 48
    %v53 = vadd.s32 %v46, 56
    %v54 = vadd.s32 %v46, 64
    %v55 = vadd.s32 %v46, 72
    %v56 = vadd.s32 %v46, 80
    %v57 = vadd.s32 %v46, 88
    %v58 = vadd.s32 %v46, 96
    %v59 = vadd.s32 %v46, 104
    %v60 = vadd.s32 %v46, 112
    %v61 = vadd.s32 %v46, 120
    %vm62 = vcmp.lt.s32.totalorder %v46, 0
    %v63 = vsub.s32 0, %v46
    %v64 = vsel %vm62, %v63, %v46
    %v65 = vshrl.u32 %v64, 3
    %v66 = vand.u32 %v64, 7
    %v67 = vsub.s32 0, %v66
    %v68 = vsel %vm62, %v67, %v66
    %vm69 = vcmp.lt.s32.totalorder %v47, 0
    %v70 = vsub.s32 0, %v47
    %v71 = vsel %vm69, %v70, %v47
    %v72 = vshrl.u32 %v71, 3
    %v73 = vand.u32 %v71, 7
    %v74 = vsub.s32 0, %v73
    %v75 = vsel %vm69, %v74, %v73
    %vm76 = vcmp.lt.s32.totalorder %v48, 0
    %v77 = vsub.s32 0, %v48
    %v78 = vsel %vm76, %v77, %v48
    %v79 = vshrl.u32 %v78, 3
    %v80 = vand.u32 %v78, 7
    %v81 = vsub.s32 0, %v80
    %v82 = vsel %vm76, %v81, %v80
    %vm83 = vcmp.lt.s32.totalorder %v49, 0
    %v84 = vsub.s32 0, %v49
    %v85 = vsel %vm83, %v84, %v49
    %v86 = vshrl.u32 %v85, 3
    %v87 = vand.u32 %v85, 7
    %v88 = vsub.s32 0, %v87
    %v89 = vsel %vm83, %v88, %v87
    %vm90 = vcmp.lt.s32.totalorder %v50, 0
    %v91 = vsub.s32 0, %v50
    %v92 = vsel %vm90, %v91, %v50
    %v93 = vshrl.u32 %v92, 3
    %v94 = vand.u32 %v92, 7
    %v95 = vsub.s32 0, %v94
    %v96 = vsel %vm90, %v95, %v94
    %vm97 = vcmp.lt.s32.totalorder %v51, 0
    %v98 = vsub.s32 0, %v51
    %v99 = vsel %vm97, %v98, %v51
    %v100 = vshrl.u32 %v99, 3
    %v101 = vand.u32 %v99, 7
    %v102 = vsub.s32 0, %v101
    %v103 = vsel %vm97, %v102, %v101
    %vm104 = vcmp.lt.s32.totalorder %v52, 0
    %v105 = vsub.s32 0, %v52
    %v106 = vsel %vm104, %v105, %v52
    %v107 = vshrl.u32 %v106, 3
    %v108 = vand.u32 %v106, 7
    %v109 = vsub.s32 0, %v108
    %v110 = vsel %vm104, %v109, %v108
    %vm111 = vcmp.lt.s32.totalorder %v53, 0
    %v112 = vsub.s32 0, %v53
    %v113 = vsel %vm111, %v112, %v53
    %v114 = vshrl.u32 %v113, 3
    %v115 = vand.u32 %v113, 7
    %v116 = vsub.s32 0, %v115
    %v117 = vsel %vm111, %v116, %v115
    %vm118 = vcmp.lt.s32.totalorder %v54, 0
    %v119 = vsub.s32 0, %v54
    %v120 = vsel %vm118, %v119, %v54
    %v121 = vshrl.u32 %v120, 3
    %v122 = vand.u32 %v120, 7
    %v123 = vsub.s32 0, %v122
    %v124 = vsel %vm118, %v123, %v122
    %vm125 = vcmp.lt.s32.totalorder %v55, 0
    %v126 = vsub.s32 0, %v55
    %v127 = vsel %vm125, %v126, %v55
    %v128 = vshrl.u32 %v127, 3
    %v129 = vand.u32 %v127, 7
    %v130 = vsub.s32 0, %v129
    %v131 = vsel %vm125, %v130, %v129
    %vm132 = vcmp.lt.s32.totalorder %v56, 0
    %v133 = vsub.s32 0, %v56
    %v134 = vsel %vm132, %v133, %v56
    %v135 = vshrl.u32 %v134, 3
    %v136 = vand.u32 %v134, 7
    %v137 = vsub.s32 0, %v136
    %v138 = vsel %vm132, %v137, %v136
    %vm139 = vcmp.lt.s32.totalorder %v57, 0
    %v140 = vsub.s32 0, %v57
    %v141 = vsel %vm139, %v140, %v57
    %v142 = vshrl.u32 %v141, 3
    %v143 = vand.u32 %v141, 7
    %v144 = vsub.s32 0, %v143
    %v145 = vsel %vm139, %v144, %v143
    %vm146 = vcmp.lt.s32.totalorder %v58, 0
    %v147 = vsub.s32 0, %v58
    %v148 = vsel %vm146, %v147, %v58
    %v149 = vshrl.u32 %v148, 3
    %v150 = vand.u32 %v148, 7
    %v151 = vsub.s32 0, %v150
    %v152 = vsel %vm146, %v151, %v150
    %vm153 = vcmp.lt.s32.totalorder %v59, 0
    %v154 = vsub.s32 0, %v59
    %v155 = vsel %vm153, %v154, %v59
    %v156 = vshrl.u32 %v155, 3
    %v157 = vand.u32 %v155, 7
    %v158 = vsub.s32 0, %v157
    %v159 = vsel %vm153, %v158, %v157
    %vm160 = vcmp.lt.s32.totalorder %v60, 0
    %v161 = vsub.s32 0, %v60
    %v162 = vsel %vm160, %v161, %v60
    %v163 = vshrl.u32 %v162, 3
    %v164 = vand.u32 %v162, 7
    %v165 = vsub.s32 0, %v164
    %v166 = vsel %vm160, %v165, %v164
    %vm167 = vcmp.lt.s32.totalorder %v61, 0
    %v168 = vsub.s32 0, %v61
    %v169 = vsel %vm167, %v168, %v61
    %v170 = vshrl.u32 %v169, 3
    %v171 = vand.u32 %v169, 7
    %v172 = vsub.s32 0, %v171
    %v173 = vsel %vm167, %v172, %v171
    %vm174 = vcmp.ne.s32.totalorder %v68, 0
    %vm175 = vcmp.ne.s32.totalorder %v75, 0
    %vm176 = vcmp.ne.s32.totalorder %v82, 0
    %vm177 = vcmp.ne.s32.totalorder %v89, 0
    %vm178 = vcmp.ne.s32.totalorder %v96, 0
    %vm179 = vcmp.ne.s32.totalorder %v103, 0
    %vm180 = vcmp.ne.s32.totalorder %v110, 0
    %vm181 = vcmp.ne.s32.totalorder %v117, 0
    %vm182 = vcmp.ne.s32.totalorder %v124, 0
    %vm183 = vcmp.ne.s32.totalorder %v131, 0
    %vm184 = vcmp.ne.s32.totalorder %v138, 0
    %vm185 = vcmp.ne.s32.totalorder %v145, 0
    %vm186 = vcmp.ne.s32.totalorder %v152, 0
    %vm187 = vcmp.ne.s32.totalorder %v159, 0
    %vm188 = vcmp.ne.s32.totalorder %v166, 0
    %vm189 = vcmp.ne.s32.totalorder %v173, 0
    %vm190 = vcmp.lt.s32.totalorder %v68, 0
    %vm191 = vcmp.lt.s32.totalorder %v75, 0
    %vm192 = vcmp.lt.s32.totalorder %v82, 0
    %vm193 = vcmp.lt.s32.totalorder %v89, 0
    %vm194 = vcmp.lt.s32.totalorder %v96, 0
    %vm195 = vcmp.lt.s32.totalorder %v103, 0
    %vm196 = vcmp.lt.s32.totalorder %v110, 0
    %vm197 = vcmp.lt.s32.totalorder %v117, 0
    %vm198 = vcmp.lt.s32.totalorder %v124, 0
    %vm199 = vcmp.lt.s32.totalorder %v131, 0
    %vm200 = vcmp.lt.s32.totalorder %v138, 0
    %vm201 = vcmp.lt.s32.totalorder %v145, 0
    %vm202 = vcmp.lt.s32.totalorder %v152, 0
    %vm203 = vcmp.lt.s32.totalorder %v159, 0
    %vm204 = vcmp.lt.s32.totalorder %v166, 0
    %vm205 = vcmp.lt.s32.totalorder %v173, 0
    %vm206 = vmand %vm190, %vm174
    %vm207 = vmand %vm191, %vm175
    %vm208 = vmand %vm192, %vm176
    %vm209 = vmand %vm193, %vm177
    %vm210 = vmand %vm194, %vm178
    %vm211 = vmand %vm195, %vm179
    %vm212 = vmand %vm196, %vm180
    %vm213 = vmand %vm197, %vm181
    %vm214 = vmand %vm198, %vm182
    %vm215 = vmand %vm199, %vm183
    %vm216 = vmand %vm200, %vm184
    %vm217 = vmand %vm201, %vm185
    %vm218 = vmand %vm202, %vm186
    %vm219 = vmand %vm203, %vm187
    %vm220 = vmand %vm204, %vm188
    %vm221 = vmand %vm205, %vm189
    %v222 = vadd.s32 %v68, 8
    %v223 = vadd.s32 %v75, 8
    %v224 = vadd.s32 %v82, 8
    %v225 = vadd.s32 %v89, 8
    %v226 = vadd.s32 %v96, 8
    %v227 = vadd.s32 %v103, 8
    %v228 = vadd.s32 %v110, 8
    %v229 = vadd.s32 %v117, 8
    %v230 = vadd.s32 %v124, 8
    %v231 = vadd.s32 %v131, 8
    %v232 = vadd.s32 %v138, 8
    %v233 = vadd.s32 %v145, 8
    %v234 = vadd.s32 %v152, 8
    %v235 = vadd.s32 %v159, 8
    %v236 = vadd.s32 %v166, 8
    %v237 = vadd.s32 %v173, 8
    %v238 = vsel %vm206, %v222, %v68
    %v239 = vsel %vm207, %v223, %v75
    %v240 = vsel %vm208, %v224, %v82
    %v241 = vsel %vm209, %v225, %v89
    %v242 = vsel %vm210, %v226, %v96
    %v243 = vsel %vm211, %v227, %v103
    %v244 = vsel %vm212, %v228, %v110
    %v245 = vsel %vm213, %v229, %v117
    %v246 = vsel %vm214, %v230, %v124
    %v247 = vsel %vm215, %v231, %v131
    %v248 = vsel %vm216, %v232, %v138
    %v249 = vsel %vm217, %v233, %v145
    %v250 = vsel %vm218, %v234, %v152
    %v251 = vsel %vm219, %v235, %v159
    %v252 = vsel %vm220, %v236, %v166
    %v253 = vsel %vm221, %v237, %v173
    %vm254 = vcmp.lt.s32.totalorder %v46, 0
    %v255 = vsub.s32 0, %v46
    %v256 = vsel %vm254, %v255, %v46
    %v257 = vshrl.u32 %v256, 6
    %v258 = vand.u32 %v256, 63
    %v259 = vsub.s32 0, %v258
    %v260 = vsel %vm254, %v259, %v258
    %vm261 = vcmp.lt.s32.totalorder %v47, 0
    %v262 = vsub.s32 0, %v47
    %v263 = vsel %vm261, %v262, %v47
    %v264 = vshrl.u32 %v263, 6
    %v265 = vand.u32 %v263, 63
    %v266 = vsub.s32 0, %v265
    %v267 = vsel %vm261, %v266, %v265
    %vm268 = vcmp.lt.s32.totalorder %v48, 0
    %v269 = vsub.s32 0, %v48
    %v270 = vsel %vm268, %v269, %v48
    %v271 = vshrl.u32 %v270, 6
    %v272 = vand.u32 %v270, 63
    %v273 = vsub.s32 0, %v272
    %v274 = vsel %vm268, %v273, %v272
    %vm275 = vcmp.lt.s32.totalorder %v49, 0
    %v276 = vsub.s32 0, %v49
    %v277 = vsel %vm275, %v276, %v49
    %v278 = vshrl.u32 %v277, 6
    %v279 = vand.u32 %v277, 63
    %v280 = vsub.s32 0, %v279
    %v281 = vsel %vm275, %v280, %v279
    %vm282 = vcmp.lt.s32.totalorder %v50, 0
    %v283 = vsub.s32 0, %v50
    %v284 = vsel %vm282, %v283, %v50
    %v285 = vshrl.u32 %v284, 6
    %v286 = vand.u32 %v284, 63
    %v287 = vsub.s32 0, %v286
    %v288 = vsel %vm282, %v287, %v286
    %vm289 = vcmp.lt.s32.totalorder %v51, 0
    %v290 = vsub.s32 0, %v51
    %v291 = vsel %vm289, %v290, %v51
    %v292 = vshrl.u32 %v291, 6
    %v293 = vand.u32 %v291, 63
    %v294 = vsub.s32 0, %v293
    %v295 = vsel %vm289, %v294, %v293
    %vm296 = vcmp.lt.s32.totalorder %v52, 0
    %v297 = vsub.s32 0, %v52
    %v298 = vsel %vm296, %v297, %v52
    %v299 = vshrl.u32 %v298, 6
    %v300 = vand.u32 %v298, 63
    %v301 = vsub.s32 0, %v300
    %v302 = vsel %vm296, %v301, %v300
    %vm303 = vcmp.lt.s32.totalorder %v53, 0
    %v304 = vsub.s32 0, %v53
    %v305 = vsel %vm303, %v304, %v53
    %v306 = vshrl.u32 %v305, 6
    %v307 = vand.u32 %v305, 63
    %v308 = vsub.s32 0, %v307
    %v309 = vsel %vm303, %v308, %v307
    %vm310 = vcmp.lt.s32.totalorder %v54, 0
    %v311 = vsub.s32 0, %v54
    %v312 = vsel %vm310, %v311, %v54
    %v313 = vshrl.u32 %v312, 6
    %v314 = vand.u32 %v312, 63
    %v315 = vsub.s32 0, %v314
    %v316 = vsel %vm310, %v315, %v314
    %vm317 = vcmp.lt.s32.totalorder %v55, 0
    %v318 = vsub.s32 0, %v55
    %v319 = vsel %vm317, %v318, %v55
    %v320 = vshrl.u32 %v319, 6
    %v321 = vand.u32 %v319, 63
    %v322 = vsub.s32 0, %v321
    %v323 = vsel %vm317, %v322, %v321
    %vm324 = vcmp.lt.s32.totalorder %v56, 0
    %v325 = vsub.s32 0, %v56
    %v326 = vsel %vm324, %v325, %v56
    %v327 = vshrl.u32 %v326, 6
    %v328 = vand.u32 %v326, 63
    %v329 = vsub.s32 0, %v328
    %v330 = vsel %vm324, %v329, %v328
    %vm331 = vcmp.lt.s32.totalorder %v57, 0
    %v332 = vsub.s32 0, %v57
    %v333 = vsel %vm331, %v332, %v57
    %v334 = vshrl.u32 %v333, 6
    %v335 = vand.u32 %v333, 63
    %v336 = vsub.s32 0, %v335
    %v337 = vsel %vm331, %v336, %v335
    %vm338 = vcmp.lt.s32.totalorder %v58, 0
    %v339 = vsub.s32 0, %v58
    %v340 = vsel %vm338, %v339, %v58
    %v341 = vshrl.u32 %v340, 6
    %v342 = vand.u32 %v340, 63
    %v343 = vsub.s32 0, %v342
    %v344 = vsel %vm338, %v343, %v342
    %vm345 = vcmp.lt.s32.totalorder %v59, 0
    %v346 = vsub.s32 0, %v59
    %v347 = vsel %vm345, %v346, %v59
    %v348 = vshrl.u32 %v347, 6
    %v349 = vand.u32 %v347, 63
    %v350 = vsub.s32 0, %v349
    %v351 = vsel %vm345, %v350, %v349
    %vm352 = vcmp.lt.s32.totalorder %v60, 0
    %v353 = vsub.s32 0, %v60
    %v354 = vsel %vm352, %v353, %v60
    %v355 = vshrl.u32 %v354, 6
    %v356 = vand.u32 %v354, 63
    %v357 = vsub.s32 0, %v356
    %v358 = vsel %vm352, %v357, %v356
    %vm359 = vcmp.lt.s32.totalorder %v61, 0
    %v360 = vsub.s32 0, %v61
    %v361 = vsel %vm359, %v360, %v61
    %v362 = vshrl.u32 %v361, 6
    %v363 = vand.u32 %v361, 63
    %v364 = vsub.s32 0, %v363
    %v365 = vsel %vm359, %v364, %v363
    %vm366 = vcmp.ne.s32.totalorder %v260, 0
    %vm367 = vcmp.ne.s32.totalorder %v267, 0
    %vm368 = vcmp.ne.s32.totalorder %v274, 0
    %vm369 = vcmp.ne.s32.totalorder %v281, 0
    %vm370 = vcmp.ne.s32.totalorder %v288, 0
    %vm371 = vcmp.ne.s32.totalorder %v295, 0
    %vm372 = vcmp.ne.s32.totalorder %v302, 0
    %vm373 = vcmp.ne.s32.totalorder %v309, 0
    %vm374 = vcmp.ne.s32.totalorder %v316, 0
    %vm375 = vcmp.ne.s32.totalorder %v323, 0
    %vm376 = vcmp.ne.s32.totalorder %v330, 0
    %vm377 = vcmp.ne.s32.totalorder %v337, 0
    %vm378 = vcmp.ne.s32.totalorder %v344, 0
    %vm379 = vcmp.ne.s32.totalorder %v351, 0
    %vm380 = vcmp.ne.s32.totalorder %v358, 0
    %vm381 = vcmp.ne.s32.totalorder %v365, 0
    %vm382 = vcmp.lt.s32.totalorder %v260, 0
    %vm383 = vcmp.lt.s32.totalorder %v267, 0
    %vm384 = vcmp.lt.s32.totalorder %v274, 0
    %vm385 = vcmp.lt.s32.totalorder %v281, 0
    %vm386 = vcmp.lt.s32.totalorder %v288, 0
    %vm387 = vcmp.lt.s32.totalorder %v295, 0
    %vm388 = vcmp.lt.s32.totalorder %v302, 0
    %vm389 = vcmp.lt.s32.totalorder %v309, 0
    %vm390 = vcmp.lt.s32.totalorder %v316, 0
    %vm391 = vcmp.lt.s32.totalorder %v323, 0
    %vm392 = vcmp.lt.s32.totalorder %v330, 0
    %vm393 = vcmp.lt.s32.totalorder %v337, 0
    %vm394 = vcmp.lt.s32.totalorder %v344, 0
    %vm395 = vcmp.lt.s32.totalorder %v351, 0
    %vm396 = vcmp.lt.s32.totalorder %v358, 0
    %vm397 = vcmp.lt.s32.totalorder %v365, 0
    %vm398 = vmand %vm382, %vm366
    %vm399 = vmand %vm383, %vm367
    %vm400 = vmand %vm384, %vm368
    %vm401 = vmand %vm385, %vm369
    %vm402 = vmand %vm386, %vm370
    %vm403 = vmand %vm387, %vm371
    %vm404 = vmand %vm388, %vm372
    %vm405 = vmand %vm389, %vm373
    %vm406 = vmand %vm390, %vm374
    %vm407 = vmand %vm391, %vm375
    %vm408 = vmand %vm392, %vm376
    %vm409 = vmand %vm393, %vm377
    %vm410 = vmand %vm394, %vm378
    %vm411 = vmand %vm395, %vm379
    %vm412 = vmand %vm396, %vm380
    %vm413 = vmand %vm397, %vm381
    %v414 = vadd.s32 %v260, 64
    %v415 = vadd.s32 %v267, 64
    %v416 = vadd.s32 %v274, 64
    %v417 = vadd.s32 %v281, 64
    %v418 = vadd.s32 %v288, 64
    %v419 = vadd.s32 %v295, 64
    %v420 = vadd.s32 %v302, 64
    %v421 = vadd.s32 %v309, 64
    %v422 = vadd.s32 %v316, 64
    %v423 = vadd.s32 %v323, 64
    %v424 = vadd.s32 %v330, 64
    %v425 = vadd.s32 %v337, 64
    %v426 = vadd.s32 %v344, 64
    %v427 = vadd.s32 %v351, 64
    %v428 = vadd.s32 %v358, 64
    %v429 = vadd.s32 %v365, 64
    %v430 = vsel %vm398, %v414, %v260
    %v431 = vsel %vm399, %v415, %v267
    %v432 = vsel %vm400, %v416, %v274
    %v433 = vsel %vm401, %v417, %v281
    %v434 = vsel %vm402, %v418, %v288
    %v435 = vsel %vm403, %v419, %v295
    %v436 = vsel %vm404, %v420, %v302
    %v437 = vsel %vm405, %v421, %v309
    %v438 = vsel %vm406, %v422, %v316
    %v439 = vsel %vm407, %v423, %v323
    %v440 = vsel %vm408, %v424, %v330
    %v441 = vsel %vm409, %v425, %v337
    %v442 = vsel %vm410, %v426, %v344
    %v443 = vsel %vm411, %v427, %v351
    %v444 = vsel %vm412, %v428, %v358
    %v445 = vsel %vm413, %v429, %v365
    %vm446 = vcmp.gt.s32.totalorder %v238, 0
    %vm447 = vcmp.gt.s32.totalorder %v239, 0
    %vm448 = vcmp.gt.s32.totalorder %v240, 0
    %vm449 = vcmp.gt.s32.totalorder %v241, 0
    %vm450 = vcmp.gt.s32.totalorder %v242, 0
    %vm451 = vcmp.gt.s32.totalorder %v243, 0
    %vm452 = vcmp.gt.s32.totalorder %v244, 0
    %vm453 = vcmp.gt.s32.totalorder %v245, 0
    %vm454 = vcmp.gt.s32.totalorder %v246, 0
    %vm455 = vcmp.gt.s32.totalorder %v247, 0
    %vm456 = vcmp.gt.s32.totalorder %v248, 0
    %vm457 = vcmp.gt.s32.totalorder %v249, 0
    %vm458 = vcmp.gt.s32.totalorder %v250, 0
    %vm459 = vcmp.gt.s32.totalorder %v251, 0
    %vm460 = vcmp.gt.s32.totalorder %v252, 0
    %vm461 = vcmp.gt.s32.totalorder %v253, 0
    %v462 = vsel %vm446, 1, 0
    %v463 = vsel %vm447, 1, 0
    %v464 = vsel %vm448, 1, 0
    %v465 = vsel %vm449, 1, 0
    %v466 = vsel %vm450, 1, 0
    %v467 = vsel %vm451, 1, 0
    %v468 = vsel %vm452, 1, 0
    %v469 = vsel %vm453, 1, 0
    %v470 = vsel %vm454, 1, 0
    %v471 = vsel %vm455, 1, 0
    %v472 = vsel %vm456, 1, 0
    %v473 = vsel %vm457, 1, 0
    %v474 = vsel %vm458, 1, 0
    %v475 = vsel %vm459, 1, 0
    %v476 = vsel %vm460, 1, 0
    %v477 = vsel %vm461, 1, 0
    %vm478 = vcmp.eq.s32.totalorder %v462, 1
    %vm479 = vcmp.eq.s32.totalorder %v463, 1
    %vm480 = vcmp.eq.s32.totalorder %v464, 1
    %vm481 = vcmp.eq.s32.totalorder %v465, 1
    %vm482 = vcmp.eq.s32.totalorder %v466, 1
    %vm483 = vcmp.eq.s32.totalorder %v467, 1
    %vm484 = vcmp.eq.s32.totalorder %v468, 1
    %vm485 = vcmp.eq.s32.totalorder %v469, 1
    %vm486 = vcmp.eq.s32.totalorder %v470, 1
    %vm487 = vcmp.eq.s32.totalorder %v471, 1
    %vm488 = vcmp.eq.s32.totalorder %v472, 1
    %vm489 = vcmp.eq.s32.totalorder %v473, 1
    %vm490 = vcmp.eq.s32.totalorder %v474, 1
    %vm491 = vcmp.eq.s32.totalorder %v475, 1
    %vm492 = vcmp.eq.s32.totalorder %v476, 1
    %vm493 = vcmp.eq.s32.totalorder %v477, 1
    %vm494 = vcmp.lt.s32.totalorder %v238, 7
    %vm495 = vcmp.lt.s32.totalorder %v239, 7
    %vm496 = vcmp.lt.s32.totalorder %v240, 7
    %vm497 = vcmp.lt.s32.totalorder %v241, 7
    %vm498 = vcmp.lt.s32.totalorder %v242, 7
    %vm499 = vcmp.lt.s32.totalorder %v243, 7
    %vm500 = vcmp.lt.s32.totalorder %v244, 7
    %vm501 = vcmp.lt.s32.totalorder %v245, 7
    %vm502 = vcmp.lt.s32.totalorder %v246, 7
    %vm503 = vcmp.lt.s32.totalorder %v247, 7
    %vm504 = vcmp.lt.s32.totalorder %v248, 7
    %vm505 = vcmp.lt.s32.totalorder %v249, 7
    %vm506 = vcmp.lt.s32.totalorder %v250, 7
    %vm507 = vcmp.lt.s32.totalorder %v251, 7
    %vm508 = vcmp.lt.s32.totalorder %v252, 7
    %vm509 = vcmp.lt.s32.totalorder %v253, 7
    %v510 = vsel %vm494, 1, 0
    %v511 = vsel %vm495, 1, 0
    %v512 = vsel %vm496, 1, 0
    %v513 = vsel %vm497, 1, 0
    %v514 = vsel %vm498, 1, 0
    %v515 = vsel %vm499, 1, 0
    %v516 = vsel %vm500, 1, 0
    %v517 = vsel %vm501, 1, 0
    %v518 = vsel %vm502, 1, 0
    %v519 = vsel %vm503, 1, 0
    %v520 = vsel %vm504, 1, 0
    %v521 = vsel %vm505, 1, 0
    %v522 = vsel %vm506, 1, 0
    %v523 = vsel %vm507, 1, 0
    %v524 = vsel %vm508, 1, 0
    %v525 = vsel %vm509, 1, 0
    %vm526 = vcmp.eq.s32.totalorder %v510, 1
    %vm527 = vcmp.eq.s32.totalorder %v511, 1
    %vm528 = vcmp.eq.s32.totalorder %v512, 1
    %vm529 = vcmp.eq.s32.totalorder %v513, 1
    %vm530 = vcmp.eq.s32.totalorder %v514, 1
    %vm531 = vcmp.eq.s32.totalorder %v515, 1
    %vm532 = vcmp.eq.s32.totalorder %v516, 1
    %vm533 = vcmp.eq.s32.totalorder %v517, 1
    %vm534 = vcmp.eq.s32.totalorder %v518, 1
    %vm535 = vcmp.eq.s32.totalorder %v519, 1
    %vm536 = vcmp.eq.s32.totalorder %v520, 1
    %vm537 = vcmp.eq.s32.totalorder %v521, 1
    %vm538 = vcmp.eq.s32.totalorder %v522, 1
    %vm539 = vcmp.eq.s32.totalorder %v523, 1
    %vm540 = vcmp.eq.s32.totalorder %v524, 1
    %vm541 = vcmp.eq.s32.totalorder %v525, 1
    %vm542 = vcmp.ge.s32.totalorder %v430, 8
    %vm543 = vcmp.ge.s32.totalorder %v431, 8
    %vm544 = vcmp.ge.s32.totalorder %v432, 8
    %vm545 = vcmp.ge.s32.totalorder %v433, 8
    %vm546 = vcmp.ge.s32.totalorder %v434, 8
    %vm547 = vcmp.ge.s32.totalorder %v435, 8
    %vm548 = vcmp.ge.s32.totalorder %v436, 8
    %vm549 = vcmp.ge.s32.totalorder %v437, 8
    %vm550 = vcmp.ge.s32.totalorder %v438, 8
    %vm551 = vcmp.ge.s32.totalorder %v439, 8
    %vm552 = vcmp.ge.s32.totalorder %v440, 8
    %vm553 = vcmp.ge.s32.totalorder %v441, 8
    %vm554 = vcmp.ge.s32.totalorder %v442, 8
    %vm555 = vcmp.ge.s32.totalorder %v443, 8
    %vm556 = vcmp.ge.s32.totalorder %v444, 8
    %vm557 = vcmp.ge.s32.totalorder %v445, 8
    %v558 = vsel %vm542, 1, 0
    %v559 = vsel %vm543, 1, 0
    %v560 = vsel %vm544, 1, 0
    %v561 = vsel %vm545, 1, 0
    %v562 = vsel %vm546, 1, 0
    %v563 = vsel %vm547, 1, 0
    %v564 = vsel %vm548, 1, 0
    %v565 = vsel %vm549, 1, 0
    %v566 = vsel %vm550, 1, 0
    %v567 = vsel %vm551, 1, 0
    %v568 = vsel %vm552, 1, 0
    %v569 = vsel %vm553, 1, 0
    %v570 = vsel %vm554, 1, 0
    %v571 = vsel %vm555, 1, 0
    %v572 = vsel %vm556, 1, 0
    %v573 = vsel %vm557, 1, 0
    %vm574 = vcmp.eq.s32.totalorder %v558, 1
    %vm575 = vcmp.eq.s32.totalorder %v559, 1
    %vm576 = vcmp.eq.s32.totalorder %v560, 1
    %vm577 = vcmp.eq.s32.totalorder %v561, 1
    %vm578 = vcmp.eq.s32.totalorder %v562, 1
    %vm579 = vcmp.eq.s32.totalorder %v563, 1
    %vm580 = vcmp.eq.s32.totalorder %v564, 1
    %vm581 = vcmp.eq.s32.totalorder %v565, 1
    %vm582 = vcmp.eq.s32.totalorder %v566, 1
    %vm583 = vcmp.eq.s32.totalorder %v567, 1
    %vm584 = vcmp.eq.s32.totalorder %v568, 1
    %vm585 = vcmp.eq.s32.totalorder %v569, 1
    %vm586 = vcmp.eq.s32.totalorder %v570, 1
    %vm587 = vcmp.eq.s32.totalorder %v571, 1
    %vm588 = vcmp.eq.s32.totalorder %v572, 1
    %vm589 = vcmp.eq.s32.totalorder %v573, 1
    %vm590 = vcmp.lt.s32.totalorder %v430, 56
    %vm591 = vcmp.lt.s32.totalorder %v431, 56
    %vm592 = vcmp.lt.s32.totalorder %v432, 56
    %vm593 = vcmp.lt.s32.totalorder %v433, 56
    %vm594 = vcmp.lt.s32.totalorder %v434, 56
    %vm595 = vcmp.lt.s32.totalorder %v435, 56
    %vm596 = vcmp.lt.s32.totalorder %v436, 56
    %vm597 = vcmp.lt.s32.totalorder %v437, 56
    %vm598 = vcmp.lt.s32.totalorder %v438, 56
    %vm599 = vcmp.lt.s32.totalorder %v439, 56
    %vm600 = vcmp.lt.s32.totalorder %v440, 56
    %vm601 = vcmp.lt.s32.totalorder %v441, 56
    %vm602 = vcmp.lt.s32.totalorder %v442, 56
    %vm603 = vcmp.lt.s32.totalorder %v443, 56
    %vm604 = vcmp.lt.s32.totalorder %v444, 56
    %vm605 = vcmp.lt.s32.totalorder %v445, 56
    %v606 = vsel %vm590, 1, 0
    %v607 = vsel %vm591, 1, 0
    %v608 = vsel %vm592, 1, 0
    %v609 = vsel %vm593, 1, 0
    %v610 = vsel %vm594, 1, 0
    %v611 = vsel %vm595, 1, 0
    %v612 = vsel %vm596, 1, 0
    %v613 = vsel %vm597, 1, 0
    %v614 = vsel %vm598, 1, 0
    %v615 = vsel %vm599, 1, 0
    %v616 = vsel %vm600, 1, 0
    %v617 = vsel %vm601, 1, 0
    %v618 = vsel %vm602, 1, 0
    %v619 = vsel %vm603, 1, 0
    %v620 = vsel %vm604, 1, 0
    %v621 = vsel %vm605, 1, 0
    %vm622 = vcmp.eq.s32.totalorder %v606, 1
    %vm623 = vcmp.eq.s32.totalorder %v607, 1
    %vm624 = vcmp.eq.s32.totalorder %v608, 1
    %vm625 = vcmp.eq.s32.totalorder %v609, 1
    %vm626 = vcmp.eq.s32.totalorder %v610, 1
    %vm627 = vcmp.eq.s32.totalorder %v611, 1
    %vm628 = vcmp.eq.s32.totalorder %v612, 1
    %vm629 = vcmp.eq.s32.totalorder %v613, 1
    %vm630 = vcmp.eq.s32.totalorder %v614, 1
    %vm631 = vcmp.eq.s32.totalorder %v615, 1
    %vm632 = vcmp.eq.s32.totalorder %v616, 1
    %vm633 = vcmp.eq.s32.totalorder %v617, 1
    %vm634 = vcmp.eq.s32.totalorder %v618, 1
    %vm635 = vcmp.eq.s32.totalorder %v619, 1
    %vm636 = vcmp.eq.s32.totalorder %v620, 1
    %vm637 = vcmp.eq.s32.totalorder %v621, 1
    %v638 = vld [vmem:[%s0] sm:$0xf]
    %v639 = vld [vmem:[%s0 + $0x4] sm:$0xf]
    %v640 = vld [vmem:[%s0 + $0x8] sm:$0xf]
    %v641 = vld [vmem:[%s0 + $0xc] sm:$0xf]
    %v642 = vld [vmem:[%s0 + $0x10] sm:$0xf]
    %v643 = vld [vmem:[%s0 + $0x14] sm:$0xf]
    %v644 = vld [vmem:[%s0 + $0x18] sm:$0xf]
    %v645 = vld [vmem:[%s0 + $0x1c] sm:$0xf]
    %v646 = vld [vmem:[%s0 + $0x20] sm:$0xf]
    %v647 = vld [vmem:[%s0 + $0x24] sm:$0xf]
    %v648 = vld [vmem:[%s0 + $0x28] sm:$0xf]
    %v649 = vld [vmem:[%s0 + $0x2c] sm:$0xf]
    %v650 = vld [vmem:[%s0 + $0x30] sm:$0xf]
    %v651 = vld [vmem:[%s0 + $0x34] sm:$0xf]
    %v652 = vld [vmem:[%s0 + $0x38] sm:$0xf]
    %v653 = vld [vmem:[%s0 + $0x3c] sm:$0xf]
    %v654 = vld [vmem:[%s1] sm:$0xff]
    %v655 = vld [vmem:[%s1 + $0x8] sm:$0xff]
    %v656 = vld [vmem:[%s1 + $0x10] sm:$0xff]
    %v657 = vld [vmem:[%s1 + $0x18] sm:$0xff]
    %v658 = vld [vmem:[%s1 + $0x20] sm:$0xff]
    %v659 = vld [vmem:[%s1 + $0x28] sm:$0xff]
    %v660 = vld [vmem:[%s1 + $0x30] sm:$0xff]
    %v661 = vld [vmem:[%s1 + $0x38] sm:$0xff]
    %v678 = vunpack.c.l.b16 %v638
    %v679 = vunpack.c.l.b16 %v639
    %v680 = vunpack.c.l.b16 %v640
    %v681 = vunpack.c.l.b16 %v641
    %v682 = vunpack.c.l.b16 %v642
    %v683 = vunpack.c.l.b16 %v643
    %v684 = vunpack.c.l.b16 %v644
    %v685 = vunpack.c.l.b16 %v645
    %v686 = vunpack.c.l.b16 %v646
    %v687 = vunpack.c.l.b16 %v647
    %v688 = vunpack.c.l.b16 %v648
    %v689 = vunpack.c.l.b16 %v649
    %v690 = vunpack.c.l.b16 %v650
    %v691 = vunpack.c.l.b16 %v651
    %v692 = vunpack.c.l.b16 %v652
    %v693 = vunpack.c.l.b16 %v653
    %v694 = vpack.c.b16 %v679, %v678
    %v695 = vpack.c.b16 %v681, %v680
    %v696 = vpack.c.b16 %v683, %v682
    %v697 = vpack.c.b16 %v685, %v684
    %v698 = vpack.c.b16 %v687, %v686
    %v699 = vpack.c.b16 %v689, %v688
    %v700 = vpack.c.b16 %v691, %v690
    %v701 = vpack.c.b16 %v693, %v692
    %v710 = vunpack.c.l.b16 %v654
    %v711 = vunpack.c.h.b16 %v654
    %v712 = vunpack.c.l.b16 %v655
    %v713 = vunpack.c.h.b16 %v655
    %v714 = vunpack.c.l.b16 %v656
    %v715 = vunpack.c.h.b16 %v656
    %v716 = vunpack.c.l.b16 %v657
    %v717 = vunpack.c.h.b16 %v657
    %v718 = vunpack.c.l.b16 %v658
    %v719 = vunpack.c.h.b16 %v658
    %v720 = vunpack.c.l.b16 %v659
    %v721 = vunpack.c.h.b16 %v659
    %v722 = vunpack.c.l.b16 %v660
    %v723 = vunpack.c.h.b16 %v660
    %v724 = vunpack.c.l.b16 %v661
    %v725 = vunpack.c.h.b16 %v661
    %v726 = vpack.c.b16 %v712, %v710
    %v727 = vpack.c.b16 %v713, %v711
    %v728 = vpack.c.b16 %v716, %v714
    %v729 = vpack.c.b16 %v717, %v715
    %v730 = vpack.c.b16 %v720, %v718
    %v731 = vpack.c.b16 %v721, %v719
    %v732 = vpack.c.b16 %v724, %v722
    %v733 = vpack.c.b16 %v725, %v723
    %vm742 = vcmask 523264
    %v744 = vsel %vm742, %v694, 0
    %v747 = vsel %vm742, %v695, 0
    %v750 = vsel %vm742, %v696, 0
    %v753 = vsel %vm742, %v697, 0
    %v756 = vsel %vm742, %v698, 0
    %v759 = vsel %vm742, %v699, 0
    %v762 = vsel %vm742, %v700, 0
    %v765 = vsel %vm742, %v701, 0
    %767 = vmatprep.subr.bf16.mxu0 %v727
    %768 = vmatpush1.bf16.msra.mxu0 %v726
    %769 = vmatprep.subr.bf16.mxu0 %v729
    %770 = vmatpush1.bf16.msra.mxu0 %v728
    %771 = vmatprep.subr.bf16.mxu0 %v731
    %772 = vmatpush1.bf16.msra.mxu0 %v730
    %773 = vmatprep.subr.bf16.mxu0 %v733
    %774 = vmatpush1.bf16.msra.mxu0 %v732
    %775 = vmatprep.subr.bf16.mxu0 0
    %776 = vmatpush1.bf16.msra.mxu0 0
    %777 = vmatprep.subr.bf16.mxu0 0
    %778 = vmatpush1.bf16.msra.mxu0 0
    %779 = vmatprep.subr.bf16.mxu0 0
    %780 = vmatpush1.bf16.msra.mxu0 0
    %781 = vmatprep.subr.bf16.mxu0 0
    %782 = vmatpush1.bf16.msra.mxu0 0
    %783 = vmatprep.subr.bf16.mxu0 0
    %784 = vmatpush1.bf16.msra.mxu0 0
    %785 = vmatprep.subr.bf16.mxu0 0
    %786 = vmatpush1.bf16.msra.mxu0 0
    %787 = vmatprep.subr.bf16.mxu0 0
    %788 = vmatpush1.bf16.msra.mxu0 0
    %789 = vmatprep.subr.bf16.mxu0 0
    %790 = vmatpush1.bf16.msra.mxu0 0
    %791 = vmatprep.subr.bf16.mxu0 0
    %792 = vmatpush1.bf16.msra.mxu0 0
    %793 = vmatprep.subr.bf16.mxu0 0
    %794 = vmatpush1.bf16.msra.mxu0 0
    %795 = vmatprep.subr.bf16.mxu0 0
    %796 = vmatpush1.bf16.msra.mxu0 0
    %797 = vmatprep.subr.bf16.mxu0 0
    %798 = vmatpush1.bf16.msra.mxu0 0
    %799 = vmatprep.mubr.bf16.mxu0 0
    %800 = vmatmul.mubr.bf16.gmra.mrb[0].mxu0 %v744
    %v801 = vpop.f32.mrb[0].mxu0
    %v802 = vadd.f32 0.0, %v801
    %v803 = vpop.f32.mrb[0].mxu0
    %v804 = vadd.f32 0.0, %v803
    %v805 = vpop.f32.mrb[0].mxu0
    %v806 = vadd.f32 0.0, %v805
    %v807 = vpop.f32.mrb[0].mxu0
    %v808 = vadd.f32 0.0, %v807
    %809 = vmatprep.mubr.bf16.mxu0 0
    %810 = vmatmul.mubr.bf16.gmra.mrb[0].mxu0 %v747
    %v811 = vpop.f32.mrb[0].mxu0
    %v812 = vadd.f32 0.0, %v811
    %v813 = vpop.f32.mrb[0].mxu0
    %v814 = vadd.f32 0.0, %v813
    %v815 = vpop.f32.mrb[0].mxu0
    %v816 = vadd.f32 0.0, %v815
    %v817 = vpop.f32.mrb[0].mxu0
    %v818 = vadd.f32 0.0, %v817
    %819 = vmatprep.mubr.bf16.mxu0 0
    %820 = vmatmul.mubr.bf16.gmra.mrb[0].mxu0 %v750
    %v821 = vpop.f32.mrb[0].mxu0
    %v822 = vadd.f32 0.0, %v821
    %v823 = vpop.f32.mrb[0].mxu0
    %v824 = vadd.f32 0.0, %v823
    %v825 = vpop.f32.mrb[0].mxu0
    %v826 = vadd.f32 0.0, %v825
    %v827 = vpop.f32.mrb[0].mxu0
    %v828 = vadd.f32 0.0, %v827
    %829 = vmatprep.mubr.bf16.mxu0 0
    %830 = vmatmul.mubr.bf16.gmra.mrb[0].mxu0 %v753
    %v831 = vpop.f32.mrb[0].mxu0
    %v832 = vadd.f32 0.0, %v831
    %v833 = vpop.f32.mrb[0].mxu0
    %v834 = vadd.f32 0.0, %v833
    %v835 = vpop.f32.mrb[0].mxu0
    %v836 = vadd.f32 0.0, %v835
    %v837 = vpop.f32.mrb[0].mxu0
    %v838 = vadd.f32 0.0, %v837
    %839 = vmatprep.mubr.bf16.mxu0 0
    %840 = vmatmul.mubr.bf16.gmra.mrb[0].mxu0 %v756
    %v841 = vpop.f32.mrb[0].mxu0
    %v842 = vadd.f32 0.0, %v841
    %v843 = vpop.f32.mrb[0].mxu0
    %v844 = vadd.f32 0.0, %v843
    %v845 = vpop.f32.mrb[0].mxu0
    %v846 = vadd.f32 0.0, %v845
    %v847 = vpop.f32.mrb[0].mxu0
    %v848 = vadd.f32 0.0, %v847
    %849 = vmatprep.mubr.bf16.mxu0 0
    %850 = vmatmul.mubr.bf16.gmra.mrb[0].mxu0 %v759
    %v851 = vpop.f32.mrb[0].mxu0
    %v852 = vadd.f32 0.0, %v851
    %v853 = vpop.f32.mrb[0].mxu0
    %v854 = vadd.f32 0.0, %v853
    %v855 = vpop.f32.mrb[0].mxu0
    %v856 = vadd.f32 0.0, %v855
    %v857 = vpop.f32.mrb[0].mxu0
    %v858 = vadd.f32 0.0, %v857
    %859 = vmatprep.mubr.bf16.mxu0 0
    %860 = vmatmul.mubr.bf16.gmra.mrb[0].mxu0 %v762
    %v861 = vpop.f32.mrb[0].mxu0
    %v862 = vadd.f32 0.0, %v861
    %v863 = vpop.f32.mrb[0].mxu0
    %v864 = vadd.f32 0.0, %v863
    %v865 = vpop.f32.mrb[0].mxu0
    %v866 = vadd.f32 0.0, %v865
    %v867 = vpop.f32.mrb[0].mxu0
    %v868 = vadd.f32 0.0, %v867
    %869 = vmatprep.mubr.bf16.mxu0 0
    %870 = vmatmul.mubr.bf16.gmra.mrb[0].mxu0 %v765
    %v871 = vpop.f32.mrb[0].mxu0
    %v872 = vadd.f32 0.0, %v871
    %v873 = vpop.f32.mrb[0].mxu0
    %v874 = vadd.f32 0.0, %v873
    %v875 = vpop.f32.mrb[0].mxu0
    %v876 = vadd.f32 0.0, %v875
    %v877 = vpop.f32.mrb[0].mxu0
    %v878 = vadd.f32 0.0, %v877
    %879 = vdwg.mxu0
    %880 = vst [vmem:[#allocation3] sm:$0xff] %v802
    %881 = vst [vmem:[#allocation3 + $0x8] sm:$0xff] %v804
    %882 = vst [vmem:[#allocation3 + $0x10] sm:$0xff] %v806
    %883 = vst [vmem:[#allocation3 + $0x18] sm:$0xff] %v808
    %884 = vst [vmem:[#allocation3 + $0x20] sm:$0xff] %v812
    %885 = vst [vmem:[#allocation3 + $0x28] sm:$0xff] %v814
    %886 = vst [vmem:[#allocation3 + $0x30] sm:$0xff] %v816
    %887 = vst [vmem:[#allocation3 + $0x38] sm:$0xff] %v818
    %888 = vst [vmem:[#allocation3 + $0x40] sm:$0xff] %v822
    %889 = vst [vmem:[#allocation3 + $0x48] sm:$0xff] %v824
    %890 = vst [vmem:[#allocation3 + $0x50] sm:$0xff] %v826
    %891 = vst [vmem:[#allocation3 + $0x58] sm:$0xff] %v828
    %892 = vst [vmem:[#allocation3 + $0x60] sm:$0xff] %v832
    %893 = vst [vmem:[#allocation3 + $0x68] sm:$0xff] %v834
    %894 = vst [vmem:[#allocation3 + $0x70] sm:$0xff] %v836
    %895 = vst [vmem:[#allocation3 + $0x78] sm:$0xff] %v838
    %896 = vst [vmem:[#allocation3 + $0x80] sm:$0xff] %v842
    %897 = vst [vmem:[#allocation3 + $0x88] sm:$0xff] %v844
    %898 = vst [vmem:[#allocation3 + $0x90] sm:$0xff] %v846
    %899 = vst [vmem:[#allocation3 + $0x98] sm:$0xff] %v848
    %900 = vst [vmem:[#allocation3 + $0xa0] sm:$0xff] %v852
    %901 = vst [vmem:[#allocation3 + $0xa8] sm:$0xff] %v854
    %902 = vst [vmem:[#allocation3 + $0xb0] sm:$0xff] %v856
    %903 = vst [vmem:[#allocation3 + $0xb8] sm:$0xff] %v858
    %904 = vst [vmem:[#allocation3 + $0xc0] sm:$0xff] %v862
    %905 = vst [vmem:[#allocation3 + $0xc8] sm:$0xff] %v864
    %906 = vst [vmem:[#allocation3 + $0xd0] sm:$0xff] %v866
    %907 = vst [vmem:[#allocation3 + $0xd8] sm:$0xff] %v868
    %908 = vst [vmem:[#allocation3 + $0xe0] sm:$0xff] %v872
    %909 = vst [vmem:[#allocation3 + $0xe8] sm:$0xff] %v874
    %910 = vst [vmem:[#allocation3 + $0xf0] sm:$0xff] %v876
    %911 = vst [vmem:[#allocation3 + $0xf8] sm:$0xff] %v878
    %v912 = vld [vmem:[%s2] sm:$0xf]
    %v913 = vld [vmem:[%s2 + $0x4] sm:$0xf]
    %v914 = vld [vmem:[%s2 + $0x8] sm:$0xf]
    %v915 = vld [vmem:[%s2 + $0xc] sm:$0xf]
    %v916 = vld [vmem:[%s2 + $0x10] sm:$0xf]
    %v917 = vld [vmem:[%s2 + $0x14] sm:$0xf]
    %v918 = vld [vmem:[%s2 + $0x18] sm:$0xf]
    %v919 = vld [vmem:[%s2 + $0x1c] sm:$0xf]
    %v928 = vunpack.c.l.b16 %v912
    %v929 = vunpack.c.l.b16 %v913
    %v930 = vunpack.c.l.b16 %v914
    %v931 = vunpack.c.l.b16 %v915
    %v932 = vunpack.c.l.b16 %v916
    %v933 = vunpack.c.l.b16 %v917
    %v934 = vunpack.c.l.b16 %v918
    %v935 = vunpack.c.l.b16 %v919
    %v936 = vpack.c.b16 %v929, %v928
    %v937 = vpack.c.b16 %v931, %v930
    %v938 = vpack.c.b16 %v933, %v932
    %v939 = vpack.c.b16 %v935, %v934
    %944 = vmatprep.subr.bf16.mxu0 0
    %945 = vmatpush1.bf16.msra.mxu0 %v936
    %946 = vmatprep.subr.bf16.mxu0 0
    %947 = vmatpush1.bf16.msra.mxu0 %v937
    %948 = vmatprep.subr.bf16.mxu0 0
    %949 = vmatpush1.bf16.msra.mxu0 %v938
    %950 = vmatprep.subr.bf16.mxu0 0
    %951 = vmatpush1.bf16.msra.mxu0 %v939
    %952 = vmatprep.subr.bf16.mxu0 0
    %953 = vmatpush1.bf16.msra.mxu0 0
    %954 = vmatprep.subr.bf16.mxu0 0
    %955 = vmatpush1.bf16.msra.mxu0 0
    %956 = vmatprep.subr.bf16.mxu0 0
    %957 = vmatpush1.bf16.msra.mxu0 0
    %958 = vmatprep.subr.bf16.mxu0 0
    %959 = vmatpush1.bf16.msra.mxu0 0
    %960 = vmatprep.subr.bf16.mxu0 0
    %961 = vmatpush1.bf16.msra.mxu0 0
    %962 = vmatprep.subr.bf16.mxu0 0
    %963 = vmatpush1.bf16.msra.mxu0 0
    %964 = vmatprep.subr.bf16.mxu0 0
    %965 = vmatpush1.bf16.msra.mxu0 0
    %966 = vmatprep.subr.bf16.mxu0 0
    %967 = vmatpush1.bf16.msra.mxu0 0
    %968 = vmatprep.subr.bf16.mxu0 0
    %969 = vmatpush1.bf16.msra.mxu0 0
    %970 = vmatprep.subr.bf16.mxu0 0
    %971 = vmatpush1.bf16.msra.mxu0 0
    %972 = vmatprep.subr.bf16.mxu0 0
    %973 = vmatpush1.bf16.msra.mxu0 0
    %974 = vmatprep.subr.bf16.mxu0 0
    %975 = vmatpush1.bf16.msra.mxu0 0
    %976 = vmatprep.mubr.bf16.mxu0 0
    %977 = vmatmul.mubr.bf16.gmra.mrb[0].mxu0 %v744
    %v978 = vpop.f32.mrb[0].mxu0
    %v979 = vadd.f32 0.0, %v978
    %v980 = vpop.f32.mrb[0].mxu0
    %v981 = vpop.f32.mrb[0].mxu0
    %v982 = vadd.f32 0.0, %v981
    %v983 = vpop.f32.mrb[0].mxu0
    %984 = vmatprep.mubr.bf16.mxu0 0
    %985 = vmatmul.mubr.bf16.gmra.mrb[0].mxu0 %v747
    %v986 = vpop.f32.mrb[0].mxu0
    %v987 = vadd.f32 0.0, %v986
    %v988 = vpop.f32.mrb[0].mxu0
    %v989 = vpop.f32.mrb[0].mxu0
    %v990 = vadd.f32 0.0, %v989
    %v991 = vpop.f32.mrb[0].mxu0
    %992 = vmatprep.mubr.bf16.mxu0 0
    %993 = vmatmul.mubr.bf16.gmra.mrb[0].mxu0 %v750
    %v994 = vpop.f32.mrb[0].mxu0
    %v995 = vadd.f32 0.0, %v994
    %v996 = vpop.f32.mrb[0].mxu0
    %v997 = vpop.f32.mrb[0].mxu0
    %v998 = vadd.f32 0.0, %v997
    %v999 = vpop.f32.mrb[0].mxu0
    %1000 = vmatprep.mubr.bf16.mxu0 0
    %1001 = vmatmul.mubr.bf16.gmra.mrb[0].mxu0 %v753
    %v1002 = vpop.f32.mrb[0].mxu0
    %v1003 = vadd.f32 0.0, %v1002
    %v1004 = vpop.f32.mrb[0].mxu0
    %v1005 = vpop.f32.mrb[0].mxu0
    %v1006 = vadd.f32 0.0, %v1005
    %v1007 = vpop.f32.mrb[0].mxu0
    %1008 = vmatprep.mubr.bf16.mxu0 0
    %1009 = vmatmul.mubr.bf16.gmra.mrb[0].mxu0 %v756
    %v1010 = vpop.f32.mrb[0].mxu0
    %v1011 = vadd.f32 0.0, %v1010
    %v1012 = vpop.f32.mrb[0].mxu0
    %v1013 = vpop.f32.mrb[0].mxu0
    %v1014 = vadd.f32 0.0, %v1013
    %v1015 = vpop.f32.mrb[0].mxu0
    %1016 = vmatprep.mubr.bf16.mxu0 0
    %1017 = vmatmul.mubr.bf16.gmra.mrb[0].mxu0 %v759
    %v1018 = vpop.f32.mrb[0].mxu0
    %v1019 = vadd.f32 0.0, %v1018
    %v1020 = vpop.f32.mrb[0].mxu0
    %v1021 = vpop.f32.mrb[0].mxu0
    %v1022 = vadd.f32 0.0, %v1021
    %v1023 = vpop.f32.mrb[0].mxu0
    %1024 = vmatprep.mubr.bf16.mxu0 0
    %1025 = vmatmul.mubr.bf16.gmra.mrb[0].mxu0 %v762
    %v1026 = vpop.f32.mrb[0].mxu0
    %v1027 = vadd.f32 0.0, %v1026
    %v1028 = vpop.f32.mrb[0].mxu0
    %v1029 = vpop.f32.mrb[0].mxu0
    %v1030 = vadd.f32 0.0, %v1029
    %v1031 = vpop.f32.mrb[0].mxu0
    %1032 = vmatprep.mubr.bf16.mxu0 0
    %1033 = vmatmul.mubr.bf16.gmra.mrb[0].mxu0 %v765
    %v1034 = vpop.f32.mrb[0].mxu0
    %v1035 = vadd.f32 0.0, %v1034
    %v1036 = vpop.f32.mrb[0].mxu0
    %v1037 = vpop.f32.mrb[0].mxu0
    %v1038 = vadd.f32 0.0, %v1037
    %v1039 = vpop.f32.mrb[0].mxu0
    %1040 = vdwg.mxu0
    %v1041 = vmax.f32 %v979, 0.0
    %v1042 = vmax.f32 %v982, 0.0
    %v1043 = vmax.f32 %v987, 0.0
    %v1044 = vmax.f32 %v990, 0.0
    %v1045 = vmax.f32 %v995, 0.0
    %v1046 = vmax.f32 %v998, 0.0
    %v1047 = vmax.f32 %v1003, 0.0
    %v1048 = vmax.f32 %v1006, 0.0
    %v1049 = vmax.f32 %v1011, 0.0
    %v1050 = vmax.f32 %v1014, 0.0
    %v1051 = vmax.f32 %v1019, 0.0
    %v1052 = vmax.f32 %v1022, 0.0
    %v1053 = vmax.f32 %v1027, 0.0
    %v1054 = vmax.f32 %v1030, 0.0
    %v1055 = vmax.f32 %v1035, 0.0
    %v1056 = vmax.f32 %v1038, 0.0
    %v1057 = vpack.c.bf16 %v1042, %v1041
    %v1058 = vpack.c.bf16 %v1044, %v1043
    %v1059 = vpack.c.bf16 %v1046, %v1045
    %v1060 = vpack.c.bf16 %v1048, %v1047
    %v1061 = vpack.c.bf16 %v1050, %v1049
    %v1062 = vpack.c.bf16 %v1052, %v1051
    %v1063 = vpack.c.bf16 %v1054, %v1053
    %v1064 = vpack.c.bf16 %v1056, %v1055
    %1065 = vst.msk [vmem:[#allocation2 + $0x8] sm:$0xff] %vm742, %v1057
    %1066 = vst.msk [vmem:[#allocation2 + $0x10] sm:$0xff] %vm742, %v1058
    %1067 = vst.msk [vmem:[#allocation2 + $0x18] sm:$0xff] %vm742, %v1059
    %1068 = vst.msk [vmem:[#allocation2 + $0x20] sm:$0xff] %vm742, %v1060
    %1069 = vst.msk [vmem:[#allocation2 + $0x28] sm:$0xff] %vm742, %v1061
    %1070 = vst.msk [vmem:[#allocation2 + $0x30] sm:$0xff] %vm742, %v1062
    %1071 = vst.msk [vmem:[#allocation2 + $0x38] sm:$0xff] %vm742, %v1063
    %1072 = vst.msk [vmem:[#allocation2 + $0x40] sm:$0xff] %vm742, %v1064
    %v1073 = vld [vmem:[#allocation2] sm:$0xf8]
    %v1074 = vld [vmem:[#allocation2 + $0x8] sm:$0xff]
    %v1075 = vld [vmem:[#allocation2 + $0x10] sm:$0xff]
    %v1076 = vld [vmem:[#allocation2 + $0x18] sm:$0xff]
    %v1077 = vld [vmem:[#allocation2 + $0x20] sm:$0xff]
    %v1078 = vld [vmem:[#allocation2 + $0x28] sm:$0xff]
    %v1079 = vld [vmem:[#allocation2 + $0x30] sm:$0xff]
    %v1080 = vld [vmem:[#allocation2 + $0x38] sm:$0xff]
    %v1081 = vld [vmem:[#allocation2 + $0x40] sm:$0xf]
    %vm1082 = vmpackc.low %vm478, %vm478
    %vm1083 = vmpackc.low %vm479, %vm479
    %vm1084 = vmpackc.low %vm480, %vm480
    %vm1085 = vmpackc.low %vm481, %vm481
    %vm1086 = vmpackc.low %vm482, %vm482
    %vm1087 = vmpackc.low %vm483, %vm483
    %vm1088 = vmpackc.low %vm484, %vm484
    %vm1089 = vmpackc.low %vm485, %vm485
    %vm1090 = vmpackc.low %vm486, %vm486
    %vm1091 = vmpackc.low %vm487, %vm487
    %vm1092 = vmpackc.low %vm488, %vm488
    %vm1093 = vmpackc.low %vm489, %vm489
    %vm1094 = vmpackc.low %vm490, %vm490
    %vm1095 = vmpackc.low %vm491, %vm491
    %vm1096 = vmpackc.low %vm492, %vm492
    %vm1097 = vmpackc.low %vm493, %vm493
    %v1098 = vsel %vm1082, 65537, 0
    %v1099 = vsel %vm1083, 65537, 0
    %v1100 = vsel %vm1084, 65537, 0
    %v1101 = vsel %vm1085, 65537, 0
    %v1102 = vsel %vm1086, 65537, 0
    %v1103 = vsel %vm1087, 65537, 0
    %v1104 = vsel %vm1088, 65537, 0
    %v1105 = vsel %vm1089, 65537, 0
    %v1106 = vsel %vm1090, 65537, 0
    %v1107 = vsel %vm1091, 65537, 0
    %v1108 = vsel %vm1092, 65537, 0
    %v1109 = vsel %vm1093, 65537, 0
    %v1110 = vsel %vm1094, 65537, 0
    %v1111 = vsel %vm1095, 65537, 0
    %v1112 = vsel %vm1096, 65537, 0
    %v1113 = vsel %vm1097, 65537, 0
    %v1114 = vunpack.c.l.b16 %v1098
    %v1115 = vunpack.c.l.b16 %v1099
    %v1116 = vunpack.c.l.b16 %v1100
    %v1117 = vunpack.c.l.b16 %v1101
    %v1118 = vunpack.c.l.b16 %v1102
    %v1119 = vunpack.c.l.b16 %v1103
    %v1120 = vunpack.c.l.b16 %v1104
    %v1121 = vunpack.c.l.b16 %v1105
    %v1122 = vunpack.c.l.b16 %v1106
    %v1123 = vunpack.c.l.b16 %v1107
    %v1124 = vunpack.c.l.b16 %v1108
    %v1125 = vunpack.c.l.b16 %v1109
    %v1126 = vunpack.c.l.b16 %v1110
    %v1127 = vunpack.c.l.b16 %v1111
    %v1128 = vunpack.c.l.b16 %v1112
    %v1129 = vunpack.c.l.b16 %v1113
    %v1130 = vpack.c.b16 %v1115, %v1114
    %v1131 = vpack.c.b16 %v1117, %v1116
    %v1132 = vpack.c.b16 %v1119, %v1118
    %v1133 = vpack.c.b16 %v1121, %v1120
    %v1134 = vpack.c.b16 %v1123, %v1122
    %v1135 = vpack.c.b16 %v1125, %v1124
    %v1136 = vpack.c.b16 %v1127, %v1126
    %v1137 = vpack.c.b16 %v1129, %v1128
    %vm1138 = vsmask.f32 3328
    %v1140 = vshrl.u32 %v1130, 16
    %v1142 = vrot.slane %v1140, 4
    %v1143 = vshll.u32 %v1130, 16
    %v1145 = vrot.slane %v1143, 5
    %v1146 = vor.u32 %v1142, %v1145
    %v1148 = vshrl.u32 %v1131, 16
    %v1150 = vrot.slane %v1148, 4
    %v1151 = vshll.u32 %v1131, 16
    %v1153 = vrot.slane %v1151, 5
    %v1154 = vor.u32 %v1150, %v1153
    %v1155 = vsel %vm1138, %v1146, %v1154
    %v1157 = vshrl.u32 %v1132, 16
    %v1159 = vrot.slane %v1157, 4
    %v1160 = vshll.u32 %v1132, 16
    %v1162 = vrot.slane %v1160, 5
    %v1163 = vor.u32 %v1159, %v1162
    %v1164 = vsel %vm1138, %v1154, %v1163
    %v1166 = vshrl.u32 %v1133, 16
    %v1168 = vrot.slane %v1166, 4
    %v1169 = vshll.u32 %v1133, 16
    %v1171 = vrot.slane %v1169, 5
    %v1172 = vor.u32 %v1168, %v1171
    %v1173 = vsel %vm1138, %v1163, %v1172
    %v1175 = vshrl.u32 %v1134, 16
    %v1177 = vrot.slane %v1175, 4
    %v1178 = vshll.u32 %v1134, 16
    %v1180 = vrot.slane %v1178, 5
    %v1181 = vor.u32 %v1177, %v1180
    %v1182 = vsel %vm1138, %v1172, %v1181
    %v1184 = vshrl.u32 %v1135, 16
    %v1186 = vrot.slane %v1184, 4
    %v1187 = vshll.u32 %v1135, 16
    %v1189 = vrot.slane %v1187, 5
    %v1190 = vor.u32 %v1186, %v1189
    %v1191 = vsel %vm1138, %v1181, %v1190
    %v1193 = vshrl.u32 %v1136, 16
    %v1195 = vrot.slane %v1193, 4
    %v1196 = vshll.u32 %v1136, 16
    %v1198 = vrot.slane %v1196, 5
    %v1199 = vor.u32 %v1195, %v1198
    %v1200 = vsel %vm1138, %v1190, %v1199
    %v1202 = vshrl.u32 %v1137, 16
    %v1204 = vrot.slane %v1202, 4
    %v1205 = vshll.u32 %v1137, 16
    %v1207 = vrot.slane %v1205, 5
    %v1208 = vor.u32 %v1204, %v1207
    %v1209 = vsel %vm1138, %v1199, %v1208
    %vm1210 = vcmp.ne.s16.totalorder %v1146, 0
    %vm1211 = vcmp.ne.s16.totalorder %v1155, 0
    %vm1212 = vcmp.ne.s16.totalorder %v1164, 0
    %vm1213 = vcmp.ne.s16.totalorder %v1173, 0
    %vm1214 = vcmp.ne.s16.totalorder %v1182, 0
    %vm1215 = vcmp.ne.s16.totalorder %v1191, 0
    %vm1216 = vcmp.ne.s16.totalorder %v1200, 0
    %vm1217 = vcmp.ne.s16.totalorder %v1209, 0
    %vm1218 = vcmp.ne.s16.totalorder %v1208, 0
    %v1219 = vsel %vm1210, %v1073, 0
    %v1220 = vsel %vm1211, %v1074, 0
    %v1221 = vsel %vm1212, %v1075, 0
    %v1222 = vsel %vm1213, %v1076, 0
    %v1223 = vsel %vm1214, %v1077, 0
    %v1224 = vsel %vm1215, %v1078, 0
    %v1225 = vsel %vm1216, %v1079, 0
    %v1226 = vsel %vm1217, %v1080, 0
    %v1227 = vsel %vm1218, %v1081, 0
    %v1228 = vld [vmem:[#allocation2] sm:$0xf0]
    %v1229 = vld [vmem:[#allocation2 + $0x40] sm:$0x1f]
    %vm1230 = vmpackc.low %vm526, %vm526
    %vm1231 = vmpackc.low %vm527, %vm527
    %vm1232 = vmpackc.low %vm528, %vm528
    %vm1233 = vmpackc.low %vm529, %vm529
    %vm1234 = vmpackc.low %vm530, %vm530
    %vm1235 = vmpackc.low %vm531, %vm531
    %vm1236 = vmpackc.low %vm532, %vm532
    %vm1237 = vmpackc.low %vm533, %vm533
    %vm1238 = vmpackc.low %vm534, %vm534
    %vm1239 = vmpackc.low %vm535, %vm535
    %vm1240 = vmpackc.low %vm536, %vm536
    %vm1241 = vmpackc.low %vm537, %vm537
    %vm1242 = vmpackc.low %vm538, %vm538
    %vm1243 = vmpackc.low %vm539, %vm539
    %vm1244 = vmpackc.low %vm540, %vm540
    %vm1245 = vmpackc.low %vm541, %vm541
    %v1246 = vsel %vm1230, 65537, 0
    %v1247 = vsel %vm1231, 65537, 0
    %v1248 = vsel %vm1232, 65537, 0
    %v1249 = vsel %vm1233, 65537, 0
    %v1250 = vsel %vm1234, 65537, 0
    %v1251 = vsel %vm1235, 65537, 0
    %v1252 = vsel %vm1236, 65537, 0
    %v1253 = vsel %vm1237, 65537, 0
    %v1254 = vsel %vm1238, 65537, 0
    %v1255 = vsel %vm1239, 65537, 0
    %v1256 = vsel %vm1240, 65537, 0
    %v1257 = vsel %vm1241, 65537, 0
    %v1258 = vsel %vm1242, 65537, 0
    %v1259 = vsel %vm1243, 65537, 0
    %v1260 = vsel %vm1244, 65537, 0
    %v1261 = vsel %vm1245, 65537, 0
    %v1262 = vunpack.c.l.b16 %v1246
    %v1263 = vunpack.c.l.b16 %v1247
    %v1264 = vunpack.c.l.b16 %v1248
    %v1265 = vunpack.c.l.b16 %v1249
    %v1266 = vunpack.c.l.b16 %v1250
    %v1267 = vunpack.c.l.b16 %v1251
    %v1268 = vunpack.c.l.b16 %v1252
    %v1269 = vunpack.c.l.b16 %v1253
    %v1270 = vunpack.c.l.b16 %v1254
    %v1271 = vunpack.c.l.b16 %v1255
    %v1272 = vunpack.c.l.b16 %v1256
    %v1273 = vunpack.c.l.b16 %v1257
    %v1274 = vunpack.c.l.b16 %v1258
    %v1275 = vunpack.c.l.b16 %v1259
    %v1276 = vunpack.c.l.b16 %v1260
    %v1277 = vunpack.c.l.b16 %v1261
    %v1278 = vpack.c.b16 %v1263, %v1262
    %v1279 = vpack.c.b16 %v1265, %v1264
    %v1280 = vpack.c.b16 %v1267, %v1266
    %v1281 = vpack.c.b16 %v1269, %v1268
    %v1282 = vpack.c.b16 %v1271, %v1270
    %v1283 = vpack.c.b16 %v1273, %v1272
    %v1284 = vpack.c.b16 %v1275, %v1274
    %v1285 = vpack.c.b16 %v1277, %v1276
    %vm1286 = vsmask.f32 4352
    %v1288 = vshrl.u32 %v1278, 16
    %v1290 = vrot.slane %v1288, 3
    %v1291 = vshll.u32 %v1278, 16
    %v1293 = vrot.slane %v1291, 4
    %v1294 = vor.u32 %v1290, %v1293
    %v1296 = vshrl.u32 %v1279, 16
    %v1298 = vrot.slane %v1296, 3
    %v1299 = vshll.u32 %v1279, 16
    %v1301 = vrot.slane %v1299, 4
    %v1302 = vor.u32 %v1298, %v1301
    %v1303 = vsel %vm1286, %v1294, %v1302
    %v1305 = vshrl.u32 %v1280, 16
    %v1307 = vrot.slane %v1305, 3
    %v1308 = vshll.u32 %v1280, 16
    %v1310 = vrot.slane %v1308, 4
    %v1311 = vor.u32 %v1307, %v1310
    %v1312 = vsel %vm1286, %v1302, %v1311
    %v1314 = vshrl.u32 %v1281, 16
    %v1316 = vrot.slane %v1314, 3
    %v1317 = vshll.u32 %v1281, 16
    %v1319 = vrot.slane %v1317, 4
    %v1320 = vor.u32 %v1316, %v1319
    %v1321 = vsel %vm1286, %v1311, %v1320
    %v1323 = vshrl.u32 %v1282, 16
    %v1325 = vrot.slane %v1323, 3
    %v1326 = vshll.u32 %v1282, 16
    %v1328 = vrot.slane %v1326, 4
    %v1329 = vor.u32 %v1325, %v1328
    %v1330 = vsel %vm1286, %v1320, %v1329
    %v1332 = vshrl.u32 %v1283, 16
    %v1334 = vrot.slane %v1332, 3
    %v1335 = vshll.u32 %v1283, 16
    %v1337 = vrot.slane %v1335, 4
    %v1338 = vor.u32 %v1334, %v1337
    %v1339 = vsel %vm1286, %v1329, %v1338
    %v1341 = vshrl.u32 %v1284, 16
    %v1343 = vrot.slane %v1341, 3
    %v1344 = vshll.u32 %v1284, 16
    %v1346 = vrot.slane %v1344, 4
    %v1347 = vor.u32 %v1343, %v1346
    %v1348 = vsel %vm1286, %v1338, %v1347
    %v1350 = vshrl.u32 %v1285, 16
    %v1352 = vrot.slane %v1350, 3
    %v1353 = vshll.u32 %v1285, 16
    %v1355 = vrot.slane %v1353, 4
    %v1356 = vor.u32 %v1352, %v1355
    %v1357 = vsel %vm1286, %v1347, %v1356
    %vm1358 = vcmp.ne.s16.totalorder %v1294, 0
    %vm1359 = vcmp.ne.s16.totalorder %v1303, 0
    %vm1360 = vcmp.ne.s16.totalorder %v1312, 0
    %vm1361 = vcmp.ne.s16.totalorder %v1321, 0
    %vm1362 = vcmp.ne.s16.totalorder %v1330, 0
    %vm1363 = vcmp.ne.s16.totalorder %v1339, 0
    %vm1364 = vcmp.ne.s16.totalorder %v1348, 0
    %vm1365 = vcmp.ne.s16.totalorder %v1357, 0
    %vm1366 = vcmp.ne.s16.totalorder %v1356, 0
    %v1367 = vsel %vm1358, %v1228, 0
    %v1368 = vsel %vm1359, %v1074, 0
    %v1369 = vsel %vm1360, %v1075, 0
    %v1370 = vsel %vm1361, %v1076, 0
    %v1371 = vsel %vm1362, %v1077, 0
    %v1372 = vsel %vm1363, %v1078, 0
    %v1373 = vsel %vm1364, %v1079, 0
    %v1374 = vsel %vm1365, %v1080, 0
    %v1375 = vsel %vm1366, %v1229, 0
    %vm1376 = vsmask.f32 7424
    %v1378 = vshrl.u32 %v1228, 16
    %v1380 = vshll.u32 %v1228, 16
    %v1382 = vrot.slane %v1380, 1
    %v1383 = vor.u32 %v1378, %v1382
    %v1385 = vshll.u32 %v1074, 16
    %v1387 = vrot.slane %v1385, 1
    %v1388 = vsel %vm1376, %v1383, %v1387
    %v1389 = vshrl.u32 %v1074, 16
    %v1391 = vor.u32 %v1389, %v1387
    %v1393 = vshll.u32 %v1075, 16
    %v1395 = vrot.slane %v1393, 1
    %v1396 = vsel %vm1376, %v1391, %v1395
    %v1397 = vshrl.u32 %v1075, 16
    %v1399 = vor.u32 %v1397, %v1395
    %v1401 = vshll.u32 %v1076, 16
    %v1403 = vrot.slane %v1401, 1
    %v1404 = vsel %vm1376, %v1399, %v1403
    %v1405 = vshrl.u32 %v1076, 16
    %v1407 = vor.u32 %v1405, %v1403
    %v1409 = vshll.u32 %v1077, 16
    %v1411 = vrot.slane %v1409, 1
    %v1412 = vsel %vm1376, %v1407, %v1411
    %v1413 = vshrl.u32 %v1077, 16
    %v1415 = vor.u32 %v1413, %v1411
    %v1417 = vshll.u32 %v1078, 16
    %v1419 = vrot.slane %v1417, 1
    %v1420 = vsel %vm1376, %v1415, %v1419
    %v1421 = vshrl.u32 %v1078, 16
    %v1423 = vor.u32 %v1421, %v1419
    %v1425 = vshll.u32 %v1079, 16
    %v1427 = vrot.slane %v1425, 1
    %v1428 = vsel %vm1376, %v1423, %v1427
    %v1429 = vshrl.u32 %v1079, 16
    %v1431 = vor.u32 %v1429, %v1427
    %v1433 = vshll.u32 %v1080, 16
    %v1435 = vrot.slane %v1433, 1
    %v1436 = vsel %vm1376, %v1431, %v1435
    %v1437 = vshrl.u32 %v1080, 16
    %v1439 = vor.u32 %v1437, %v1435
    %v1441 = vshll.u32 %v1081, 16
    %v1443 = vrot.slane %v1441, 1
    %v1444 = vsel %vm1376, %v1439, %v1443
    %v1445 = vshrl.u32 %v1081, 16
    %v1447 = vor.u32 %v1445, %v1443
    %1448 = vrot.lane.b32.xlu0 %v1388, 64
    %v1449 = vpop.permute.xlu0 %1448
    %1450 = vrot.lane.b32.xlu0 %v1396, 64
    %v1451 = vpop.permute.xlu0 %1450
    %1452 = vrot.lane.b32.xlu0 %v1404, 64
    %v1453 = vpop.permute.xlu0 %1452
    %1454 = vrot.lane.b32.xlu0 %v1412, 64
    %v1455 = vpop.permute.xlu0 %1454
    %1456 = vrot.lane.b32.xlu0 %v1420, 64
    %v1457 = vpop.permute.xlu0 %1456
    %1458 = vrot.lane.b32.xlu0 %v1428, 64
    %v1459 = vpop.permute.xlu0 %1458
    %1460 = vrot.lane.b32.xlu0 %v1436, 64
    %v1461 = vpop.permute.xlu0 %1460
    %1462 = vrot.lane.b32.xlu0 %v1444, 64
    %v1463 = vpop.permute.xlu0 %1462
    %1464 = vrot.lane.b32.xlu0 %v1447, 64
    %v1465 = vpop.permute.xlu0 %1464
    %vm1475 = vcmask 1046528
    %v1476 = vrot.slane %v1367, 1
    %v1477 = vrot.slane %v1368, 1
    %v1478 = vsel %vm1475, %v1476, %v1477
    %v1479 = vrot.slane %v1369, 1
    %v1480 = vsel %vm1475, %v1477, %v1479
    %v1481 = vrot.slane %v1370, 1
    %v1482 = vsel %vm1475, %v1479, %v1481
    %v1483 = vrot.slane %v1371, 1
    %v1484 = vsel %vm1475, %v1481, %v1483
    %v1485 = vrot.slane %v1372, 1
    %v1486 = vsel %vm1475, %v1483, %v1485
    %v1487 = vrot.slane %v1373, 1
    %v1488 = vsel %vm1475, %v1485, %v1487
    %v1489 = vrot.slane %v1374, 1
    %v1490 = vsel %vm1475, %v1487, %v1489
    %v1491 = vrot.slane %v1375, 1
    %v1492 = vsel %vm1475, %v1489, %v1491
    %v1504 = vsel %vm742, %v1219, %v1449
    %v1508 = vsel %vm742, %v1220, %v1451
    %v1512 = vsel %vm742, %v1221, %v1453
    %v1516 = vsel %vm742, %v1222, %v1455
    %v1520 = vsel %vm742, %v1223, %v1457
    %v1524 = vsel %vm742, %v1224, %v1459
    %v1528 = vsel %vm742, %v1225, %v1461
    %v1532 = vsel %vm742, %v1226, %v1463
    %v1536 = vsel %vm742, %v1227, %v1465
    %vm1538 = vmpackc.low %vm574, %vm574
    %vm1539 = vmpackc.low %vm575, %vm575
    %vm1540 = vmpackc.low %vm576, %vm576
    %vm1541 = vmpackc.low %vm577, %vm577
    %vm1542 = vmpackc.low %vm578, %vm578
    %vm1543 = vmpackc.low %vm579, %vm579
    %vm1544 = vmpackc.low %vm580, %vm580
    %vm1545 = vmpackc.low %vm581, %vm581
    %vm1546 = vmpackc.low %vm582, %vm582
    %vm1547 = vmpackc.low %vm583, %vm583
    %vm1548 = vmpackc.low %vm584, %vm584
    %vm1549 = vmpackc.low %vm585, %vm585
    %vm1550 = vmpackc.low %vm586, %vm586
    %vm1551 = vmpackc.low %vm587, %vm587
    %vm1552 = vmpackc.low %vm588, %vm588
    %vm1553 = vmpackc.low %vm589, %vm589
    %v1554 = vsel %vm1538, 65537, 0
    %v1555 = vsel %vm1539, 65537, 0
    %v1556 = vsel %vm1540, 65537, 0
    %v1557 = vsel %vm1541, 65537, 0
    %v1558 = vsel %vm1542, 65537, 0
    %v1559 = vsel %vm1543, 65537, 0
    %v1560 = vsel %vm1544, 65537, 0
    %v1561 = vsel %vm1545, 65537, 0
    %v1562 = vsel %vm1546, 65537, 0
    %v1563 = vsel %vm1547, 65537, 0
    %v1564 = vsel %vm1548, 65537, 0
    %v1565 = vsel %vm1549, 65537, 0
    %v1566 = vsel %vm1550, 65537, 0
    %v1567 = vsel %vm1551, 65537, 0
    %v1568 = vsel %vm1552, 65537, 0
    %v1569 = vsel %vm1553, 65537, 0
    %v1570 = vunpack.c.l.b16 %v1554
    %v1571 = vunpack.c.l.b16 %v1555
    %v1572 = vunpack.c.l.b16 %v1556
    %v1573 = vunpack.c.l.b16 %v1557
    %v1574 = vunpack.c.l.b16 %v1558
    %v1575 = vunpack.c.l.b16 %v1559
    %v1576 = vunpack.c.l.b16 %v1560
    %v1577 = vunpack.c.l.b16 %v1561
    %v1578 = vunpack.c.l.b16 %v1562
    %v1579 = vunpack.c.l.b16 %v1563
    %v1580 = vunpack.c.l.b16 %v1564
    %v1581 = vunpack.c.l.b16 %v1565
    %v1582 = vunpack.c.l.b16 %v1566
    %v1583 = vunpack.c.l.b16 %v1567
    %v1584 = vunpack.c.l.b16 %v1568
    %v1585 = vunpack.c.l.b16 %v1569
    %v1586 = vpack.c.b16 %v1571, %v1570
    %v1587 = vpack.c.b16 %v1573, %v1572
    %v1588 = vpack.c.b16 %v1575, %v1574
    %v1589 = vpack.c.b16 %v1577, %v1576
    %v1590 = vpack.c.b16 %v1579, %v1578
    %v1591 = vpack.c.b16 %v1581, %v1580
    %v1592 = vpack.c.b16 %v1583, %v1582
    %v1593 = vpack.c.b16 %v1585, %v1584
    %v1595 = vshrl.u32 %v1586, 16
    %v1597 = vrot.slane %v1595, 4
    %v1598 = vshll.u32 %v1586, 16
    %v1600 = vrot.slane %v1598, 5
    %v1601 = vor.u32 %v1597, %v1600
    %v1603 = vshrl.u32 %v1587, 16
    %v1605 = vrot.slane %v1603, 4
    %v1606 = vshll.u32 %v1587, 16
    %v1608 = vrot.slane %v1606, 5
    %v1609 = vor.u32 %v1605, %v1608
    %v1610 = vsel %vm1138, %v1601, %v1609
    %v1612 = vshrl.u32 %v1588, 16
    %v1614 = vrot.slane %v1612, 4
    %v1615 = vshll.u32 %v1588, 16
    %v1617 = vrot.slane %v1615, 5
    %v1618 = vor.u32 %v1614, %v1617
    %v1619 = vsel %vm1138, %v1609, %v1618
    %v1621 = vshrl.u32 %v1589, 16
    %v1623 = vrot.slane %v1621, 4
    %v1624 = vshll.u32 %v1589, 16
    %v1626 = vrot.slane %v1624, 5
    %v1627 = vor.u32 %v1623, %v1626
    %v1628 = vsel %vm1138, %v1618, %v1627
    %v1630 = vshrl.u32 %v1590, 16
    %v1632 = vrot.slane %v1630, 4
    %v1633 = vshll.u32 %v1590, 16
    %v1635 = vrot.slane %v1633, 5
    %v1636 = vor.u32 %v1632, %v1635
    %v1637 = vsel %vm1138, %v1627, %v1636
    %v1639 = vshrl.u32 %v1591, 16
    %v1641 = vrot.slane %v1639, 4
    %v1642 = vshll.u32 %v1591, 16
    %v1644 = vrot.slane %v1642, 5
    %v1645 = vor.u32 %v1641, %v1644
    %v1646 = vsel %vm1138, %v1636, %v1645
    %v1648 = vshrl.u32 %v1592, 16
    %v1650 = vrot.slane %v1648, 4
    %v1651 = vshll.u32 %v1592, 16
    %v1653 = vrot.slane %v1651, 5
    %v1654 = vor.u32 %v1650, %v1653
    %v1655 = vsel %vm1138, %v1645, %v1654
    %v1657 = vshrl.u32 %v1593, 16
    %v1659 = vrot.slane %v1657, 4
    %v1660 = vshll.u32 %v1593, 16
    %v1662 = vrot.slane %v1660, 5
    %v1663 = vor.u32 %v1659, %v1662
    %v1664 = vsel %vm1138, %v1654, %v1663
    %vm1665 = vcmp.ne.s16.totalorder %v1601, 0
    %vm1666 = vcmp.ne.s16.totalorder %v1610, 0
    %vm1667 = vcmp.ne.s16.totalorder %v1619, 0
    %vm1668 = vcmp.ne.s16.totalorder %v1628, 0
    %vm1669 = vcmp.ne.s16.totalorder %v1637, 0
    %vm1670 = vcmp.ne.s16.totalorder %v1646, 0
    %vm1671 = vcmp.ne.s16.totalorder %v1655, 0
    %vm1672 = vcmp.ne.s16.totalorder %v1664, 0
    %vm1673 = vcmp.ne.s16.totalorder %v1663, 0
    %v1674 = vsel %vm1665, %v1504, 0
    %v1675 = vsel %vm1665, %v1478, 0
    %v1676 = vsel %vm1666, %v1508, 0
    %v1677 = vsel %vm1666, %v1480, 0
    %v1678 = vsel %vm1667, %v1512, 0
    %v1679 = vsel %vm1667, %v1482, 0
    %v1680 = vsel %vm1668, %v1516, 0
    %v1681 = vsel %vm1668, %v1484, 0
    %v1682 = vsel %vm1669, %v1520, 0
    %v1683 = vsel %vm1669, %v1486, 0
    %v1684 = vsel %vm1670, %v1524, 0
    %v1685 = vsel %vm1670, %v1488, 0
    %v1686 = vsel %vm1671, %v1528, 0
    %v1687 = vsel %vm1671, %v1490, 0
    %v1688 = vsel %vm1672, %v1532, 0
    %v1689 = vsel %vm1672, %v1492, 0
    %v1690 = vsel %vm1673, %v1536, 0
    %v1691 = vsel %vm1673, %v1491, 0
    %v1692 = vld [vmem:[%s3] sm:$0xf]
    %v1693 = vld [vmem:[%s3 + $0x4] sm:$0xf]
    %v1694 = vld [vmem:[%s3 + $0x8] sm:$0xf]
    %v1695 = vld [vmem:[%s3 + $0xc] sm:$0xf]
    %v1696 = vld [vmem:[%s3 + $0x10] sm:$0xf]
    %v1697 = vld [vmem:[%s3 + $0x14] sm:$0xf]
    %v1698 = vld [vmem:[%s3 + $0x18] sm:$0xf]
    %v1699 = vld [vmem:[%s3 + $0x1c] sm:$0xf]
    %v1700 = vld [vmem:[%s3 + $0x20] sm:$0xf]
    %v1701 = vld [vmem:[%s3 + $0x24] sm:$0xf]
    %v1702 = vld [vmem:[%s3 + $0x28] sm:$0xf]
    %v1703 = vld [vmem:[%s3 + $0x2c] sm:$0xf]
    %v1704 = vld [vmem:[%s3 + $0x30] sm:$0xf]
    %v1705 = vld [vmem:[%s3 + $0x34] sm:$0xf]
    %v1706 = vld [vmem:[%s3 + $0x38] sm:$0xf]
    %v1707 = vld [vmem:[%s3 + $0x3c] sm:$0xf]
    %v1708 = vld [vmem:[%s3 + $0x40] sm:$0xf]
    %v1709 = vld [vmem:[%s3 + $0x44] sm:$0xf]
    %v1710 = vld [vmem:[%s3 + $0x48] sm:$0xf]
    %v1711 = vld [vmem:[%s3 + $0x4c] sm:$0xf]
    %v1712 = vld [vmem:[%s3 + $0x50] sm:$0xf]
    %v1713 = vld [vmem:[%s3 + $0x54] sm:$0xf]
    %v1714 = vld [vmem:[%s3 + $0x58] sm:$0xf]
    %v1715 = vld [vmem:[%s3 + $0x5c] sm:$0xf]
    %v1716 = vld [vmem:[#allocation2] sm:$0x80]
    %v1717 = vld [vmem:[#allocation2 + $0x40] sm:$0xff]
    %v1718 = vrot.slane %v1143, 1
    %v1719 = vor.u32 %v1140, %v1718
    %v1720 = vrot.slane %v1151, 1
    %v1721 = vsel %vm1376, %v1719, %v1720
    %v1722 = vor.u32 %v1148, %v1720
    %v1723 = vrot.slane %v1160, 1
    %v1724 = vsel %vm1376, %v1722, %v1723
    %v1725 = vor.u32 %v1157, %v1723
    %v1726 = vrot.slane %v1169, 1
    %v1727 = vsel %vm1376, %v1725, %v1726
    %v1728 = vor.u32 %v1166, %v1726
    %v1729 = vrot.slane %v1178, 1
    %v1730 = vsel %vm1376, %v1728, %v1729
    %v1731 = vor.u32 %v1175, %v1729
    %v1732 = vrot.slane %v1187, 1
    %v1733 = vsel %vm1376, %v1731, %v1732
    %v1734 = vor.u32 %v1184, %v1732
    %v1735 = vrot.slane %v1196, 1
    %v1736 = vsel %vm1376, %v1734, %v1735
    %v1737 = vor.u32 %v1193, %v1735
    %v1738 = vrot.slane %v1205, 1
    %v1739 = vsel %vm1376, %v1737, %v1738
    %v1740 = vor.u32 %v1202, %v1738
    %vm1741 = vcmp.ne.s16.totalorder %v1718, 0
    %vm1742 = vcmp.ne.s16.totalorder %v1721, 0
    %vm1743 = vcmp.ne.s16.totalorder %v1724, 0
    %vm1744 = vcmp.ne.s16.totalorder %v1727, 0
    %vm1745 = vcmp.ne.s16.totalorder %v1730, 0
    %vm1746 = vcmp.ne.s16.totalorder %v1733, 0
    %vm1747 = vcmp.ne.s16.totalorder %v1736, 0
    %vm1748 = vcmp.ne.s16.totalorder %v1739, 0
    %vm1749 = vcmp.ne.s16.totalorder %v1740, 0
    %v1750 = vsel %vm1741, %v1716, 0
    %v1751 = vsel %vm1742, %v1074, 0
    %v1752 = vsel %vm1743, %v1075, 0
    %v1753 = vsel %vm1744, %v1076, 0
    %v1754 = vsel %vm1745, %v1077, 0
    %v1755 = vsel %vm1746, %v1078, 0
    %v1756 = vsel %vm1747, %v1079, 0
    %v1757 = vsel %vm1748, %v1080, 0
    %v1758 = vsel %vm1749, %v1717, 0
    %v1759 = vld [vmem:[#allocation2 + $0x48] sm:$0x1]
    %vm1760 = vsmask.f32 256
    %v1761 = vrot.slane %v1288, 7
    %v1762 = vor.u32 %v1761, %v1291
    %v1763 = vrot.slane %v1296, 7
    %v1764 = vor.u32 %v1763, %v1299
    %v1765 = vsel %vm1760, %v1761, %v1764
    %v1766 = vrot.slane %v1305, 7
    %v1767 = vor.u32 %v1766, %v1308
    %v1768 = vsel %vm1760, %v1763, %v1767
    %v1769 = vrot.slane %v1314, 7
    %v1770 = vor.u32 %v1769, %v1317
    %v1771 = vsel %vm1760, %v1766, %v1770
    %v1772 = vrot.slane %v1323, 7
    %v1773 = vor.u32 %v1772, %v1326
    %v1774 = vsel %vm1760, %v1769, %v1773
    %v1775 = vrot.slane %v1332, 7
    %v1776 = vor.u32 %v1775, %v1335
    %v1777 = vsel %vm1760, %v1772, %v1776
    %v1778 = vrot.slane %v1341, 7
    %v1779 = vor.u32 %v1778, %v1344
    %v1780 = vsel %vm1760, %v1775, %v1779
    %v1781 = vrot.slane %v1350, 7
    %v1782 = vor.u32 %v1781, %v1353
    %v1783 = vsel %vm1760, %v1778, %v1782
    %vm1784 = vcmp.ne.s16.totalorder %v1762, 0
    %vm1785 = vcmp.ne.s16.totalorder %v1765, 0
    %vm1786 = vcmp.ne.s16.totalorder %v1768, 0
    %vm1787 = vcmp.ne.s16.totalorder %v1771, 0
    %vm1788 = vcmp.ne.s16.totalorder %v1774, 0
    %vm1789 = vcmp.ne.s16.totalorder %v1777, 0
    %vm1790 = vcmp.ne.s16.totalorder %v1780, 0
    %vm1791 = vcmp.ne.s16.totalorder %v1783, 0
    %vm1792 = vcmp.ne.s16.totalorder %v1781, 0
    %v1793 = vsel %vm1784, %v1074, 0
    %v1794 = vsel %vm1785, %v1075, 0
    %v1795 = vsel %vm1786, %v1076, 0
    %v1796 = vsel %vm1787, %v1077, 0
    %v1797 = vsel %vm1788, %v1078, 0
    %v1798 = vsel %vm1789, %v1079, 0
    %v1799 = vsel %vm1790, %v1080, 0
    %v1800 = vsel %vm1791, %v1717, 0
    %v1801 = vsel %vm1792, %v1759, 0
    %v1803 = vshll.u32 %v1717, 16
    %v1805 = vrot.slane %v1803, 1
    %v1806 = vsel %vm1376, %v1439, %v1805
    %v1807 = vshrl.u32 %v1717, 16
    %v1809 = vor.u32 %v1807, %v1805
    %1810 = vrot.lane.b32.xlu0 %v1387, 64
    %v1811 = vpop.permute.xlu0 %1810
    %1812 = vrot.lane.b32.xlu0 %v1806, 64
    %v1813 = vpop.permute.xlu0 %1812
    %1814 = vrot.lane.b32.xlu0 %v1809, 64
    %v1815 = vpop.permute.xlu0 %1814
    %v1825 = vrot.slane %v1793, 1
    %v1826 = vrot.slane %v1794, 1
    %v1827 = vsel %vm1475, %v1825, %v1826
    %v1828 = vrot.slane %v1795, 1
    %v1829 = vsel %vm1475, %v1826, %v1828
    %v1830 = vrot.slane %v1796, 1
    %v1831 = vsel %vm1475, %v1828, %v1830
    %v1832 = vrot.slane %v1797, 1
    %v1833 = vsel %vm1475, %v1830, %v1832
    %v1834 = vrot.slane %v1798, 1
    %v1835 = vsel %vm1475, %v1832, %v1834
    %v1836 = vrot.slane %v1799, 1
    %v1837 = vsel %vm1475, %v1834, %v1836
    %v1838 = vrot.slane %v1800, 1
    %v1839 = vsel %vm1475, %v1836, %v1838
    %v1840 = vrot.slane %v1801, 1
    %v1841 = vsel %vm1475, %v1838, %v1840
    %v1844 = vsel %vm742, %v1750, %v1811
    %v1846 = vsel %vm742, %v1751, %v1451
    %v1848 = vsel %vm742, %v1752, %v1453
    %v1850 = vsel %vm742, %v1753, %v1455
    %v1852 = vsel %vm742, %v1754, %v1457
    %v1854 = vsel %vm742, %v1755, %v1459
    %v1856 = vsel %vm742, %v1756, %v1461
    %v1859 = vsel %vm742, %v1757, %v1813
    %v1862 = vsel %vm742, %v1758, %v1815
    %s1863 = scalar_lea.vmem %s3, 96
    %v1864 = vld [vmem:[%s1863] sm:$0xf]
    %v1865 = vld [vmem:[%s1863 + $0x4] sm:$0xf]
    %v1866 = vld [vmem:[%s1863 + $0x8] sm:$0xf]
    %v1867 = vld [vmem:[%s1863 + $0xc] sm:$0xf]
    %v1868 = vld [vmem:[%s1863 + $0x10] sm:$0xf]
    %v1869 = vld [vmem:[%s1863 + $0x14] sm:$0xf]
    %v1870 = vld [vmem:[%s1863 + $0x18] sm:$0xf]
    %v1871 = vld [vmem:[%s1863 + $0x1c] sm:$0xf]
    %v1872 = vld [vmem:[%s1863 + $0x20] sm:$0xf]
    %v1873 = vld [vmem:[%s1863 + $0x24] sm:$0xf]
    %v1874 = vld [vmem:[%s1863 + $0x28] sm:$0xf]
    %v1875 = vld [vmem:[%s1863 + $0x2c] sm:$0xf]
    %v1876 = vld [vmem:[%s1863 + $0x30] sm:$0xf]
    %v1877 = vld [vmem:[%s1863 + $0x34] sm:$0xf]
    %v1878 = vld [vmem:[%s1863 + $0x38] sm:$0xf]
    %v1879 = vld [vmem:[%s1863 + $0x3c] sm:$0xf]
    %v1880 = vld [vmem:[%s1863 + $0x40] sm:$0xf]
    %v1881 = vld [vmem:[%s1863 + $0x44] sm:$0xf]
    %v1882 = vld [vmem:[%s1863 + $0x48] sm:$0xf]
    %v1883 = vld [vmem:[%s1863 + $0x4c] sm:$0xf]
    %v1884 = vld [vmem:[%s1863 + $0x50] sm:$0xf]
    %v1885 = vld [vmem:[%s1863 + $0x54] sm:$0xf]
    %v1886 = vld [vmem:[%s1863 + $0x58] sm:$0xf]
    %v1887 = vld [vmem:[%s1863 + $0x5c] sm:$0xf]
    %v1888 = vshrl.u32 %v1844, 16
    %v1890 = vrot.slane %v1888, 7
    %v1891 = vshrl.u32 %v1846, 16
    %v1893 = vrot.slane %v1891, 7
    %v1894 = vshll.u32 %v1846, 16
    %v1896 = vor.u32 %v1893, %v1894
    %v1897 = vsel %vm1760, %v1890, %v1896
    %v1899 = vshrl.u32 %v1825, 16
    %v1901 = vrot.slane %v1899, 7
    %v1903 = vshrl.u32 %v1827, 16
    %v1905 = vrot.slane %v1903, 7
    %v1906 = vshll.u32 %v1827, 16
    %v1908 = vor.u32 %v1905, %v1906
    %v1909 = vsel %vm1760, %v1901, %v1908
    %v1910 = vshrl.u32 %v1848, 16
    %v1912 = vrot.slane %v1910, 7
    %v1913 = vshll.u32 %v1848, 16
    %v1915 = vor.u32 %v1912, %v1913
    %v1916 = vsel %vm1760, %v1893, %v1915
    %v1918 = vshrl.u32 %v1829, 16
    %v1920 = vrot.slane %v1918, 7
    %v1921 = vshll.u32 %v1829, 16
    %v1923 = vor.u32 %v1920, %v1921
    %v1924 = vsel %vm1760, %v1905, %v1923
    %v1925 = vshrl.u32 %v1850, 16
    %v1927 = vrot.slane %v1925, 7
    %v1928 = vshll.u32 %v1850, 16
    %v1930 = vor.u32 %v1927, %v1928
    %v1931 = vsel %vm1760, %v1912, %v1930
    %v1933 = vshrl.u32 %v1831, 16
    %v1935 = vrot.slane %v1933, 7
    %v1936 = vshll.u32 %v1831, 16
    %v1938 = vor.u32 %v1935, %v1936
    %v1939 = vsel %vm1760, %v1920, %v1938
    %v1940 = vshrl.u32 %v1852, 16
    %v1942 = vrot.slane %v1940, 7
    %v1943 = vshll.u32 %v1852, 16
    %v1945 = vor.u32 %v1942, %v1943
    %v1946 = vsel %vm1760, %v1927, %v1945
    %v1948 = vshrl.u32 %v1833, 16
    %v1950 = vrot.slane %v1948, 7
    %v1951 = vshll.u32 %v1833, 16
    %v1953 = vor.u32 %v1950, %v1951
    %v1954 = vsel %vm1760, %v1935, %v1953
    %v1955 = vshrl.u32 %v1854, 16
    %v1957 = vrot.slane %v1955, 7
    %v1958 = vshll.u32 %v1854, 16
    %v1960 = vor.u32 %v1957, %v1958
    %v1961 = vsel %vm1760, %v1942, %v1960
    %v1963 = vshrl.u32 %v1835, 16
    %v1965 = vrot.slane %v1963, 7
    %v1966 = vshll.u32 %v1835, 16
    %v1968 = vor.u32 %v1965, %v1966
    %v1969 = vsel %vm1760, %v1950, %v1968
    %v1970 = vshrl.u32 %v1856, 16
    %v1972 = vrot.slane %v1970, 7
    %v1973 = vshll.u32 %v1856, 16
    %v1975 = vor.u32 %v1972, %v1973
    %v1976 = vsel %vm1760, %v1957, %v1975
    %v1978 = vshrl.u32 %v1837, 16
    %v1980 = vrot.slane %v1978, 7
    %v1981 = vshll.u32 %v1837, 16
    %v1983 = vor.u32 %v1980, %v1981
    %v1984 = vsel %vm1760, %v1965, %v1983
    %v1985 = vshrl.u32 %v1859, 16
    %v1987 = vrot.slane %v1985, 7
    %v1988 = vshll.u32 %v1859, 16
    %v1990 = vor.u32 %v1987, %v1988
    %v1991 = vsel %vm1760, %v1972, %v1990
    %v1993 = vshrl.u32 %v1839, 16
    %v1995 = vrot.slane %v1993, 7
    %v1996 = vshll.u32 %v1839, 16
    %v1998 = vor.u32 %v1995, %v1996
    %v1999 = vsel %vm1760, %v1980, %v1998
    %v2000 = vshrl.u32 %v1862, 16
    %v2002 = vrot.slane %v2000, 7
    %v2003 = vshll.u32 %v1862, 16
    %v2005 = vor.u32 %v2002, %v2003
    %v2006 = vsel %vm1760, %v1987, %v2005
    %v2008 = vshrl.u32 %v1841, 16
    %v2010 = vrot.slane %v2008, 7
    %v2011 = vshll.u32 %v1841, 16
    %v2013 = vor.u32 %v2010, %v2011
    %v2014 = vsel %vm1760, %v1995, %v2013
    %v2047 = vunpack.c.l.b16 %v1864
    %v2048 = vunpack.c.l.b16 %v1865
    %v2049 = vunpack.c.l.b16 %v1866
    %v2050 = vunpack.c.l.b16 %v1867
    %v2051 = vunpack.c.l.b16 %v1868
    %v2052 = vunpack.c.l.b16 %v1869
    %v2053 = vunpack.c.l.b16 %v1870
    %v2054 = vunpack.c.l.b16 %v1871
    %v2055 = vunpack.c.l.b16 %v1872
    %v2056 = vunpack.c.l.b16 %v1873
    %v2057 = vunpack.c.l.b16 %v1874
    %v2058 = vunpack.c.l.b16 %v1875
    %v2059 = vunpack.c.l.b16 %v1876
    %v2060 = vunpack.c.l.b16 %v1877
    %v2061 = vunpack.c.l.b16 %v1878
    %v2062 = vunpack.c.l.b16 %v1879
    %v2063 = vunpack.c.l.b16 %v1880
    %v2064 = vunpack.c.l.b16 %v1881
    %v2065 = vunpack.c.l.b16 %v1882
    %v2066 = vunpack.c.l.b16 %v1883
    %v2067 = vunpack.c.l.b16 %v1884
    %v2068 = vunpack.c.l.b16 %v1885
    %v2069 = vunpack.c.l.b16 %v1886
    %v2070 = vunpack.c.l.b16 %v1887
    %v2071 = vpack.c.b16 %v2048, %v2047
    %v2072 = vpack.c.b16 %v2050, %v2049
    %v2073 = vpack.c.b16 %v2052, %v2051
    %v2074 = vpack.c.b16 %v2054, %v2053
    %v2075 = vpack.c.b16 %v2056, %v2055
    %v2076 = vpack.c.b16 %v2058, %v2057
    %v2077 = vpack.c.b16 %v2060, %v2059
    %v2078 = vpack.c.b16 %v2062, %v2061
    %v2079 = vpack.c.b16 %v2064, %v2063
    %v2080 = vpack.c.b16 %v2066, %v2065
    %v2081 = vpack.c.b16 %v2068, %v2067
    %v2082 = vpack.c.b16 %v2070, %v2069
    %v2096 = vsel %vm742, %v1909, 0
    %v2099 = vsel %vm742, %v1924, 0
    %v2102 = vsel %vm742, %v1939, 0
    %v2105 = vsel %vm742, %v1954, 0
    %v2108 = vsel %vm742, %v1969, 0
    %v2111 = vsel %vm742, %v1984, 0
    %v2114 = vsel %vm742, %v1999, 0
    %v2117 = vsel %vm742, %v2014, 0
    %2119 = vmatprep.subr.bf16.mxu0 0
    %2120 = vmatpush1.bf16.msra.mxu0 %v2071
    %2121 = vmatprep.subr.bf16.mxu0 0
    %2122 = vmatpush1.bf16.msra.mxu0 %v2072
    %2123 = vmatprep.subr.bf16.mxu0 0
    %2124 = vmatpush1.bf16.msra.mxu0 %v2073
    %2125 = vmatprep.subr.bf16.mxu0 0
    %2126 = vmatpush1.bf16.msra.mxu0 %v2074
    %2127 = vmatprep.subr.bf16.mxu0 0
    %2128 = vmatpush1.bf16.msra.mxu0 %v2075
    %2129 = vmatprep.subr.bf16.mxu0 0
    %2130 = vmatpush1.bf16.msra.mxu0 %v2076
    %2131 = vmatprep.subr.bf16.mxu0 0
    %2132 = vmatpush1.bf16.msra.mxu0 %v2077
    %2133 = vmatprep.subr.bf16.mxu0 0
    %2134 = vmatpush1.bf16.msra.mxu0 %v2078
    %2135 = vmatprep.subr.bf16.mxu0 0
    %2136 = vmatpush1.bf16.msra.mxu0 %v2079
    %2137 = vmatprep.subr.bf16.mxu0 0
    %2138 = vmatpush1.bf16.msra.mxu0 %v2080
    %2139 = vmatprep.subr.bf16.mxu0 0
    %2140 = vmatpush1.bf16.msra.mxu0 %v2081
    %2141 = vmatprep.subr.bf16.mxu0 0
    %2142 = vmatpush1.bf16.msra.mxu0 %v2082
    %2143 = vmatprep.subr.bf16.mxu0 0
    %2144 = vmatpush1.bf16.msra.mxu0 0
    %2145 = vmatprep.subr.bf16.mxu0 0
    %2146 = vmatpush1.bf16.msra.mxu0 0
    %2147 = vmatprep.subr.bf16.mxu0 0
    %2148 = vmatpush1.bf16.msra.mxu0 0
    %2149 = vmatprep.subr.bf16.mxu0 0
    %2150 = vmatpush1.bf16.msra.mxu0 0
    %2151 = vmatprep.mubr.bf16.mxu0 %v2096
    %2152 = vmatmul.mubr.bf16.gmra.mrb[0].mxu0 %v1897
    %v2153 = vpop.f32.mrb[0].mxu0
    %v2154 = vadd.f32 0.0, %v2153
    %v2155 = vpop.f32.mrb[0].mxu0
    %v2156 = vpop.f32.mrb[0].mxu0
    %v2157 = vadd.f32 0.0, %v2156
    %v2158 = vpop.f32.mrb[0].mxu0
    %2159 = vmatprep.mubr.bf16.mxu0 %v2099
    %2160 = vmatmul.mubr.bf16.gmra.mrb[0].mxu0 %v1916
    %v2161 = vpop.f32.mrb[0].mxu0
    %v2162 = vadd.f32 0.0, %v2161
    %v2163 = vpop.f32.mrb[0].mxu0
    %v2164 = vpop.f32.mrb[0].mxu0
    %v2165 = vadd.f32 0.0, %v2164
    %v2166 = vpop.f32.mrb[0].mxu0
    %2167 = vmatprep.mubr.bf16.mxu0 %v2102
    %2168 = vmatmul.mubr.bf16.gmra.mrb[0].mxu0 %v1931
    %v2169 = vpop.f32.mrb[0].mxu0
    %v2170 = vadd.f32 0.0, %v2169
    %v2171 = vpop.f32.mrb[0].mxu0
    %v2172 = vpop.f32.mrb[0].mxu0
    %v2173 = vadd.f32 0.0, %v2172
    %v2174 = vpop.f32.mrb[0].mxu0
    %2175 = vmatprep.mubr.bf16.mxu0 %v2105
    %2176 = vmatmul.mubr.bf16.gmra.mrb[0].mxu0 %v1946
    %v2177 = vpop.f32.mrb[0].mxu0
    %v2178 = vadd.f32 0.0, %v2177
    %v2179 = vpop.f32.mrb[0].mxu0
    %v2180 = vpop.f32.mrb[0].mxu0
    %v2181 = vadd.f32 0.0, %v2180
    %v2182 = vpop.f32.mrb[0].mxu0
    %2183 = vmatprep.mubr.bf16.mxu0 %v2108
    %2184 = vmatmul.mubr.bf16.gmra.mrb[0].mxu0 %v1961
    %v2185 = vpop.f32.mrb[0].mxu0
    %v2186 = vadd.f32 0.0, %v2185
    %v2187 = vpop.f32.mrb[0].mxu0
    %v2188 = vpop.f32.mrb[0].mxu0
    %v2189 = vadd.f32 0.0, %v2188
    %v2190 = vpop.f32.mrb[0].mxu0
    %2191 = vmatprep.mubr.bf16.mxu0 %v2111
    %2192 = vmatmul.mubr.bf16.gmra.mrb[0].mxu0 %v1976
    %v2193 = vpop.f32.mrb[0].mxu0
    %v2194 = vadd.f32 0.0, %v2193
    %v2195 = vpop.f32.mrb[0].mxu0
    %v2196 = vpop.f32.mrb[0].mxu0
    %v2197 = vadd.f32 0.0, %v2196
    %v2198 = vpop.f32.mrb[0].mxu0
    %2199 = vmatprep.mubr.bf16.mxu0 %v2114
    %2200 = vmatmul.mubr.bf16.gmra.mrb[0].mxu0 %v1991
    %v2201 = vpop.f32.mrb[0].mxu0
    %v2202 = vadd.f32 0.0, %v2201
    %v2203 = vpop.f32.mrb[0].mxu0
    %v2204 = vpop.f32.mrb[0].mxu0
    %v2205 = vadd.f32 0.0, %v2204
    %v2206 = vpop.f32.mrb[0].mxu0
    %2207 = vmatprep.mubr.bf16.mxu0 %v2117
    %2208 = vmatmul.mubr.bf16.gmra.mrb[0].mxu0 %v2006
    %v2209 = vpop.f32.mrb[0].mxu0
    %v2210 = vadd.f32 0.0, %v2209
    %v2211 = vpop.f32.mrb[0].mxu0
    %v2212 = vpop.f32.mrb[0].mxu0
    %v2213 = vadd.f32 0.0, %v2212
    %v2214 = vpop.f32.mrb[0].mxu0
    %2215 = vdwg.mxu0
    %v2217 = vshrl.u32 %v1674, 16
    %v2219 = vrot.slane %v2217, 3
    %v2220 = vshll.u32 %v1674, 16
    %v2222 = vrot.slane %v2220, 4
    %v2223 = vor.u32 %v2219, %v2222
    %v2225 = vshrl.u32 %v1676, 16
    %v2227 = vrot.slane %v2225, 3
    %v2228 = vshll.u32 %v1676, 16
    %v2230 = vrot.slane %v2228, 4
    %v2231 = vor.u32 %v2227, %v2230
    %v2232 = vsel %vm1286, %v2223, %v2231
    %v2234 = vshrl.u32 %v1675, 16
    %v2236 = vrot.slane %v2234, 3
    %v2237 = vshll.u32 %v1675, 16
    %v2239 = vrot.slane %v2237, 4
    %v2240 = vor.u32 %v2236, %v2239
    %v2242 = vshrl.u32 %v1677, 16
    %v2244 = vrot.slane %v2242, 3
    %v2245 = vshll.u32 %v1677, 16
    %v2247 = vrot.slane %v2245, 4
    %v2248 = vor.u32 %v2244, %v2247
    %v2249 = vsel %vm1286, %v2240, %v2248
    %v2251 = vshrl.u32 %v1678, 16
    %v2253 = vrot.slane %v2251, 3
    %v2254 = vshll.u32 %v1678, 16
    %v2256 = vrot.slane %v2254, 4
    %v2257 = vor.u32 %v2253, %v2256
    %v2258 = vsel %vm1286, %v2231, %v2257
    %v2260 = vshrl.u32 %v1679, 16
    %v2262 = vrot.slane %v2260, 3
    %v2263 = vshll.u32 %v1679, 16
    %v2265 = vrot.slane %v2263, 4
    %v2266 = vor.u32 %v2262, %v2265
    %v2267 = vsel %vm1286, %v2248, %v2266
    %v2269 = vshrl.u32 %v1680, 16
    %v2271 = vrot.slane %v2269, 3
    %v2272 = vshll.u32 %v1680, 16
    %v2274 = vrot.slane %v2272, 4
    %v2275 = vor.u32 %v2271, %v2274
    %v2276 = vsel %vm1286, %v2257, %v2275
    %v2278 = vshrl.u32 %v1681, 16
    %v2280 = vrot.slane %v2278, 3
    %v2281 = vshll.u32 %v1681, 16
    %v2283 = vrot.slane %v2281, 4
    %v2284 = vor.u32 %v2280, %v2283
    %v2285 = vsel %vm1286, %v2266, %v2284
    %v2287 = vshrl.u32 %v1682, 16
    %v2289 = vrot.slane %v2287, 3
    %v2290 = vshll.u32 %v1682, 16
    %v2292 = vrot.slane %v2290, 4
    %v2293 = vor.u32 %v2289, %v2292
    %v2294 = vsel %vm1286, %v2275, %v2293
    %v2296 = vshrl.u32 %v1683, 16
    %v2298 = vrot.slane %v2296, 3
    %v2299 = vshll.u32 %v1683, 16
    %v2301 = vrot.slane %v2299, 4
    %v2302 = vor.u32 %v2298, %v2301
    %v2303 = vsel %vm1286, %v2284, %v2302
    %v2305 = vshrl.u32 %v1684, 16
    %v2307 = vrot.slane %v2305, 3
    %v2308 = vshll.u32 %v1684, 16
    %v2310 = vrot.slane %v2308, 4
    %v2311 = vor.u32 %v2307, %v2310
    %v2312 = vsel %vm1286, %v2293, %v2311
    %v2314 = vshrl.u32 %v1685, 16
    %v2316 = vrot.slane %v2314, 3
    %v2317 = vshll.u32 %v1685, 16
    %v2319 = vrot.slane %v2317, 4
    %v2320 = vor.u32 %v2316, %v2319
    %v2321 = vsel %vm1286, %v2302, %v2320
    %v2323 = vshrl.u32 %v1686, 16
    %v2325 = vrot.slane %v2323, 3
    %v2326 = vshll.u32 %v1686, 16
    %v2328 = vrot.slane %v2326, 4
    %v2329 = vor.u32 %v2325, %v2328
    %v2330 = vsel %vm1286, %v2311, %v2329
    %v2332 = vshrl.u32 %v1687, 16
    %v2334 = vrot.slane %v2332, 3
    %v2335 = vshll.u32 %v1687, 16
    %v2337 = vrot.slane %v2335, 4
    %v2338 = vor.u32 %v2334, %v2337
    %v2339 = vsel %vm1286, %v2320, %v2338
    %v2341 = vshrl.u32 %v1688, 16
    %v2343 = vrot.slane %v2341, 3
    %v2344 = vshll.u32 %v1688, 16
    %v2346 = vrot.slane %v2344, 4
    %v2347 = vor.u32 %v2343, %v2346
    %v2348 = vsel %vm1286, %v2329, %v2347
    %v2350 = vshrl.u32 %v1689, 16
    %v2352 = vrot.slane %v2350, 3
    %v2353 = vshll.u32 %v1689, 16
    %v2355 = vrot.slane %v2353, 4
    %v2356 = vor.u32 %v2352, %v2355
    %v2357 = vsel %vm1286, %v2338, %v2356
    %v2359 = vshrl.u32 %v1690, 16
    %v2361 = vrot.slane %v2359, 3
    %v2362 = vshll.u32 %v1690, 16
    %v2364 = vrot.slane %v2362, 4
    %v2365 = vor.u32 %v2361, %v2364
    %v2366 = vsel %vm1286, %v2347, %v2365
    %v2368 = vshrl.u32 %v1691, 16
    %v2370 = vrot.slane %v2368, 3
    %v2371 = vshll.u32 %v1691, 16
    %v2373 = vrot.slane %v2371, 4
    %v2374 = vor.u32 %v2370, %v2373
    %v2375 = vsel %vm1286, %v2356, %v2374
    %v2408 = vunpack.c.l.b16 %v1692
    %v2409 = vunpack.c.l.b16 %v1693
    %v2410 = vunpack.c.l.b16 %v1694
    %v2411 = vunpack.c.l.b16 %v1695
    %v2412 = vunpack.c.l.b16 %v1696
    %v2413 = vunpack.c.l.b16 %v1697
    %v2414 = vunpack.c.l.b16 %v1698
    %v2415 = vunpack.c.l.b16 %v1699
    %v2416 = vunpack.c.l.b16 %v1700
    %v2417 = vunpack.c.l.b16 %v1701
    %v2418 = vunpack.c.l.b16 %v1702
    %v2419 = vunpack.c.l.b16 %v1703
    %v2420 = vunpack.c.l.b16 %v1704
    %v2421 = vunpack.c.l.b16 %v1705
    %v2422 = vunpack.c.l.b16 %v1706
    %v2423 = vunpack.c.l.b16 %v1707
    %v2424 = vunpack.c.l.b16 %v1708
    %v2425 = vunpack.c.l.b16 %v1709
    %v2426 = vunpack.c.l.b16 %v1710
    %v2427 = vunpack.c.l.b16 %v1711
    %v2428 = vunpack.c.l.b16 %v1712
    %v2429 = vunpack.c.l.b16 %v1713
    %v2430 = vunpack.c.l.b16 %v1714
    %v2431 = vunpack.c.l.b16 %v1715
    %v2432 = vpack.c.b16 %v2409, %v2408
    %v2433 = vpack.c.b16 %v2411, %v2410
    %v2434 = vpack.c.b16 %v2413, %v2412
    %v2435 = vpack.c.b16 %v2415, %v2414
    %v2436 = vpack.c.b16 %v2417, %v2416
    %v2437 = vpack.c.b16 %v2419, %v2418
    %v2438 = vpack.c.b16 %v2421, %v2420
    %v2439 = vpack.c.b16 %v2423, %v2422
    %v2440 = vpack.c.b16 %v2425, %v2424
    %v2441 = vpack.c.b16 %v2427, %v2426
    %v2442 = vpack.c.b16 %v2429, %v2428
    %v2443 = vpack.c.b16 %v2431, %v2430
    %v2457 = vsel %vm742, %v2249, 0
    %v2460 = vsel %vm742, %v2267, 0
    %v2463 = vsel %vm742, %v2285, 0
    %v2466 = vsel %vm742, %v2303, 0
    %v2469 = vsel %vm742, %v2321, 0
    %v2472 = vsel %vm742, %v2339, 0
    %v2475 = vsel %vm742, %v2357, 0
    %v2478 = vsel %vm742, %v2375, 0
    %2480 = vmatprep.subr.bf16.mxu0 0
    %2481 = vmatpush1.bf16.msra.mxu0 %v2432
    %2482 = vmatprep.subr.bf16.mxu0 0
    %2483 = vmatpush1.bf16.msra.mxu0 %v2433
    %2484 = vmatprep.subr.bf16.mxu0 0
    %2485 = vmatpush1.bf16.msra.mxu0 %v2434
    %2486 = vmatprep.subr.bf16.mxu0 0
    %2487 = vmatpush1.bf16.msra.mxu0 %v2435
    %2488 = vmatprep.subr.bf16.mxu0 0
    %2489 = vmatpush1.bf16.msra.mxu0 %v2436
    %2490 = vmatprep.subr.bf16.mxu0 0
    %2491 = vmatpush1.bf16.msra.mxu0 %v2437
    %2492 = vmatprep.subr.bf16.mxu0 0
    %2493 = vmatpush1.bf16.msra.mxu0 %v2438
    %2494 = vmatprep.subr.bf16.mxu0 0
    %2495 = vmatpush1.bf16.msra.mxu0 %v2439
    %2496 = vmatprep.subr.bf16.mxu0 0
    %2497 = vmatpush1.bf16.msra.mxu0 %v2440
    %2498 = vmatprep.subr.bf16.mxu0 0
    %2499 = vmatpush1.bf16.msra.mxu0 %v2441
    %2500 = vmatprep.subr.bf16.mxu0 0
    %2501 = vmatpush1.bf16.msra.mxu0 %v2442
    %2502 = vmatprep.subr.bf16.mxu0 0
    %2503 = vmatpush1.bf16.msra.mxu0 %v2443
    %2504 = vmatprep.subr.bf16.mxu0 0
    %2505 = vmatpush1.bf16.msra.mxu0 0
    %2506 = vmatprep.subr.bf16.mxu0 0
    %2507 = vmatpush1.bf16.msra.mxu0 0
    %2508 = vmatprep.subr.bf16.mxu0 0
    %2509 = vmatpush1.bf16.msra.mxu0 0
    %2510 = vmatprep.subr.bf16.mxu0 0
    %2511 = vmatpush1.bf16.msra.mxu0 0
    %2512 = vmatprep.mubr.bf16.mxu0 %v2457
    %2513 = vmatmul.mubr.bf16.gmra.mrb[0].mxu0 %v2232
    %v2514 = vpop.f32.mrb[0].mxu0
    %v2515 = vadd.f32 %v2154, %v2514
    %v2516 = vpop.f32.mrb[0].mxu0
    %v2517 = vpop.f32.mrb[0].mxu0
    %v2518 = vadd.f32 %v2157, %v2517
    %v2519 = vpop.f32.mrb[0].mxu0
    %2520 = vmatprep.mubr.bf16.mxu0 %v2460
    %2521 = vmatmul.mubr.bf16.gmra.mrb[0].mxu0 %v2258
    %v2522 = vpop.f32.mrb[0].mxu0
    %v2523 = vadd.f32 %v2162, %v2522
    %v2524 = vpop.f32.mrb[0].mxu0
    %v2525 = vpop.f32.mrb[0].mxu0
    %v2526 = vadd.f32 %v2165, %v2525
    %v2527 = vpop.f32.mrb[0].mxu0
    %2528 = vmatprep.mubr.bf16.mxu0 %v2463
    %2529 = vmatmul.mubr.bf16.gmra.mrb[0].mxu0 %v2276
    %v2530 = vpop.f32.mrb[0].mxu0
    %v2531 = vadd.f32 %v2170, %v2530
    %v2532 = vpop.f32.mrb[0].mxu0
    %v2533 = vpop.f32.mrb[0].mxu0
    %v2534 = vadd.f32 %v2173, %v2533
    %v2535 = vpop.f32.mrb[0].mxu0
    %2536 = vmatprep.mubr.bf16.mxu0 %v2466
    %2537 = vmatmul.mubr.bf16.gmra.mrb[0].mxu0 %v2294
    %v2538 = vpop.f32.mrb[0].mxu0
    %v2539 = vadd.f32 %v2178, %v2538
    %v2540 = vpop.f32.mrb[0].mxu0
    %v2541 = vpop.f32.mrb[0].mxu0
    %v2542 = vadd.f32 %v2181, %v2541
    %v2543 = vpop.f32.mrb[0].mxu0
    %2544 = vmatprep.mubr.bf16.mxu0 %v2469
    %2545 = vmatmul.mubr.bf16.gmra.mrb[0].mxu0 %v2312
    %v2546 = vpop.f32.mrb[0].mxu0
    %v2547 = vadd.f32 %v2186, %v2546
    %v2548 = vpop.f32.mrb[0].mxu0
    %v2549 = vpop.f32.mrb[0].mxu0
    %v2550 = vadd.f32 %v2189, %v2549
    %v2551 = vpop.f32.mrb[0].mxu0
    %2552 = vmatprep.mubr.bf16.mxu0 %v2472
    %2553 = vmatmul.mubr.bf16.gmra.mrb[0].mxu0 %v2330
    %v2554 = vpop.f32.mrb[0].mxu0
    %v2555 = vadd.f32 %v2194, %v2554
    %v2556 = vpop.f32.mrb[0].mxu0
    %v2557 = vpop.f32.mrb[0].mxu0
    %v2558 = vadd.f32 %v2197, %v2557
    %v2559 = vpop.f32.mrb[0].mxu0
    %2560 = vmatprep.mubr.bf16.mxu0 %v2475
    %2561 = vmatmul.mubr.bf16.gmra.mrb[0].mxu0 %v2348
    %v2562 = vpop.f32.mrb[0].mxu0
    %v2563 = vadd.f32 %v2202, %v2562
    %v2564 = vpop.f32.mrb[0].mxu0
    %v2565 = vpop.f32.mrb[0].mxu0
    %v2566 = vadd.f32 %v2205, %v2565
    %v2567 = vpop.f32.mrb[0].mxu0
    %2568 = vmatprep.mubr.bf16.mxu0 %v2478
    %2569 = vmatmul.mubr.bf16.gmra.mrb[0].mxu0 %v2366
    %v2570 = vpop.f32.mrb[0].mxu0
    %v2571 = vadd.f32 %v2210, %v2570
    %v2572 = vpop.f32.mrb[0].mxu0
    %v2573 = vpop.f32.mrb[0].mxu0
    %v2574 = vadd.f32 %v2213, %v2573
    %v2575 = vpop.f32.mrb[0].mxu0
    %2576 = vdwg.mxu0
    %v2577 = vld [vmem:[#allocation2 + $0x8] sm:$0xf8]
    %v2578 = vld [vmem:[#allocation2 + $0x48] sm:$0xf]
    %v2579 = vsel %vm1210, %v2577, 0
    %v2580 = vsel %vm1211, %v1075, 0
    %v2581 = vsel %vm1212, %v1076, 0
    %v2582 = vsel %vm1213, %v1077, 0
    %v2583 = vsel %vm1214, %v1078, 0
    %v2584 = vsel %vm1215, %v1079, 0
    %v2585 = vsel %vm1216, %v1080, 0
    %v2586 = vsel %vm1217, %v1717, 0
    %v2587 = vsel %vm1218, %v2578, 0
    %v2588 = vld [vmem:[#allocation2 + $0x8] sm:$0xf0]
    %v2589 = vld [vmem:[#allocation2 + $0x48] sm:$0x1f]
    %v2590 = vsel %vm1358, %v2588, 0
    %v2591 = vsel %vm1359, %v1075, 0
    %v2592 = vsel %vm1360, %v1076, 0
    %v2593 = vsel %vm1361, %v1077, 0
    %v2594 = vsel %vm1362, %v1078, 0
    %v2595 = vsel %vm1363, %v1079, 0
    %v2596 = vsel %vm1364, %v1080, 0
    %v2597 = vsel %vm1365, %v1717, 0
    %v2598 = vsel %vm1366, %v2589, 0
    %v2600 = vshrl.u32 %v2588, 16
    %v2602 = vshll.u32 %v2588, 16
    %v2604 = vrot.slane %v2602, 1
    %v2605 = vor.u32 %v2600, %v2604
    %v2606 = vsel %vm1376, %v2605, %v1395
    %v2608 = vshll.u32 %v2578, 16
    %v2610 = vrot.slane %v2608, 1
    %v2611 = vsel %vm1376, %v1809, %v2610
    %v2612 = vshrl.u32 %v2578, 16
    %v2614 = vor.u32 %v2612, %v2610
    %2615 = vrot.lane.b32.xlu0 %v2606, 64
    %v2616 = vpop.permute.xlu0 %2615
    %2617 = vrot.lane.b32.xlu0 %v2611, 64
    %v2618 = vpop.permute.xlu0 %2617
    %2619 = vrot.lane.b32.xlu0 %v2614, 64
    %v2620 = vpop.permute.xlu0 %2619
    %v2630 = vrot.slane %v2590, 1
    %v2631 = vrot.slane %v2591, 1
    %v2632 = vsel %vm1475, %v2630, %v2631
    %v2633 = vrot.slane %v2592, 1
    %v2634 = vsel %vm1475, %v2631, %v2633
    %v2635 = vrot.slane %v2593, 1
    %v2636 = vsel %vm1475, %v2633, %v2635
    %v2637 = vrot.slane %v2594, 1
    %v2638 = vsel %vm1475, %v2635, %v2637
    %v2639 = vrot.slane %v2595, 1
    %v2640 = vsel %vm1475, %v2637, %v2639
    %v2641 = vrot.slane %v2596, 1
    %v2642 = vsel %vm1475, %v2639, %v2641
    %v2643 = vrot.slane %v2597, 1
    %v2644 = vsel %vm1475, %v2641, %v2643
    %v2645 = vrot.slane %v2598, 1
    %v2646 = vsel %vm1475, %v2643, %v2645
    %v2658 = vsel %vm742, %v2579, %v2616
    %v2661 = vsel %vm742, %v2580, %v1453
    %v2664 = vsel %vm742, %v2581, %v1455
    %v2667 = vsel %vm742, %v2582, %v1457
    %v2670 = vsel %vm742, %v2583, %v1459
    %v2673 = vsel %vm742, %v2584, %v1461
    %v2676 = vsel %vm742, %v2585, %v1813
    %v2680 = vsel %vm742, %v2586, %v2618
    %v2684 = vsel %vm742, %v2587, %v2620
    %vm2686 = vmpackc.low %vm622, %vm622
    %vm2687 = vmpackc.low %vm623, %vm623
    %vm2688 = vmpackc.low %vm624, %vm624
    %vm2689 = vmpackc.low %vm625, %vm625
    %vm2690 = vmpackc.low %vm626, %vm626
    %vm2691 = vmpackc.low %vm627, %vm627
    %vm2692 = vmpackc.low %vm628, %vm628
    %vm2693 = vmpackc.low %vm629, %vm629
    %vm2694 = vmpackc.low %vm630, %vm630
    %vm2695 = vmpackc.low %vm631, %vm631
    %vm2696 = vmpackc.low %vm632, %vm632
    %vm2697 = vmpackc.low %vm633, %vm633
    %vm2698 = vmpackc.low %vm634, %vm634
    %vm2699 = vmpackc.low %vm635, %vm635
    %vm2700 = vmpackc.low %vm636, %vm636
    %vm2701 = vmpackc.low %vm637, %vm637
    %v2702 = vsel %vm2686, 65537, 0
    %v2703 = vsel %vm2687, 65537, 0
    %v2704 = vsel %vm2688, 65537, 0
    %v2705 = vsel %vm2689, 65537, 0
    %v2706 = vsel %vm2690, 65537, 0
    %v2707 = vsel %vm2691, 65537, 0
    %v2708 = vsel %vm2692, 65537, 0
    %v2709 = vsel %vm2693, 65537, 0
    %v2710 = vsel %vm2694, 65537, 0
    %v2711 = vsel %vm2695, 65537, 0
    %v2712 = vsel %vm2696, 65537, 0
    %v2713 = vsel %vm2697, 65537, 0
    %v2714 = vsel %vm2698, 65537, 0
    %v2715 = vsel %vm2699, 65537, 0
    %v2716 = vsel %vm2700, 65537, 0
    %v2717 = vsel %vm2701, 65537, 0
    %v2718 = vunpack.c.l.b16 %v2702
    %v2719 = vunpack.c.l.b16 %v2703
    %v2720 = vunpack.c.l.b16 %v2704
    %v2721 = vunpack.c.l.b16 %v2705
    %v2722 = vunpack.c.l.b16 %v2706
    %v2723 = vunpack.c.l.b16 %v2707
    %v2724 = vunpack.c.l.b16 %v2708
    %v2725 = vunpack.c.l.b16 %v2709
    %v2726 = vunpack.c.l.b16 %v2710
    %v2727 = vunpack.c.l.b16 %v2711
    %v2728 = vunpack.c.l.b16 %v2712
    %v2729 = vunpack.c.l.b16 %v2713
    %v2730 = vunpack.c.l.b16 %v2714
    %v2731 = vunpack.c.l.b16 %v2715
    %v2732 = vunpack.c.l.b16 %v2716
    %v2733 = vunpack.c.l.b16 %v2717
    %v2734 = vpack.c.b16 %v2719, %v2718
    %v2735 = vpack.c.b16 %v2721, %v2720
    %v2736 = vpack.c.b16 %v2723, %v2722
    %v2737 = vpack.c.b16 %v2725, %v2724
    %v2738 = vpack.c.b16 %v2727, %v2726
    %v2739 = vpack.c.b16 %v2729, %v2728
    %v2740 = vpack.c.b16 %v2731, %v2730
    %v2741 = vpack.c.b16 %v2733, %v2732
    %v2743 = vshrl.u32 %v2734, 16
    %v2745 = vrot.slane %v2743, 4
    %v2746 = vshll.u32 %v2734, 16
    %v2748 = vrot.slane %v2746, 5
    %v2749 = vor.u32 %v2745, %v2748
    %v2751 = vshrl.u32 %v2735, 16
    %v2753 = vrot.slane %v2751, 4
    %v2754 = vshll.u32 %v2735, 16
    %v2756 = vrot.slane %v2754, 5
    %v2757 = vor.u32 %v2753, %v2756
    %v2758 = vsel %vm1138, %v2749, %v2757
    %v2760 = vshrl.u32 %v2736, 16
    %v2762 = vrot.slane %v2760, 4
    %v2763 = vshll.u32 %v2736, 16
    %v2765 = vrot.slane %v2763, 5
    %v2766 = vor.u32 %v2762, %v2765
    %v2767 = vsel %vm1138, %v2757, %v2766
    %v2769 = vshrl.u32 %v2737, 16
    %v2771 = vrot.slane %v2769, 4
    %v2772 = vshll.u32 %v2737, 16
    %v2774 = vrot.slane %v2772, 5
    %v2775 = vor.u32 %v2771, %v2774
    %v2776 = vsel %vm1138, %v2766, %v2775
    %v2778 = vshrl.u32 %v2738, 16
    %v2780 = vrot.slane %v2778, 4
    %v2781 = vshll.u32 %v2738, 16
    %v2783 = vrot.slane %v2781, 5
    %v2784 = vor.u32 %v2780, %v2783
    %v2785 = vsel %vm1138, %v2775, %v2784
    %v2787 = vshrl.u32 %v2739, 16
    %v2789 = vrot.slane %v2787, 4
    %v2790 = vshll.u32 %v2739, 16
    %v2792 = vrot.slane %v2790, 5
    %v2793 = vor.u32 %v2789, %v2792
    %v2794 = vsel %vm1138, %v2784, %v2793
    %v2796 = vshrl.u32 %v2740, 16
    %v2798 = vrot.slane %v2796, 4
    %v2799 = vshll.u32 %v2740, 16
    %v2801 = vrot.slane %v2799, 5
    %v2802 = vor.u32 %v2798, %v2801
    %v2803 = vsel %vm1138, %v2793, %v2802
    %v2805 = vshrl.u32 %v2741, 16
    %v2807 = vrot.slane %v2805, 4
    %v2808 = vshll.u32 %v2741, 16
    %v2810 = vrot.slane %v2808, 5
    %v2811 = vor.u32 %v2807, %v2810
    %v2812 = vsel %vm1138, %v2802, %v2811
    %vm2813 = vcmp.ne.s16.totalorder %v2749, 0
    %vm2814 = vcmp.ne.s16.totalorder %v2758, 0
    %vm2815 = vcmp.ne.s16.totalorder %v2767, 0
    %vm2816 = vcmp.ne.s16.totalorder %v2776, 0
    %vm2817 = vcmp.ne.s16.totalorder %v2785, 0
    %vm2818 = vcmp.ne.s16.totalorder %v2794, 0
    %vm2819 = vcmp.ne.s16.totalorder %v2803, 0
    %vm2820 = vcmp.ne.s16.totalorder %v2812, 0
    %vm2821 = vcmp.ne.s16.totalorder %v2811, 0
    %v2822 = vsel %vm2813, %v2658, 0
    %v2823 = vsel %vm2813, %v2632, 0
    %v2824 = vsel %vm2814, %v2661, 0
    %v2825 = vsel %vm2814, %v2634, 0
    %v2826 = vsel %vm2815, %v2664, 0
    %v2827 = vsel %vm2815, %v2636, 0
    %v2828 = vsel %vm2816, %v2667, 0
    %v2829 = vsel %vm2816, %v2638, 0
    %v2830 = vsel %vm2817, %v2670, 0
    %v2831 = vsel %vm2817, %v2640, 0
    %v2832 = vsel %vm2818, %v2673, 0
    %v2833 = vsel %vm2818, %v2642, 0
    %v2834 = vsel %vm2819, %v2676, 0
    %v2835 = vsel %vm2819, %v2644, 0
    %v2836 = vsel %vm2820, %v2680, 0
    %v2837 = vsel %vm2820, %v2646, 0
    %v2838 = vsel %vm2821, %v2684, 0
    %v2839 = vsel %vm2821, %v2645, 0
    %s2840 = scalar_lea.vmem %s3, 192
    %v2841 = vld [vmem:[%s2840] sm:$0xf]
    %v2842 = vld [vmem:[%s2840 + $0x4] sm:$0xf]
    %v2843 = vld [vmem:[%s2840 + $0x8] sm:$0xf]
    %v2844 = vld [vmem:[%s2840 + $0xc] sm:$0xf]
    %v2845 = vld [vmem:[%s2840 + $0x10] sm:$0xf]
    %v2846 = vld [vmem:[%s2840 + $0x14] sm:$0xf]
    %v2847 = vld [vmem:[%s2840 + $0x18] sm:$0xf]
    %v2848 = vld [vmem:[%s2840 + $0x1c] sm:$0xf]
    %v2849 = vld [vmem:[%s2840 + $0x20] sm:$0xf]
    %v2850 = vld [vmem:[%s2840 + $0x24] sm:$0xf]
    %v2851 = vld [vmem:[%s2840 + $0x28] sm:$0xf]
    %v2852 = vld [vmem:[%s2840 + $0x2c] sm:$0xf]
    %v2853 = vld [vmem:[%s2840 + $0x30] sm:$0xf]
    %v2854 = vld [vmem:[%s2840 + $0x34] sm:$0xf]
    %v2855 = vld [vmem:[%s2840 + $0x38] sm:$0xf]
    %v2856 = vld [vmem:[%s2840 + $0x3c] sm:$0xf]
    %v2857 = vld [vmem:[%s2840 + $0x40] sm:$0xf]
    %v2858 = vld [vmem:[%s2840 + $0x44] sm:$0xf]
    %v2859 = vld [vmem:[%s2840 + $0x48] sm:$0xf]
    %v2860 = vld [vmem:[%s2840 + $0x4c] sm:$0xf]
    %v2861 = vld [vmem:[%s2840 + $0x50] sm:$0xf]
    %v2862 = vld [vmem:[%s2840 + $0x54] sm:$0xf]
    %v2863 = vld [vmem:[%s2840 + $0x58] sm:$0xf]
    %v2864 = vld [vmem:[%s2840 + $0x5c] sm:$0xf]
    %v2866 = vshrl.u32 %v2822, 16
    %v2868 = vrot.slane %v2866, 3
    %v2869 = vshll.u32 %v2822, 16
    %v2871 = vrot.slane %v2869, 4
    %v2872 = vor.u32 %v2868, %v2871
    %v2874 = vshrl.u32 %v2824, 16
    %v2876 = vrot.slane %v2874, 3
    %v2877 = vshll.u32 %v2824, 16
    %v2879 = vrot.slane %v2877, 4
    %v2880 = vor.u32 %v2876, %v2879
    %v2881 = vsel %vm1286, %v2872, %v2880
    %v2883 = vshrl.u32 %v2823, 16
    %v2885 = vrot.slane %v2883, 3
    %v2886 = vshll.u32 %v2823, 16
    %v2888 = vrot.slane %v2886, 4
    %v2889 = vor.u32 %v2885, %v2888
    %v2891 = vshrl.u32 %v2825, 16
    %v2893 = vrot.slane %v2891, 3
    %v2894 = vshll.u32 %v2825, 16
    %v2896 = vrot.slane %v2894, 4
    %v2897 = vor.u32 %v2893, %v2896
    %v2898 = vsel %vm1286, %v2889, %v2897
    %v2900 = vshrl.u32 %v2826, 16
    %v2902 = vrot.slane %v2900, 3
    %v2903 = vshll.u32 %v2826, 16
    %v2905 = vrot.slane %v2903, 4
    %v2906 = vor.u32 %v2902, %v2905
    %v2907 = vsel %vm1286, %v2880, %v2906
    %v2909 = vshrl.u32 %v2827, 16
    %v2911 = vrot.slane %v2909, 3
    %v2912 = vshll.u32 %v2827, 16
    %v2914 = vrot.slane %v2912, 4
    %v2915 = vor.u32 %v2911, %v2914
    %v2916 = vsel %vm1286, %v2897, %v2915
    %v2918 = vshrl.u32 %v2828, 16
    %v2920 = vrot.slane %v2918, 3
    %v2921 = vshll.u32 %v2828, 16
    %v2923 = vrot.slane %v2921, 4
    %v2924 = vor.u32 %v2920, %v2923
    %v2925 = vsel %vm1286, %v2906, %v2924
    %v2927 = vshrl.u32 %v2829, 16
    %v2929 = vrot.slane %v2927, 3
    %v2930 = vshll.u32 %v2829, 16
    %v2932 = vrot.slane %v2930, 4
    %v2933 = vor.u32 %v2929, %v2932
    %v2934 = vsel %vm1286, %v2915, %v2933
    %v2936 = vshrl.u32 %v2830, 16
    %v2938 = vrot.slane %v2936, 3
    %v2939 = vshll.u32 %v2830, 16
    %v2941 = vrot.slane %v2939, 4
    %v2942 = vor.u32 %v2938, %v2941
    %v2943 = vsel %vm1286, %v2924, %v2942
    %v2945 = vshrl.u32 %v2831, 16
    %v2947 = vrot.slane %v2945, 3
    %v2948 = vshll.u32 %v2831, 16
    %v2950 = vrot.slane %v2948, 4
    %v2951 = vor.u32 %v2947, %v2950
    %v2952 = vsel %vm1286, %v2933, %v2951
    %v2954 = vshrl.u32 %v2832, 16
    %v2956 = vrot.slane %v2954, 3
    %v2957 = vshll.u32 %v2832, 16
    %v2959 = vrot.slane %v2957, 4
    %v2960 = vor.u32 %v2956, %v2959
    %v2961 = vsel %vm1286, %v2942, %v2960
    %v2963 = vshrl.u32 %v2833, 16
    %v2965 = vrot.slane %v2963, 3
    %v2966 = vshll.u32 %v2833, 16
    %v2968 = vrot.slane %v2966, 4
    %v2969 = vor.u32 %v2965, %v2968
    %v2970 = vsel %vm1286, %v2951, %v2969
    %v2972 = vshrl.u32 %v2834, 16
    %v2974 = vrot.slane %v2972, 3
    %v2975 = vshll.u32 %v2834, 16
    %v2977 = vrot.slane %v2975, 4
    %v2978 = vor.u32 %v2974, %v2977
    %v2979 = vsel %vm1286, %v2960, %v2978
    %v2981 = vshrl.u32 %v2835, 16
    %v2983 = vrot.slane %v2981, 3
    %v2984 = vshll.u32 %v2835, 16
    %v2986 = vrot.slane %v2984, 4
    %v2987 = vor.u32 %v2983, %v2986
    %v2988 = vsel %vm1286, %v2969, %v2987
    %v2990 = vshrl.u32 %v2836, 16
    %v2992 = vrot.slane %v2990, 3
    %v2993 = vshll.u32 %v2836, 16
    %v2995 = vrot.slane %v2993, 4
    %v2996 = vor.u32 %v2992, %v2995
    %v2997 = vsel %vm1286, %v2978, %v2996
    %v2999 = vshrl.u32 %v2837, 16
    %v3001 = vrot.slane %v2999, 3
    %v3002 = vshll.u32 %v2837, 16
    %v3004 = vrot.slane %v3002, 4
    %v3005 = vor.u32 %v3001, %v3004
    %v3006 = vsel %vm1286, %v2987, %v3005
    %v3008 = vshrl.u32 %v2838, 16
    %v3010 = vrot.slane %v3008, 3
    %v3011 = vshll.u32 %v2838, 16
    %v3013 = vrot.slane %v3011, 4
    %v3014 = vor.u32 %v3010, %v3013
    %v3015 = vsel %vm1286, %v2996, %v3014
    %v3017 = vshrl.u32 %v2839, 16
    %v3019 = vrot.slane %v3017, 3
    %v3020 = vshll.u32 %v2839, 16
    %v3022 = vrot.slane %v3020, 4
    %v3023 = vor.u32 %v3019, %v3022
    %v3024 = vsel %vm1286, %v3005, %v3023
    %v3057 = vunpack.c.l.b16 %v2841
    %v3058 = vunpack.c.l.b16 %v2842
    %v3059 = vunpack.c.l.b16 %v2843
    %v3060 = vunpack.c.l.b16 %v2844
    %v3061 = vunpack.c.l.b16 %v2845
    %v3062 = vunpack.c.l.b16 %v2846
    %v3063 = vunpack.c.l.b16 %v2847
    %v3064 = vunpack.c.l.b16 %v2848
    %v3065 = vunpack.c.l.b16 %v2849
    %v3066 = vunpack.c.l.b16 %v2850
    %v3067 = vunpack.c.l.b16 %v2851
    %v3068 = vunpack.c.l.b16 %v2852
    %v3069 = vunpack.c.l.b16 %v2853
    %v3070 = vunpack.c.l.b16 %v2854
    %v3071 = vunpack.c.l.b16 %v2855
    %v3072 = vunpack.c.l.b16 %v2856
    %v3073 = vunpack.c.l.b16 %v2857
    %v3074 = vunpack.c.l.b16 %v2858
    %v3075 = vunpack.c.l.b16 %v2859
    %v3076 = vunpack.c.l.b16 %v2860
    %v3077 = vunpack.c.l.b16 %v2861
    %v3078 = vunpack.c.l.b16 %v2862
    %v3079 = vunpack.c.l.b16 %v2863
    %v3080 = vunpack.c.l.b16 %v2864
    %v3081 = vpack.c.b16 %v3058, %v3057
    %v3082 = vpack.c.b16 %v3060, %v3059
    %v3083 = vpack.c.b16 %v3062, %v3061
    %v3084 = vpack.c.b16 %v3064, %v3063
    %v3085 = vpack.c.b16 %v3066, %v3065
    %v3086 = vpack.c.b16 %v3068, %v3067
    %v3087 = vpack.c.b16 %v3070, %v3069
    %v3088 = vpack.c.b16 %v3072, %v3071
    %v3089 = vpack.c.b16 %v3074, %v3073
    %v3090 = vpack.c.b16 %v3076, %v3075
    %v3091 = vpack.c.b16 %v3078, %v3077
    %v3092 = vpack.c.b16 %v3080, %v3079
    %v3106 = vsel %vm742, %v2898, 0
    %v3109 = vsel %vm742, %v2916, 0
    %v3112 = vsel %vm742, %v2934, 0
    %v3115 = vsel %vm742, %v2952, 0
    %v3118 = vsel %vm742, %v2970, 0
    %v3121 = vsel %vm742, %v2988, 0
    %v3124 = vsel %vm742, %v3006, 0
    %v3127 = vsel %vm742, %v3024, 0
    %3129 = vmatprep.subr.bf16.mxu0 0
    %3130 = vmatpush1.bf16.msra.mxu0 %v3081
    %3131 = vmatprep.subr.bf16.mxu0 0
    %3132 = vmatpush1.bf16.msra.mxu0 %v3082
    %3133 = vmatprep.subr.bf16.mxu0 0
    %3134 = vmatpush1.bf16.msra.mxu0 %v3083
    %3135 = vmatprep.subr.bf16.mxu0 0
    %3136 = vmatpush1.bf16.msra.mxu0 %v3084
    %3137 = vmatprep.subr.bf16.mxu0 0
    %3138 = vmatpush1.bf16.msra.mxu0 %v3085
    %3139 = vmatprep.subr.bf16.mxu0 0
    %3140 = vmatpush1.bf16.msra.mxu0 %v3086
    %3141 = vmatprep.subr.bf16.mxu0 0
    %3142 = vmatpush1.bf16.msra.mxu0 %v3087
    %3143 = vmatprep.subr.bf16.mxu0 0
    %3144 = vmatpush1.bf16.msra.mxu0 %v3088
    %3145 = vmatprep.subr.bf16.mxu0 0
    %3146 = vmatpush1.bf16.msra.mxu0 %v3089
    %3147 = vmatprep.subr.bf16.mxu0 0
    %3148 = vmatpush1.bf16.msra.mxu0 %v3090
    %3149 = vmatprep.subr.bf16.mxu0 0
    %3150 = vmatpush1.bf16.msra.mxu0 %v3091
    %3151 = vmatprep.subr.bf16.mxu0 0
    %3152 = vmatpush1.bf16.msra.mxu0 %v3092
    %3153 = vmatprep.subr.bf16.mxu0 0
    %3154 = vmatpush1.bf16.msra.mxu0 0
    %3155 = vmatprep.subr.bf16.mxu0 0
    %3156 = vmatpush1.bf16.msra.mxu0 0
    %3157 = vmatprep.subr.bf16.mxu0 0
    %3158 = vmatpush1.bf16.msra.mxu0 0
    %3159 = vmatprep.subr.bf16.mxu0 0
    %3160 = vmatpush1.bf16.msra.mxu0 0
    %3161 = vmatprep.mubr.bf16.mxu0 %v3106
    %3162 = vmatmul.mubr.bf16.gmra.mrb[0].mxu0 %v2881
    %v3163 = vpop.f32.mrb[0].mxu0
    %v3164 = vadd.f32 0.0, %v3163
    %v3165 = vpop.f32.mrb[0].mxu0
    %v3166 = vpop.f32.mrb[0].mxu0
    %v3167 = vadd.f32 0.0, %v3166
    %v3168 = vpop.f32.mrb[0].mxu0
    %3169 = vmatprep.mubr.bf16.mxu0 %v3109
    %3170 = vmatmul.mubr.bf16.gmra.mrb[0].mxu0 %v2907
    %v3171 = vpop.f32.mrb[0].mxu0
    %v3172 = vadd.f32 0.0, %v3171
    %v3173 = vpop.f32.mrb[0].mxu0
    %v3174 = vpop.f32.mrb[0].mxu0
    %v3175 = vadd.f32 0.0, %v3174
    %v3176 = vpop.f32.mrb[0].mxu0
    %3177 = vmatprep.mubr.bf16.mxu0 %v3112
    %3178 = vmatmul.mubr.bf16.gmra.mrb[0].mxu0 %v2925
    %v3179 = vpop.f32.mrb[0].mxu0
    %v3180 = vadd.f32 0.0, %v3179
    %v3181 = vpop.f32.mrb[0].mxu0
    %v3182 = vpop.f32.mrb[0].mxu0
    %v3183 = vadd.f32 0.0, %v3182
    %v3184 = vpop.f32.mrb[0].mxu0
    %3185 = vmatprep.mubr.bf16.mxu0 %v3115
    %3186 = vmatmul.mubr.bf16.gmra.mrb[0].mxu0 %v2943
    %v3187 = vpop.f32.mrb[0].mxu0
    %v3188 = vadd.f32 0.0, %v3187
    %v3189 = vpop.f32.mrb[0].mxu0
    %v3190 = vpop.f32.mrb[0].mxu0
    %v3191 = vadd.f32 0.0, %v3190
    %v3192 = vpop.f32.mrb[0].mxu0
    %3193 = vmatprep.mubr.bf16.mxu0 %v3118
    %3194 = vmatmul.mubr.bf16.gmra.mrb[0].mxu0 %v2961
    %v3195 = vpop.f32.mrb[0].mxu0
    %v3196 = vadd.f32 0.0, %v3195
    %v3197 = vpop.f32.mrb[0].mxu0
    %v3198 = vpop.f32.mrb[0].mxu0
    %v3199 = vadd.f32 0.0, %v3198
    %v3200 = vpop.f32.mrb[0].mxu0
    %3201 = vmatprep.mubr.bf16.mxu0 %v3121
    %3202 = vmatmul.mubr.bf16.gmra.mrb[0].mxu0 %v2979
    %v3203 = vpop.f32.mrb[0].mxu0
    %v3204 = vadd.f32 0.0, %v3203
    %v3205 = vpop.f32.mrb[0].mxu0
    %v3206 = vpop.f32.mrb[0].mxu0
    %v3207 = vadd.f32 0.0, %v3206
    %v3208 = vpop.f32.mrb[0].mxu0
    %3209 = vmatprep.mubr.bf16.mxu0 %v3124
    %3210 = vmatmul.mubr.bf16.gmra.mrb[0].mxu0 %v2997
    %v3211 = vpop.f32.mrb[0].mxu0
    %v3212 = vadd.f32 0.0, %v3211
    %v3213 = vpop.f32.mrb[0].mxu0
    %v3214 = vpop.f32.mrb[0].mxu0
    %v3215 = vadd.f32 0.0, %v3214
    %v3216 = vpop.f32.mrb[0].mxu0
    %3217 = vmatprep.mubr.bf16.mxu0 %v3127
    %3218 = vmatmul.mubr.bf16.gmra.mrb[0].mxu0 %v3015
    %v3219 = vpop.f32.mrb[0].mxu0
    %v3220 = vadd.f32 0.0, %v3219
    %v3221 = vpop.f32.mrb[0].mxu0
    %v3222 = vpop.f32.mrb[0].mxu0
    %v3223 = vadd.f32 0.0, %v3222
    %v3224 = vpop.f32.mrb[0].mxu0
    %3225 = vdwg.mxu0
    %v3226 = vadd.f32 %v2515, %v3164
    %v3227 = vadd.f32 %v2518, %v3167
    %v3228 = vadd.f32 %v2523, %v3172
    %v3229 = vadd.f32 %v2526, %v3175
    %v3230 = vadd.f32 %v2531, %v3180
    %v3231 = vadd.f32 %v2534, %v3183
    %v3232 = vadd.f32 %v2539, %v3188
    %v3233 = vadd.f32 %v2542, %v3191
    %v3234 = vadd.f32 %v2547, %v3196
    %v3235 = vadd.f32 %v2550, %v3199
    %v3236 = vadd.f32 %v2555, %v3204
    %v3237 = vadd.f32 %v2558, %v3207
    %v3238 = vadd.f32 %v2563, %v3212
    %v3239 = vadd.f32 %v2566, %v3215
    %v3240 = vadd.f32 %v2571, %v3220
    %v3241 = vadd.f32 %v2574, %v3223
    %v3242 = vmax.f32 %v3226, 0.0
    %v3243 = vmax.f32 %v3227, 0.0
    %v3244 = vmax.f32 %v3228, 0.0
    %v3245 = vmax.f32 %v3229, 0.0
    %v3246 = vmax.f32 %v3230, 0.0
    %v3247 = vmax.f32 %v3231, 0.0
    %v3248 = vmax.f32 %v3232, 0.0
    %v3249 = vmax.f32 %v3233, 0.0
    %v3250 = vmax.f32 %v3234, 0.0
    %v3251 = vmax.f32 %v3235, 0.0
    %v3252 = vmax.f32 %v3236, 0.0
    %v3253 = vmax.f32 %v3237, 0.0
    %v3254 = vmax.f32 %v3238, 0.0
    %v3255 = vmax.f32 %v3239, 0.0
    %v3256 = vmax.f32 %v3240, 0.0
    %v3257 = vmax.f32 %v3241, 0.0
    %v3258 = vpack.c.bf16 %v3243, %v3242
    %v3259 = vpack.c.bf16 %v3245, %v3244
    %v3260 = vpack.c.bf16 %v3247, %v3246
    %v3261 = vpack.c.bf16 %v3249, %v3248
    %v3262 = vpack.c.bf16 %v3251, %v3250
    %v3263 = vpack.c.bf16 %v3253, %v3252
    %v3264 = vpack.c.bf16 %v3255, %v3254
    %v3265 = vpack.c.bf16 %v3257, %v3256
    %v3266 = vld [vmem:[%s4] sm:$0xff]
    %v3267 = vld [vmem:[%s4 + $0x8] sm:$0xff]
    %v3268 = vld [vmem:[%s4 + $0x10] sm:$0xff]
    %v3269 = vld [vmem:[%s4 + $0x18] sm:$0xff]
    %v3270 = vld [vmem:[%s4 + $0x20] sm:$0xff]
    %v3271 = vld [vmem:[%s4 + $0x28] sm:$0xff]
    %v3272 = vld [vmem:[%s4 + $0x30] sm:$0xff]
    %v3273 = vld [vmem:[%s4 + $0x38] sm:$0xff]
    %v3274 = vld [vmem:[#allocation3] sm:$0xff]
    %v3275 = vld [vmem:[#allocation3 + $0x8] sm:$0xff]
    %v3276 = vld [vmem:[#allocation3 + $0x10] sm:$0xff]
    %v3277 = vld [vmem:[#allocation3 + $0x18] sm:$0xff]
    %v3278 = vld [vmem:[#allocation3 + $0x20] sm:$0xff]
    %v3279 = vld [vmem:[#allocation3 + $0x28] sm:$0xff]
    %v3280 = vld [vmem:[#allocation3 + $0x30] sm:$0xff]
    %v3281 = vld [vmem:[#allocation3 + $0x38] sm:$0xff]
    %v3282 = vld [vmem:[#allocation3 + $0x40] sm:$0xff]
    %v3283 = vld [vmem:[#allocation3 + $0x48] sm:$0xff]
    %v3284 = vld [vmem:[#allocation3 + $0x50] sm:$0xff]
    %v3285 = vld [vmem:[#allocation3 + $0x58] sm:$0xff]
    %v3286 = vld [vmem:[#allocation3 + $0x60] sm:$0xff]
    %v3287 = vld [vmem:[#allocation3 + $0x68] sm:$0xff]
    %v3288 = vld [vmem:[#allocation3 + $0x70] sm:$0xff]
    %v3289 = vld [vmem:[#allocation3 + $0x78] sm:$0xff]
    %v3290 = vld [vmem:[#allocation3 + $0x80] sm:$0xff]
    %v3291 = vld [vmem:[#allocation3 + $0x88] sm:$0xff]
    %v3292 = vld [vmem:[#allocation3 + $0x90] sm:$0xff]
    %v3293 = vld [vmem:[#allocation3 + $0x98] sm:$0xff]
    %v3294 = vld [vmem:[#allocation3 + $0xa0] sm:$0xff]
    %v3295 = vld [vmem:[#allocation3 + $0xa8] sm:$0xff]
    %v3296 = vld [vmem:[#allocation3 + $0xb0] sm:$0xff]
    %v3297 = vld [vmem:[#allocation3 + $0xb8] sm:$0xff]
    %v3298 = vld [vmem:[#allocation3 + $0xc0] sm:$0xff]
    %v3299 = vld [vmem:[#allocation3 + $0xc8] sm:$0xff]
    %v3300 = vld [vmem:[#allocation3 + $0xd0] sm:$0xff]
    %v3301 = vld [vmem:[#allocation3 + $0xd8] sm:$0xff]
    %v3302 = vld [vmem:[#allocation3 + $0xe0] sm:$0xff]
    %v3303 = vld [vmem:[#allocation3 + $0xe8] sm:$0xff]
    %v3304 = vld [vmem:[#allocation3 + $0xf0] sm:$0xff]
    %v3305 = vld [vmem:[#allocation3 + $0xf8] sm:$0xff]
    %v3314 = vunpack.c.l.b16 %v3266
    %v3315 = vunpack.c.h.b16 %v3266
    %v3316 = vunpack.c.l.b16 %v3267
    %v3317 = vunpack.c.h.b16 %v3267
    %v3318 = vunpack.c.l.b16 %v3268
    %v3319 = vunpack.c.h.b16 %v3268
    %v3320 = vunpack.c.l.b16 %v3269
    %v3321 = vunpack.c.h.b16 %v3269
    %v3322 = vunpack.c.l.b16 %v3270
    %v3323 = vunpack.c.h.b16 %v3270
    %v3324 = vunpack.c.l.b16 %v3271
    %v3325 = vunpack.c.h.b16 %v3271
    %v3326 = vunpack.c.l.b16 %v3272
    %v3327 = vunpack.c.h.b16 %v3272
    %v3328 = vunpack.c.l.b16 %v3273
    %v3329 = vunpack.c.h.b16 %v3273
    %v3330 = vpack.c.b16 %v3316, %v3314
    %v3331 = vpack.c.b16 %v3317, %v3315
    %v3332 = vpack.c.b16 %v3320, %v3318
    %v3333 = vpack.c.b16 %v3321, %v3319
    %v3334 = vpack.c.b16 %v3324, %v3322
    %v3335 = vpack.c.b16 %v3325, %v3323
    %v3336 = vpack.c.b16 %v3328, %v3326
    %v3337 = vpack.c.b16 %v3329, %v3327
    %v3347 = vsel %vm742, %v3258, 0
    %v3350 = vsel %vm742, %v3259, 0
    %v3353 = vsel %vm742, %v3260, 0
    %v3356 = vsel %vm742, %v3261, 0
    %v3359 = vsel %vm742, %v3262, 0
    %v3362 = vsel %vm742, %v3263, 0
    %v3365 = vsel %vm742, %v3264, 0
    %v3368 = vsel %vm742, %v3265, 0
    %3370 = vmatprep.subr.bf16.mxu0 %v3331
    %3371 = vmatpush1.bf16.msra.mxu0 %v3330
    %3372 = vmatprep.subr.bf16.mxu0 %v3333
    %3373 = vmatpush1.bf16.msra.mxu0 %v3332
    %3374 = vmatprep.subr.bf16.mxu0 %v3335
    %3375 = vmatpush1.bf16.msra.mxu0 %v3334
    %3376 = vmatprep.subr.bf16.mxu0 %v3337
    %3377 = vmatpush1.bf16.msra.mxu0 %v3336
    %3378 = vmatprep.subr.bf16.mxu0 0
    %3379 = vmatpush1.bf16.msra.mxu0 0
    %3380 = vmatprep.subr.bf16.mxu0 0
    %3381 = vmatpush1.bf16.msra.mxu0 0
    %3382 = vmatprep.subr.bf16.mxu0 0
    %3383 = vmatpush1.bf16.msra.mxu0 0
    %3384 = vmatprep.subr.bf16.mxu0 0
    %3385 = vmatpush1.bf16.msra.mxu0 0
    %3386 = vmatprep.subr.bf16.mxu0 0
    %3387 = vmatpush1.bf16.msra.mxu0 0
    %3388 = vmatprep.subr.bf16.mxu0 0
    %3389 = vmatpush1.bf16.msra.mxu0 0
    %3390 = vmatprep.subr.bf16.mxu0 0
    %3391 = vmatpush1.bf16.msra.mxu0 0
    %3392 = vmatprep.subr.bf16.mxu0 0
    %3393 = vmatpush1.bf16.msra.mxu0 0
    %3394 = vmatprep.subr.bf16.mxu0 0
    %3395 = vmatpush1.bf16.msra.mxu0 0
    %3396 = vmatprep.subr.bf16.mxu0 0
    %3397 = vmatpush1.bf16.msra.mxu0 0
    %3398 = vmatprep.subr.bf16.mxu0 0
    %3399 = vmatpush1.bf16.msra.mxu0 0
    %3400 = vmatprep.subr.bf16.mxu0 0
    %3401 = vmatpush1.bf16.msra.mxu0 0
    %3402 = vmatprep.mubr.bf16.mxu0 0
    %3403 = vmatmul.mubr.bf16.gmra.mrb[0].mxu0 %v3347
    %v3404 = vpop.f32.mrb[0].mxu0
    %v3405 = vadd.f32 %v3274, %v3404
    %v3406 = vpop.f32.mrb[0].mxu0
    %v3407 = vadd.f32 %v3275, %v3406
    %v3408 = vpop.f32.mrb[0].mxu0
    %v3409 = vadd.f32 %v3276, %v3408
    %v3410 = vpop.f32.mrb[0].mxu0
    %v3411 = vadd.f32 %v3277, %v3410
    %3412 = vmatprep.mubr.bf16.mxu0 0
    %3413 = vmatmul.mubr.bf16.gmra.mrb[0].mxu0 %v3350
    %v3414 = vpop.f32.mrb[0].mxu0
    %v3415 = vadd.f32 %v3278, %v3414
    %v3416 = vpop.f32.mrb[0].mxu0
    %v3417 = vadd.f32 %v3279, %v3416
    %v3418 = vpop.f32.mrb[0].mxu0
    %v3419 = vadd.f32 %v3280, %v3418
    %v3420 = vpop.f32.mrb[0].mxu0
    %v3421 = vadd.f32 %v3281, %v3420
    %3422 = vmatprep.mubr.bf16.mxu0 0
    %3423 = vmatmul.mubr.bf16.gmra.mrb[0].mxu0 %v3353
    %v3424 = vpop.f32.mrb[0].mxu0
    %v3425 = vadd.f32 %v3282, %v3424
    %v3426 = vpop.f32.mrb[0].mxu0
    %v3427 = vadd.f32 %v3283, %v3426
    %v3428 = vpop.f32.mrb[0].mxu0
    %v3429 = vadd.f32 %v3284, %v3428
    %v3430 = vpop.f32.mrb[0].mxu0
    %v3431 = vadd.f32 %v3285, %v3430
    %3432 = vmatprep.mubr.bf16.mxu0 0
    %3433 = vmatmul.mubr.bf16.gmra.mrb[0].mxu0 %v3356
    %v3434 = vpop.f32.mrb[0].mxu0
    %v3435 = vadd.f32 %v3286, %v3434
    %v3436 = vpop.f32.mrb[0].mxu0
    %v3437 = vadd.f32 %v3287, %v3436
    %v3438 = vpop.f32.mrb[0].mxu0
    %v3439 = vadd.f32 %v3288, %v3438
    %v3440 = vpop.f32.mrb[0].mxu0
    %v3441 = vadd.f32 %v3289, %v3440
    %3442 = vmatprep.mubr.bf16.mxu0 0
    %3443 = vmatmul.mubr.bf16.gmra.mrb[0].mxu0 %v3359
    %v3444 = vpop.f32.mrb[0].mxu0
    %v3445 = vadd.f32 %v3290, %v3444
    %v3446 = vpop.f32.mrb[0].mxu0
    %v3447 = vadd.f32 %v3291, %v3446
    %v3448 = vpop.f32.mrb[0].mxu0
    %v3449 = vadd.f32 %v3292, %v3448
    %v3450 = vpop.f32.mrb[0].mxu0
    %v3451 = vadd.f32 %v3293, %v3450
    %3452 = vmatprep.mubr.bf16.mxu0 0
    %3453 = vmatmul.mubr.bf16.gmra.mrb[0].mxu0 %v3362
    %v3454 = vpop.f32.mrb[0].mxu0
    %v3455 = vadd.f32 %v3294, %v3454
    %v3456 = vpop.f32.mrb[0].mxu0
    %v3457 = vadd.f32 %v3295, %v3456
    %v3458 = vpop.f32.mrb[0].mxu0
    %v3459 = vadd.f32 %v3296, %v3458
    %v3460 = vpop.f32.mrb[0].mxu0
    %v3461 = vadd.f32 %v3297, %v3460
    %3462 = vmatprep.mubr.bf16.mxu0 0
    %3463 = vmatmul.mubr.bf16.gmra.mrb[0].mxu0 %v3365
    %v3464 = vpop.f32.mrb[0].mxu0
    %v3465 = vadd.f32 %v3298, %v3464
    %v3466 = vpop.f32.mrb[0].mxu0
    %v3467 = vadd.f32 %v3299, %v3466
    %v3468 = vpop.f32.mrb[0].mxu0
    %v3469 = vadd.f32 %v3300, %v3468
    %v3470 = vpop.f32.mrb[0].mxu0
    %v3471 = vadd.f32 %v3301, %v3470
    %3472 = vmatprep.mubr.bf16.mxu0 0
    %3473 = vmatmul.mubr.bf16.gmra.mrb[0].mxu0 %v3368
    %v3474 = vpop.f32.mrb[0].mxu0
    %v3475 = vadd.f32 %v3302, %v3474
    %v3476 = vpop.f32.mrb[0].mxu0
    %v3477 = vadd.f32 %v3303, %v3476
    %v3478 = vpop.f32.mrb[0].mxu0
    %v3479 = vadd.f32 %v3304, %v3478
    %v3480 = vpop.f32.mrb[0].mxu0
    %v3481 = vadd.f32 %v3305, %v3480
    %3482 = vdwg.mxu0
    %v3483 = vmax.f32 %v3405, 0.0
    %v3484 = vmax.f32 %v3407, 0.0
    %v3485 = vmax.f32 %v3409, 0.0
    %v3486 = vmax.f32 %v3411, 0.0
    %v3487 = vmax.f32 %v3415, 0.0
    %v3488 = vmax.f32 %v3417, 0.0
    %v3489 = vmax.f32 %v3419, 0.0
    %v3490 = vmax.f32 %v3421, 0.0
    %v3491 = vmax.f32 %v3425, 0.0
    %v3492 = vmax.f32 %v3427, 0.0
    %v3493 = vmax.f32 %v3429, 0.0
    %v3494 = vmax.f32 %v3431, 0.0
    %v3495 = vmax.f32 %v3435, 0.0
    %v3496 = vmax.f32 %v3437, 0.0
    %v3497 = vmax.f32 %v3439, 0.0
    %v3498 = vmax.f32 %v3441, 0.0
    %v3499 = vmax.f32 %v3445, 0.0
    %v3500 = vmax.f32 %v3447, 0.0
    %v3501 = vmax.f32 %v3449, 0.0
    %v3502 = vmax.f32 %v3451, 0.0
    %v3503 = vmax.f32 %v3455, 0.0
    %v3504 = vmax.f32 %v3457, 0.0
    %v3505 = vmax.f32 %v3459, 0.0
    %v3506 = vmax.f32 %v3461, 0.0
    %v3507 = vmax.f32 %v3465, 0.0
    %v3508 = vmax.f32 %v3467, 0.0
    %v3509 = vmax.f32 %v3469, 0.0
    %v3510 = vmax.f32 %v3471, 0.0
    %v3511 = vmax.f32 %v3475, 0.0
    %v3512 = vmax.f32 %v3477, 0.0
    %v3513 = vmax.f32 %v3479, 0.0
    %v3514 = vmax.f32 %v3481, 0.0
    %3515 = vst [vmem:[#allocation3] sm:$0xff] %v3483
    %3516 = vst [vmem:[#allocation3 + $0x8] sm:$0xff] %v3484
    %3517 = vst [vmem:[#allocation3 + $0x10] sm:$0xff] %v3485
    %3518 = vst [vmem:[#allocation3 + $0x18] sm:$0xff] %v3486
    %3519 = vst [vmem:[#allocation3 + $0x20] sm:$0xff] %v3487
    %3520 = vst [vmem:[#allocation3 + $0x28] sm:$0xff] %v3488
    %3521 = vst [vmem:[#allocation3 + $0x30] sm:$0xff] %v3489
    %3522 = vst [vmem:[#allocation3 + $0x38] sm:$0xff] %v3490
    %3523 = vst [vmem:[#allocation3 + $0x40] sm:$0xff] %v3491
    %3524 = vst [vmem:[#allocation3 + $0x48] sm:$0xff] %v3492
    %3525 = vst [vmem:[#allocation3 + $0x50] sm:$0xff] %v3493
    %3526 = vst [vmem:[#allocation3 + $0x58] sm:$0xff] %v3494
    %3527 = vst [vmem:[#allocation3 + $0x60] sm:$0xff] %v3495
    %3528 = vst [vmem:[#allocation3 + $0x68] sm:$0xff] %v3496
    %3529 = vst [vmem:[#allocation3 + $0x70] sm:$0xff] %v3497
    %3530 = vst [vmem:[#allocation3 + $0x78] sm:$0xff] %v3498
    %3531 = vst [vmem:[#allocation3 + $0x80] sm:$0xff] %v3499
    %3532 = vst [vmem:[#allocation3 + $0x88] sm:$0xff] %v3500
    %3533 = vst [vmem:[#allocation3 + $0x90] sm:$0xff] %v3501
    %3534 = vst [vmem:[#allocation3 + $0x98] sm:$0xff] %v3502
    %3535 = vst [vmem:[#allocation3 + $0xa0] sm:$0xff] %v3503
    %3536 = vst [vmem:[#allocation3 + $0xa8] sm:$0xff] %v3504
    %3537 = vst [vmem:[#allocation3 + $0xb0] sm:$0xff] %v3505
    %3538 = vst [vmem:[#allocation3 + $0xb8] sm:$0xff] %v3506
    %3539 = vst [vmem:[#allocation3 + $0xc0] sm:$0xff] %v3507
    %3540 = vst [vmem:[#allocation3 + $0xc8] sm:$0xff] %v3508
    %3541 = vst [vmem:[#allocation3 + $0xd0] sm:$0xff] %v3509
    %3542 = vst [vmem:[#allocation3 + $0xd8] sm:$0xff] %v3510
    %3543 = vst [vmem:[#allocation3 + $0xe0] sm:$0xff] %v3511
    %3544 = vst [vmem:[#allocation3 + $0xe8] sm:$0xff] %v3512
    %3545 = vst [vmem:[#allocation3 + $0xf0] sm:$0xff] %v3513
    %3546 = vst [vmem:[#allocation3 + $0xf8] sm:$0xff] %v3514
    %v3547 = vld [vmem:[#allocation3] sm:$0xff]
    %v3548 = vld [vmem:[#allocation3 + $0x8] sm:$0xff]
    %v3549 = vld [vmem:[#allocation3 + $0x10] sm:$0xff]
    %v3550 = vld [vmem:[#allocation3 + $0x18] sm:$0xff]
    %v3551 = vld [vmem:[#allocation3 + $0x20] sm:$0xff]
    %v3552 = vld [vmem:[#allocation3 + $0x28] sm:$0xff]
    %v3553 = vld [vmem:[#allocation3 + $0x30] sm:$0xff]
    %v3554 = vld [vmem:[#allocation3 + $0x38] sm:$0xff]
    %v3555 = vld [vmem:[#allocation3 + $0x40] sm:$0xff]
    %v3556 = vld [vmem:[#allocation3 + $0x48] sm:$0xff]
    %v3557 = vld [vmem:[#allocation3 + $0x50] sm:$0xff]
    %v3558 = vld [vmem:[#allocation3 + $0x58] sm:$0xff]
    %v3559 = vld [vmem:[#allocation3 + $0x60] sm:$0xff]
    %v3560 = vld [vmem:[#allocation3 + $0x68] sm:$0xff]
    %v3561 = vld [vmem:[#allocation3 + $0x70] sm:$0xff]
    %v3562 = vld [vmem:[#allocation3 + $0x78] sm:$0xff]
    %v3563 = vld [vmem:[#allocation3 + $0x80] sm:$0xff]
    %v3564 = vld [vmem:[#allocation3 + $0x88] sm:$0xff]
    %v3565 = vld [vmem:[#allocation3 + $0x90] sm:$0xff]
    %v3566 = vld [vmem:[#allocation3 + $0x98] sm:$0xff]
    %v3567 = vld [vmem:[#allocation3 + $0xa0] sm:$0xff]
    %v3568 = vld [vmem:[#allocation3 + $0xa8] sm:$0xff]
    %v3569 = vld [vmem:[#allocation3 + $0xb0] sm:$0xff]
    %v3570 = vld [vmem:[#allocation3 + $0xb8] sm:$0xff]
    %v3571 = vld [vmem:[#allocation3 + $0xc0] sm:$0xff]
    %v3572 = vld [vmem:[#allocation3 + $0xc8] sm:$0xff]
    %v3573 = vld [vmem:[#allocation3 + $0xd0] sm:$0xff]
    %v3574 = vld [vmem:[#allocation3 + $0xd8] sm:$0xff]
    %v3575 = vld [vmem:[#allocation3 + $0xe0] sm:$0xff]
    %v3576 = vld [vmem:[#allocation3 + $0xe8] sm:$0xff]
    %v3577 = vld [vmem:[#allocation3 + $0xf0] sm:$0xff]
    %v3578 = vld [vmem:[#allocation3 + $0xf8] sm:$0xff]
    %v3579 = vpack.c.bf16 %v3549, %v3547
    %v3580 = vpack.c.bf16 %v3550, %v3548
    %v3581 = vpack.c.bf16 %v3553, %v3551
    %v3582 = vpack.c.bf16 %v3554, %v3552
    %v3583 = vpack.c.bf16 %v3557, %v3555
    %v3584 = vpack.c.bf16 %v3558, %v3556
    %v3585 = vpack.c.bf16 %v3561, %v3559
    %v3586 = vpack.c.bf16 %v3562, %v3560
    %v3587 = vpack.c.bf16 %v3565, %v3563
    %v3588 = vpack.c.bf16 %v3566, %v3564
    %v3589 = vpack.c.bf16 %v3569, %v3567
    %v3590 = vpack.c.bf16 %v3570, %v3568
    %v3591 = vpack.c.bf16 %v3573, %v3571
    %v3592 = vpack.c.bf16 %v3574, %v3572
    %v3593 = vpack.c.bf16 %v3577, %v3575
    %v3594 = vpack.c.bf16 %v3578, %v3576
    %v3595 = vld [vmem:[%s5] sm:$0xf]
    %v3596 = vld [vmem:[%s5 + $0x4] sm:$0xf]
    %v3597 = vld [vmem:[%s5 + $0x8] sm:$0xf]
    %v3598 = vld [vmem:[%s5 + $0xc] sm:$0xf]
    %v3599 = vld [vmem:[%s5 + $0x10] sm:$0xf]
    %v3600 = vld [vmem:[%s5 + $0x14] sm:$0xf]
    %v3601 = vld [vmem:[%s5 + $0x18] sm:$0xf]
    %v3602 = vld [vmem:[%s5 + $0x1c] sm:$0xf]
    %v3603 = vld [vmem:[%s5 + $0x20] sm:$0xf]
    %v3604 = vld [vmem:[%s5 + $0x24] sm:$0xf]
    %v3605 = vld [vmem:[%s5 + $0x28] sm:$0xf]
    %v3606 = vld [vmem:[%s5 + $0x2c] sm:$0xf]
    %v3607 = vld [vmem:[%s5 + $0x30] sm:$0xf]
    %v3608 = vld [vmem:[%s5 + $0x34] sm:$0xf]
    %v3609 = vld [vmem:[%s5 + $0x38] sm:$0xf]
    %v3610 = vld [vmem:[%s5 + $0x3c] sm:$0xf]
    %v3611 = vld [vmem:[%s5 + $0x40] sm:$0xf]
    %v3612 = vld [vmem:[%s5 + $0x44] sm:$0xf]
    %v3613 = vld [vmem:[%s5 + $0x48] sm:$0xf]
    %v3614 = vld [vmem:[%s5 + $0x4c] sm:$0xf]
    %v3615 = vld [vmem:[%s5 + $0x50] sm:$0xf]
    %v3616 = vld [vmem:[%s5 + $0x54] sm:$0xf]
    %v3617 = vld [vmem:[%s5 + $0x58] sm:$0xf]
    %v3618 = vld [vmem:[%s5 + $0x5c] sm:$0xf]
    %v3619 = vld [vmem:[%s5 + $0x60] sm:$0xf]
    %v3620 = vld [vmem:[%s5 + $0x64] sm:$0xf]
    %v3621 = vld [vmem:[%s5 + $0x68] sm:$0xf]
    %v3622 = vld [vmem:[%s5 + $0x6c] sm:$0xf]
    %v3623 = vld [vmem:[%s5 + $0x70] sm:$0xf]
    %v3624 = vld [vmem:[%s5 + $0x74] sm:$0xf]
    %v3625 = vld [vmem:[%s5 + $0x78] sm:$0xf]
    %v3626 = vld [vmem:[%s5 + $0x7c] sm:$0xf]
    %v3659 = vunpack.c.l.b16 %v3595
    %v3660 = vunpack.c.l.b16 %v3596
    %v3661 = vunpack.c.l.b16 %v3597
    %v3662 = vunpack.c.l.b16 %v3598
    %v3663 = vunpack.c.l.b16 %v3599
    %v3664 = vunpack.c.l.b16 %v3600
    %v3665 = vunpack.c.l.b16 %v3601
    %v3666 = vunpack.c.l.b16 %v3602
    %v3667 = vunpack.c.l.b16 %v3603
    %v3668 = vunpack.c.l.b16 %v3604
    %v3669 = vunpack.c.l.b16 %v3605
    %v3670 = vunpack.c.l.b16 %v3606
    %v3671 = vunpack.c.l.b16 %v3607
    %v3672 = vunpack.c.l.b16 %v3608
    %v3673 = vunpack.c.l.b16 %v3609
    %v3674 = vunpack.c.l.b16 %v3610
    %v3675 = vunpack.c.l.b16 %v3611
    %v3676 = vunpack.c.l.b16 %v3612
    %v3677 = vunpack.c.l.b16 %v3613
    %v3678 = vunpack.c.l.b16 %v3614
    %v3679 = vunpack.c.l.b16 %v3615
    %v3680 = vunpack.c.l.b16 %v3616
    %v3681 = vunpack.c.l.b16 %v3617
    %v3682 = vunpack.c.l.b16 %v3618
    %v3683 = vunpack.c.l.b16 %v3619
    %v3684 = vunpack.c.l.b16 %v3620
    %v3685 = vunpack.c.l.b16 %v3621
    %v3686 = vunpack.c.l.b16 %v3622
    %v3687 = vunpack.c.l.b16 %v3623
    %v3688 = vunpack.c.l.b16 %v3624
    %v3689 = vunpack.c.l.b16 %v3625
    %v3690 = vunpack.c.l.b16 %v3626
    %v3691 = vpack.c.b16 %v3660, %v3659
    %v3692 = vpack.c.b16 %v3662, %v3661
    %v3693 = vpack.c.b16 %v3664, %v3663
    %v3694 = vpack.c.b16 %v3666, %v3665
    %v3695 = vpack.c.b16 %v3668, %v3667
    %v3696 = vpack.c.b16 %v3670, %v3669
    %v3697 = vpack.c.b16 %v3672, %v3671
    %v3698 = vpack.c.b16 %v3674, %v3673
    %v3699 = vpack.c.b16 %v3676, %v3675
    %v3700 = vpack.c.b16 %v3678, %v3677
    %v3701 = vpack.c.b16 %v3680, %v3679
    %v3702 = vpack.c.b16 %v3682, %v3681
    %v3703 = vpack.c.b16 %v3684, %v3683
    %v3704 = vpack.c.b16 %v3686, %v3685
    %v3705 = vpack.c.b16 %v3688, %v3687
    %v3706 = vpack.c.b16 %v3690, %v3689
    %3723 = vmatprep.subr.bf16.mxu0 0
    %3724 = vmatpush1.bf16.msra.mxu0 %v3691
    %3725 = vmatprep.subr.bf16.mxu0 0
    %3726 = vmatpush1.bf16.msra.mxu0 %v3692
    %3727 = vmatprep.subr.bf16.mxu0 0
    %3728 = vmatpush1.bf16.msra.mxu0 %v3693
    %3729 = vmatprep.subr.bf16.mxu0 0
    %3730 = vmatpush1.bf16.msra.mxu0 %v3694
    %3731 = vmatprep.subr.bf16.mxu0 0
    %3732 = vmatpush1.bf16.msra.mxu0 %v3695
    %3733 = vmatprep.subr.bf16.mxu0 0
    %3734 = vmatpush1.bf16.msra.mxu0 %v3696
    %3735 = vmatprep.subr.bf16.mxu0 0
    %3736 = vmatpush1.bf16.msra.mxu0 %v3697
    %3737 = vmatprep.subr.bf16.mxu0 0
    %3738 = vmatpush1.bf16.msra.mxu0 %v3698
    %3739 = vmatprep.subr.bf16.mxu0 0
    %3740 = vmatpush1.bf16.msra.mxu0 %v3699
    %3741 = vmatprep.subr.bf16.mxu0 0
    %3742 = vmatpush1.bf16.msra.mxu0 %v3700
    %3743 = vmatprep.subr.bf16.mxu0 0
    %3744 = vmatpush1.bf16.msra.mxu0 %v3701
    %3745 = vmatprep.subr.bf16.mxu0 0
    %3746 = vmatpush1.bf16.msra.mxu0 %v3702
    %3747 = vmatprep.subr.bf16.mxu0 0
    %3748 = vmatpush1.bf16.msra.mxu0 %v3703
    %3749 = vmatprep.subr.bf16.mxu0 0
    %3750 = vmatpush1.bf16.msra.mxu0 %v3704
    %3751 = vmatprep.subr.bf16.mxu0 0
    %3752 = vmatpush1.bf16.msra.mxu0 %v3705
    %3753 = vmatprep.subr.bf16.mxu0 0
    %3754 = vmatpush1.bf16.msra.mxu0 %v3706
    %3755 = vmatprep.mubr.bf16.mxu0 %v3580
    %3756 = vmatmul.mubr.bf16.gmra.mrb[0].mxu0 %v3579
    %v3757 = vpop.f32.mrb[0].mxu0
    %v3758 = vadd.f32 0.0, %v3757
    %v3759 = vpop.f32.mrb[0].mxu0
    %v3760 = vpop.f32.mrb[0].mxu0
    %v3761 = vadd.f32 0.0, %v3760
    %v3762 = vpop.f32.mrb[0].mxu0
    %3763 = vmatprep.mubr.bf16.mxu0 %v3582
    %3764 = vmatmul.mubr.bf16.gmra.mrb[0].mxu0 %v3581
    %v3765 = vpop.f32.mrb[0].mxu0
    %v3766 = vadd.f32 0.0, %v3765
    %v3767 = vpop.f32.mrb[0].mxu0
    %v3768 = vpop.f32.mrb[0].mxu0
    %v3769 = vadd.f32 0.0, %v3768
    %v3770 = vpop.f32.mrb[0].mxu0
    %3771 = vmatprep.mubr.bf16.mxu0 %v3584
    %3772 = vmatmul.mubr.bf16.gmra.mrb[0].mxu0 %v3583
    %v3773 = vpop.f32.mrb[0].mxu0
    %v3774 = vadd.f32 0.0, %v3773
    %v3775 = vpop.f32.mrb[0].mxu0
    %v3776 = vpop.f32.mrb[0].mxu0
    %v3777 = vadd.f32 0.0, %v3776
    %v3778 = vpop.f32.mrb[0].mxu0
    %3779 = vmatprep.mubr.bf16.mxu0 %v3586
    %3780 = vmatmul.mubr.bf16.gmra.mrb[0].mxu0 %v3585
    %v3781 = vpop.f32.mrb[0].mxu0
    %v3782 = vadd.f32 0.0, %v3781
    %v3783 = vpop.f32.mrb[0].mxu0
    %v3784 = vpop.f32.mrb[0].mxu0
    %v3785 = vadd.f32 0.0, %v3784
    %v3786 = vpop.f32.mrb[0].mxu0
    %3787 = vmatprep.mubr.bf16.mxu0 %v3588
    %3788 = vmatmul.mubr.bf16.gmra.mrb[0].mxu0 %v3587
    %v3789 = vpop.f32.mrb[0].mxu0
    %v3790 = vadd.f32 0.0, %v3789
    %v3791 = vpop.f32.mrb[0].mxu0
    %v3792 = vpop.f32.mrb[0].mxu0
    %v3793 = vadd.f32 0.0, %v3792
    %v3794 = vpop.f32.mrb[0].mxu0
    %3795 = vmatprep.mubr.bf16.mxu0 %v3590
    %3796 = vmatmul.mubr.bf16.gmra.mrb[0].mxu0 %v3589
    %v3797 = vpop.f32.mrb[0].mxu0
    %v3798 = vadd.f32 0.0, %v3797
    %v3799 = vpop.f32.mrb[0].mxu0
    %v3800 = vpop.f32.mrb[0].mxu0
    %v3801 = vadd.f32 0.0, %v3800
    %v3802 = vpop.f32.mrb[0].mxu0
    %3803 = vmatprep.mubr.bf16.mxu0 %v3592
    %3804 = vmatmul.mubr.bf16.gmra.mrb[0].mxu0 %v3591
    %v3805 = vpop.f32.mrb[0].mxu0
    %v3806 = vadd.f32 0.0, %v3805
    %v3807 = vpop.f32.mrb[0].mxu0
    %v3808 = vpop.f32.mrb[0].mxu0
    %v3809 = vadd.f32 0.0, %v3808
    %v3810 = vpop.f32.mrb[0].mxu0
    %3811 = vmatprep.mubr.bf16.mxu0 %v3594
    %3812 = vmatmul.mubr.bf16.gmra.mrb[0].mxu0 %v3593
    %v3813 = vpop.f32.mrb[0].mxu0
    %v3814 = vadd.f32 0.0, %v3813
    %v3815 = vpop.f32.mrb[0].mxu0
    %v3816 = vpop.f32.mrb[0].mxu0
    %v3817 = vadd.f32 0.0, %v3816
    %v3818 = vpop.f32.mrb[0].mxu0
    %3819 = vdwg.mxu0
    %v3820 = vmax.f32 %v3758, 0.0
    %v3821 = vmax.f32 %v3761, 0.0
    %v3822 = vmax.f32 %v3766, 0.0
    %v3823 = vmax.f32 %v3769, 0.0
    %v3824 = vmax.f32 %v3774, 0.0
    %v3825 = vmax.f32 %v3777, 0.0
    %v3826 = vmax.f32 %v3782, 0.0
    %v3827 = vmax.f32 %v3785, 0.0
    %v3828 = vmax.f32 %v3790, 0.0
    %v3829 = vmax.f32 %v3793, 0.0
    %v3830 = vmax.f32 %v3798, 0.0
    %v3831 = vmax.f32 %v3801, 0.0
    %v3832 = vmax.f32 %v3806, 0.0
    %v3833 = vmax.f32 %v3809, 0.0
    %v3834 = vmax.f32 %v3814, 0.0
    %v3835 = vmax.f32 %v3817, 0.0
    %v3836 = vpack.c.bf16 %v3821, %v3820
    %v3837 = vpack.c.bf16 %v3823, %v3822
    %v3838 = vpack.c.bf16 %v3825, %v3824
    %v3839 = vpack.c.bf16 %v3827, %v3826
    %v3840 = vpack.c.bf16 %v3829, %v3828
    %v3841 = vpack.c.bf16 %v3831, %v3830
    %v3842 = vpack.c.bf16 %v3833, %v3832
    %v3843 = vpack.c.bf16 %v3835, %v3834
    %3844 = vst.msk [vmem:[#allocation2 + $0x8] sm:$0xff] %vm742, %v3836
    %3845 = vst.msk [vmem:[#allocation2 + $0x10] sm:$0xff] %vm742, %v3837
    %3846 = vst.msk [vmem:[#allocation2 + $0x18] sm:$0xff] %vm742, %v3838
    %3847 = vst.msk [vmem:[#allocation2 + $0x20] sm:$0xff] %vm742, %v3839
    %3848 = vst.msk [vmem:[#allocation2 + $0x28] sm:$0xff] %vm742, %v3840
    %3849 = vst.msk [vmem:[#allocation2 + $0x30] sm:$0xff] %vm742, %v3841
    %3850 = vst.msk [vmem:[#allocation2 + $0x38] sm:$0xff] %vm742, %v3842
    %3851 = vst.msk [vmem:[#allocation2 + $0x40] sm:$0xff] %vm742, %v3843
    %v3852 = vld [vmem:[#allocation2] sm:$0xf8]
    %v3853 = vld [vmem:[#allocation2 + $0x8] sm:$0xff]
    %v3854 = vld [vmem:[#allocation2 + $0x10] sm:$0xff]
    %v3855 = vld [vmem:[#allocation2 + $0x18] sm:$0xff]
    %v3856 = vld [vmem:[#allocation2 + $0x20] sm:$0xff]
    %v3857 = vld [vmem:[#allocation2 + $0x28] sm:$0xff]
    %v3858 = vld [vmem:[#allocation2 + $0x30] sm:$0xff]
    %v3859 = vld [vmem:[#allocation2 + $0x38] sm:$0xff]
    %v3860 = vld [vmem:[#allocation2 + $0x40] sm:$0xf]
    %v3861 = vsel %vm1210, %v3852, 0
    %v3862 = vsel %vm1211, %v3853, 0
    %v3863 = vsel %vm1212, %v3854, 0
    %v3864 = vsel %vm1213, %v3855, 0
    %v3865 = vsel %vm1214, %v3856, 0
    %v3866 = vsel %vm1215, %v3857, 0
    %v3867 = vsel %vm1216, %v3858, 0
    %v3868 = vsel %vm1217, %v3859, 0
    %v3869 = vsel %vm1218, %v3860, 0
    %v3870 = vld [vmem:[#allocation2] sm:$0xf0]
    %v3871 = vld [vmem:[#allocation2 + $0x40] sm:$0x1f]
    %v3872 = vsel %vm1358, %v3870, 0
    %v3873 = vsel %vm1359, %v3853, 0
    %v3874 = vsel %vm1360, %v3854, 0
    %v3875 = vsel %vm1361, %v3855, 0
    %v3876 = vsel %vm1362, %v3856, 0
    %v3877 = vsel %vm1363, %v3857, 0
    %v3878 = vsel %vm1364, %v3858, 0
    %v3879 = vsel %vm1365, %v3859, 0
    %v3880 = vsel %vm1366, %v3871, 0
    %v3882 = vshrl.u32 %v3870, 16
    %v3884 = vshll.u32 %v3870, 16
    %v3886 = vrot.slane %v3884, 1
    %v3887 = vor.u32 %v3882, %v3886
    %v3889 = vshll.u32 %v3853, 16
    %v3891 = vrot.slane %v3889, 1
    %v3892 = vsel %vm1376, %v3887, %v3891
    %v3893 = vshrl.u32 %v3853, 16
    %v3895 = vor.u32 %v3893, %v3891
    %v3897 = vshll.u32 %v3854, 16
    %v3899 = vrot.slane %v3897, 1
    %v3900 = vsel %vm1376, %v3895, %v3899
    %v3901 = vshrl.u32 %v3854, 16
    %v3903 = vor.u32 %v3901, %v3899
    %v3905 = vshll.u32 %v3855, 16
    %v3907 = vrot.slane %v3905, 1
    %v3908 = vsel %vm1376, %v3903, %v3907
    %v3909 = vshrl.u32 %v3855, 16
    %v3911 = vor.u32 %v3909, %v3907
    %v3913 = vshll.u32 %v3856, 16
    %v3915 = vrot.slane %v3913, 1
    %v3916 = vsel %vm1376, %v3911, %v3915
    %v3917 = vshrl.u32 %v3856, 16
    %v3919 = vor.u32 %v3917, %v3915
    %v3921 = vshll.u32 %v3857, 16
    %v3923 = vrot.slane %v3921, 1
    %v3924 = vsel %vm1376, %v3919, %v3923
    %v3925 = vshrl.u32 %v3857, 16
    %v3927 = vor.u32 %v3925, %v3923
    %v3929 = vshll.u32 %v3858, 16
    %v3931 = vrot.slane %v3929, 1
    %v3932 = vsel %vm1376, %v3927, %v3931
    %v3933 = vshrl.u32 %v3858, 16
    %v3935 = vor.u32 %v3933, %v3931
    %v3937 = vshll.u32 %v3859, 16
    %v3939 = vrot.slane %v3937, 1
    %v3940 = vsel %vm1376, %v3935, %v3939
    %v3941 = vshrl.u32 %v3859, 16
    %v3943 = vor.u32 %v3941, %v3939
    %v3945 = vshll.u32 %v3860, 16
    %v3947 = vrot.slane %v3945, 1
    %v3948 = vsel %vm1376, %v3943, %v3947
    %v3949 = vshrl.u32 %v3860, 16
    %v3951 = vor.u32 %v3949, %v3947
    %3952 = vrot.lane.b32.xlu0 %v3892, 64
    %v3953 = vpop.permute.xlu0 %3952
    %3954 = vrot.lane.b32.xlu0 %v3900, 64
    %v3955 = vpop.permute.xlu0 %3954
    %3956 = vrot.lane.b32.xlu0 %v3908, 64
    %v3957 = vpop.permute.xlu0 %3956
    %3958 = vrot.lane.b32.xlu0 %v3916, 64
    %v3959 = vpop.permute.xlu0 %3958
    %3960 = vrot.lane.b32.xlu0 %v3924, 64
    %v3961 = vpop.permute.xlu0 %3960
    %3962 = vrot.lane.b32.xlu0 %v3932, 64
    %v3963 = vpop.permute.xlu0 %3962
    %3964 = vrot.lane.b32.xlu0 %v3940, 64
    %v3965 = vpop.permute.xlu0 %3964
    %3966 = vrot.lane.b32.xlu0 %v3948, 64
    %v3967 = vpop.permute.xlu0 %3966
    %3968 = vrot.lane.b32.xlu0 %v3951, 64
    %v3969 = vpop.permute.xlu0 %3968
    %v3979 = vrot.slane %v3872, 1
    %v3980 = vrot.slane %v3873, 1
    %v3981 = vsel %vm1475, %v3979, %v3980
    %v3982 = vrot.slane %v3874, 1
    %v3983 = vsel %vm1475, %v3980, %v3982
    %v3984 = vrot.slane %v3875, 1
    %v3985 = vsel %vm1475, %v3982, %v3984
    %v3986 = vrot.slane %v3876, 1
    %v3987 = vsel %vm1475, %v3984, %v3986
    %v3988 = vrot.slane %v3877, 1
    %v3989 = vsel %vm1475, %v3986, %v3988
    %v3990 = vrot.slane %v3878, 1
    %v3991 = vsel %vm1475, %v3988, %v3990
    %v3992 = vrot.slane %v3879, 1
    %v3993 = vsel %vm1475, %v3990, %v3992
    %v3994 = vrot.slane %v3880, 1
    %v3995 = vsel %vm1475, %v3992, %v3994
    %v4007 = vsel %vm742, %v3861, %v3953
    %v4011 = vsel %vm742, %v3862, %v3955
    %v4015 = vsel %vm742, %v3863, %v3957
    %v4019 = vsel %vm742, %v3864, %v3959
    %v4023 = vsel %vm742, %v3865, %v3961
    %v4027 = vsel %vm742, %v3866, %v3963
    %v4031 = vsel %vm742, %v3867, %v3965
    %v4035 = vsel %vm742, %v3868, %v3967
    %v4039 = vsel %vm742, %v3869, %v3969
    %v4041 = vsel %vm1665, %v4007, 0
    %v4042 = vsel %vm1665, %v3981, 0
    %v4043 = vsel %vm1666, %v4011, 0
    %v4044 = vsel %vm1666, %v3983, 0
    %v4045 = vsel %vm1667, %v4015, 0
    %v4046 = vsel %vm1667, %v3985, 0
    %v4047 = vsel %vm1668, %v4019, 0
    %v4048 = vsel %vm1668, %v3987, 0
    %v4049 = vsel %vm1669, %v4023, 0
    %v4050 = vsel %vm1669, %v3989, 0
    %v4051 = vsel %vm1670, %v4027, 0
    %v4052 = vsel %vm1670, %v3991, 0
    %v4053 = vsel %vm1671, %v4031, 0
    %v4054 = vsel %vm1671, %v3993, 0
    %v4055 = vsel %vm1672, %v4035, 0
    %v4056 = vsel %vm1672, %v3995, 0
    %v4057 = vsel %vm1673, %v4039, 0
    %v4058 = vsel %vm1673, %v3994, 0
    %v4059 = vld [vmem:[%s6] sm:$0xf]
    %v4060 = vld [vmem:[%s6 + $0x4] sm:$0xf]
    %v4061 = vld [vmem:[%s6 + $0x8] sm:$0xf]
    %v4062 = vld [vmem:[%s6 + $0xc] sm:$0xf]
    %v4063 = vld [vmem:[%s6 + $0x10] sm:$0xf]
    %v4064 = vld [vmem:[%s6 + $0x14] sm:$0xf]
    %v4065 = vld [vmem:[%s6 + $0x18] sm:$0xf]
    %v4066 = vld [vmem:[%s6 + $0x1c] sm:$0xf]
    %v4067 = vld [vmem:[%s6 + $0x20] sm:$0xf]
    %v4068 = vld [vmem:[%s6 + $0x24] sm:$0xf]
    %v4069 = vld [vmem:[%s6 + $0x28] sm:$0xf]
    %v4070 = vld [vmem:[%s6 + $0x2c] sm:$0xf]
    %v4071 = vld [vmem:[%s6 + $0x30] sm:$0xf]
    %v4072 = vld [vmem:[%s6 + $0x34] sm:$0xf]
    %v4073 = vld [vmem:[%s6 + $0x38] sm:$0xf]
    %v4074 = vld [vmem:[%s6 + $0x3c] sm:$0xf]
    %v4075 = vld [vmem:[%s6 + $0x40] sm:$0xf]
    %v4076 = vld [vmem:[%s6 + $0x44] sm:$0xf]
    %v4077 = vld [vmem:[%s6 + $0x48] sm:$0xf]
    %v4078 = vld [vmem:[%s6 + $0x4c] sm:$0xf]
    %v4079 = vld [vmem:[%s6 + $0x50] sm:$0xf]
    %v4080 = vld [vmem:[%s6 + $0x54] sm:$0xf]
    %v4081 = vld [vmem:[%s6 + $0x58] sm:$0xf]
    %v4082 = vld [vmem:[%s6 + $0x5c] sm:$0xf]
    %v4083 = vld [vmem:[#allocation2] sm:$0x80]
    %v4084 = vld [vmem:[#allocation2 + $0x40] sm:$0xff]
    %v4085 = vsel %vm1741, %v4083, 0
    %v4086 = vsel %vm1742, %v3853, 0
    %v4087 = vsel %vm1743, %v3854, 0
    %v4088 = vsel %vm1744, %v3855, 0
    %v4089 = vsel %vm1745, %v3856, 0
    %v4090 = vsel %vm1746, %v3857, 0
    %v4091 = vsel %vm1747, %v3858, 0
    %v4092 = vsel %vm1748, %v3859, 0
    %v4093 = vsel %vm1749, %v4084, 0
    %v4094 = vld [vmem:[#allocation2 + $0x48] sm:$0x1]
    %v4095 = vsel %vm1784, %v3853, 0
    %v4096 = vsel %vm1785, %v3854, 0
    %v4097 = vsel %vm1786, %v3855, 0
    %v4098 = vsel %vm1787, %v3856, 0
    %v4099 = vsel %vm1788, %v3857, 0
    %v4100 = vsel %vm1789, %v3858, 0
    %v4101 = vsel %vm1790, %v3859, 0
    %v4102 = vsel %vm1791, %v4084, 0
    %v4103 = vsel %vm1792, %v4094, 0
    %v4105 = vshll.u32 %v4084, 16
    %v4107 = vrot.slane %v4105, 1
    %v4108 = vsel %vm1376, %v3943, %v4107
    %v4109 = vshrl.u32 %v4084, 16
    %v4111 = vor.u32 %v4109, %v4107
    %4112 = vrot.lane.b32.xlu0 %v3891, 64
    %v4113 = vpop.permute.xlu0 %4112
    %4114 = vrot.lane.b32.xlu0 %v4108, 64
    %v4115 = vpop.permute.xlu0 %4114
    %4116 = vrot.lane.b32.xlu0 %v4111, 64
    %v4117 = vpop.permute.xlu0 %4116
    %v4127 = vrot.slane %v4095, 1
    %v4128 = vrot.slane %v4096, 1
    %v4129 = vsel %vm1475, %v4127, %v4128
    %v4130 = vrot.slane %v4097, 1
    %v4131 = vsel %vm1475, %v4128, %v4130
    %v4132 = vrot.slane %v4098, 1
    %v4133 = vsel %vm1475, %v4130, %v4132
    %v4134 = vrot.slane %v4099, 1
    %v4135 = vsel %vm1475, %v4132, %v4134
    %v4136 = vrot.slane %v4100, 1
    %v4137 = vsel %vm1475, %v4134, %v4136
    %v4138 = vrot.slane %v4101, 1
    %v4139 = vsel %vm1475, %v4136, %v4138
    %v4140 = vrot.slane %v4102, 1
    %v4141 = vsel %vm1475, %v4138, %v4140
    %v4142 = vrot.slane %v4103, 1
    %v4143 = vsel %vm1475, %v4140, %v4142
    %v4146 = vsel %vm742, %v4085, %v4113
    %v4148 = vsel %vm742, %v4086, %v3955
    %v4150 = vsel %vm742, %v4087, %v3957
    %v4152 = vsel %vm742, %v4088, %v3959
    %v4154 = vsel %vm742, %v4089, %v3961
    %v4156 = vsel %vm742, %v4090, %v3963
    %v4158 = vsel %vm742, %v4091, %v3965
    %v4161 = vsel %vm742, %v4092, %v4115
    %v4164 = vsel %vm742, %v4093, %v4117
    %s4165 = scalar_lea.vmem %s6, 96
    %v4166 = vld [vmem:[%s4165] sm:$0xf]
    %v4167 = vld [vmem:[%s4165 + $0x4] sm:$0xf]
    %v4168 = vld [vmem:[%s4165 + $0x8] sm:$0xf]
    %v4169 = vld [vmem:[%s4165 + $0xc] sm:$0xf]
    %v4170 = vld [vmem:[%s4165 + $0x10] sm:$0xf]
    %v4171 = vld [vmem:[%s4165 + $0x14] sm:$0xf]
    %v4172 = vld [vmem:[%s4165 + $0x18] sm:$0xf]
    %v4173 = vld [vmem:[%s4165 + $0x1c] sm:$0xf]
    %v4174 = vld [vmem:[%s4165 + $0x20] sm:$0xf]
    %v4175 = vld [vmem:[%s4165 + $0x24] sm:$0xf]
    %v4176 = vld [vmem:[%s4165 + $0x28] sm:$0xf]
    %v4177 = vld [vmem:[%s4165 + $0x2c] sm:$0xf]
    %v4178 = vld [vmem:[%s4165 + $0x30] sm:$0xf]
    %v4179 = vld [vmem:[%s4165 + $0x34] sm:$0xf]
    %v4180 = vld [vmem:[%s4165 + $0x38] sm:$0xf]
    %v4181 = vld [vmem:[%s4165 + $0x3c] sm:$0xf]
    %v4182 = vld [vmem:[%s4165 + $0x40] sm:$0xf]
    %v4183 = vld [vmem:[%s4165 + $0x44] sm:$0xf]
    %v4184 = vld [vmem:[%s4165 + $0x48] sm:$0xf]
    %v4185 = vld [vmem:[%s4165 + $0x4c] sm:$0xf]
    %v4186 = vld [vmem:[%s4165 + $0x50] sm:$0xf]
    %v4187 = vld [vmem:[%s4165 + $0x54] sm:$0xf]
    %v4188 = vld [vmem:[%s4165 + $0x58] sm:$0xf]
    %v4189 = vld [vmem:[%s4165 + $0x5c] sm:$0xf]
    %v4190 = vshrl.u32 %v4146, 16
    %v4192 = vrot.slane %v4190, 7
    %v4193 = vshrl.u32 %v4148, 16
    %v4195 = vrot.slane %v4193, 7
    %v4196 = vshll.u32 %v4148, 16
    %v4198 = vor.u32 %v4195, %v4196
    %v4199 = vsel %vm1760, %v4192, %v4198
    %v4201 = vshrl.u32 %v4127, 16
    %v4203 = vrot.slane %v4201, 7
    %v4205 = vshrl.u32 %v4129, 16
    %v4207 = vrot.slane %v4205, 7
    %v4208 = vshll.u32 %v4129, 16
    %v4210 = vor.u32 %v4207, %v4208
    %v4211 = vsel %vm1760, %v4203, %v4210
    %v4212 = vshrl.u32 %v4150, 16
    %v4214 = vrot.slane %v4212, 7
    %v4215 = vshll.u32 %v4150, 16
    %v4217 = vor.u32 %v4214, %v4215
    %v4218 = vsel %vm1760, %v4195, %v4217
    %v4220 = vshrl.u32 %v4131, 16
    %v4222 = vrot.slane %v4220, 7
    %v4223 = vshll.u32 %v4131, 16
    %v4225 = vor.u32 %v4222, %v4223
    %v4226 = vsel %vm1760, %v4207, %v4225
    %v4227 = vshrl.u32 %v4152, 16
    %v4229 = vrot.slane %v4227, 7
    %v4230 = vshll.u32 %v4152, 16
    %v4232 = vor.u32 %v4229, %v4230
    %v4233 = vsel %vm1760, %v4214, %v4232
    %v4235 = vshrl.u32 %v4133, 16
    %v4237 = vrot.slane %v4235, 7
    %v4238 = vshll.u32 %v4133, 16
    %v4240 = vor.u32 %v4237, %v4238
    %v4241 = vsel %vm1760, %v4222, %v4240
    %v4242 = vshrl.u32 %v4154, 16
    %v4244 = vrot.slane %v4242, 7
    %v4245 = vshll.u32 %v4154, 16
    %v4247 = vor.u32 %v4244, %v4245
    %v4248 = vsel %vm1760, %v4229, %v4247
    %v4250 = vshrl.u32 %v4135, 16
    %v4252 = vrot.slane %v4250, 7
    %v4253 = vshll.u32 %v4135, 16
    %v4255 = vor.u32 %v4252, %v4253
    %v4256 = vsel %vm1760, %v4237, %v4255
    %v4257 = vshrl.u32 %v4156, 16
    %v4259 = vrot.slane %v4257, 7
    %v4260 = vshll.u32 %v4156, 16
    %v4262 = vor.u32 %v4259, %v4260
    %v4263 = vsel %vm1760, %v4244, %v4262
    %v4265 = vshrl.u32 %v4137, 16
    %v4267 = vrot.slane %v4265, 7
    %v4268 = vshll.u32 %v4137, 16
    %v4270 = vor.u32 %v4267, %v4268
    %v4271 = vsel %vm1760, %v4252, %v4270
    %v4272 = vshrl.u32 %v4158, 16
    %v4274 = vrot.slane %v4272, 7
    %v4275 = vshll.u32 %v4158, 16
    %v4277 = vor.u32 %v4274, %v4275
    %v4278 = vsel %vm1760, %v4259, %v4277
    %v4280 = vshrl.u32 %v4139, 16
    %v4282 = vrot.slane %v4280, 7
    %v4283 = vshll.u32 %v4139, 16
    %v4285 = vor.u32 %v4282, %v4283
    %v4286 = vsel %vm1760, %v4267, %v4285
    %v4287 = vshrl.u32 %v4161, 16
    %v4289 = vrot.slane %v4287, 7
    %v4290 = vshll.u32 %v4161, 16
    %v4292 = vor.u32 %v4289, %v4290
    %v4293 = vsel %vm1760, %v4274, %v4292
    %v4295 = vshrl.u32 %v4141, 16
    %v4297 = vrot.slane %v4295, 7
    %v4298 = vshll.u32 %v4141, 16
    %v4300 = vor.u32 %v4297, %v4298
    %v4301 = vsel %vm1760, %v4282, %v4300
    %v4302 = vshrl.u32 %v4164, 16
    %v4304 = vrot.slane %v4302, 7
    %v4305 = vshll.u32 %v4164, 16
    %v4307 = vor.u32 %v4304, %v4305
    %v4308 = vsel %vm1760, %v4289, %v4307
    %v4310 = vshrl.u32 %v4143, 16
    %v4312 = vrot.slane %v4310, 7
    %v4313 = vshll.u32 %v4143, 16
    %v4315 = vor.u32 %v4312, %v4313
    %v4316 = vsel %vm1760, %v4297, %v4315
    %v4349 = vunpack.c.l.b16 %v4166
    %v4350 = vunpack.c.l.b16 %v4167
    %v4351 = vunpack.c.l.b16 %v4168
    %v4352 = vunpack.c.l.b16 %v4169
    %v4353 = vunpack.c.l.b16 %v4170
    %v4354 = vunpack.c.l.b16 %v4171
    %v4355 = vunpack.c.l.b16 %v4172
    %v4356 = vunpack.c.l.b16 %v4173
    %v4357 = vunpack.c.l.b16 %v4174
    %v4358 = vunpack.c.l.b16 %v4175
    %v4359 = vunpack.c.l.b16 %v4176
    %v4360 = vunpack.c.l.b16 %v4177
    %v4361 = vunpack.c.l.b16 %v4178
    %v4362 = vunpack.c.l.b16 %v4179
    %v4363 = vunpack.c.l.b16 %v4180
    %v4364 = vunpack.c.l.b16 %v4181
    %v4365 = vunpack.c.l.b16 %v4182
    %v4366 = vunpack.c.l.b16 %v4183
    %v4367 = vunpack.c.l.b16 %v4184
    %v4368 = vunpack.c.l.b16 %v4185
    %v4369 = vunpack.c.l.b16 %v4186
    %v4370 = vunpack.c.l.b16 %v4187
    %v4371 = vunpack.c.l.b16 %v4188
    %v4372 = vunpack.c.l.b16 %v4189
    %v4373 = vpack.c.b16 %v4350, %v4349
    %v4374 = vpack.c.b16 %v4352, %v4351
    %v4375 = vpack.c.b16 %v4354, %v4353
    %v4376 = vpack.c.b16 %v4356, %v4355
    %v4377 = vpack.c.b16 %v4358, %v4357
    %v4378 = vpack.c.b16 %v4360, %v4359
    %v4379 = vpack.c.b16 %v4362, %v4361
    %v4380 = vpack.c.b16 %v4364, %v4363
    %v4381 = vpack.c.b16 %v4366, %v4365
    %v4382 = vpack.c.b16 %v4368, %v4367
    %v4383 = vpack.c.b16 %v4370, %v4369
    %v4384 = vpack.c.b16 %v4372, %v4371
    %v4398 = vsel %vm742, %v4211, 0
    %v4401 = vsel %vm742, %v4226, 0
    %v4404 = vsel %vm742, %v4241, 0
    %v4407 = vsel %vm742, %v4256, 0
    %v4410 = vsel %vm742, %v4271, 0
    %v4413 = vsel %vm742, %v4286, 0
    %v4416 = vsel %vm742, %v4301, 0
    %v4419 = vsel %vm742, %v4316, 0
    %4421 = vmatprep.subr.bf16.mxu0 0
    %4422 = vmatpush1.bf16.msra.mxu0 %v4373
    %4423 = vmatprep.subr.bf16.mxu0 0
    %4424 = vmatpush1.bf16.msra.mxu0 %v4374
    %4425 = vmatprep.subr.bf16.mxu0 0
    %4426 = vmatpush1.bf16.msra.mxu0 %v4375
    %4427 = vmatprep.subr.bf16.mxu0 0
    %4428 = vmatpush1.bf16.msra.mxu0 %v4376
    %4429 = vmatprep.subr.bf16.mxu0 0
    %4430 = vmatpush1.bf16.msra.mxu0 %v4377
    %4431 = vmatprep.subr.bf16.mxu0 0
    %4432 = vmatpush1.bf16.msra.mxu0 %v4378
    %4433 = vmatprep.subr.bf16.mxu0 0
    %4434 = vmatpush1.bf16.msra.mxu0 %v4379
    %4435 = vmatprep.subr.bf16.mxu0 0
    %4436 = vmatpush1.bf16.msra.mxu0 %v4380
    %4437 = vmatprep.subr.bf16.mxu0 0
    %4438 = vmatpush1.bf16.msra.mxu0 %v4381
    %4439 = vmatprep.subr.bf16.mxu0 0
    %4440 = vmatpush1.bf16.msra.mxu0 %v4382
    %4441 = vmatprep.subr.bf16.mxu0 0
    %4442 = vmatpush1.bf16.msra.mxu0 %v4383
    %4443 = vmatprep.subr.bf16.mxu0 0
    %4444 = vmatpush1.bf16.msra.mxu0 %v4384
    %4445 = vmatprep.subr.bf16.mxu0 0
    %4446 = vmatpush1.bf16.msra.mxu0 0
    %4447 = vmatprep.subr.bf16.mxu0 0
    %4448 = vmatpush1.bf16.msra.mxu0 0
    %4449 = vmatprep.subr.bf16.mxu0 0
    %4450 = vmatpush1.bf16.msra.mxu0 0
    %4451 = vmatprep.subr.bf16.mxu0 0
    %4452 = vmatpush1.bf16.msra.mxu0 0
    %4453 = vmatprep.mubr.bf16.mxu0 %v4398
    %4454 = vmatmul.mubr.bf16.gmra.mrb[0].mxu0 %v4199
    %v4455 = vpop.f32.mrb[0].mxu0
    %v4456 = vadd.f32 0.0, %v4455
    %v4457 = vpop.f32.mrb[0].mxu0
    %v4458 = vpop.f32.mrb[0].mxu0
    %v4459 = vadd.f32 0.0, %v4458
    %v4460 = vpop.f32.mrb[0].mxu0
    %4461 = vmatprep.mubr.bf16.mxu0 %v4401
    %4462 = vmatmul.mubr.bf16.gmra.mrb[0].mxu0 %v4218
    %v4463 = vpop.f32.mrb[0].mxu0
    %v4464 = vadd.f32 0.0, %v4463
    %v4465 = vpop.f32.mrb[0].mxu0
    %v4466 = vpop.f32.mrb[0].mxu0
    %v4467 = vadd.f32 0.0, %v4466
    %v4468 = vpop.f32.mrb[0].mxu0
    %4469 = vmatprep.mubr.bf16.mxu0 %v4404
    %4470 = vmatmul.mubr.bf16.gmra.mrb[0].mxu0 %v4233
    %v4471 = vpop.f32.mrb[0].mxu0
    %v4472 = vadd.f32 0.0, %v4471
    %v4473 = vpop.f32.mrb[0].mxu0
    %v4474 = vpop.f32.mrb[0].mxu0
    %v4475 = vadd.f32 0.0, %v4474
    %v4476 = vpop.f32.mrb[0].mxu0
    %4477 = vmatprep.mubr.bf16.mxu0 %v4407
    %4478 = vmatmul.mubr.bf16.gmra.mrb[0].mxu0 %v4248
    %v4479 = vpop.f32.mrb[0].mxu0
    %v4480 = vadd.f32 0.0, %v4479
    %v4481 = vpop.f32.mrb[0].mxu0
    %v4482 = vpop.f32.mrb[0].mxu0
    %v4483 = vadd.f32 0.0, %v4482
    %v4484 = vpop.f32.mrb[0].mxu0
    %4485 = vmatprep.mubr.bf16.mxu0 %v4410
    %4486 = vmatmul.mubr.bf16.gmra.mrb[0].mxu0 %v4263
    %v4487 = vpop.f32.mrb[0].mxu0
    %v4488 = vadd.f32 0.0, %v4487
    %v4489 = vpop.f32.mrb[0].mxu0
    %v4490 = vpop.f32.mrb[0].mxu0
    %v4491 = vadd.f32 0.0, %v4490
    %v4492 = vpop.f32.mrb[0].mxu0
    %4493 = vmatprep.mubr.bf16.mxu0 %v4413
    %4494 = vmatmul.mubr.bf16.gmra.mrb[0].mxu0 %v4278
    %v4495 = vpop.f32.mrb[0].mxu0
    %v4496 = vadd.f32 0.0, %v4495
    %v4497 = vpop.f32.mrb[0].mxu0
    %v4498 = vpop.f32.mrb[0].mxu0
    %v4499 = vadd.f32 0.0, %v4498
    %v4500 = vpop.f32.mrb[0].mxu0
    %4501 = vmatprep.mubr.bf16.mxu0 %v4416
    %4502 = vmatmul.mubr.bf16.gmra.mrb[0].mxu0 %v4293
    %v4503 = vpop.f32.mrb[0].mxu0
    %v4504 = vadd.f32 0.0, %v4503
    %v4505 = vpop.f32.mrb[0].mxu0
    %v4506 = vpop.f32.mrb[0].mxu0
    %v4507 = vadd.f32 0.0, %v4506
    %v4508 = vpop.f32.mrb[0].mxu0
    %4509 = vmatprep.mubr.bf16.mxu0 %v4419
    %4510 = vmatmul.mubr.bf16.gmra.mrb[0].mxu0 %v4308
    %v4511 = vpop.f32.mrb[0].mxu0
    %v4512 = vadd.f32 0.0, %v4511
    %v4513 = vpop.f32.mrb[0].mxu0
    %v4514 = vpop.f32.mrb[0].mxu0
    %v4515 = vadd.f32 0.0, %v4514
    %v4516 = vpop.f32.mrb[0].mxu0
    %4517 = vdwg.mxu0
    %v4519 = vshrl.u32 %v4041, 16
    %v4521 = vrot.slane %v4519, 3
    %v4522 = vshll.u32 %v4041, 16
    %v4524 = vrot.slane %v4522, 4
    %v4525 = vor.u32 %v4521, %v4524
    %v4527 = vshrl.u32 %v4043, 16
    %v4529 = vrot.slane %v4527, 3
    %v4530 = vshll.u32 %v4043, 16
    %v4532 = vrot.slane %v4530, 4
    %v4533 = vor.u32 %v4529, %v4532
    %v4534 = vsel %vm1286, %v4525, %v4533
    %v4536 = vshrl.u32 %v4042, 16
    %v4538 = vrot.slane %v4536, 3
    %v4539 = vshll.u32 %v4042, 16
    %v4541 = vrot.slane %v4539, 4
    %v4542 = vor.u32 %v4538, %v4541
    %v4544 = vshrl.u32 %v4044, 16
    %v4546 = vrot.slane %v4544, 3
    %v4547 = vshll.u32 %v4044, 16
    %v4549 = vrot.slane %v4547, 4
    %v4550 = vor.u32 %v4546, %v4549
    %v4551 = vsel %vm1286, %v4542, %v4550
    %v4553 = vshrl.u32 %v4045, 16
    %v4555 = vrot.slane %v4553, 3
    %v4556 = vshll.u32 %v4045, 16
    %v4558 = vrot.slane %v4556, 4
    %v4559 = vor.u32 %v4555, %v4558
    %v4560 = vsel %vm1286, %v4533, %v4559
    %v4562 = vshrl.u32 %v4046, 16
    %v4564 = vrot.slane %v4562, 3
    %v4565 = vshll.u32 %v4046, 16
    %v4567 = vrot.slane %v4565, 4
    %v4568 = vor.u32 %v4564, %v4567
    %v4569 = vsel %vm1286, %v4550, %v4568
    %v4571 = vshrl.u32 %v4047, 16
    %v4573 = vrot.slane %v4571, 3
    %v4574 = vshll.u32 %v4047, 16
    %v4576 = vrot.slane %v4574, 4
    %v4577 = vor.u32 %v4573, %v4576
    %v4578 = vsel %vm1286, %v4559, %v4577
    %v4580 = vshrl.u32 %v4048, 16
    %v4582 = vrot.slane %v4580, 3
    %v4583 = vshll.u32 %v4048, 16
    %v4585 = vrot.slane %v4583, 4
    %v4586 = vor.u32 %v4582, %v4585
    %v4587 = vsel %vm1286, %v4568, %v4586
    %v4589 = vshrl.u32 %v4049, 16
    %v4591 = vrot.slane %v4589, 3
    %v4592 = vshll.u32 %v4049, 16
    %v4594 = vrot.slane %v4592, 4
    %v4595 = vor.u32 %v4591, %v4594
    %v4596 = vsel %vm1286, %v4577, %v4595
    %v4598 = vshrl.u32 %v4050, 16
    %v4600 = vrot.slane %v4598, 3
    %v4601 = vshll.u32 %v4050, 16
    %v4603 = vrot.slane %v4601, 4
    %v4604 = vor.u32 %v4600, %v4603
    %v4605 = vsel %vm1286, %v4586, %v4604
    %v4607 = vshrl.u32 %v4051, 16
    %v4609 = vrot.slane %v4607, 3
    %v4610 = vshll.u32 %v4051, 16
    %v4612 = vrot.slane %v4610, 4
    %v4613 = vor.u32 %v4609, %v4612
    %v4614 = vsel %vm1286, %v4595, %v4613
    %v4616 = vshrl.u32 %v4052, 16
    %v4618 = vrot.slane %v4616, 3
    %v4619 = vshll.u32 %v4052, 16
    %v4621 = vrot.slane %v4619, 4
    %v4622 = vor.u32 %v4618, %v4621
    %v4623 = vsel %vm1286, %v4604, %v4622
    %v4625 = vshrl.u32 %v4053, 16
    %v4627 = vrot.slane %v4625, 3
    %v4628 = vshll.u32 %v4053, 16
    %v4630 = vrot.slane %v4628, 4
    %v4631 = vor.u32 %v4627, %v4630
    %v4632 = vsel %vm1286, %v4613, %v4631
    %v4634 = vshrl.u32 %v4054, 16
    %v4636 = vrot.slane %v4634, 3
    %v4637 = vshll.u32 %v4054, 16
    %v4639 = vrot.slane %v4637, 4
    %v4640 = vor.u32 %v4636, %v4639
    %v4641 = vsel %vm1286, %v4622, %v4640
    %v4643 = vshrl.u32 %v4055, 16
    %v4645 = vrot.slane %v4643, 3
    %v4646 = vshll.u32 %v4055, 16
    %v4648 = vrot.slane %v4646, 4
    %v4649 = vor.u32 %v4645, %v4648
    %v4650 = vsel %vm1286, %v4631, %v4649
    %v4652 = vshrl.u32 %v4056, 16
    %v4654 = vrot.slane %v4652, 3
    %v4655 = vshll.u32 %v4056, 16
    %v4657 = vrot.slane %v4655, 4
    %v4658 = vor.u32 %v4654, %v4657
    %v4659 = vsel %vm1286, %v4640, %v4658
    %v4661 = vshrl.u32 %v4057, 16
    %v4663 = vrot.slane %v4661, 3
    %v4664 = vshll.u32 %v4057, 16
    %v4666 = vrot.slane %v4664, 4
    %v4667 = vor.u32 %v4663, %v4666
    %v4668 = vsel %vm1286, %v4649, %v4667
    %v4670 = vshrl.u32 %v4058, 16
    %v4672 = vrot.slane %v4670, 3
    %v4673 = vshll.u32 %v4058, 16
    %v4675 = vrot.slane %v4673, 4
    %v4676 = vor.u32 %v4672, %v4675
    %v4677 = vsel %vm1286, %v4658, %v4676
    %v4710 = vunpack.c.l.b16 %v4059
    %v4711 = vunpack.c.l.b16 %v4060
    %v4712 = vunpack.c.l.b16 %v4061
    %v4713 = vunpack.c.l.b16 %v4062
    %v4714 = vunpack.c.l.b16 %v4063
    %v4715 = vunpack.c.l.b16 %v4064
    %v4716 = vunpack.c.l.b16 %v4065
    %v4717 = vunpack.c.l.b16 %v4066
    %v4718 = vunpack.c.l.b16 %v4067
    %v4719 = vunpack.c.l.b16 %v4068
    %v4720 = vunpack.c.l.b16 %v4069
    %v4721 = vunpack.c.l.b16 %v4070
    %v4722 = vunpack.c.l.b16 %v4071
    %v4723 = vunpack.c.l.b16 %v4072
    %v4724 = vunpack.c.l.b16 %v4073
    %v4725 = vunpack.c.l.b16 %v4074
    %v4726 = vunpack.c.l.b16 %v4075
    %v4727 = vunpack.c.l.b16 %v4076
    %v4728 = vunpack.c.l.b16 %v4077
    %v4729 = vunpack.c.l.b16 %v4078
    %v4730 = vunpack.c.l.b16 %v4079
    %v4731 = vunpack.c.l.b16 %v4080
    %v4732 = vunpack.c.l.b16 %v4081
    %v4733 = vunpack.c.l.b16 %v4082
    %v4734 = vpack.c.b16 %v4711, %v4710
    %v4735 = vpack.c.b16 %v4713, %v4712
    %v4736 = vpack.c.b16 %v4715, %v4714
    %v4737 = vpack.c.b16 %v4717, %v4716
    %v4738 = vpack.c.b16 %v4719, %v4718
    %v4739 = vpack.c.b16 %v4721, %v4720
    %v4740 = vpack.c.b16 %v4723, %v4722
    %v4741 = vpack.c.b16 %v4725, %v4724
    %v4742 = vpack.c.b16 %v4727, %v4726
    %v4743 = vpack.c.b16 %v4729, %v4728
    %v4744 = vpack.c.b16 %v4731, %v4730
    %v4745 = vpack.c.b16 %v4733, %v4732
    %v4759 = vsel %vm742, %v4551, 0
    %v4762 = vsel %vm742, %v4569, 0
    %v4765 = vsel %vm742, %v4587, 0
    %v4768 = vsel %vm742, %v4605, 0
    %v4771 = vsel %vm742, %v4623, 0
    %v4774 = vsel %vm742, %v4641, 0
    %v4777 = vsel %vm742, %v4659, 0
    %v4780 = vsel %vm742, %v4677, 0
    %4782 = vmatprep.subr.bf16.mxu0 0
    %4783 = vmatpush1.bf16.msra.mxu0 %v4734
    %4784 = vmatprep.subr.bf16.mxu0 0
    %4785 = vmatpush1.bf16.msra.mxu0 %v4735
    %4786 = vmatprep.subr.bf16.mxu0 0
    %4787 = vmatpush1.bf16.msra.mxu0 %v4736
    %4788 = vmatprep.subr.bf16.mxu0 0
    %4789 = vmatpush1.bf16.msra.mxu0 %v4737
    %4790 = vmatprep.subr.bf16.mxu0 0
    %4791 = vmatpush1.bf16.msra.mxu0 %v4738
    %4792 = vmatprep.subr.bf16.mxu0 0
    %4793 = vmatpush1.bf16.msra.mxu0 %v4739
    %4794 = vmatprep.subr.bf16.mxu0 0
    %4795 = vmatpush1.bf16.msra.mxu0 %v4740
    %4796 = vmatprep.subr.bf16.mxu0 0
    %4797 = vmatpush1.bf16.msra.mxu0 %v4741
    %4798 = vmatprep.subr.bf16.mxu0 0
    %4799 = vmatpush1.bf16.msra.mxu0 %v4742
    %4800 = vmatprep.subr.bf16.mxu0 0
    %4801 = vmatpush1.bf16.msra.mxu0 %v4743
    %4802 = vmatprep.subr.bf16.mxu0 0
    %4803 = vmatpush1.bf16.msra.mxu0 %v4744
    %4804 = vmatprep.subr.bf16.mxu0 0
    %4805 = vmatpush1.bf16.msra.mxu0 %v4745
    %4806 = vmatprep.subr.bf16.mxu0 0
    %4807 = vmatpush1.bf16.msra.mxu0 0
    %4808 = vmatprep.subr.bf16.mxu0 0
    %4809 = vmatpush1.bf16.msra.mxu0 0
    %4810 = vmatprep.subr.bf16.mxu0 0
    %4811 = vmatpush1.bf16.msra.mxu0 0
    %4812 = vmatprep.subr.bf16.mxu0 0
    %4813 = vmatpush1.bf16.msra.mxu0 0
    %4814 = vmatprep.mubr.bf16.mxu0 %v4759
    %4815 = vmatmul.mubr.bf16.gmra.mrb[0].mxu0 %v4534
    %v4816 = vpop.f32.mrb[0].mxu0
    %v4817 = vadd.f32 %v4456, %v4816
    %v4818 = vpop.f32.mrb[0].mxu0
    %v4819 = vpop.f32.mrb[0].mxu0
    %v4820 = vadd.f32 %v4459, %v4819
    %v4821 = vpop.f32.mrb[0].mxu0
    %4822 = vmatprep.mubr.bf16.mxu0 %v4762
    %4823 = vmatmul.mubr.bf16.gmra.mrb[0].mxu0 %v4560
    %v4824 = vpop.f32.mrb[0].mxu0
    %v4825 = vadd.f32 %v4464, %v4824
    %v4826 = vpop.f32.mrb[0].mxu0
    %v4827 = vpop.f32.mrb[0].mxu0
    %v4828 = vadd.f32 %v4467, %v4827
    %v4829 = vpop.f32.mrb[0].mxu0
    %4830 = vmatprep.mubr.bf16.mxu0 %v4765
    %4831 = vmatmul.mubr.bf16.gmra.mrb[0].mxu0 %v4578
    %v4832 = vpop.f32.mrb[0].mxu0
    %v4833 = vadd.f32 %v4472, %v4832
    %v4834 = vpop.f32.mrb[0].mxu0
    %v4835 = vpop.f32.mrb[0].mxu0
    %v4836 = vadd.f32 %v4475, %v4835
    %v4837 = vpop.f32.mrb[0].mxu0
    %4838 = vmatprep.mubr.bf16.mxu0 %v4768
    %4839 = vmatmul.mubr.bf16.gmra.mrb[0].mxu0 %v4596
    %v4840 = vpop.f32.mrb[0].mxu0
    %v4841 = vadd.f32 %v4480, %v4840
    %v4842 = vpop.f32.mrb[0].mxu0
    %v4843 = vpop.f32.mrb[0].mxu0
    %v4844 = vadd.f32 %v4483, %v4843
    %v4845 = vpop.f32.mrb[0].mxu0
    %4846 = vmatprep.mubr.bf16.mxu0 %v4771
    %4847 = vmatmul.mubr.bf16.gmra.mrb[0].mxu0 %v4614
    %v4848 = vpop.f32.mrb[0].mxu0
    %v4849 = vadd.f32 %v4488, %v4848
    %v4850 = vpop.f32.mrb[0].mxu0
    %v4851 = vpop.f32.mrb[0].mxu0
    %v4852 = vadd.f32 %v4491, %v4851
    %v4853 = vpop.f32.mrb[0].mxu0
    %4854 = vmatprep.mubr.bf16.mxu0 %v4774
    %4855 = vmatmul.mubr.bf16.gmra.mrb[0].mxu0 %v4632
    %v4856 = vpop.f32.mrb[0].mxu0
    %v4857 = vadd.f32 %v4496, %v4856
    %v4858 = vpop.f32.mrb[0].mxu0
    %v4859 = vpop.f32.mrb[0].mxu0
    %v4860 = vadd.f32 %v4499, %v4859
    %v4861 = vpop.f32.mrb[0].mxu0
    %4862 = vmatprep.mubr.bf16.mxu0 %v4777
    %4863 = vmatmul.mubr.bf16.gmra.mrb[0].mxu0 %v4650
    %v4864 = vpop.f32.mrb[0].mxu0
    %v4865 = vadd.f32 %v4504, %v4864
    %v4866 = vpop.f32.mrb[0].mxu0
    %v4867 = vpop.f32.mrb[0].mxu0
    %v4868 = vadd.f32 %v4507, %v4867
    %v4869 = vpop.f32.mrb[0].mxu0
    %4870 = vmatprep.mubr.bf16.mxu0 %v4780
    %4871 = vmatmul.mubr.bf16.gmra.mrb[0].mxu0 %v4668
    %v4872 = vpop.f32.mrb[0].mxu0
    %v4873 = vadd.f32 %v4512, %v4872
    %v4874 = vpop.f32.mrb[0].mxu0
    %v4875 = vpop.f32.mrb[0].mxu0
    %v4876 = vadd.f32 %v4515, %v4875
    %v4877 = vpop.f32.mrb[0].mxu0
    %4878 = vdwg.mxu0
    %v4879 = vld [vmem:[#allocation2 + $0x8] sm:$0xf8]
    %v4880 = vld [vmem:[#allocation2 + $0x48] sm:$0xf]
    %v4881 = vsel %vm1210, %v4879, 0
    %v4882 = vsel %vm1211, %v3854, 0
    %v4883 = vsel %vm1212, %v3855, 0
    %v4884 = vsel %vm1213, %v3856, 0
    %v4885 = vsel %vm1214, %v3857, 0
    %v4886 = vsel %vm1215, %v3858, 0
    %v4887 = vsel %vm1216, %v3859, 0
    %v4888 = vsel %vm1217, %v4084, 0
    %v4889 = vsel %vm1218, %v4880, 0
    %v4890 = vld [vmem:[#allocation2 + $0x8] sm:$0xf0]
    %v4891 = vld [vmem:[#allocation2 + $0x48] sm:$0x1f]
    %v4892 = vsel %vm1358, %v4890, 0
    %v4893 = vsel %vm1359, %v3854, 0
    %v4894 = vsel %vm1360, %v3855, 0
    %v4895 = vsel %vm1361, %v3856, 0
    %v4896 = vsel %vm1362, %v3857, 0
    %v4897 = vsel %vm1363, %v3858, 0
    %v4898 = vsel %vm1364, %v3859, 0
    %v4899 = vsel %vm1365, %v4084, 0
    %v4900 = vsel %vm1366, %v4891, 0
    %v4902 = vshrl.u32 %v4890, 16
    %v4904 = vshll.u32 %v4890, 16
    %v4906 = vrot.slane %v4904, 1
    %v4907 = vor.u32 %v4902, %v4906
    %v4908 = vsel %vm1376, %v4907, %v3899
    %v4910 = vshll.u32 %v4880, 16
    %v4912 = vrot.slane %v4910, 1
    %v4913 = vsel %vm1376, %v4111, %v4912
    %v4914 = vshrl.u32 %v4880, 16
    %v4916 = vor.u32 %v4914, %v4912
    %4917 = vrot.lane.b32.xlu0 %v4908, 64
    %v4918 = vpop.permute.xlu0 %4917
    %4919 = vrot.lane.b32.xlu0 %v4913, 64
    %v4920 = vpop.permute.xlu0 %4919
    %4921 = vrot.lane.b32.xlu0 %v4916, 64
    %v4922 = vpop.permute.xlu0 %4921
    %v4932 = vrot.slane %v4892, 1
    %v4933 = vrot.slane %v4893, 1
    %v4934 = vsel %vm1475, %v4932, %v4933
    %v4935 = vrot.slane %v4894, 1
    %v4936 = vsel %vm1475, %v4933, %v4935
    %v4937 = vrot.slane %v4895, 1
    %v4938 = vsel %vm1475, %v4935, %v4937
    %v4939 = vrot.slane %v4896, 1
    %v4940 = vsel %vm1475, %v4937, %v4939
    %v4941 = vrot.slane %v4897, 1
    %v4942 = vsel %vm1475, %v4939, %v4941
    %v4943 = vrot.slane %v4898, 1
    %v4944 = vsel %vm1475, %v4941, %v4943
    %v4945 = vrot.slane %v4899, 1
    %v4946 = vsel %vm1475, %v4943, %v4945
    %v4947 = vrot.slane %v4900, 1
    %v4948 = vsel %vm1475, %v4945, %v4947
    %v4960 = vsel %vm742, %v4881, %v4918
    %v4963 = vsel %vm742, %v4882, %v3957
    %v4966 = vsel %vm742, %v4883, %v3959
    %v4969 = vsel %vm742, %v4884, %v3961
    %v4972 = vsel %vm742, %v4885, %v3963
    %v4975 = vsel %vm742, %v4886, %v3965
    %v4978 = vsel %vm742, %v4887, %v4115
    %v4982 = vsel %vm742, %v4888, %v4920
    %v4986 = vsel %vm742, %v4889, %v4922
    %v4988 = vsel %vm2813, %v4960, 0
    %v4989 = vsel %vm2813, %v4934, 0
    %v4990 = vsel %vm2814, %v4963, 0
    %v4991 = vsel %vm2814, %v4936, 0
    %v4992 = vsel %vm2815, %v4966, 0
    %v4993 = vsel %vm2815, %v4938, 0
    %v4994 = vsel %vm2816, %v4969, 0
    %v4995 = vsel %vm2816, %v4940, 0
    %v4996 = vsel %vm2817, %v4972, 0
    %v4997 = vsel %vm2817, %v4942, 0
    %v4998 = vsel %vm2818, %v4975, 0
    %v4999 = vsel %vm2818, %v4944, 0
    %v5000 = vsel %vm2819, %v4978, 0
    %v5001 = vsel %vm2819, %v4946, 0
    %v5002 = vsel %vm2820, %v4982, 0
    %v5003 = vsel %vm2820, %v4948, 0
    %v5004 = vsel %vm2821, %v4986, 0
    %v5005 = vsel %vm2821, %v4947, 0
    %s5006 = scalar_lea.vmem %s6, 192
    %v5007 = vld [vmem:[%s5006] sm:$0xf]
    %v5008 = vld [vmem:[%s5006 + $0x4] sm:$0xf]
    %v5009 = vld [vmem:[%s5006 + $0x8] sm:$0xf]
    %v5010 = vld [vmem:[%s5006 + $0xc] sm:$0xf]
    %v5011 = vld [vmem:[%s5006 + $0x10] sm:$0xf]
    %v5012 = vld [vmem:[%s5006 + $0x14] sm:$0xf]
    %v5013 = vld [vmem:[%s5006 + $0x18] sm:$0xf]
    %v5014 = vld [vmem:[%s5006 + $0x1c] sm:$0xf]
    %v5015 = vld [vmem:[%s5006 + $0x20] sm:$0xf]
    %v5016 = vld [vmem:[%s5006 + $0x24] sm:$0xf]
    %v5017 = vld [vmem:[%s5006 + $0x28] sm:$0xf]
    %v5018 = vld [vmem:[%s5006 + $0x2c] sm:$0xf]
    %v5019 = vld [vmem:[%s5006 + $0x30] sm:$0xf]
    %v5020 = vld [vmem:[%s5006 + $0x34] sm:$0xf]
    %v5021 = vld [vmem:[%s5006 + $0x38] sm:$0xf]
    %v5022 = vld [vmem:[%s5006 + $0x3c] sm:$0xf]
    %v5023 = vld [vmem:[%s5006 + $0x40] sm:$0xf]
    %v5024 = vld [vmem:[%s5006 + $0x44] sm:$0xf]
    %v5025 = vld [vmem:[%s5006 + $0x48] sm:$0xf]
    %v5026 = vld [vmem:[%s5006 + $0x4c] sm:$0xf]
    %v5027 = vld [vmem:[%s5006 + $0x50] sm:$0xf]
    %v5028 = vld [vmem:[%s5006 + $0x54] sm:$0xf]
    %v5029 = vld [vmem:[%s5006 + $0x58] sm:$0xf]
    %v5030 = vld [vmem:[%s5006 + $0x5c] sm:$0xf]
    %v5032 = vshrl.u32 %v4988, 16
    %v5034 = vrot.slane %v5032, 3
    %v5035 = vshll.u32 %v4988, 16
    %v5037 = vrot.slane %v5035, 4
    %v5038 = vor.u32 %v5034, %v5037
    %v5040 = vshrl.u32 %v4990, 16
    %v5042 = vrot.slane %v5040, 3
    %v5043 = vshll.u32 %v4990, 16
    %v5045 = vrot.slane %v5043, 4
    %v5046 = vor.u32 %v5042, %v5045
    %v5047 = vsel %vm1286, %v5038, %v5046
    %v5049 = vshrl.u32 %v4989, 16
    %v5051 = vrot.slane %v5049, 3
    %v5052 = vshll.u32 %v4989, 16
    %v5054 = vrot.slane %v5052, 4
    %v5055 = vor.u32 %v5051, %v5054
    %v5057 = vshrl.u32 %v4991, 16
    %v5059 = vrot.slane %v5057, 3
    %v5060 = vshll.u32 %v4991, 16
    %v5062 = vrot.slane %v5060, 4
    %v5063 = vor.u32 %v5059, %v5062
    %v5064 = vsel %vm1286, %v5055, %v5063
    %v5066 = vshrl.u32 %v4992, 16
    %v5068 = vrot.slane %v5066, 3
    %v5069 = vshll.u32 %v4992, 16
    %v5071 = vrot.slane %v5069, 4
    %v5072 = vor.u32 %v5068, %v5071
    %v5073 = vsel %vm1286, %v5046, %v5072
    %v5075 = vshrl.u32 %v4993, 16
    %v5077 = vrot.slane %v5075, 3
    %v5078 = vshll.u32 %v4993, 16
    %v5080 = vrot.slane %v5078, 4
    %v5081 = vor.u32 %v5077, %v5080
    %v5082 = vsel %vm1286, %v5063, %v5081
    %v5084 = vshrl.u32 %v4994, 16
    %v5086 = vrot.slane %v5084, 3
    %v5087 = vshll.u32 %v4994, 16
    %v5089 = vrot.slane %v5087, 4
    %v5090 = vor.u32 %v5086, %v5089
    %v5091 = vsel %vm1286, %v5072, %v5090
    %v5093 = vshrl.u32 %v4995, 16
    %v5095 = vrot.slane %v5093, 3
    %v5096 = vshll.u32 %v4995, 16
    %v5098 = vrot.slane %v5096, 4
    %v5099 = vor.u32 %v5095, %v5098
    %v5100 = vsel %vm1286, %v5081, %v5099
    %v5102 = vshrl.u32 %v4996, 16
    %v5104 = vrot.slane %v5102, 3
    %v5105 = vshll.u32 %v4996, 16
    %v5107 = vrot.slane %v5105, 4
    %v5108 = vor.u32 %v5104, %v5107
    %v5109 = vsel %vm1286, %v5090, %v5108
    %v5111 = vshrl.u32 %v4997, 16
    %v5113 = vrot.slane %v5111, 3
    %v5114 = vshll.u32 %v4997, 16
    %v5116 = vrot.slane %v5114, 4
    %v5117 = vor.u32 %v5113, %v5116
    %v5118 = vsel %vm1286, %v5099, %v5117
    %v5120 = vshrl.u32 %v4998, 16
    %v5122 = vrot.slane %v5120, 3
    %v5123 = vshll.u32 %v4998, 16
    %v5125 = vrot.slane %v5123, 4
    %v5126 = vor.u32 %v5122, %v5125
    %v5127 = vsel %vm1286, %v5108, %v5126
    %v5129 = vshrl.u32 %v4999, 16
    %v5131 = vrot.slane %v5129, 3
    %v5132 = vshll.u32 %v4999, 16
    %v5134 = vrot.slane %v5132, 4
    %v5135 = vor.u32 %v5131, %v5134
    %v5136 = vsel %vm1286, %v5117, %v5135
    %v5138 = vshrl.u32 %v5000, 16
    %v5140 = vrot.slane %v5138, 3
    %v5141 = vshll.u32 %v5000, 16
    %v5143 = vrot.slane %v5141, 4
    %v5144 = vor.u32 %v5140, %v5143
    %v5145 = vsel %vm1286, %v5126, %v5144
    %v5147 = vshrl.u32 %v5001, 16
    %v5149 = vrot.slane %v5147, 3
    %v5150 = vshll.u32 %v5001, 16
    %v5152 = vrot.slane %v5150, 4
    %v5153 = vor.u32 %v5149, %v5152
    %v5154 = vsel %vm1286, %v5135, %v5153
    %v5156 = vshrl.u32 %v5002, 16
    %v5158 = vrot.slane %v5156, 3
    %v5159 = vshll.u32 %v5002, 16
    %v5161 = vrot.slane %v5159, 4
    %v5162 = vor.u32 %v5158, %v5161
    %v5163 = vsel %vm1286, %v5144, %v5162
    %v5165 = vshrl.u32 %v5003, 16
    %v5167 = vrot.slane %v5165, 3
    %v5168 = vshll.u32 %v5003, 16
    %v5170 = vrot.slane %v5168, 4
    %v5171 = vor.u32 %v5167, %v5170
    %v5172 = vsel %vm1286, %v5153, %v5171
    %v5174 = vshrl.u32 %v5004, 16
    %v5176 = vrot.slane %v5174, 3
    %v5177 = vshll.u32 %v5004, 16
    %v5179 = vrot.slane %v5177, 4
    %v5180 = vor.u32 %v5176, %v5179
    %v5181 = vsel %vm1286, %v5162, %v5180
    %v5183 = vshrl.u32 %v5005, 16
    %v5185 = vrot.slane %v5183, 3
    %v5186 = vshll.u32 %v5005, 16
    %v5188 = vrot.slane %v5186, 4
    %v5189 = vor.u32 %v5185, %v5188
    %v5190 = vsel %vm1286, %v5171, %v5189
    %v5223 = vunpack.c.l.b16 %v5007
    %v5224 = vunpack.c.l.b16 %v5008
    %v5225 = vunpack.c.l.b16 %v5009
    %v5226 = vunpack.c.l.b16 %v5010
    %v5227 = vunpack.c.l.b16 %v5011
    %v5228 = vunpack.c.l.b16 %v5012
    %v5229 = vunpack.c.l.b16 %v5013
    %v5230 = vunpack.c.l.b16 %v5014
    %v5231 = vunpack.c.l.b16 %v5015
    %v5232 = vunpack.c.l.b16 %v5016
    %v5233 = vunpack.c.l.b16 %v5017
    %v5234 = vunpack.c.l.b16 %v5018
    %v5235 = vunpack.c.l.b16 %v5019
    %v5236 = vunpack.c.l.b16 %v5020
    %v5237 = vunpack.c.l.b16 %v5021
    %v5238 = vunpack.c.l.b16 %v5022
    %v5239 = vunpack.c.l.b16 %v5023
    %v5240 = vunpack.c.l.b16 %v5024
    %v5241 = vunpack.c.l.b16 %v5025
    %v5242 = vunpack.c.l.b16 %v5026
    %v5243 = vunpack.c.l.b16 %v5027
    %v5244 = vunpack.c.l.b16 %v5028
    %v5245 = vunpack.c.l.b16 %v5029
    %v5246 = vunpack.c.l.b16 %v5030
    %v5247 = vpack.c.b16 %v5224, %v5223
    %v5248 = vpack.c.b16 %v5226, %v5225
    %v5249 = vpack.c.b16 %v5228, %v5227
    %v5250 = vpack.c.b16 %v5230, %v5229
    %v5251 = vpack.c.b16 %v5232, %v5231
    %v5252 = vpack.c.b16 %v5234, %v5233
    %v5253 = vpack.c.b16 %v5236, %v5235
    %v5254 = vpack.c.b16 %v5238, %v5237
    %v5255 = vpack.c.b16 %v5240, %v5239
    %v5256 = vpack.c.b16 %v5242, %v5241
    %v5257 = vpack.c.b16 %v5244, %v5243
    %v5258 = vpack.c.b16 %v5246, %v5245
    %v5272 = vsel %vm742, %v5064, 0
    %v5275 = vsel %vm742, %v5082, 0
    %v5278 = vsel %vm742, %v5100, 0
    %v5281 = vsel %vm742, %v5118, 0
    %v5284 = vsel %vm742, %v5136, 0
    %v5287 = vsel %vm742, %v5154, 0
    %v5290 = vsel %vm742, %v5172, 0
    %v5293 = vsel %vm742, %v5190, 0
    %5295 = vmatprep.subr.bf16.mxu0 0
    %5296 = vmatpush1.bf16.msra.mxu0 %v5247
    %5297 = vmatprep.subr.bf16.mxu0 0
    %5298 = vmatpush1.bf16.msra.mxu0 %v5248
    %5299 = vmatprep.subr.bf16.mxu0 0
    %5300 = vmatpush1.bf16.msra.mxu0 %v5249
    %5301 = vmatprep.subr.bf16.mxu0 0
    %5302 = vmatpush1.bf16.msra.mxu0 %v5250
    %5303 = vmatprep.subr.bf16.mxu0 0
    %5304 = vmatpush1.bf16.msra.mxu0 %v5251
    %5305 = vmatprep.subr.bf16.mxu0 0
    %5306 = vmatpush1.bf16.msra.mxu0 %v5252
    %5307 = vmatprep.subr.bf16.mxu0 0
    %5308 = vmatpush1.bf16.msra.mxu0 %v5253
    %5309 = vmatprep.subr.bf16.mxu0 0
    %5310 = vmatpush1.bf16.msra.mxu0 %v5254
    %5311 = vmatprep.subr.bf16.mxu0 0
    %5312 = vmatpush1.bf16.msra.mxu0 %v5255
    %5313 = vmatprep.subr.bf16.mxu0 0
    %5314 = vmatpush1.bf16.msra.mxu0 %v5256
    %5315 = vmatprep.subr.bf16.mxu0 0
    %5316 = vmatpush1.bf16.msra.mxu0 %v5257
    %5317 = vmatprep.subr.bf16.mxu0 0
    %5318 = vmatpush1.bf16.msra.mxu0 %v5258
    %5319 = vmatprep.subr.bf16.mxu0 0
    %5320 = vmatpush1.bf16.msra.mxu0 0
    %5321 = vmatprep.subr.bf16.mxu0 0
    %5322 = vmatpush1.bf16.msra.mxu0 0
    %5323 = vmatprep.subr.bf16.mxu0 0
    %5324 = vmatpush1.bf16.msra.mxu0 0
    %5325 = vmatprep.subr.bf16.mxu0 0
    %5326 = vmatpush1.bf16.msra.mxu0 0
    %5327 = vmatprep.mubr.bf16.mxu0 %v5272
    %5328 = vmatmul.mubr.bf16.gmra.mrb[0].mxu0 %v5047
    %v5329 = vpop.f32.mrb[0].mxu0
    %v5330 = vadd.f32 0.0, %v5329
    %v5331 = vpop.f32.mrb[0].mxu0
    %v5332 = vpop.f32.mrb[0].mxu0
    %v5333 = vadd.f32 0.0, %v5332
    %v5334 = vpop.f32.mrb[0].mxu0
    %5335 = vmatprep.mubr.bf16.mxu0 %v5275
    %5336 = vmatmul.mubr.bf16.gmra.mrb[0].mxu0 %v5073
    %v5337 = vpop.f32.mrb[0].mxu0
    %v5338 = vadd.f32 0.0, %v5337
    %v5339 = vpop.f32.mrb[0].mxu0
    %v5340 = vpop.f32.mrb[0].mxu0
    %v5341 = vadd.f32 0.0, %v5340
    %v5342 = vpop.f32.mrb[0].mxu0
    %5343 = vmatprep.mubr.bf16.mxu0 %v5278
    %5344 = vmatmul.mubr.bf16.gmra.mrb[0].mxu0 %v5091
    %v5345 = vpop.f32.mrb[0].mxu0
    %v5346 = vadd.f32 0.0, %v5345
    %v5347 = vpop.f32.mrb[0].mxu0
    %v5348 = vpop.f32.mrb[0].mxu0
    %v5349 = vadd.f32 0.0, %v5348
    %v5350 = vpop.f32.mrb[0].mxu0
    %5351 = vmatprep.mubr.bf16.mxu0 %v5281
    %5352 = vmatmul.mubr.bf16.gmra.mrb[0].mxu0 %v5109
    %v5353 = vpop.f32.mrb[0].mxu0
    %v5354 = vadd.f32 0.0, %v5353
    %v5355 = vpop.f32.mrb[0].mxu0
    %v5356 = vpop.f32.mrb[0].mxu0
    %v5357 = vadd.f32 0.0, %v5356
    %v5358 = vpop.f32.mrb[0].mxu0
    %5359 = vmatprep.mubr.bf16.mxu0 %v5284
    %5360 = vmatmul.mubr.bf16.gmra.mrb[0].mxu0 %v5127
    %v5361 = vpop.f32.mrb[0].mxu0
    %v5362 = vadd.f32 0.0, %v5361
    %v5363 = vpop.f32.mrb[0].mxu0
    %v5364 = vpop.f32.mrb[0].mxu0
    %v5365 = vadd.f32 0.0, %v5364
    %v5366 = vpop.f32.mrb[0].mxu0
    %5367 = vmatprep.mubr.bf16.mxu0 %v5287
    %5368 = vmatmul.mubr.bf16.gmra.mrb[0].mxu0 %v5145
    %v5369 = vpop.f32.mrb[0].mxu0
    %v5370 = vadd.f32 0.0, %v5369
    %v5371 = vpop.f32.mrb[0].mxu0
    %v5372 = vpop.f32.mrb[0].mxu0
    %v5373 = vadd.f32 0.0, %v5372
    %v5374 = vpop.f32.mrb[0].mxu0
    %5375 = vmatprep.mubr.bf16.mxu0 %v5290
    %5376 = vmatmul.mubr.bf16.gmra.mrb[0].mxu0 %v5163
    %v5377 = vpop.f32.mrb[0].mxu0
    %v5378 = vadd.f32 0.0, %v5377
    %v5379 = vpop.f32.mrb[0].mxu0
    %v5380 = vpop.f32.mrb[0].mxu0
    %v5381 = vadd.f32 0.0, %v5380
    %v5382 = vpop.f32.mrb[0].mxu0
    %5383 = vmatprep.mubr.bf16.mxu0 %v5293
    %5384 = vmatmul.mubr.bf16.gmra.mrb[0].mxu0 %v5181
    %v5385 = vpop.f32.mrb[0].mxu0
    %v5386 = vadd.f32 0.0, %v5385
    %v5387 = vpop.f32.mrb[0].mxu0
    %v5388 = vpop.f32.mrb[0].mxu0
    %v5389 = vadd.f32 0.0, %v5388
    %v5390 = vpop.f32.mrb[0].mxu0
    %5391 = vdwg.mxu0
    %v5392 = vadd.f32 %v4817, %v5330
    %v5393 = vadd.f32 %v4820, %v5333
    %v5394 = vadd.f32 %v4825, %v5338
    %v5395 = vadd.f32 %v4828, %v5341
    %v5396 = vadd.f32 %v4833, %v5346
    %v5397 = vadd.f32 %v4836, %v5349
    %v5398 = vadd.f32 %v4841, %v5354
    %v5399 = vadd.f32 %v4844, %v5357
    %v5400 = vadd.f32 %v4849, %v5362
    %v5401 = vadd.f32 %v4852, %v5365
    %v5402 = vadd.f32 %v4857, %v5370
    %v5403 = vadd.f32 %v4860, %v5373
    %v5404 = vadd.f32 %v4865, %v5378
    %v5405 = vadd.f32 %v4868, %v5381
    %v5406 = vadd.f32 %v4873, %v5386
    %v5407 = vadd.f32 %v4876, %v5389
    %v5408 = vmax.f32 %v5392, 0.0
    %v5409 = vmax.f32 %v5393, 0.0
    %v5410 = vmax.f32 %v5394, 0.0
    %v5411 = vmax.f32 %v5395, 0.0
    %v5412 = vmax.f32 %v5396, 0.0
    %v5413 = vmax.f32 %v5397, 0.0
    %v5414 = vmax.f32 %v5398, 0.0
    %v5415 = vmax.f32 %v5399, 0.0
    %v5416 = vmax.f32 %v5400, 0.0
    %v5417 = vmax.f32 %v5401, 0.0
    %v5418 = vmax.f32 %v5402, 0.0
    %v5419 = vmax.f32 %v5403, 0.0
    %v5420 = vmax.f32 %v5404, 0.0
    %v5421 = vmax.f32 %v5405, 0.0
    %v5422 = vmax.f32 %v5406, 0.0
    %v5423 = vmax.f32 %v5407, 0.0
    %v5424 = vpack.c.bf16 %v5409, %v5408
    %v5425 = vpack.c.bf16 %v5411, %v5410
    %v5426 = vpack.c.bf16 %v5413, %v5412
    %v5427 = vpack.c.bf16 %v5415, %v5414
    %v5428 = vpack.c.bf16 %v5417, %v5416
    %v5429 = vpack.c.bf16 %v5419, %v5418
    %v5430 = vpack.c.bf16 %v5421, %v5420
    %v5431 = vpack.c.bf16 %v5423, %v5422
    %v5432 = vld [vmem:[%s7] sm:$0xff]
    %v5433 = vld [vmem:[%s7 + $0x8] sm:$0xff]
    %v5434 = vld [vmem:[%s7 + $0x10] sm:$0xff]
    %v5435 = vld [vmem:[%s7 + $0x18] sm:$0xff]
    %v5436 = vld [vmem:[%s7 + $0x20] sm:$0xff]
    %v5437 = vld [vmem:[%s7 + $0x28] sm:$0xff]
    %v5438 = vld [vmem:[%s7 + $0x30] sm:$0xff]
    %v5439 = vld [vmem:[%s7 + $0x38] sm:$0xff]
    %v5440 = vld [vmem:[#allocation3] sm:$0xff]
    %v5441 = vld [vmem:[#allocation3 + $0x8] sm:$0xff]
    %v5442 = vld [vmem:[#allocation3 + $0x10] sm:$0xff]
    %v5443 = vld [vmem:[#allocation3 + $0x18] sm:$0xff]
    %v5444 = vld [vmem:[#allocation3 + $0x20] sm:$0xff]
    %v5445 = vld [vmem:[#allocation3 + $0x28] sm:$0xff]
    %v5446 = vld [vmem:[#allocation3 + $0x30] sm:$0xff]
    %v5447 = vld [vmem:[#allocation3 + $0x38] sm:$0xff]
    %v5448 = vld [vmem:[#allocation3 + $0x40] sm:$0xff]
    %v5449 = vld [vmem:[#allocation3 + $0x48] sm:$0xff]
    %v5450 = vld [vmem:[#allocation3 + $0x50] sm:$0xff]
    %v5451 = vld [vmem:[#allocation3 + $0x58] sm:$0xff]
    %v5452 = vld [vmem:[#allocation3 + $0x60] sm:$0xff]
    %v5453 = vld [vmem:[#allocation3 + $0x68] sm:$0xff]
    %v5454 = vld [vmem:[#allocation3 + $0x70] sm:$0xff]
    %v5455 = vld [vmem:[#allocation3 + $0x78] sm:$0xff]
    %v5456 = vld [vmem:[#allocation3 + $0x80] sm:$0xff]
    %v5457 = vld [vmem:[#allocation3 + $0x88] sm:$0xff]
    %v5458 = vld [vmem:[#allocation3 + $0x90] sm:$0xff]
    %v5459 = vld [vmem:[#allocation3 + $0x98] sm:$0xff]
    %v5460 = vld [vmem:[#allocation3 + $0xa0] sm:$0xff]
    %v5461 = vld [vmem:[#allocation3 + $0xa8] sm:$0xff]
    %v5462 = vld [vmem:[#allocation3 + $0xb0] sm:$0xff]
    %v5463 = vld [vmem:[#allocation3 + $0xb8] sm:$0xff]
    %v5464 = vld [vmem:[#allocation3 + $0xc0] sm:$0xff]
    %v5465 = vld [vmem:[#allocation3 + $0xc8] sm:$0xff]
    %v5466 = vld [vmem:[#allocation3 + $0xd0] sm:$0xff]
    %v5467 = vld [vmem:[#allocation3 + $0xd8] sm:$0xff]
    %v5468 = vld [vmem:[#allocation3 + $0xe0] sm:$0xff]
    %v5469 = vld [vmem:[#allocation3 + $0xe8] sm:$0xff]
    %v5470 = vld [vmem:[#allocation3 + $0xf0] sm:$0xff]
    %v5471 = vld [vmem:[#allocation3 + $0xf8] sm:$0xff]
    %v5480 = vunpack.c.l.b16 %v5432
    %v5481 = vunpack.c.h.b16 %v5432
    %v5482 = vunpack.c.l.b16 %v5433
    %v5483 = vunpack.c.h.b16 %v5433
    %v5484 = vunpack.c.l.b16 %v5434
    %v5485 = vunpack.c.h.b16 %v5434
    %v5486 = vunpack.c.l.b16 %v5435
    %v5487 = vunpack.c.h.b16 %v5435
    %v5488 = vunpack.c.l.b16 %v5436
    %v5489 = vunpack.c.h.b16 %v5436
    %v5490 = vunpack.c.l.b16 %v5437
    %v5491 = vunpack.c.h.b16 %v5437
    %v5492 = vunpack.c.l.b16 %v5438
    %v5493 = vunpack.c.h.b16 %v5438
    %v5494 = vunpack.c.l.b16 %v5439
    %v5495 = vunpack.c.h.b16 %v5439
    %v5496 = vpack.c.b16 %v5482, %v5480
    %v5497 = vpack.c.b16 %v5483, %v5481
    %v5498 = vpack.c.b16 %v5486, %v5484
    %v5499 = vpack.c.b16 %v5487, %v5485
    %v5500 = vpack.c.b16 %v5490, %v5488
    %v5501 = vpack.c.b16 %v5491, %v5489
    %v5502 = vpack.c.b16 %v5494, %v5492
    %v5503 = vpack.c.b16 %v5495, %v5493
    %v5513 = vsel %vm742, %v5424, 0
    %v5516 = vsel %vm742, %v5425, 0
    %v5519 = vsel %vm742, %v5426, 0
    %v5522 = vsel %vm742, %v5427, 0
    %v5525 = vsel %vm742, %v5428, 0
    %v5528 = vsel %vm742, %v5429, 0
    %v5531 = vsel %vm742, %v5430, 0
    %v5534 = vsel %vm742, %v5431, 0
    %5536 = vmatprep.subr.bf16.mxu0 %v5497
    %5537 = vmatpush1.bf16.msra.mxu0 %v5496
    %5538 = vmatprep.subr.bf16.mxu0 %v5499
    %5539 = vmatpush1.bf16.msra.mxu0 %v5498
    %5540 = vmatprep.subr.bf16.mxu0 %v5501
    %5541 = vmatpush1.bf16.msra.mxu0 %v5500
    %5542 = vmatprep.subr.bf16.mxu0 %v5503
    %5543 = vmatpush1.bf16.msra.mxu0 %v5502
    %5544 = vmatprep.subr.bf16.mxu0 0
    %5545 = vmatpush1.bf16.msra.mxu0 0
    %5546 = vmatprep.subr.bf16.mxu0 0
    %5547 = vmatpush1.bf16.msra.mxu0 0
    %5548 = vmatprep.subr.bf16.mxu0 0
    %5549 = vmatpush1.bf16.msra.mxu0 0
    %5550 = vmatprep.subr.bf16.mxu0 0
    %5551 = vmatpush1.bf16.msra.mxu0 0
    %5552 = vmatprep.subr.bf16.mxu0 0
    %5553 = vmatpush1.bf16.msra.mxu0 0
    %5554 = vmatprep.subr.bf16.mxu0 0
    %5555 = vmatpush1.bf16.msra.mxu0 0
    %5556 = vmatprep.subr.bf16.mxu0 0
    %5557 = vmatpush1.bf16.msra.mxu0 0
    %5558 = vmatprep.subr.bf16.mxu0 0
    %5559 = vmatpush1.bf16.msra.mxu0 0
    %5560 = vmatprep.subr.bf16.mxu0 0
    %5561 = vmatpush1.bf16.msra.mxu0 0
    %5562 = vmatprep.subr.bf16.mxu0 0
    %5563 = vmatpush1.bf16.msra.mxu0 0
    %5564 = vmatprep.subr.bf16.mxu0 0
    %5565 = vmatpush1.bf16.msra.mxu0 0
    %5566 = vmatprep.subr.bf16.mxu0 0
    %5567 = vmatpush1.bf16.msra.mxu0 0
    %5568 = vmatprep.mubr.bf16.mxu0 0
    %5569 = vmatmul.mubr.bf16.gmra.mrb[0].mxu0 %v5513
    %v5570 = vpop.f32.mrb[0].mxu0
    %v5571 = vadd.f32 %v5440, %v5570
    %v5572 = vpop.f32.mrb[0].mxu0
    %v5573 = vadd.f32 %v5441, %v5572
    %v5574 = vpop.f32.mrb[0].mxu0
    %v5575 = vadd.f32 %v5442, %v5574
    %v5576 = vpop.f32.mrb[0].mxu0
    %v5577 = vadd.f32 %v5443, %v5576
    %5578 = vmatprep.mubr.bf16.mxu0 0
    %5579 = vmatmul.mubr.bf16.gmra.mrb[0].mxu0 %v5516
    %v5580 = vpop.f32.mrb[0].mxu0
    %v5581 = vadd.f32 %v5444, %v5580
    %v5582 = vpop.f32.mrb[0].mxu0
    %v5583 = vadd.f32 %v5445, %v5582
    %v5584 = vpop.f32.mrb[0].mxu0
    %v5585 = vadd.f32 %v5446, %v5584
    %v5586 = vpop.f32.mrb[0].mxu0
    %v5587 = vadd.f32 %v5447, %v5586
    %5588 = vmatprep.mubr.bf16.mxu0 0
    %5589 = vmatmul.mubr.bf16.gmra.mrb[0].mxu0 %v5519
    %v5590 = vpop.f32.mrb[0].mxu0
    %v5591 = vadd.f32 %v5448, %v5590
    %v5592 = vpop.f32.mrb[0].mxu0
    %v5593 = vadd.f32 %v5449, %v5592
    %v5594 = vpop.f32.mrb[0].mxu0
    %v5595 = vadd.f32 %v5450, %v5594
    %v5596 = vpop.f32.mrb[0].mxu0
    %v5597 = vadd.f32 %v5451, %v5596
    %5598 = vmatprep.mubr.bf16.mxu0 0
    %5599 = vmatmul.mubr.bf16.gmra.mrb[0].mxu0 %v5522
    %v5600 = vpop.f32.mrb[0].mxu0
    %v5601 = vadd.f32 %v5452, %v5600
    %v5602 = vpop.f32.mrb[0].mxu0
    %v5603 = vadd.f32 %v5453, %v5602
    %v5604 = vpop.f32.mrb[0].mxu0
    %v5605 = vadd.f32 %v5454, %v5604
    %v5606 = vpop.f32.mrb[0].mxu0
    %v5607 = vadd.f32 %v5455, %v5606
    %5608 = vmatprep.mubr.bf16.mxu0 0
    %5609 = vmatmul.mubr.bf16.gmra.mrb[0].mxu0 %v5525
    %v5610 = vpop.f32.mrb[0].mxu0
    %v5611 = vadd.f32 %v5456, %v5610
    %v5612 = vpop.f32.mrb[0].mxu0
    %v5613 = vadd.f32 %v5457, %v5612
    %v5614 = vpop.f32.mrb[0].mxu0
    %v5615 = vadd.f32 %v5458, %v5614
    %v5616 = vpop.f32.mrb[0].mxu0
    %v5617 = vadd.f32 %v5459, %v5616
    %5618 = vmatprep.mubr.bf16.mxu0 0
    %5619 = vmatmul.mubr.bf16.gmra.mrb[0].mxu0 %v5528
    %v5620 = vpop.f32.mrb[0].mxu0
    %v5621 = vadd.f32 %v5460, %v5620
    %v5622 = vpop.f32.mrb[0].mxu0
    %v5623 = vadd.f32 %v5461, %v5622
    %v5624 = vpop.f32.mrb[0].mxu0
    %v5625 = vadd.f32 %v5462, %v5624
    %v5626 = vpop.f32.mrb[0].mxu0
    %v5627 = vadd.f32 %v5463, %v5626
    %5628 = vmatprep.mubr.bf16.mxu0 0
    %5629 = vmatmul.mubr.bf16.gmra.mrb[0].mxu0 %v5531
    %v5630 = vpop.f32.mrb[0].mxu0
    %v5631 = vadd.f32 %v5464, %v5630
    %v5632 = vpop.f32.mrb[0].mxu0
    %v5633 = vadd.f32 %v5465, %v5632
    %v5634 = vpop.f32.mrb[0].mxu0
    %v5635 = vadd.f32 %v5466, %v5634
    %v5636 = vpop.f32.mrb[0].mxu0
    %v5637 = vadd.f32 %v5467, %v5636
    %5638 = vmatprep.mubr.bf16.mxu0 0
    %5639 = vmatmul.mubr.bf16.gmra.mrb[0].mxu0 %v5534
    %v5640 = vpop.f32.mrb[0].mxu0
    %v5641 = vadd.f32 %v5468, %v5640
    %v5642 = vpop.f32.mrb[0].mxu0
    %v5643 = vadd.f32 %v5469, %v5642
    %v5644 = vpop.f32.mrb[0].mxu0
    %v5645 = vadd.f32 %v5470, %v5644
    %v5646 = vpop.f32.mrb[0].mxu0
    %v5647 = vadd.f32 %v5471, %v5646
    %5648 = vdwg.mxu0
    %v5649 = vmax.f32 %v5571, 0.0
    %v5650 = vmax.f32 %v5573, 0.0
    %v5651 = vmax.f32 %v5575, 0.0
    %v5652 = vmax.f32 %v5577, 0.0
    %v5653 = vmax.f32 %v5581, 0.0
    %v5654 = vmax.f32 %v5583, 0.0
    %v5655 = vmax.f32 %v5585, 0.0
    %v5656 = vmax.f32 %v5587, 0.0
    %v5657 = vmax.f32 %v5591, 0.0
    %v5658 = vmax.f32 %v5593, 0.0
    %v5659 = vmax.f32 %v5595, 0.0
    %v5660 = vmax.f32 %v5597, 0.0
    %v5661 = vmax.f32 %v5601, 0.0
    %v5662 = vmax.f32 %v5603, 0.0
    %v5663 = vmax.f32 %v5605, 0.0
    %v5664 = vmax.f32 %v5607, 0.0
    %v5665 = vmax.f32 %v5611, 0.0
    %v5666 = vmax.f32 %v5613, 0.0
    %v5667 = vmax.f32 %v5615, 0.0
    %v5668 = vmax.f32 %v5617, 0.0
    %v5669 = vmax.f32 %v5621, 0.0
    %v5670 = vmax.f32 %v5623, 0.0
    %v5671 = vmax.f32 %v5625, 0.0
    %v5672 = vmax.f32 %v5627, 0.0
    %v5673 = vmax.f32 %v5631, 0.0
    %v5674 = vmax.f32 %v5633, 0.0
    %v5675 = vmax.f32 %v5635, 0.0
    %v5676 = vmax.f32 %v5637, 0.0
    %v5677 = vmax.f32 %v5641, 0.0
    %v5678 = vmax.f32 %v5643, 0.0
    %v5679 = vmax.f32 %v5645, 0.0
    %v5680 = vmax.f32 %v5647, 0.0
    %5681 = vst [vmem:[#allocation3] sm:$0xff] %v5649
    %5682 = vst [vmem:[#allocation3 + $0x8] sm:$0xff] %v5650
    %5683 = vst [vmem:[#allocation3 + $0x10] sm:$0xff] %v5651
    %5684 = vst [vmem:[#allocation3 + $0x18] sm:$0xff] %v5652
    %5685 = vst [vmem:[#allocation3 + $0x20] sm:$0xff] %v5653
    %5686 = vst [vmem:[#allocation3 + $0x28] sm:$0xff] %v5654
    %5687 = vst [vmem:[#allocation3 + $0x30] sm:$0xff] %v5655
    %5688 = vst [vmem:[#allocation3 + $0x38] sm:$0xff] %v5656
    %5689 = vst [vmem:[#allocation3 + $0x40] sm:$0xff] %v5657
    %5690 = vst [vmem:[#allocation3 + $0x48] sm:$0xff] %v5658
    %5691 = vst [vmem:[#allocation3 + $0x50] sm:$0xff] %v5659
    %5692 = vst [vmem:[#allocation3 + $0x58] sm:$0xff] %v5660
    %5693 = vst [vmem:[#allocation3 + $0x60] sm:$0xff] %v5661
    %5694 = vst [vmem:[#allocation3 + $0x68] sm:$0xff] %v5662
    %5695 = vst [vmem:[#allocation3 + $0x70] sm:$0xff] %v5663
    %5696 = vst [vmem:[#allocation3 + $0x78] sm:$0xff] %v5664
    %5697 = vst [vmem:[#allocation3 + $0x80] sm:$0xff] %v5665
    %5698 = vst [vmem:[#allocation3 + $0x88] sm:$0xff] %v5666
    %5699 = vst [vmem:[#allocation3 + $0x90] sm:$0xff] %v5667
    %5700 = vst [vmem:[#allocation3 + $0x98] sm:$0xff] %v5668
    %5701 = vst [vmem:[#allocation3 + $0xa0] sm:$0xff] %v5669
    %5702 = vst [vmem:[#allocation3 + $0xa8] sm:$0xff] %v5670
    %5703 = vst [vmem:[#allocation3 + $0xb0] sm:$0xff] %v5671
    %5704 = vst [vmem:[#allocation3 + $0xb8] sm:$0xff] %v5672
    %5705 = vst [vmem:[#allocation3 + $0xc0] sm:$0xff] %v5673
    %5706 = vst [vmem:[#allocation3 + $0xc8] sm:$0xff] %v5674
    %5707 = vst [vmem:[#allocation3 + $0xd0] sm:$0xff] %v5675
    %5708 = vst [vmem:[#allocation3 + $0xd8] sm:$0xff] %v5676
    %5709 = vst [vmem:[#allocation3 + $0xe0] sm:$0xff] %v5677
    %5710 = vst [vmem:[#allocation3 + $0xe8] sm:$0xff] %v5678
    %5711 = vst [vmem:[#allocation3 + $0xf0] sm:$0xff] %v5679
    %5712 = vst [vmem:[#allocation3 + $0xf8] sm:$0xff] %v5680
    %v5713 = vld [vmem:[#allocation3] sm:$0xff]
    %v5714 = vld [vmem:[#allocation3 + $0x8] sm:$0xff]
    %v5715 = vld [vmem:[#allocation3 + $0x10] sm:$0xff]
    %v5716 = vld [vmem:[#allocation3 + $0x18] sm:$0xff]
    %v5717 = vld [vmem:[#allocation3 + $0x20] sm:$0xff]
    %v5718 = vld [vmem:[#allocation3 + $0x28] sm:$0xff]
    %v5719 = vld [vmem:[#allocation3 + $0x30] sm:$0xff]
    %v5720 = vld [vmem:[#allocation3 + $0x38] sm:$0xff]
    %v5721 = vld [vmem:[#allocation3 + $0x40] sm:$0xff]
    %v5722 = vld [vmem:[#allocation3 + $0x48] sm:$0xff]
    %v5723 = vld [vmem:[#allocation3 + $0x50] sm:$0xff]
    %v5724 = vld [vmem:[#allocation3 + $0x58] sm:$0xff]
    %v5725 = vld [vmem:[#allocation3 + $0x60] sm:$0xff]
    %v5726 = vld [vmem:[#allocation3 + $0x68] sm:$0xff]
    %v5727 = vld [vmem:[#allocation3 + $0x70] sm:$0xff]
    %v5728 = vld [vmem:[#allocation3 + $0x78] sm:$0xff]
    %v5729 = vld [vmem:[#allocation3 + $0x80] sm:$0xff]
    %v5730 = vld [vmem:[#allocation3 + $0x88] sm:$0xff]
    %v5731 = vld [vmem:[#allocation3 + $0x90] sm:$0xff]
    %v5732 = vld [vmem:[#allocation3 + $0x98] sm:$0xff]
    %v5733 = vld [vmem:[#allocation3 + $0xa0] sm:$0xff]
    %v5734 = vld [vmem:[#allocation3 + $0xa8] sm:$0xff]
    %v5735 = vld [vmem:[#allocation3 + $0xb0] sm:$0xff]
    %v5736 = vld [vmem:[#allocation3 + $0xb8] sm:$0xff]
    %v5737 = vld [vmem:[#allocation3 + $0xc0] sm:$0xff]
    %v5738 = vld [vmem:[#allocation3 + $0xc8] sm:$0xff]
    %v5739 = vld [vmem:[#allocation3 + $0xd0] sm:$0xff]
    %v5740 = vld [vmem:[#allocation3 + $0xd8] sm:$0xff]
    %v5741 = vld [vmem:[#allocation3 + $0xe0] sm:$0xff]
    %v5742 = vld [vmem:[#allocation3 + $0xe8] sm:$0xff]
    %v5743 = vld [vmem:[#allocation3 + $0xf0] sm:$0xff]
    %v5744 = vld [vmem:[#allocation3 + $0xf8] sm:$0xff]
    %v5745 = vpack.c.bf16 %v5715, %v5713
    %v5746 = vpack.c.bf16 %v5716, %v5714
    %v5747 = vpack.c.bf16 %v5719, %v5717
    %v5748 = vpack.c.bf16 %v5720, %v5718
    %v5749 = vpack.c.bf16 %v5723, %v5721
    %v5750 = vpack.c.bf16 %v5724, %v5722
    %v5751 = vpack.c.bf16 %v5727, %v5725
    %v5752 = vpack.c.bf16 %v5728, %v5726
    %v5753 = vpack.c.bf16 %v5731, %v5729
    %v5754 = vpack.c.bf16 %v5732, %v5730
    %v5755 = vpack.c.bf16 %v5735, %v5733
    %v5756 = vpack.c.bf16 %v5736, %v5734
    %v5757 = vpack.c.bf16 %v5739, %v5737
    %v5758 = vpack.c.bf16 %v5740, %v5738
    %v5759 = vpack.c.bf16 %v5743, %v5741
    %v5760 = vpack.c.bf16 %v5744, %v5742
    %v5761 = vld [vmem:[%s8] sm:$0xf]
    %v5762 = vld [vmem:[%s8 + $0x4] sm:$0xf]
    %v5763 = vld [vmem:[%s8 + $0x8] sm:$0xf]
    %v5764 = vld [vmem:[%s8 + $0xc] sm:$0xf]
    %v5765 = vld [vmem:[%s8 + $0x10] sm:$0xf]
    %v5766 = vld [vmem:[%s8 + $0x14] sm:$0xf]
    %v5767 = vld [vmem:[%s8 + $0x18] sm:$0xf]
    %v5768 = vld [vmem:[%s8 + $0x1c] sm:$0xf]
    %v5769 = vld [vmem:[%s8 + $0x20] sm:$0xf]
    %v5770 = vld [vmem:[%s8 + $0x24] sm:$0xf]
    %v5771 = vld [vmem:[%s8 + $0x28] sm:$0xf]
    %v5772 = vld [vmem:[%s8 + $0x2c] sm:$0xf]
    %v5773 = vld [vmem:[%s8 + $0x30] sm:$0xf]
    %v5774 = vld [vmem:[%s8 + $0x34] sm:$0xf]
    %v5775 = vld [vmem:[%s8 + $0x38] sm:$0xf]
    %v5776 = vld [vmem:[%s8 + $0x3c] sm:$0xf]
    %v5777 = vld [vmem:[%s8 + $0x40] sm:$0xf]
    %v5778 = vld [vmem:[%s8 + $0x44] sm:$0xf]
    %v5779 = vld [vmem:[%s8 + $0x48] sm:$0xf]
    %v5780 = vld [vmem:[%s8 + $0x4c] sm:$0xf]
    %v5781 = vld [vmem:[%s8 + $0x50] sm:$0xf]
    %v5782 = vld [vmem:[%s8 + $0x54] sm:$0xf]
    %v5783 = vld [vmem:[%s8 + $0x58] sm:$0xf]
    %v5784 = vld [vmem:[%s8 + $0x5c] sm:$0xf]
    %v5785 = vld [vmem:[%s8 + $0x60] sm:$0xf]
    %v5786 = vld [vmem:[%s8 + $0x64] sm:$0xf]
    %v5787 = vld [vmem:[%s8 + $0x68] sm:$0xf]
    %v5788 = vld [vmem:[%s8 + $0x6c] sm:$0xf]
    %v5789 = vld [vmem:[%s8 + $0x70] sm:$0xf]
    %v5790 = vld [vmem:[%s8 + $0x74] sm:$0xf]
    %v5791 = vld [vmem:[%s8 + $0x78] sm:$0xf]
    %v5792 = vld [vmem:[%s8 + $0x7c] sm:$0xf]
    %v5825 = vunpack.c.l.b16 %v5761
    %v5826 = vunpack.c.l.b16 %v5762
    %v5827 = vunpack.c.l.b16 %v5763
    %v5828 = vunpack.c.l.b16 %v5764
    %v5829 = vunpack.c.l.b16 %v5765
    %v5830 = vunpack.c.l.b16 %v5766
    %v5831 = vunpack.c.l.b16 %v5767
    %v5832 = vunpack.c.l.b16 %v5768
    %v5833 = vunpack.c.l.b16 %v5769
    %v5834 = vunpack.c.l.b16 %v5770
    %v5835 = vunpack.c.l.b16 %v5771
    %v5836 = vunpack.c.l.b16 %v5772
    %v5837 = vunpack.c.l.b16 %v5773
    %v5838 = vunpack.c.l.b16 %v5774
    %v5839 = vunpack.c.l.b16 %v5775
    %v5840 = vunpack.c.l.b16 %v5776
    %v5841 = vunpack.c.l.b16 %v5777
    %v5842 = vunpack.c.l.b16 %v5778
    %v5843 = vunpack.c.l.b16 %v5779
    %v5844 = vunpack.c.l.b16 %v5780
    %v5845 = vunpack.c.l.b16 %v5781
    %v5846 = vunpack.c.l.b16 %v5782
    %v5847 = vunpack.c.l.b16 %v5783
    %v5848 = vunpack.c.l.b16 %v5784
    %v5849 = vunpack.c.l.b16 %v5785
    %v5850 = vunpack.c.l.b16 %v5786
    %v5851 = vunpack.c.l.b16 %v5787
    %v5852 = vunpack.c.l.b16 %v5788
    %v5853 = vunpack.c.l.b16 %v5789
    %v5854 = vunpack.c.l.b16 %v5790
    %v5855 = vunpack.c.l.b16 %v5791
    %v5856 = vunpack.c.l.b16 %v5792
    %v5857 = vpack.c.b16 %v5826, %v5825
    %v5858 = vpack.c.b16 %v5828, %v5827
    %v5859 = vpack.c.b16 %v5830, %v5829
    %v5860 = vpack.c.b16 %v5832, %v5831
    %v5861 = vpack.c.b16 %v5834, %v5833
    %v5862 = vpack.c.b16 %v5836, %v5835
    %v5863 = vpack.c.b16 %v5838, %v5837
    %v5864 = vpack.c.b16 %v5840, %v5839
    %v5865 = vpack.c.b16 %v5842, %v5841
    %v5866 = vpack.c.b16 %v5844, %v5843
    %v5867 = vpack.c.b16 %v5846, %v5845
    %v5868 = vpack.c.b16 %v5848, %v5847
    %v5869 = vpack.c.b16 %v5850, %v5849
    %v5870 = vpack.c.b16 %v5852, %v5851
    %v5871 = vpack.c.b16 %v5854, %v5853
    %v5872 = vpack.c.b16 %v5856, %v5855
    %5889 = vmatprep.subr.bf16.mxu0 0
    %5890 = vmatpush1.bf16.msra.mxu0 %v5857
    %5891 = vmatprep.subr.bf16.mxu0 0
    %5892 = vmatpush1.bf16.msra.mxu0 %v5858
    %5893 = vmatprep.subr.bf16.mxu0 0
    %5894 = vmatpush1.bf16.msra.mxu0 %v5859
    %5895 = vmatprep.subr.bf16.mxu0 0
    %5896 = vmatpush1.bf16.msra.mxu0 %v5860
    %5897 = vmatprep.subr.bf16.mxu0 0
    %5898 = vmatpush1.bf16.msra.mxu0 %v5861
    %5899 = vmatprep.subr.bf16.mxu0 0
    %5900 = vmatpush1.bf16.msra.mxu0 %v5862
    %5901 = vmatprep.subr.bf16.mxu0 0
    %5902 = vmatpush1.bf16.msra.mxu0 %v5863
    %5903 = vmatprep.subr.bf16.mxu0 0
    %5904 = vmatpush1.bf16.msra.mxu0 %v5864
    %5905 = vmatprep.subr.bf16.mxu0 0
    %5906 = vmatpush1.bf16.msra.mxu0 %v5865
    %5907 = vmatprep.subr.bf16.mxu0 0
    %5908 = vmatpush1.bf16.msra.mxu0 %v5866
    %5909 = vmatprep.subr.bf16.mxu0 0
    %5910 = vmatpush1.bf16.msra.mxu0 %v5867
    %5911 = vmatprep.subr.bf16.mxu0 0
    %5912 = vmatpush1.bf16.msra.mxu0 %v5868
    %5913 = vmatprep.subr.bf16.mxu0 0
    %5914 = vmatpush1.bf16.msra.mxu0 %v5869
    %5915 = vmatprep.subr.bf16.mxu0 0
    %5916 = vmatpush1.bf16.msra.mxu0 %v5870
    %5917 = vmatprep.subr.bf16.mxu0 0
    %5918 = vmatpush1.bf16.msra.mxu0 %v5871
    %5919 = vmatprep.subr.bf16.mxu0 0
    %5920 = vmatpush1.bf16.msra.mxu0 %v5872
    %5921 = vmatprep.mubr.bf16.mxu0 %v5746
    %5922 = vmatmul.mubr.bf16.gmra.mrb[0].mxu0 %v5745
    %v5923 = vpop.f32.mrb[0].mxu0
    %v5924 = vadd.f32 0.0, %v5923
    %v5925 = vpop.f32.mrb[0].mxu0
    %v5926 = vpop.f32.mrb[0].mxu0
    %v5927 = vadd.f32 0.0, %v5926
    %v5928 = vpop.f32.mrb[0].mxu0
    %5929 = vmatprep.mubr.bf16.mxu0 %v5748
    %5930 = vmatmul.mubr.bf16.gmra.mrb[0].mxu0 %v5747
    %v5931 = vpop.f32.mrb[0].mxu0
    %v5932 = vadd.f32 0.0, %v5931
    %v5933 = vpop.f32.mrb[0].mxu0
    %v5934 = vpop.f32.mrb[0].mxu0
    %v5935 = vadd.f32 0.0, %v5934
    %v5936 = vpop.f32.mrb[0].mxu0
    %5937 = vmatprep.mubr.bf16.mxu0 %v5750
    %5938 = vmatmul.mubr.bf16.gmra.mrb[0].mxu0 %v5749
    %v5939 = vpop.f32.mrb[0].mxu0
    %v5940 = vadd.f32 0.0, %v5939
    %v5941 = vpop.f32.mrb[0].mxu0
    %v5942 = vpop.f32.mrb[0].mxu0
    %v5943 = vadd.f32 0.0, %v5942
    %v5944 = vpop.f32.mrb[0].mxu0
    %5945 = vmatprep.mubr.bf16.mxu0 %v5752
    %5946 = vmatmul.mubr.bf16.gmra.mrb[0].mxu0 %v5751
    %v5947 = vpop.f32.mrb[0].mxu0
    %v5948 = vadd.f32 0.0, %v5947
    %v5949 = vpop.f32.mrb[0].mxu0
    %v5950 = vpop.f32.mrb[0].mxu0
    %v5951 = vadd.f32 0.0, %v5950
    %v5952 = vpop.f32.mrb[0].mxu0
    %5953 = vmatprep.mubr.bf16.mxu0 %v5754
    %5954 = vmatmul.mubr.bf16.gmra.mrb[0].mxu0 %v5753
    %v5955 = vpop.f32.mrb[0].mxu0
    %v5956 = vadd.f32 0.0, %v5955
    %v5957 = vpop.f32.mrb[0].mxu0
    %v5958 = vpop.f32.mrb[0].mxu0
    %v5959 = vadd.f32 0.0, %v5958
    %v5960 = vpop.f32.mrb[0].mxu0
    %5961 = vmatprep.mubr.bf16.mxu0 %v5756
    %5962 = vmatmul.mubr.bf16.gmra.mrb[0].mxu0 %v5755
    %v5963 = vpop.f32.mrb[0].mxu0
    %v5964 = vadd.f32 0.0, %v5963
    %v5965 = vpop.f32.mrb[0].mxu0
    %v5966 = vpop.f32.mrb[0].mxu0
    %v5967 = vadd.f32 0.0, %v5966
    %v5968 = vpop.f32.mrb[0].mxu0
    %5969 = vmatprep.mubr.bf16.mxu0 %v5758
    %5970 = vmatmul.mubr.bf16.gmra.mrb[0].mxu0 %v5757
    %v5971 = vpop.f32.mrb[0].mxu0
    %v5972 = vadd.f32 0.0, %v5971
    %v5973 = vpop.f32.mrb[0].mxu0
    %v5974 = vpop.f32.mrb[0].mxu0
    %v5975 = vadd.f32 0.0, %v5974
    %v5976 = vpop.f32.mrb[0].mxu0
    %5977 = vmatprep.mubr.bf16.mxu0 %v5760
    %5978 = vmatmul.mubr.bf16.gmra.mrb[0].mxu0 %v5759
    %v5979 = vpop.f32.mrb[0].mxu0
    %v5980 = vadd.f32 0.0, %v5979
    %v5981 = vpop.f32.mrb[0].mxu0
    %v5982 = vpop.f32.mrb[0].mxu0
    %v5983 = vadd.f32 0.0, %v5982
    %v5984 = vpop.f32.mrb[0].mxu0
    %5985 = vdwg.mxu0
    %v5986 = vmax.f32 %v5924, 0.0
    %v5987 = vmax.f32 %v5927, 0.0
    %v5988 = vmax.f32 %v5932, 0.0
    %v5989 = vmax.f32 %v5935, 0.0
    %v5990 = vmax.f32 %v5940, 0.0
    %v5991 = vmax.f32 %v5943, 0.0
    %v5992 = vmax.f32 %v5948, 0.0
    %v5993 = vmax.f32 %v5951, 0.0
    %v5994 = vmax.f32 %v5956, 0.0
    %v5995 = vmax.f32 %v5959, 0.0
    %v5996 = vmax.f32 %v5964, 0.0
    %v5997 = vmax.f32 %v5967, 0.0
    %v5998 = vmax.f32 %v5972, 0.0
    %v5999 = vmax.f32 %v5975, 0.0
    %v6000 = vmax.f32 %v5980, 0.0
    %v6001 = vmax.f32 %v5983, 0.0
    %v6002 = vpack.c.bf16 %v5987, %v5986
    %v6003 = vpack.c.bf16 %v5989, %v5988
    %v6004 = vpack.c.bf16 %v5991, %v5990
    %v6005 = vpack.c.bf16 %v5993, %v5992
    %v6006 = vpack.c.bf16 %v5995, %v5994
    %v6007 = vpack.c.bf16 %v5997, %v5996
    %v6008 = vpack.c.bf16 %v5999, %v5998
    %v6009 = vpack.c.bf16 %v6001, %v6000
    %6010 = vst.msk [vmem:[#allocation2 + $0x8] sm:$0xff] %vm742, %v6002
    %6011 = vst.msk [vmem:[#allocation2 + $0x10] sm:$0xff] %vm742, %v6003
    %6012 = vst.msk [vmem:[#allocation2 + $0x18] sm:$0xff] %vm742, %v6004
    %6013 = vst.msk [vmem:[#allocation2 + $0x20] sm:$0xff] %vm742, %v6005
    %6014 = vst.msk [vmem:[#allocation2 + $0x28] sm:$0xff] %vm742, %v6006
    %6015 = vst.msk [vmem:[#allocation2 + $0x30] sm:$0xff] %vm742, %v6007
    %6016 = vst.msk [vmem:[#allocation2 + $0x38] sm:$0xff] %vm742, %v6008
    %6017 = vst.msk [vmem:[#allocation2 + $0x40] sm:$0xff] %vm742, %v6009
    %v6018 = vld [vmem:[#allocation2] sm:$0xf8]
    %v6019 = vld [vmem:[#allocation2 + $0x8] sm:$0xff]
    %v6020 = vld [vmem:[#allocation2 + $0x10] sm:$0xff]
    %v6021 = vld [vmem:[#allocation2 + $0x18] sm:$0xff]
    %v6022 = vld [vmem:[#allocation2 + $0x20] sm:$0xff]
    %v6023 = vld [vmem:[#allocation2 + $0x28] sm:$0xff]
    %v6024 = vld [vmem:[#allocation2 + $0x30] sm:$0xff]
    %v6025 = vld [vmem:[#allocation2 + $0x38] sm:$0xff]
    %v6026 = vld [vmem:[#allocation2 + $0x40] sm:$0xf]
    %v6027 = vsel %vm1210, %v6018, 0
    %v6028 = vsel %vm1211, %v6019, 0
    %v6029 = vsel %vm1212, %v6020, 0
    %v6030 = vsel %vm1213, %v6021, 0
    %v6031 = vsel %vm1214, %v6022, 0
    %v6032 = vsel %vm1215, %v6023, 0
    %v6033 = vsel %vm1216, %v6024, 0
    %v6034 = vsel %vm1217, %v6025, 0
    %v6035 = vsel %vm1218, %v6026, 0
    %v6036 = vld [vmem:[#allocation2] sm:$0xf0]
    %v6037 = vld [vmem:[#allocation2 + $0x40] sm:$0x1f]
    %v6038 = vsel %vm1358, %v6036, 0
    %v6039 = vsel %vm1359, %v6019, 0
    %v6040 = vsel %vm1360, %v6020, 0
    %v6041 = vsel %vm1361, %v6021, 0
    %v6042 = vsel %vm1362, %v6022, 0
    %v6043 = vsel %vm1363, %v6023, 0
    %v6044 = vsel %vm1364, %v6024, 0
    %v6045 = vsel %vm1365, %v6025, 0
    %v6046 = vsel %vm1366, %v6037, 0
    %v6048 = vshrl.u32 %v6036, 16
    %v6050 = vshll.u32 %v6036, 16
    %v6052 = vrot.slane %v6050, 1
    %v6053 = vor.u32 %v6048, %v6052
    %v6055 = vshll.u32 %v6019, 16
    %v6057 = vrot.slane %v6055, 1
    %v6058 = vsel %vm1376, %v6053, %v6057
    %v6059 = vshrl.u32 %v6019, 16
    %v6061 = vor.u32 %v6059, %v6057
    %v6063 = vshll.u32 %v6020, 16
    %v6065 = vrot.slane %v6063, 1
    %v6066 = vsel %vm1376, %v6061, %v6065
    %v6067 = vshrl.u32 %v6020, 16
    %v6069 = vor.u32 %v6067, %v6065
    %v6071 = vshll.u32 %v6021, 16
    %v6073 = vrot.slane %v6071, 1
    %v6074 = vsel %vm1376, %v6069, %v6073
    %v6075 = vshrl.u32 %v6021, 16
    %v6077 = vor.u32 %v6075, %v6073
    %v6079 = vshll.u32 %v6022, 16
    %v6081 = vrot.slane %v6079, 1
    %v6082 = vsel %vm1376, %v6077, %v6081
    %v6083 = vshrl.u32 %v6022, 16
    %v6085 = vor.u32 %v6083, %v6081
    %v6087 = vshll.u32 %v6023, 16
    %v6089 = vrot.slane %v6087, 1
    %v6090 = vsel %vm1376, %v6085, %v6089
    %v6091 = vshrl.u32 %v6023, 16
    %v6093 = vor.u32 %v6091, %v6089
    %v6095 = vshll.u32 %v6024, 16
    %v6097 = vrot.slane %v6095, 1
    %v6098 = vsel %vm1376, %v6093, %v6097
    %v6099 = vshrl.u32 %v6024, 16
    %v6101 = vor.u32 %v6099, %v6097
    %v6103 = vshll.u32 %v6025, 16
    %v6105 = vrot.slane %v6103, 1
    %v6106 = vsel %vm1376, %v6101, %v6105
    %v6107 = vshrl.u32 %v6025, 16
    %v6109 = vor.u32 %v6107, %v6105
    %v6111 = vshll.u32 %v6026, 16
    %v6113 = vrot.slane %v6111, 1
    %v6114 = vsel %vm1376, %v6109, %v6113
    %v6115 = vshrl.u32 %v6026, 16
    %v6117 = vor.u32 %v6115, %v6113
    %6118 = vrot.lane.b32.xlu0 %v6058, 64
    %v6119 = vpop.permute.xlu0 %6118
    %6120 = vrot.lane.b32.xlu0 %v6066, 64
    %v6121 = vpop.permute.xlu0 %6120
    %6122 = vrot.lane.b32.xlu0 %v6074, 64
    %v6123 = vpop.permute.xlu0 %6122
    %6124 = vrot.lane.b32.xlu0 %v6082, 64
    %v6125 = vpop.permute.xlu0 %6124
    %6126 = vrot.lane.b32.xlu0 %v6090, 64
    %v6127 = vpop.permute.xlu0 %6126
    %6128 = vrot.lane.b32.xlu0 %v6098, 64
    %v6129 = vpop.permute.xlu0 %6128
    %6130 = vrot.lane.b32.xlu0 %v6106, 64
    %v6131 = vpop.permute.xlu0 %6130
    %6132 = vrot.lane.b32.xlu0 %v6114, 64
    %v6133 = vpop.permute.xlu0 %6132
    %6134 = vrot.lane.b32.xlu0 %v6117, 64
    %v6135 = vpop.permute.xlu0 %6134
    %v6145 = vrot.slane %v6038, 1
    %v6146 = vrot.slane %v6039, 1
    %v6147 = vsel %vm1475, %v6145, %v6146
    %v6148 = vrot.slane %v6040, 1
    %v6149 = vsel %vm1475, %v6146, %v6148
    %v6150 = vrot.slane %v6041, 1
    %v6151 = vsel %vm1475, %v6148, %v6150
    %v6152 = vrot.slane %v6042, 1
    %v6153 = vsel %vm1475, %v6150, %v6152
    %v6154 = vrot.slane %v6043, 1
    %v6155 = vsel %vm1475, %v6152, %v6154
    %v6156 = vrot.slane %v6044, 1
    %v6157 = vsel %vm1475, %v6154, %v6156
    %v6158 = vrot.slane %v6045, 1
    %v6159 = vsel %vm1475, %v6156, %v6158
    %v6160 = vrot.slane %v6046, 1
    %v6161 = vsel %vm1475, %v6158, %v6160
    %v6173 = vsel %vm742, %v6027, %v6119
    %v6177 = vsel %vm742, %v6028, %v6121
    %v6181 = vsel %vm742, %v6029, %v6123
    %v6185 = vsel %vm742, %v6030, %v6125
    %v6189 = vsel %vm742, %v6031, %v6127
    %v6193 = vsel %vm742, %v6032, %v6129
    %v6197 = vsel %vm742, %v6033, %v6131
    %v6201 = vsel %vm742, %v6034, %v6133
    %v6205 = vsel %vm742, %v6035, %v6135
    %v6207 = vsel %vm1665, %v6173, 0
    %v6208 = vsel %vm1665, %v6147, 0
    %v6209 = vsel %vm1666, %v6177, 0
    %v6210 = vsel %vm1666, %v6149, 0
    %v6211 = vsel %vm1667, %v6181, 0
    %v6212 = vsel %vm1667, %v6151, 0
    %v6213 = vsel %vm1668, %v6185, 0
    %v6214 = vsel %vm1668, %v6153, 0
    %v6215 = vsel %vm1669, %v6189, 0
    %v6216 = vsel %vm1669, %v6155, 0
    %v6217 = vsel %vm1670, %v6193, 0
    %v6218 = vsel %vm1670, %v6157, 0
    %v6219 = vsel %vm1671, %v6197, 0
    %v6220 = vsel %vm1671, %v6159, 0
    %v6221 = vsel %vm1672, %v6201, 0
    %v6222 = vsel %vm1672, %v6161, 0
    %v6223 = vsel %vm1673, %v6205, 0
    %v6224 = vsel %vm1673, %v6160, 0
    %v6225 = vld [vmem:[%s9] sm:$0xf]
    %v6226 = vld [vmem:[%s9 + $0x4] sm:$0xf]
    %v6227 = vld [vmem:[%s9 + $0x8] sm:$0xf]
    %v6228 = vld [vmem:[%s9 + $0xc] sm:$0xf]
    %v6229 = vld [vmem:[%s9 + $0x10] sm:$0xf]
    %v6230 = vld [vmem:[%s9 + $0x14] sm:$0xf]
    %v6231 = vld [vmem:[%s9 + $0x18] sm:$0xf]
    %v6232 = vld [vmem:[%s9 + $0x1c] sm:$0xf]
    %v6233 = vld [vmem:[%s9 + $0x20] sm:$0xf]
    %v6234 = vld [vmem:[%s9 + $0x24] sm:$0xf]
    %v6235 = vld [vmem:[%s9 + $0x28] sm:$0xf]
    %v6236 = vld [vmem:[%s9 + $0x2c] sm:$0xf]
    %v6237 = vld [vmem:[%s9 + $0x30] sm:$0xf]
    %v6238 = vld [vmem:[%s9 + $0x34] sm:$0xf]
    %v6239 = vld [vmem:[%s9 + $0x38] sm:$0xf]
    %v6240 = vld [vmem:[%s9 + $0x3c] sm:$0xf]
    %v6241 = vld [vmem:[%s9 + $0x40] sm:$0xf]
    %v6242 = vld [vmem:[%s9 + $0x44] sm:$0xf]
    %v6243 = vld [vmem:[%s9 + $0x48] sm:$0xf]
    %v6244 = vld [vmem:[%s9 + $0x4c] sm:$0xf]
    %v6245 = vld [vmem:[%s9 + $0x50] sm:$0xf]
    %v6246 = vld [vmem:[%s9 + $0x54] sm:$0xf]
    %v6247 = vld [vmem:[%s9 + $0x58] sm:$0xf]
    %v6248 = vld [vmem:[%s9 + $0x5c] sm:$0xf]
    %v6249 = vld [vmem:[#allocation2] sm:$0x80]
    %v6250 = vld [vmem:[#allocation2 + $0x40] sm:$0xff]
    %v6251 = vsel %vm1741, %v6249, 0
    %v6252 = vsel %vm1742, %v6019, 0
    %v6253 = vsel %vm1743, %v6020, 0
    %v6254 = vsel %vm1744, %v6021, 0
    %v6255 = vsel %vm1745, %v6022, 0
    %v6256 = vsel %vm1746, %v6023, 0
    %v6257 = vsel %vm1747, %v6024, 0
    %v6258 = vsel %vm1748, %v6025, 0
    %v6259 = vsel %vm1749, %v6250, 0
    %v6260 = vld [vmem:[#allocation2 + $0x48] sm:$0x1]
    %v6261 = vsel %vm1784, %v6019, 0
    %v6262 = vsel %vm1785, %v6020, 0
    %v6263 = vsel %vm1786, %v6021, 0
    %v6264 = vsel %vm1787, %v6022, 0
    %v6265 = vsel %vm1788, %v6023, 0
    %v6266 = vsel %vm1789, %v6024, 0
    %v6267 = vsel %vm1790, %v6025, 0
    %v6268 = vsel %vm1791, %v6250, 0
    %v6269 = vsel %vm1792, %v6260, 0
    %v6271 = vshll.u32 %v6250, 16
    %v6273 = vrot.slane %v6271, 1
    %v6274 = vsel %vm1376, %v6109, %v6273
    %v6275 = vshrl.u32 %v6250, 16
    %v6277 = vor.u32 %v6275, %v6273
    %6278 = vrot.lane.b32.xlu0 %v6057, 64
    %v6279 = vpop.permute.xlu0 %6278
    %6280 = vrot.lane.b32.xlu0 %v6274, 64
    %v6281 = vpop.permute.xlu0 %6280
    %6282 = vrot.lane.b32.xlu0 %v6277, 64
    %v6283 = vpop.permute.xlu0 %6282
    %v6293 = vrot.slane %v6261, 1
    %v6294 = vrot.slane %v6262, 1
    %v6295 = vsel %vm1475, %v6293, %v6294
    %v6296 = vrot.slane %v6263, 1
    %v6297 = vsel %vm1475, %v6294, %v6296
    %v6298 = vrot.slane %v6264, 1
    %v6299 = vsel %vm1475, %v6296, %v6298
    %v6300 = vrot.slane %v6265, 1
    %v6301 = vsel %vm1475, %v6298, %v6300
    %v6302 = vrot.slane %v6266, 1
    %v6303 = vsel %vm1475, %v6300, %v6302
    %v6304 = vrot.slane %v6267, 1
    %v6305 = vsel %vm1475, %v6302, %v6304
    %v6306 = vrot.slane %v6268, 1
    %v6307 = vsel %vm1475, %v6304, %v6306
    %v6308 = vrot.slane %v6269, 1
    %v6309 = vsel %vm1475, %v6306, %v6308
    %v6312 = vsel %vm742, %v6251, %v6279
    %v6314 = vsel %vm742, %v6252, %v6121
    %v6316 = vsel %vm742, %v6253, %v6123
    %v6318 = vsel %vm742, %v6254, %v6125
    %v6320 = vsel %vm742, %v6255, %v6127
    %v6322 = vsel %vm742, %v6256, %v6129
    %v6324 = vsel %vm742, %v6257, %v6131
    %v6327 = vsel %vm742, %v6258, %v6281
    %v6330 = vsel %vm742, %v6259, %v6283
    %s6331 = scalar_lea.vmem %s9, 96
    %v6332 = vld [vmem:[%s6331] sm:$0xf]
    %v6333 = vld [vmem:[%s6331 + $0x4] sm:$0xf]
    %v6334 = vld [vmem:[%s6331 + $0x8] sm:$0xf]
    %v6335 = vld [vmem:[%s6331 + $0xc] sm:$0xf]
    %v6336 = vld [vmem:[%s6331 + $0x10] sm:$0xf]
    %v6337 = vld [vmem:[%s6331 + $0x14] sm:$0xf]
    %v6338 = vld [vmem:[%s6331 + $0x18] sm:$0xf]
    %v6339 = vld [vmem:[%s6331 + $0x1c] sm:$0xf]
    %v6340 = vld [vmem:[%s6331 + $0x20] sm:$0xf]
    %v6341 = vld [vmem:[%s6331 + $0x24] sm:$0xf]
    %v6342 = vld [vmem:[%s6331 + $0x28] sm:$0xf]
    %v6343 = vld [vmem:[%s6331 + $0x2c] sm:$0xf]
    %v6344 = vld [vmem:[%s6331 + $0x30] sm:$0xf]
    %v6345 = vld [vmem:[%s6331 + $0x34] sm:$0xf]
    %v6346 = vld [vmem:[%s6331 + $0x38] sm:$0xf]
    %v6347 = vld [vmem:[%s6331 + $0x3c] sm:$0xf]
    %v6348 = vld [vmem:[%s6331 + $0x40] sm:$0xf]
    %v6349 = vld [vmem:[%s6331 + $0x44] sm:$0xf]
    %v6350 = vld [vmem:[%s6331 + $0x48] sm:$0xf]
    %v6351 = vld [vmem:[%s6331 + $0x4c] sm:$0xf]
    %v6352 = vld [vmem:[%s6331 + $0x50] sm:$0xf]
    %v6353 = vld [vmem:[%s6331 + $0x54] sm:$0xf]
    %v6354 = vld [vmem:[%s6331 + $0x58] sm:$0xf]
    %v6355 = vld [vmem:[%s6331 + $0x5c] sm:$0xf]
    %v6356 = vshrl.u32 %v6312, 16
    %v6358 = vrot.slane %v6356, 7
    %v6359 = vshrl.u32 %v6314, 16
    %v6361 = vrot.slane %v6359, 7
    %v6362 = vshll.u32 %v6314, 16
    %v6364 = vor.u32 %v6361, %v6362
    %v6365 = vsel %vm1760, %v6358, %v6364
    %v6367 = vshrl.u32 %v6293, 16
    %v6369 = vrot.slane %v6367, 7
    %v6371 = vshrl.u32 %v6295, 16
    %v6373 = vrot.slane %v6371, 7
    %v6374 = vshll.u32 %v6295, 16
    %v6376 = vor.u32 %v6373, %v6374
    %v6377 = vsel %vm1760, %v6369, %v6376
    %v6378 = vshrl.u32 %v6316, 16
    %v6380 = vrot.slane %v6378, 7
    %v6381 = vshll.u32 %v6316, 16
    %v6383 = vor.u32 %v6380, %v6381
    %v6384 = vsel %vm1760, %v6361, %v6383
    %v6386 = vshrl.u32 %v6297, 16
    %v6388 = vrot.slane %v6386, 7
    %v6389 = vshll.u32 %v6297, 16
    %v6391 = vor.u32 %v6388, %v6389
    %v6392 = vsel %vm1760, %v6373, %v6391
    %v6393 = vshrl.u32 %v6318, 16
    %v6395 = vrot.slane %v6393, 7
    %v6396 = vshll.u32 %v6318, 16
    %v6398 = vor.u32 %v6395, %v6396
    %v6399 = vsel %vm1760, %v6380, %v6398
    %v6401 = vshrl.u32 %v6299, 16
    %v6403 = vrot.slane %v6401, 7
    %v6404 = vshll.u32 %v6299, 16
    %v6406 = vor.u32 %v6403, %v6404
    %v6407 = vsel %vm1760, %v6388, %v6406
    %v6408 = vshrl.u32 %v6320, 16
    %v6410 = vrot.slane %v6408, 7
    %v6411 = vshll.u32 %v6320, 16
    %v6413 = vor.u32 %v6410, %v6411
    %v6414 = vsel %vm1760, %v6395, %v6413
    %v6416 = vshrl.u32 %v6301, 16
    %v6418 = vrot.slane %v6416, 7
    %v6419 = vshll.u32 %v6301, 16
    %v6421 = vor.u32 %v6418, %v6419
    %v6422 = vsel %vm1760, %v6403, %v6421
    %v6423 = vshrl.u32 %v6322, 16
    %v6425 = vrot.slane %v6423, 7
    %v6426 = vshll.u32 %v6322, 16
    %v6428 = vor.u32 %v6425, %v6426
    %v6429 = vsel %vm1760, %v6410, %v6428
    %v6431 = vshrl.u32 %v6303, 16
    %v6433 = vrot.slane %v6431, 7
    %v6434 = vshll.u32 %v6303, 16
    %v6436 = vor.u32 %v6433, %v6434
    %v6437 = vsel %vm1760, %v6418, %v6436
    %v6438 = vshrl.u32 %v6324, 16
    %v6440 = vrot.slane %v6438, 7
    %v6441 = vshll.u32 %v6324, 16
    %v6443 = vor.u32 %v6440, %v6441
    %v6444 = vsel %vm1760, %v6425, %v6443
    %v6446 = vshrl.u32 %v6305, 16
    %v6448 = vrot.slane %v6446, 7
    %v6449 = vshll.u32 %v6305, 16
    %v6451 = vor.u32 %v6448, %v6449
    %v6452 = vsel %vm1760, %v6433, %v6451
    %v6453 = vshrl.u32 %v6327, 16
    %v6455 = vrot.slane %v6453, 7
    %v6456 = vshll.u32 %v6327, 16
    %v6458 = vor.u32 %v6455, %v6456
    %v6459 = vsel %vm1760, %v6440, %v6458
    %v6461 = vshrl.u32 %v6307, 16
    %v6463 = vrot.slane %v6461, 7
    %v6464 = vshll.u32 %v6307, 16
    %v6466 = vor.u32 %v6463, %v6464
    %v6467 = vsel %vm1760, %v6448, %v6466
    %v6468 = vshrl.u32 %v6330, 16
    %v6470 = vrot.slane %v6468, 7
    %v6471 = vshll.u32 %v6330, 16
    %v6473 = vor.u32 %v6470, %v6471
    %v6474 = vsel %vm1760, %v6455, %v6473
    %v6476 = vshrl.u32 %v6309, 16
    %v6478 = vrot.slane %v6476, 7
    %v6479 = vshll.u32 %v6309, 16
    %v6481 = vor.u32 %v6478, %v6479
    %v6482 = vsel %vm1760, %v6463, %v6481
    %v6515 = vunpack.c.l.b16 %v6332
    %v6516 = vunpack.c.l.b16 %v6333
    %v6517 = vunpack.c.l.b16 %v6334
    %v6518 = vunpack.c.l.b16 %v6335
    %v6519 = vunpack.c.l.b16 %v6336
    %v6520 = vunpack.c.l.b16 %v6337
    %v6521 = vunpack.c.l.b16 %v6338
    %v6522 = vunpack.c.l.b16 %v6339
    %v6523 = vunpack.c.l.b16 %v6340
    %v6524 = vunpack.c.l.b16 %v6341
    %v6525 = vunpack.c.l.b16 %v6342
    %v6526 = vunpack.c.l.b16 %v6343
    %v6527 = vunpack.c.l.b16 %v6344
    %v6528 = vunpack.c.l.b16 %v6345
    %v6529 = vunpack.c.l.b16 %v6346
    %v6530 = vunpack.c.l.b16 %v6347
    %v6531 = vunpack.c.l.b16 %v6348
    %v6532 = vunpack.c.l.b16 %v6349
    %v6533 = vunpack.c.l.b16 %v6350
    %v6534 = vunpack.c.l.b16 %v6351
    %v6535 = vunpack.c.l.b16 %v6352
    %v6536 = vunpack.c.l.b16 %v6353
    %v6537 = vunpack.c.l.b16 %v6354
    %v6538 = vunpack.c.l.b16 %v6355
    %v6539 = vpack.c.b16 %v6516, %v6515
    %v6540 = vpack.c.b16 %v6518, %v6517
    %v6541 = vpack.c.b16 %v6520, %v6519
    %v6542 = vpack.c.b16 %v6522, %v6521
    %v6543 = vpack.c.b16 %v6524, %v6523
    %v6544 = vpack.c.b16 %v6526, %v6525
    %v6545 = vpack.c.b16 %v6528, %v6527
    %v6546 = vpack.c.b16 %v6530, %v6529
    %v6547 = vpack.c.b16 %v6532, %v6531
    %v6548 = vpack.c.b16 %v6534, %v6533
    %v6549 = vpack.c.b16 %v6536, %v6535
    %v6550 = vpack.c.b16 %v6538, %v6537
    %v6564 = vsel %vm742, %v6377, 0
    %v6567 = vsel %vm742, %v6392, 0
    %v6570 = vsel %vm742, %v6407, 0
    %v6573 = vsel %vm742, %v6422, 0
    %v6576 = vsel %vm742, %v6437, 0
    %v6579 = vsel %vm742, %v6452, 0
    %v6582 = vsel %vm742, %v6467, 0
    %v6585 = vsel %vm742, %v6482, 0
    %6587 = vmatprep.subr.bf16.mxu0 0
    %6588 = vmatpush1.bf16.msra.mxu0 %v6539
    %6589 = vmatprep.subr.bf16.mxu0 0
    %6590 = vmatpush1.bf16.msra.mxu0 %v6540
    %6591 = vmatprep.subr.bf16.mxu0 0
    %6592 = vmatpush1.bf16.msra.mxu0 %v6541
    %6593 = vmatprep.subr.bf16.mxu0 0
    %6594 = vmatpush1.bf16.msra.mxu0 %v6542
    %6595 = vmatprep.subr.bf16.mxu0 0
    %6596 = vmatpush1.bf16.msra.mxu0 %v6543
    %6597 = vmatprep.subr.bf16.mxu0 0
    %6598 = vmatpush1.bf16.msra.mxu0 %v6544
    %6599 = vmatprep.subr.bf16.mxu0 0
    %6600 = vmatpush1.bf16.msra.mxu0 %v6545
    %6601 = vmatprep.subr.bf16.mxu0 0
    %6602 = vmatpush1.bf16.msra.mxu0 %v6546
    %6603 = vmatprep.subr.bf16.mxu0 0
    %6604 = vmatpush1.bf16.msra.mxu0 %v6547
    %6605 = vmatprep.subr.bf16.mxu0 0
    %6606 = vmatpush1.bf16.msra.mxu0 %v6548
    %6607 = vmatprep.subr.bf16.mxu0 0
    %6608 = vmatpush1.bf16.msra.mxu0 %v6549
    %6609 = vmatprep.subr.bf16.mxu0 0
    %6610 = vmatpush1.bf16.msra.mxu0 %v6550
    %6611 = vmatprep.subr.bf16.mxu0 0
    %6612 = vmatpush1.bf16.msra.mxu0 0
    %6613 = vmatprep.subr.bf16.mxu0 0
    %6614 = vmatpush1.bf16.msra.mxu0 0
    %6615 = vmatprep.subr.bf16.mxu0 0
    %6616 = vmatpush1.bf16.msra.mxu0 0
    %6617 = vmatprep.subr.bf16.mxu0 0
    %6618 = vmatpush1.bf16.msra.mxu0 0
    %6619 = vmatprep.mubr.bf16.mxu0 %v6564
    %6620 = vmatmul.mubr.bf16.gmra.mrb[0].mxu0 %v6365
    %v6621 = vpop.f32.mrb[0].mxu0
    %v6622 = vadd.f32 0.0, %v6621
    %v6623 = vpop.f32.mrb[0].mxu0
    %v6624 = vpop.f32.mrb[0].mxu0
    %v6625 = vadd.f32 0.0, %v6624
    %v6626 = vpop.f32.mrb[0].mxu0
    %6627 = vmatprep.mubr.bf16.mxu0 %v6567
    %6628 = vmatmul.mubr.bf16.gmra.mrb[0].mxu0 %v6384
    %v6629 = vpop.f32.mrb[0].mxu0
    %v6630 = vadd.f32 0.0, %v6629
    %v6631 = vpop.f32.mrb[0].mxu0
    %v6632 = vpop.f32.mrb[0].mxu0
    %v6633 = vadd.f32 0.0, %v6632
    %v6634 = vpop.f32.mrb[0].mxu0
    %6635 = vmatprep.mubr.bf16.mxu0 %v6570
    %6636 = vmatmul.mubr.bf16.gmra.mrb[0].mxu0 %v6399
    %v6637 = vpop.f32.mrb[0].mxu0
    %v6638 = vadd.f32 0.0, %v6637
    %v6639 = vpop.f32.mrb[0].mxu0
    %v6640 = vpop.f32.mrb[0].mxu0
    %v6641 = vadd.f32 0.0, %v6640
    %v6642 = vpop.f32.mrb[0].mxu0
    %6643 = vmatprep.mubr.bf16.mxu0 %v6573
    %6644 = vmatmul.mubr.bf16.gmra.mrb[0].mxu0 %v6414
    %v6645 = vpop.f32.mrb[0].mxu0
    %v6646 = vadd.f32 0.0, %v6645
    %v6647 = vpop.f32.mrb[0].mxu0
    %v6648 = vpop.f32.mrb[0].mxu0
    %v6649 = vadd.f32 0.0, %v6648
    %v6650 = vpop.f32.mrb[0].mxu0
    %6651 = vmatprep.mubr.bf16.mxu0 %v6576
    %6652 = vmatmul.mubr.bf16.gmra.mrb[0].mxu0 %v6429
    %v6653 = vpop.f32.mrb[0].mxu0
    %v6654 = vadd.f32 0.0, %v6653
    %v6655 = vpop.f32.mrb[0].mxu0
    %v6656 = vpop.f32.mrb[0].mxu0
    %v6657 = vadd.f32 0.0, %v6656
    %v6658 = vpop.f32.mrb[0].mxu0
    %6659 = vmatprep.mubr.bf16.mxu0 %v6579
    %6660 = vmatmul.mubr.bf16.gmra.mrb[0].mxu0 %v6444
    %v6661 = vpop.f32.mrb[0].mxu0
    %v6662 = vadd.f32 0.0, %v6661
    %v6663 = vpop.f32.mrb[0].mxu0
    %v6664 = vpop.f32.mrb[0].mxu0
    %v6665 = vadd.f32 0.0, %v6664
    %v6666 = vpop.f32.mrb[0].mxu0
    %6667 = vmatprep.mubr.bf16.mxu0 %v6582
    %6668 = vmatmul.mubr.bf16.gmra.mrb[0].mxu0 %v6459
    %v6669 = vpop.f32.mrb[0].mxu0
    %v6670 = vadd.f32 0.0, %v6669
    %v6671 = vpop.f32.mrb[0].mxu0
    %v6672 = vpop.f32.mrb[0].mxu0
    %v6673 = vadd.f32 0.0, %v6672
    %v6674 = vpop.f32.mrb[0].mxu0
    %6675 = vmatprep.mubr.bf16.mxu0 %v6585
    %6676 = vmatmul.mubr.bf16.gmra.mrb[0].mxu0 %v6474
    %v6677 = vpop.f32.mrb[0].mxu0
    %v6678 = vadd.f32 0.0, %v6677
    %v6679 = vpop.f32.mrb[0].mxu0
    %v6680 = vpop.f32.mrb[0].mxu0
    %v6681 = vadd.f32 0.0, %v6680
    %v6682 = vpop.f32.mrb[0].mxu0
    %6683 = vdwg.mxu0
    %v6685 = vshrl.u32 %v6207, 16
    %v6687 = vrot.slane %v6685, 3
    %v6688 = vshll.u32 %v6207, 16
    %v6690 = vrot.slane %v6688, 4
    %v6691 = vor.u32 %v6687, %v6690
    %v6693 = vshrl.u32 %v6209, 16
    %v6695 = vrot.slane %v6693, 3
    %v6696 = vshll.u32 %v6209, 16
    %v6698 = vrot.slane %v6696, 4
    %v6699 = vor.u32 %v6695, %v6698
    %v6700 = vsel %vm1286, %v6691, %v6699
    %v6702 = vshrl.u32 %v6208, 16
    %v6704 = vrot.slane %v6702, 3
    %v6705 = vshll.u32 %v6208, 16
    %v6707 = vrot.slane %v6705, 4
    %v6708 = vor.u32 %v6704, %v6707
    %v6710 = vshrl.u32 %v6210, 16
    %v6712 = vrot.slane %v6710, 3
    %v6713 = vshll.u32 %v6210, 16
    %v6715 = vrot.slane %v6713, 4
    %v6716 = vor.u32 %v6712, %v6715
    %v6717 = vsel %vm1286, %v6708, %v6716
    %v6719 = vshrl.u32 %v6211, 16
    %v6721 = vrot.slane %v6719, 3
    %v6722 = vshll.u32 %v6211, 16
    %v6724 = vrot.slane %v6722, 4
    %v6725 = vor.u32 %v6721, %v6724
    %v6726 = vsel %vm1286, %v6699, %v6725
    %v6728 = vshrl.u32 %v6212, 16
    %v6730 = vrot.slane %v6728, 3
    %v6731 = vshll.u32 %v6212, 16
    %v6733 = vrot.slane %v6731, 4
    %v6734 = vor.u32 %v6730, %v6733
    %v6735 = vsel %vm1286, %v6716, %v6734
    %v6737 = vshrl.u32 %v6213, 16
    %v6739 = vrot.slane %v6737, 3
    %v6740 = vshll.u32 %v6213, 16
    %v6742 = vrot.slane %v6740, 4
    %v6743 = vor.u32 %v6739, %v6742
    %v6744 = vsel %vm1286, %v6725, %v6743
    %v6746 = vshrl.u32 %v6214, 16
    %v6748 = vrot.slane %v6746, 3
    %v6749 = vshll.u32 %v6214, 16
    %v6751 = vrot.slane %v6749, 4
    %v6752 = vor.u32 %v6748, %v6751
    %v6753 = vsel %vm1286, %v6734, %v6752
    %v6755 = vshrl.u32 %v6215, 16
    %v6757 = vrot.slane %v6755, 3
    %v6758 = vshll.u32 %v6215, 16
    %v6760 = vrot.slane %v6758, 4
    %v6761 = vor.u32 %v6757, %v6760
    %v6762 = vsel %vm1286, %v6743, %v6761
    %v6764 = vshrl.u32 %v6216, 16
    %v6766 = vrot.slane %v6764, 3
    %v6767 = vshll.u32 %v6216, 16
    %v6769 = vrot.slane %v6767, 4
    %v6770 = vor.u32 %v6766, %v6769
    %v6771 = vsel %vm1286, %v6752, %v6770
    %v6773 = vshrl.u32 %v6217, 16
    %v6775 = vrot.slane %v6773, 3
    %v6776 = vshll.u32 %v6217, 16
    %v6778 = vrot.slane %v6776, 4
    %v6779 = vor.u32 %v6775, %v6778
    %v6780 = vsel %vm1286, %v6761, %v6779
    %v6782 = vshrl.u32 %v6218, 16
    %v6784 = vrot.slane %v6782, 3
    %v6785 = vshll.u32 %v6218, 16
    %v6787 = vrot.slane %v6785, 4
    %v6788 = vor.u32 %v6784, %v6787
    %v6789 = vsel %vm1286, %v6770, %v6788
    %v6791 = vshrl.u32 %v6219, 16
    %v6793 = vrot.slane %v6791, 3
    %v6794 = vshll.u32 %v6219, 16
    %v6796 = vrot.slane %v6794, 4
    %v6797 = vor.u32 %v6793, %v6796
    %v6798 = vsel %vm1286, %v6779, %v6797
    %v6800 = vshrl.u32 %v6220, 16
    %v6802 = vrot.slane %v6800, 3
    %v6803 = vshll.u32 %v6220, 16
    %v6805 = vrot.slane %v6803, 4
    %v6806 = vor.u32 %v6802, %v6805
    %v6807 = vsel %vm1286, %v6788, %v6806
    %v6809 = vshrl.u32 %v6221, 16
    %v6811 = vrot.slane %v6809, 3
    %v6812 = vshll.u32 %v6221, 16
    %v6814 = vrot.slane %v6812, 4
    %v6815 = vor.u32 %v6811, %v6814
    %v6816 = vsel %vm1286, %v6797, %v6815
    %v6818 = vshrl.u32 %v6222, 16
    %v6820 = vrot.slane %v6818, 3
    %v6821 = vshll.u32 %v6222, 16
    %v6823 = vrot.slane %v6821, 4
    %v6824 = vor.u32 %v6820, %v6823
    %v6825 = vsel %vm1286, %v6806, %v6824
    %v6827 = vshrl.u32 %v6223, 16
    %v6829 = vrot.slane %v6827, 3
    %v6830 = vshll.u32 %v6223, 16
    %v6832 = vrot.slane %v6830, 4
    %v6833 = vor.u32 %v6829, %v6832
    %v6834 = vsel %vm1286, %v6815, %v6833
    %v6836 = vshrl.u32 %v6224, 16
    %v6838 = vrot.slane %v6836, 3
    %v6839 = vshll.u32 %v6224, 16
    %v6841 = vrot.slane %v6839, 4
    %v6842 = vor.u32 %v6838, %v6841
    %v6843 = vsel %vm1286, %v6824, %v6842
    %v6876 = vunpack.c.l.b16 %v6225
    %v6877 = vunpack.c.l.b16 %v6226
    %v6878 = vunpack.c.l.b16 %v6227
    %v6879 = vunpack.c.l.b16 %v6228
    %v6880 = vunpack.c.l.b16 %v6229
    %v6881 = vunpack.c.l.b16 %v6230
    %v6882 = vunpack.c.l.b16 %v6231
    %v6883 = vunpack.c.l.b16 %v6232
    %v6884 = vunpack.c.l.b16 %v6233
    %v6885 = vunpack.c.l.b16 %v6234
    %v6886 = vunpack.c.l.b16 %v6235
    %v6887 = vunpack.c.l.b16 %v6236
    %v6888 = vunpack.c.l.b16 %v6237
    %v6889 = vunpack.c.l.b16 %v6238
    %v6890 = vunpack.c.l.b16 %v6239
    %v6891 = vunpack.c.l.b16 %v6240
    %v6892 = vunpack.c.l.b16 %v6241
    %v6893 = vunpack.c.l.b16 %v6242
    %v6894 = vunpack.c.l.b16 %v6243
    %v6895 = vunpack.c.l.b16 %v6244
    %v6896 = vunpack.c.l.b16 %v6245
    %v6897 = vunpack.c.l.b16 %v6246
    %v6898 = vunpack.c.l.b16 %v6247
    %v6899 = vunpack.c.l.b16 %v6248
    %v6900 = vpack.c.b16 %v6877, %v6876
    %v6901 = vpack.c.b16 %v6879, %v6878
    %v6902 = vpack.c.b16 %v6881, %v6880
    %v6903 = vpack.c.b16 %v6883, %v6882
    %v6904 = vpack.c.b16 %v6885, %v6884
    %v6905 = vpack.c.b16 %v6887, %v6886
    %v6906 = vpack.c.b16 %v6889, %v6888
    %v6907 = vpack.c.b16 %v6891, %v6890
    %v6908 = vpack.c.b16 %v6893, %v6892
    %v6909 = vpack.c.b16 %v6895, %v6894
    %v6910 = vpack.c.b16 %v6897, %v6896
    %v6911 = vpack.c.b16 %v6899, %v6898
    %v6925 = vsel %vm742, %v6717, 0
    %v6928 = vsel %vm742, %v6735, 0
    %v6931 = vsel %vm742, %v6753, 0
    %v6934 = vsel %vm742, %v6771, 0
    %v6937 = vsel %vm742, %v6789, 0
    %v6940 = vsel %vm742, %v6807, 0
    %v6943 = vsel %vm742, %v6825, 0
    %v6946 = vsel %vm742, %v6843, 0
    %6948 = vmatprep.subr.bf16.mxu0 0
    %6949 = vmatpush1.bf16.msra.mxu0 %v6900
    %6950 = vmatprep.subr.bf16.mxu0 0
    %6951 = vmatpush1.bf16.msra.mxu0 %v6901
    %6952 = vmatprep.subr.bf16.mxu0 0
    %6953 = vmatpush1.bf16.msra.mxu0 %v6902
    %6954 = vmatprep.subr.bf16.mxu0 0
    %6955 = vmatpush1.bf16.msra.mxu0 %v6903
    %6956 = vmatprep.subr.bf16.mxu0 0
    %6957 = vmatpush1.bf16.msra.mxu0 %v6904
    %6958 = vmatprep.subr.bf16.mxu0 0
    %6959 = vmatpush1.bf16.msra.mxu0 %v6905
    %6960 = vmatprep.subr.bf16.mxu0 0
    %6961 = vmatpush1.bf16.msra.mxu0 %v6906
    %6962 = vmatprep.subr.bf16.mxu0 0
    %6963 = vmatpush1.bf16.msra.mxu0 %v6907
    %6964 = vmatprep.subr.bf16.mxu0 0
    %6965 = vmatpush1.bf16.msra.mxu0 %v6908
    %6966 = vmatprep.subr.bf16.mxu0 0
    %6967 = vmatpush1.bf16.msra.mxu0 %v6909
    %6968 = vmatprep.subr.bf16.mxu0 0
    %6969 = vmatpush1.bf16.msra.mxu0 %v6910
    %6970 = vmatprep.subr.bf16.mxu0 0
    %6971 = vmatpush1.bf16.msra.mxu0 %v6911
    %6972 = vmatprep.subr.bf16.mxu0 0
    %6973 = vmatpush1.bf16.msra.mxu0 0
    %6974 = vmatprep.subr.bf16.mxu0 0
    %6975 = vmatpush1.bf16.msra.mxu0 0
    %6976 = vmatprep.subr.bf16.mxu0 0
    %6977 = vmatpush1.bf16.msra.mxu0 0
    %6978 = vmatprep.subr.bf16.mxu0 0
    %6979 = vmatpush1.bf16.msra.mxu0 0
    %6980 = vmatprep.mubr.bf16.mxu0 %v6925
    %6981 = vmatmul.mubr.bf16.gmra.mrb[0].mxu0 %v6700
    %v6982 = vpop.f32.mrb[0].mxu0
    %v6983 = vadd.f32 %v6622, %v6982
    %v6984 = vpop.f32.mrb[0].mxu0
    %v6985 = vpop.f32.mrb[0].mxu0
    %v6986 = vadd.f32 %v6625, %v6985
    %v6987 = vpop.f32.mrb[0].mxu0
    %6988 = vmatprep.mubr.bf16.mxu0 %v6928
    %6989 = vmatmul.mubr.bf16.gmra.mrb[0].mxu0 %v6726
    %v6990 = vpop.f32.mrb[0].mxu0
    %v6991 = vadd.f32 %v6630, %v6990
    %v6992 = vpop.f32.mrb[0].mxu0
    %v6993 = vpop.f32.mrb[0].mxu0
    %v6994 = vadd.f32 %v6633, %v6993
    %v6995 = vpop.f32.mrb[0].mxu0
    %6996 = vmatprep.mubr.bf16.mxu0 %v6931
    %6997 = vmatmul.mubr.bf16.gmra.mrb[0].mxu0 %v6744
    %v6998 = vpop.f32.mrb[0].mxu0
    %v6999 = vadd.f32 %v6638, %v6998
    %v7000 = vpop.f32.mrb[0].mxu0
    %v7001 = vpop.f32.mrb[0].mxu0
    %v7002 = vadd.f32 %v6641, %v7001
    %v7003 = vpop.f32.mrb[0].mxu0
    %7004 = vmatprep.mubr.bf16.mxu0 %v6934
    %7005 = vmatmul.mubr.bf16.gmra.mrb[0].mxu0 %v6762
    %v7006 = vpop.f32.mrb[0].mxu0
    %v7007 = vadd.f32 %v6646, %v7006
    %v7008 = vpop.f32.mrb[0].mxu0
    %v7009 = vpop.f32.mrb[0].mxu0
    %v7010 = vadd.f32 %v6649, %v7009
    %v7011 = vpop.f32.mrb[0].mxu0
    %7012 = vmatprep.mubr.bf16.mxu0 %v6937
    %7013 = vmatmul.mubr.bf16.gmra.mrb[0].mxu0 %v6780
    %v7014 = vpop.f32.mrb[0].mxu0
    %v7015 = vadd.f32 %v6654, %v7014
    %v7016 = vpop.f32.mrb[0].mxu0
    %v7017 = vpop.f32.mrb[0].mxu0
    %v7018 = vadd.f32 %v6657, %v7017
    %v7019 = vpop.f32.mrb[0].mxu0
    %7020 = vmatprep.mubr.bf16.mxu0 %v6940
    %7021 = vmatmul.mubr.bf16.gmra.mrb[0].mxu0 %v6798
    %v7022 = vpop.f32.mrb[0].mxu0
    %v7023 = vadd.f32 %v6662, %v7022
    %v7024 = vpop.f32.mrb[0].mxu0
    %v7025 = vpop.f32.mrb[0].mxu0
    %v7026 = vadd.f32 %v6665, %v7025
    %v7027 = vpop.f32.mrb[0].mxu0
    %7028 = vmatprep.mubr.bf16.mxu0 %v6943
    %7029 = vmatmul.mubr.bf16.gmra.mrb[0].mxu0 %v6816
    %v7030 = vpop.f32.mrb[0].mxu0
    %v7031 = vadd.f32 %v6670, %v7030
    %v7032 = vpop.f32.mrb[0].mxu0
    %v7033 = vpop.f32.mrb[0].mxu0
    %v7034 = vadd.f32 %v6673, %v7033
    %v7035 = vpop.f32.mrb[0].mxu0
    %7036 = vmatprep.mubr.bf16.mxu0 %v6946
    %7037 = vmatmul.mubr.bf16.gmra.mrb[0].mxu0 %v6834
    %v7038 = vpop.f32.mrb[0].mxu0
    %v7039 = vadd.f32 %v6678, %v7038
    %v7040 = vpop.f32.mrb[0].mxu0
    %v7041 = vpop.f32.mrb[0].mxu0
    %v7042 = vadd.f32 %v6681, %v7041
    %v7043 = vpop.f32.mrb[0].mxu0
    %7044 = vdwg.mxu0
    %v7045 = vld [vmem:[#allocation2 + $0x8] sm:$0xf8]
    %v7046 = vld [vmem:[#allocation2 + $0x48] sm:$0xf]
    %v7047 = vsel %vm1210, %v7045, 0
    %v7048 = vsel %vm1211, %v6020, 0
    %v7049 = vsel %vm1212, %v6021, 0
    %v7050 = vsel %vm1213, %v6022, 0
    %v7051 = vsel %vm1214, %v6023, 0
    %v7052 = vsel %vm1215, %v6024, 0
    %v7053 = vsel %vm1216, %v6025, 0
    %v7054 = vsel %vm1217, %v6250, 0
    %v7055 = vsel %vm1218, %v7046, 0
    %v7056 = vld [vmem:[#allocation2 + $0x8] sm:$0xf0]
    %v7057 = vld [vmem:[#allocation2 + $0x48] sm:$0x1f]
    %v7058 = vsel %vm1358, %v7056, 0
    %v7059 = vsel %vm1359, %v6020, 0
    %v7060 = vsel %vm1360, %v6021, 0
    %v7061 = vsel %vm1361, %v6022, 0
    %v7062 = vsel %vm1362, %v6023, 0
    %v7063 = vsel %vm1363, %v6024, 0
    %v7064 = vsel %vm1364, %v6025, 0
    %v7065 = vsel %vm1365, %v6250, 0
    %v7066 = vsel %vm1366, %v7057, 0
    %v7068 = vshrl.u32 %v7056, 16
    %v7070 = vshll.u32 %v7056, 16
    %v7072 = vrot.slane %v7070, 1
    %v7073 = vor.u32 %v7068, %v7072
    %v7074 = vsel %vm1376, %v7073, %v6065
    %v7076 = vshll.u32 %v7046, 16
    %v7078 = vrot.slane %v7076, 1
    %v7079 = vsel %vm1376, %v6277, %v7078
    %v7080 = vshrl.u32 %v7046, 16
    %v7082 = vor.u32 %v7080, %v7078
    %7083 = vrot.lane.b32.xlu0 %v7074, 64
    %v7084 = vpop.permute.xlu0 %7083
    %7085 = vrot.lane.b32.xlu0 %v7079, 64
    %v7086 = vpop.permute.xlu0 %7085
    %7087 = vrot.lane.b32.xlu0 %v7082, 64
    %v7088 = vpop.permute.xlu0 %7087
    %v7098 = vrot.slane %v7058, 1
    %v7099 = vrot.slane %v7059, 1
    %v7100 = vsel %vm1475, %v7098, %v7099
    %v7101 = vrot.slane %v7060, 1
    %v7102 = vsel %vm1475, %v7099, %v7101
    %v7103 = vrot.slane %v7061, 1
    %v7104 = vsel %vm1475, %v7101, %v7103
    %v7105 = vrot.slane %v7062, 1
    %v7106 = vsel %vm1475, %v7103, %v7105
    %v7107 = vrot.slane %v7063, 1
    %v7108 = vsel %vm1475, %v7105, %v7107
    %v7109 = vrot.slane %v7064, 1
    %v7110 = vsel %vm1475, %v7107, %v7109
    %v7111 = vrot.slane %v7065, 1
    %v7112 = vsel %vm1475, %v7109, %v7111
    %v7113 = vrot.slane %v7066, 1
    %v7114 = vsel %vm1475, %v7111, %v7113
    %v7126 = vsel %vm742, %v7047, %v7084
    %v7129 = vsel %vm742, %v7048, %v6123
    %v7132 = vsel %vm742, %v7049, %v6125
    %v7135 = vsel %vm742, %v7050, %v6127
    %v7138 = vsel %vm742, %v7051, %v6129
    %v7141 = vsel %vm742, %v7052, %v6131
    %v7144 = vsel %vm742, %v7053, %v6281
    %v7148 = vsel %vm742, %v7054, %v7086
    %v7152 = vsel %vm742, %v7055, %v7088
    %v7154 = vsel %vm2813, %v7126, 0
    %v7155 = vsel %vm2813, %v7100, 0
    %v7156 = vsel %vm2814, %v7129, 0
    %v7157 = vsel %vm2814, %v7102, 0
    %v7158 = vsel %vm2815, %v7132, 0
    %v7159 = vsel %vm2815, %v7104, 0
    %v7160 = vsel %vm2816, %v7135, 0
    %v7161 = vsel %vm2816, %v7106, 0
    %v7162 = vsel %vm2817, %v7138, 0
    %v7163 = vsel %vm2817, %v7108, 0
    %v7164 = vsel %vm2818, %v7141, 0
    %v7165 = vsel %vm2818, %v7110, 0
    %v7166 = vsel %vm2819, %v7144, 0
    %v7167 = vsel %vm2819, %v7112, 0
    %v7168 = vsel %vm2820, %v7148, 0
    %v7169 = vsel %vm2820, %v7114, 0
    %v7170 = vsel %vm2821, %v7152, 0
    %v7171 = vsel %vm2821, %v7113, 0
    %s7172 = scalar_lea.vmem %s9, 192
    %v7173 = vld [vmem:[%s7172] sm:$0xf]
    %v7174 = vld [vmem:[%s7172 + $0x4] sm:$0xf]
    %v7175 = vld [vmem:[%s7172 + $0x8] sm:$0xf]
    %v7176 = vld [vmem:[%s7172 + $0xc] sm:$0xf]
    %v7177 = vld [vmem:[%s7172 + $0x10] sm:$0xf]
    %v7178 = vld [vmem:[%s7172 + $0x14] sm:$0xf]
    %v7179 = vld [vmem:[%s7172 + $0x18] sm:$0xf]
    %v7180 = vld [vmem:[%s7172 + $0x1c] sm:$0xf]
    %v7181 = vld [vmem:[%s7172 + $0x20] sm:$0xf]
    %v7182 = vld [vmem:[%s7172 + $0x24] sm:$0xf]
    %v7183 = vld [vmem:[%s7172 + $0x28] sm:$0xf]
    %v7184 = vld [vmem:[%s7172 + $0x2c] sm:$0xf]
    %v7185 = vld [vmem:[%s7172 + $0x30] sm:$0xf]
    %v7186 = vld [vmem:[%s7172 + $0x34] sm:$0xf]
    %v7187 = vld [vmem:[%s7172 + $0x38] sm:$0xf]
    %v7188 = vld [vmem:[%s7172 + $0x3c] sm:$0xf]
    %v7189 = vld [vmem:[%s7172 + $0x40] sm:$0xf]
    %v7190 = vld [vmem:[%s7172 + $0x44] sm:$0xf]
    %v7191 = vld [vmem:[%s7172 + $0x48] sm:$0xf]
    %v7192 = vld [vmem:[%s7172 + $0x4c] sm:$0xf]
    %v7193 = vld [vmem:[%s7172 + $0x50] sm:$0xf]
    %v7194 = vld [vmem:[%s7172 + $0x54] sm:$0xf]
    %v7195 = vld [vmem:[%s7172 + $0x58] sm:$0xf]
    %v7196 = vld [vmem:[%s7172 + $0x5c] sm:$0xf]
    %v7198 = vshrl.u32 %v7154, 16
    %v7200 = vrot.slane %v7198, 3
    %v7201 = vshll.u32 %v7154, 16
    %v7203 = vrot.slane %v7201, 4
    %v7204 = vor.u32 %v7200, %v7203
    %v7206 = vshrl.u32 %v7156, 16
    %v7208 = vrot.slane %v7206, 3
    %v7209 = vshll.u32 %v7156, 16
    %v7211 = vrot.slane %v7209, 4
    %v7212 = vor.u32 %v7208, %v7211
    %v7213 = vsel %vm1286, %v7204, %v7212
    %v7215 = vshrl.u32 %v7155, 16
    %v7217 = vrot.slane %v7215, 3
    %v7218 = vshll.u32 %v7155, 16
    %v7220 = vrot.slane %v7218, 4
    %v7221 = vor.u32 %v7217, %v7220
    %v7223 = vshrl.u32 %v7157, 16
    %v7225 = vrot.slane %v7223, 3
    %v7226 = vshll.u32 %v7157, 16
    %v7228 = vrot.slane %v7226, 4
    %v7229 = vor.u32 %v7225, %v7228
    %v7230 = vsel %vm1286, %v7221, %v7229
    %v7232 = vshrl.u32 %v7158, 16
    %v7234 = vrot.slane %v7232, 3
    %v7235 = vshll.u32 %v7158, 16
    %v7237 = vrot.slane %v7235, 4
    %v7238 = vor.u32 %v7234, %v7237
    %v7239 = vsel %vm1286, %v7212, %v7238
    %v7241 = vshrl.u32 %v7159, 16
    %v7243 = vrot.slane %v7241, 3
    %v7244 = vshll.u32 %v7159, 16
    %v7246 = vrot.slane %v7244, 4
    %v7247 = vor.u32 %v7243, %v7246
    %v7248 = vsel %vm1286, %v7229, %v7247
    %v7250 = vshrl.u32 %v7160, 16
    %v7252 = vrot.slane %v7250, 3
    %v7253 = vshll.u32 %v7160, 16
    %v7255 = vrot.slane %v7253, 4
    %v7256 = vor.u32 %v7252, %v7255
    %v7257 = vsel %vm1286, %v7238, %v7256
    %v7259 = vshrl.u32 %v7161, 16
    %v7261 = vrot.slane %v7259, 3
    %v7262 = vshll.u32 %v7161, 16
    %v7264 = vrot.slane %v7262, 4
    %v7265 = vor.u32 %v7261, %v7264
    %v7266 = vsel %vm1286, %v7247, %v7265
    %v7268 = vshrl.u32 %v7162, 16
    %v7270 = vrot.slane %v7268, 3
    %v7271 = vshll.u32 %v7162, 16
    %v7273 = vrot.slane %v7271, 4
    %v7274 = vor.u32 %v7270, %v7273
    %v7275 = vsel %vm1286, %v7256, %v7274
    %v7277 = vshrl.u32 %v7163, 16
    %v7279 = vrot.slane %v7277, 3
    %v7280 = vshll.u32 %v7163, 16
    %v7282 = vrot.slane %v7280, 4
    %v7283 = vor.u32 %v7279, %v7282
    %v7284 = vsel %vm1286, %v7265, %v7283
    %v7286 = vshrl.u32 %v7164, 16
    %v7288 = vrot.slane %v7286, 3
    %v7289 = vshll.u32 %v7164, 16
    %v7291 = vrot.slane %v7289, 4
    %v7292 = vor.u32 %v7288, %v7291
    %v7293 = vsel %vm1286, %v7274, %v7292
    %v7295 = vshrl.u32 %v7165, 16
    %v7297 = vrot.slane %v7295, 3
    %v7298 = vshll.u32 %v7165, 16
    %v7300 = vrot.slane %v7298, 4
    %v7301 = vor.u32 %v7297, %v7300
    %v7302 = vsel %vm1286, %v7283, %v7301
    %v7304 = vshrl.u32 %v7166, 16
    %v7306 = vrot.slane %v7304, 3
    %v7307 = vshll.u32 %v7166, 16
    %v7309 = vrot.slane %v7307, 4
    %v7310 = vor.u32 %v7306, %v7309
    %v7311 = vsel %vm1286, %v7292, %v7310
    %v7313 = vshrl.u32 %v7167, 16
    %v7315 = vrot.slane %v7313, 3
    %v7316 = vshll.u32 %v7167, 16
    %v7318 = vrot.slane %v7316, 4
    %v7319 = vor.u32 %v7315, %v7318
    %v7320 = vsel %vm1286, %v7301, %v7319
    %v7322 = vshrl.u32 %v7168, 16
    %v7324 = vrot.slane %v7322, 3
    %v7325 = vshll.u32 %v7168, 16
    %v7327 = vrot.slane %v7325, 4
    %v7328 = vor.u32 %v7324, %v7327
    %v7329 = vsel %vm1286, %v7310, %v7328
    %v7331 = vshrl.u32 %v7169, 16
    %v7333 = vrot.slane %v7331, 3
    %v7334 = vshll.u32 %v7169, 16
    %v7336 = vrot.slane %v7334, 4
    %v7337 = vor.u32 %v7333, %v7336
    %v7338 = vsel %vm1286, %v7319, %v7337
    %v7340 = vshrl.u32 %v7170, 16
    %v7342 = vrot.slane %v7340, 3
    %v7343 = vshll.u32 %v7170, 16
    %v7345 = vrot.slane %v7343, 4
    %v7346 = vor.u32 %v7342, %v7345
    %v7347 = vsel %vm1286, %v7328, %v7346
    %v7349 = vshrl.u32 %v7171, 16
    %v7351 = vrot.slane %v7349, 3
    %v7352 = vshll.u32 %v7171, 16
    %v7354 = vrot.slane %v7352, 4
    %v7355 = vor.u32 %v7351, %v7354
    %v7356 = vsel %vm1286, %v7337, %v7355
    %v7389 = vunpack.c.l.b16 %v7173
    %v7390 = vunpack.c.l.b16 %v7174
    %v7391 = vunpack.c.l.b16 %v7175
    %v7392 = vunpack.c.l.b16 %v7176
    %v7393 = vunpack.c.l.b16 %v7177
    %v7394 = vunpack.c.l.b16 %v7178
    %v7395 = vunpack.c.l.b16 %v7179
    %v7396 = vunpack.c.l.b16 %v7180
    %v7397 = vunpack.c.l.b16 %v7181
    %v7398 = vunpack.c.l.b16 %v7182
    %v7399 = vunpack.c.l.b16 %v7183
    %v7400 = vunpack.c.l.b16 %v7184
    %v7401 = vunpack.c.l.b16 %v7185
    %v7402 = vunpack.c.l.b16 %v7186
    %v7403 = vunpack.c.l.b16 %v7187
    %v7404 = vunpack.c.l.b16 %v7188
    %v7405 = vunpack.c.l.b16 %v7189
    %v7406 = vunpack.c.l.b16 %v7190
    %v7407 = vunpack.c.l.b16 %v7191
    %v7408 = vunpack.c.l.b16 %v7192
    %v7409 = vunpack.c.l.b16 %v7193
    %v7410 = vunpack.c.l.b16 %v7194
    %v7411 = vunpack.c.l.b16 %v7195
    %v7412 = vunpack.c.l.b16 %v7196
    %v7413 = vpack.c.b16 %v7390, %v7389
    %v7414 = vpack.c.b16 %v7392, %v7391
    %v7415 = vpack.c.b16 %v7394, %v7393
    %v7416 = vpack.c.b16 %v7396, %v7395
    %v7417 = vpack.c.b16 %v7398, %v7397
    %v7418 = vpack.c.b16 %v7400, %v7399
    %v7419 = vpack.c.b16 %v7402, %v7401
    %v7420 = vpack.c.b16 %v7404, %v7403
    %v7421 = vpack.c.b16 %v7406, %v7405
    %v7422 = vpack.c.b16 %v7408, %v7407
    %v7423 = vpack.c.b16 %v7410, %v7409
    %v7424 = vpack.c.b16 %v7412, %v7411
    %v7438 = vsel %vm742, %v7230, 0
    %v7441 = vsel %vm742, %v7248, 0
    %v7444 = vsel %vm742, %v7266, 0
    %v7447 = vsel %vm742, %v7284, 0
    %v7450 = vsel %vm742, %v7302, 0
    %v7453 = vsel %vm742, %v7320, 0
    %v7456 = vsel %vm742, %v7338, 0
    %v7459 = vsel %vm742, %v7356, 0
    %7461 = vmatprep.subr.bf16.mxu0 0
    %7462 = vmatpush1.bf16.msra.mxu0 %v7413
    %7463 = vmatprep.subr.bf16.mxu0 0
    %7464 = vmatpush1.bf16.msra.mxu0 %v7414
    %7465 = vmatprep.subr.bf16.mxu0 0
    %7466 = vmatpush1.bf16.msra.mxu0 %v7415
    %7467 = vmatprep.subr.bf16.mxu0 0
    %7468 = vmatpush1.bf16.msra.mxu0 %v7416
    %7469 = vmatprep.subr.bf16.mxu0 0
    %7470 = vmatpush1.bf16.msra.mxu0 %v7417
    %7471 = vmatprep.subr.bf16.mxu0 0
    %7472 = vmatpush1.bf16.msra.mxu0 %v7418
    %7473 = vmatprep.subr.bf16.mxu0 0
    %7474 = vmatpush1.bf16.msra.mxu0 %v7419
    %7475 = vmatprep.subr.bf16.mxu0 0
    %7476 = vmatpush1.bf16.msra.mxu0 %v7420
    %7477 = vmatprep.subr.bf16.mxu0 0
    %7478 = vmatpush1.bf16.msra.mxu0 %v7421
    %7479 = vmatprep.subr.bf16.mxu0 0
    %7480 = vmatpush1.bf16.msra.mxu0 %v7422
    %7481 = vmatprep.subr.bf16.mxu0 0
    %7482 = vmatpush1.bf16.msra.mxu0 %v7423
    %7483 = vmatprep.subr.bf16.mxu0 0
    %7484 = vmatpush1.bf16.msra.mxu0 %v7424
    %7485 = vmatprep.subr.bf16.mxu0 0
    %7486 = vmatpush1.bf16.msra.mxu0 0
    %7487 = vmatprep.subr.bf16.mxu0 0
    %7488 = vmatpush1.bf16.msra.mxu0 0
    %7489 = vmatprep.subr.bf16.mxu0 0
    %7490 = vmatpush1.bf16.msra.mxu0 0
    %7491 = vmatprep.subr.bf16.mxu0 0
    %7492 = vmatpush1.bf16.msra.mxu0 0
    %7493 = vmatprep.mubr.bf16.mxu0 %v7438
    %7494 = vmatmul.mubr.bf16.gmra.mrb[0].mxu0 %v7213
    %v7495 = vpop.f32.mrb[0].mxu0
    %v7496 = vadd.f32 0.0, %v7495
    %v7497 = vpop.f32.mrb[0].mxu0
    %v7498 = vpop.f32.mrb[0].mxu0
    %v7499 = vadd.f32 0.0, %v7498
    %v7500 = vpop.f32.mrb[0].mxu0
    %7501 = vmatprep.mubr.bf16.mxu0 %v7441
    %7502 = vmatmul.mubr.bf16.gmra.mrb[0].mxu0 %v7239
    %v7503 = vpop.f32.mrb[0].mxu0
    %v7504 = vadd.f32 0.0, %v7503
    %v7505 = vpop.f32.mrb[0].mxu0
    %v7506 = vpop.f32.mrb[0].mxu0
    %v7507 = vadd.f32 0.0, %v7506
    %v7508 = vpop.f32.mrb[0].mxu0
    %7509 = vmatprep.mubr.bf16.mxu0 %v7444
    %7510 = vmatmul.mubr.bf16.gmra.mrb[0].mxu0 %v7257
    %v7511 = vpop.f32.mrb[0].mxu0
    %v7512 = vadd.f32 0.0, %v7511
    %v7513 = vpop.f32.mrb[0].mxu0
    %v7514 = vpop.f32.mrb[0].mxu0
    %v7515 = vadd.f32 0.0, %v7514
    %v7516 = vpop.f32.mrb[0].mxu0
    %7517 = vmatprep.mubr.bf16.mxu0 %v7447
    %7518 = vmatmul.mubr.bf16.gmra.mrb[0].mxu0 %v7275
    %v7519 = vpop.f32.mrb[0].mxu0
    %v7520 = vadd.f32 0.0, %v7519
    %v7521 = vpop.f32.mrb[0].mxu0
    %v7522 = vpop.f32.mrb[0].mxu0
    %v7523 = vadd.f32 0.0, %v7522
    %v7524 = vpop.f32.mrb[0].mxu0
    %7525 = vmatprep.mubr.bf16.mxu0 %v7450
    %7526 = vmatmul.mubr.bf16.gmra.mrb[0].mxu0 %v7293
    %v7527 = vpop.f32.mrb[0].mxu0
    %v7528 = vadd.f32 0.0, %v7527
    %v7529 = vpop.f32.mrb[0].mxu0
    %v7530 = vpop.f32.mrb[0].mxu0
    %v7531 = vadd.f32 0.0, %v7530
    %v7532 = vpop.f32.mrb[0].mxu0
    %7533 = vmatprep.mubr.bf16.mxu0 %v7453
    %7534 = vmatmul.mubr.bf16.gmra.mrb[0].mxu0 %v7311
    %v7535 = vpop.f32.mrb[0].mxu0
    %v7536 = vadd.f32 0.0, %v7535
    %v7537 = vpop.f32.mrb[0].mxu0
    %v7538 = vpop.f32.mrb[0].mxu0
    %v7539 = vadd.f32 0.0, %v7538
    %v7540 = vpop.f32.mrb[0].mxu0
    %7541 = vmatprep.mubr.bf16.mxu0 %v7456
    %7542 = vmatmul.mubr.bf16.gmra.mrb[0].mxu0 %v7329
    %v7543 = vpop.f32.mrb[0].mxu0
    %v7544 = vadd.f32 0.0, %v7543
    %v7545 = vpop.f32.mrb[0].mxu0
    %v7546 = vpop.f32.mrb[0].mxu0
    %v7547 = vadd.f32 0.0, %v7546
    %v7548 = vpop.f32.mrb[0].mxu0
    %7549 = vmatprep.mubr.bf16.mxu0 %v7459
    %7550 = vmatmul.mubr.bf16.gmra.mrb[0].mxu0 %v7347
    %v7551 = vpop.f32.mrb[0].mxu0
    %v7552 = vadd.f32 0.0, %v7551
    %v7553 = vpop.f32.mrb[0].mxu0
    %v7554 = vpop.f32.mrb[0].mxu0
    %v7555 = vadd.f32 0.0, %v7554
    %v7556 = vpop.f32.mrb[0].mxu0
    %7557 = vdwg.mxu0
    %v7558 = vadd.f32 %v6983, %v7496
    %v7559 = vadd.f32 %v6986, %v7499
    %v7560 = vadd.f32 %v6991, %v7504
    %v7561 = vadd.f32 %v6994, %v7507
    %v7562 = vadd.f32 %v6999, %v7512
    %v7563 = vadd.f32 %v7002, %v7515
    %v7564 = vadd.f32 %v7007, %v7520
    %v7565 = vadd.f32 %v7010, %v7523
    %v7566 = vadd.f32 %v7015, %v7528
    %v7567 = vadd.f32 %v7018, %v7531
    %v7568 = vadd.f32 %v7023, %v7536
    %v7569 = vadd.f32 %v7026, %v7539
    %v7570 = vadd.f32 %v7031, %v7544
    %v7571 = vadd.f32 %v7034, %v7547
    %v7572 = vadd.f32 %v7039, %v7552
    %v7573 = vadd.f32 %v7042, %v7555
    %v7574 = vmax.f32 %v7558, 0.0
    %v7575 = vmax.f32 %v7559, 0.0
    %v7576 = vmax.f32 %v7560, 0.0
    %v7577 = vmax.f32 %v7561, 0.0
    %v7578 = vmax.f32 %v7562, 0.0
    %v7579 = vmax.f32 %v7563, 0.0
    %v7580 = vmax.f32 %v7564, 0.0
    %v7581 = vmax.f32 %v7565, 0.0
    %v7582 = vmax.f32 %v7566, 0.0
    %v7583 = vmax.f32 %v7567, 0.0
    %v7584 = vmax.f32 %v7568, 0.0
    %v7585 = vmax.f32 %v7569, 0.0
    %v7586 = vmax.f32 %v7570, 0.0
    %v7587 = vmax.f32 %v7571, 0.0
    %v7588 = vmax.f32 %v7572, 0.0
    %v7589 = vmax.f32 %v7573, 0.0
    %v7590 = vpack.c.bf16 %v7575, %v7574
    %v7591 = vpack.c.bf16 %v7577, %v7576
    %v7592 = vpack.c.bf16 %v7579, %v7578
    %v7593 = vpack.c.bf16 %v7581, %v7580
    %v7594 = vpack.c.bf16 %v7583, %v7582
    %v7595 = vpack.c.bf16 %v7585, %v7584
    %v7596 = vpack.c.bf16 %v7587, %v7586
    %v7597 = vpack.c.bf16 %v7589, %v7588
    %v7598 = vld [vmem:[%s10] sm:$0xff]
    %v7599 = vld [vmem:[%s10 + $0x8] sm:$0xff]
    %v7600 = vld [vmem:[%s10 + $0x10] sm:$0xff]
    %v7601 = vld [vmem:[%s10 + $0x18] sm:$0xff]
    %v7602 = vld [vmem:[%s10 + $0x20] sm:$0xff]
    %v7603 = vld [vmem:[%s10 + $0x28] sm:$0xff]
    %v7604 = vld [vmem:[%s10 + $0x30] sm:$0xff]
    %v7605 = vld [vmem:[%s10 + $0x38] sm:$0xff]
    %v7606 = vld [vmem:[#allocation3] sm:$0xff]
    %v7607 = vld [vmem:[#allocation3 + $0x8] sm:$0xff]
    %v7608 = vld [vmem:[#allocation3 + $0x10] sm:$0xff]
    %v7609 = vld [vmem:[#allocation3 + $0x18] sm:$0xff]
    %v7610 = vld [vmem:[#allocation3 + $0x20] sm:$0xff]
    %v7611 = vld [vmem:[#allocation3 + $0x28] sm:$0xff]
    %v7612 = vld [vmem:[#allocation3 + $0x30] sm:$0xff]
    %v7613 = vld [vmem:[#allocation3 + $0x38] sm:$0xff]
    %v7614 = vld [vmem:[#allocation3 + $0x40] sm:$0xff]
    %v7615 = vld [vmem:[#allocation3 + $0x48] sm:$0xff]
    %v7616 = vld [vmem:[#allocation3 + $0x50] sm:$0xff]
    %v7617 = vld [vmem:[#allocation3 + $0x58] sm:$0xff]
    %v7618 = vld [vmem:[#allocation3 + $0x60] sm:$0xff]
    %v7619 = vld [vmem:[#allocation3 + $0x68] sm:$0xff]
    %v7620 = vld [vmem:[#allocation3 + $0x70] sm:$0xff]
    %v7621 = vld [vmem:[#allocation3 + $0x78] sm:$0xff]
    %v7622 = vld [vmem:[#allocation3 + $0x80] sm:$0xff]
    %v7623 = vld [vmem:[#allocation3 + $0x88] sm:$0xff]
    %v7624 = vld [vmem:[#allocation3 + $0x90] sm:$0xff]
    %v7625 = vld [vmem:[#allocation3 + $0x98] sm:$0xff]
    %v7626 = vld [vmem:[#allocation3 + $0xa0] sm:$0xff]
    %v7627 = vld [vmem:[#allocation3 + $0xa8] sm:$0xff]
    %v7628 = vld [vmem:[#allocation3 + $0xb0] sm:$0xff]
    %v7629 = vld [vmem:[#allocation3 + $0xb8] sm:$0xff]
    %v7630 = vld [vmem:[#allocation3 + $0xc0] sm:$0xff]
    %v7631 = vld [vmem:[#allocation3 + $0xc8] sm:$0xff]
    %v7632 = vld [vmem:[#allocation3 + $0xd0] sm:$0xff]
    %v7633 = vld [vmem:[#allocation3 + $0xd8] sm:$0xff]
    %v7634 = vld [vmem:[#allocation3 + $0xe0] sm:$0xff]
    %v7635 = vld [vmem:[#allocation3 + $0xe8] sm:$0xff]
    %v7636 = vld [vmem:[#allocation3 + $0xf0] sm:$0xff]
    %v7637 = vld [vmem:[#allocation3 + $0xf8] sm:$0xff]
    %v7646 = vunpack.c.l.b16 %v7598
    %v7647 = vunpack.c.h.b16 %v7598
    %v7648 = vunpack.c.l.b16 %v7599
    %v7649 = vunpack.c.h.b16 %v7599
    %v7650 = vunpack.c.l.b16 %v7600
    %v7651 = vunpack.c.h.b16 %v7600
    %v7652 = vunpack.c.l.b16 %v7601
    %v7653 = vunpack.c.h.b16 %v7601
    %v7654 = vunpack.c.l.b16 %v7602
    %v7655 = vunpack.c.h.b16 %v7602
    %v7656 = vunpack.c.l.b16 %v7603
    %v7657 = vunpack.c.h.b16 %v7603
    %v7658 = vunpack.c.l.b16 %v7604
    %v7659 = vunpack.c.h.b16 %v7604
    %v7660 = vunpack.c.l.b16 %v7605
    %v7661 = vunpack.c.h.b16 %v7605
    %v7662 = vpack.c.b16 %v7648, %v7646
    %v7663 = vpack.c.b16 %v7649, %v7647
    %v7664 = vpack.c.b16 %v7652, %v7650
    %v7665 = vpack.c.b16 %v7653, %v7651
    %v7666 = vpack.c.b16 %v7656, %v7654
    %v7667 = vpack.c.b16 %v7657, %v7655
    %v7668 = vpack.c.b16 %v7660, %v7658
    %v7669 = vpack.c.b16 %v7661, %v7659
    %v7679 = vsel %vm742, %v7590, 0
    %v7682 = vsel %vm742, %v7591, 0
    %v7685 = vsel %vm742, %v7592, 0
    %v7688 = vsel %vm742, %v7593, 0
    %v7691 = vsel %vm742, %v7594, 0
    %v7694 = vsel %vm742, %v7595, 0
    %v7697 = vsel %vm742, %v7596, 0
    %v7700 = vsel %vm742, %v7597, 0
    %7702 = vmatprep.subr.bf16.mxu0 %v7663
    %7703 = vmatpush1.bf16.msra.mxu0 %v7662
    %7704 = vmatprep.subr.bf16.mxu0 %v7665
    %7705 = vmatpush1.bf16.msra.mxu0 %v7664
    %7706 = vmatprep.subr.bf16.mxu0 %v7667
    %7707 = vmatpush1.bf16.msra.mxu0 %v7666
    %7708 = vmatprep.subr.bf16.mxu0 %v7669
    %7709 = vmatpush1.bf16.msra.mxu0 %v7668
    %7710 = vmatprep.subr.bf16.mxu0 0
    %7711 = vmatpush1.bf16.msra.mxu0 0
    %7712 = vmatprep.subr.bf16.mxu0 0
    %7713 = vmatpush1.bf16.msra.mxu0 0
    %7714 = vmatprep.subr.bf16.mxu0 0
    %7715 = vmatpush1.bf16.msra.mxu0 0
    %7716 = vmatprep.subr.bf16.mxu0 0
    %7717 = vmatpush1.bf16.msra.mxu0 0
    %7718 = vmatprep.subr.bf16.mxu0 0
    %7719 = vmatpush1.bf16.msra.mxu0 0
    %7720 = vmatprep.subr.bf16.mxu0 0
    %7721 = vmatpush1.bf16.msra.mxu0 0
    %7722 = vmatprep.subr.bf16.mxu0 0
    %7723 = vmatpush1.bf16.msra.mxu0 0
    %7724 = vmatprep.subr.bf16.mxu0 0
    %7725 = vmatpush1.bf16.msra.mxu0 0
    %7726 = vmatprep.subr.bf16.mxu0 0
    %7727 = vmatpush1.bf16.msra.mxu0 0
    %7728 = vmatprep.subr.bf16.mxu0 0
    %7729 = vmatpush1.bf16.msra.mxu0 0
    %7730 = vmatprep.subr.bf16.mxu0 0
    %7731 = vmatpush1.bf16.msra.mxu0 0
    %7732 = vmatprep.subr.bf16.mxu0 0
    %7733 = vmatpush1.bf16.msra.mxu0 0
    %7734 = vmatprep.mubr.bf16.mxu0 0
    %7735 = vmatmul.mubr.bf16.gmra.mrb[0].mxu0 %v7679
    %v7736 = vpop.f32.mrb[0].mxu0
    %v7737 = vadd.f32 %v7606, %v7736
    %v7738 = vpop.f32.mrb[0].mxu0
    %v7739 = vadd.f32 %v7607, %v7738
    %v7740 = vpop.f32.mrb[0].mxu0
    %v7741 = vadd.f32 %v7608, %v7740
    %v7742 = vpop.f32.mrb[0].mxu0
    %v7743 = vadd.f32 %v7609, %v7742
    %7744 = vmatprep.mubr.bf16.mxu0 0
    %7745 = vmatmul.mubr.bf16.gmra.mrb[0].mxu0 %v7682
    %v7746 = vpop.f32.mrb[0].mxu0
    %v7747 = vadd.f32 %v7610, %v7746
    %v7748 = vpop.f32.mrb[0].mxu0
    %v7749 = vadd.f32 %v7611, %v7748
    %v7750 = vpop.f32.mrb[0].mxu0
    %v7751 = vadd.f32 %v7612, %v7750
    %v7752 = vpop.f32.mrb[0].mxu0
    %v7753 = vadd.f32 %v7613, %v7752
    %7754 = vmatprep.mubr.bf16.mxu0 0
    %7755 = vmatmul.mubr.bf16.gmra.mrb[0].mxu0 %v7685
    %v7756 = vpop.f32.mrb[0].mxu0
    %v7757 = vadd.f32 %v7614, %v7756
    %v7758 = vpop.f32.mrb[0].mxu0
    %v7759 = vadd.f32 %v7615, %v7758
    %v7760 = vpop.f32.mrb[0].mxu0
    %v7761 = vadd.f32 %v7616, %v7760
    %v7762 = vpop.f32.mrb[0].mxu0
    %v7763 = vadd.f32 %v7617, %v7762
    %7764 = vmatprep.mubr.bf16.mxu0 0
    %7765 = vmatmul.mubr.bf16.gmra.mrb[0].mxu0 %v7688
    %v7766 = vpop.f32.mrb[0].mxu0
    %v7767 = vadd.f32 %v7618, %v7766
    %v7768 = vpop.f32.mrb[0].mxu0
    %v7769 = vadd.f32 %v7619, %v7768
    %v7770 = vpop.f32.mrb[0].mxu0
    %v7771 = vadd.f32 %v7620, %v7770
    %v7772 = vpop.f32.mrb[0].mxu0
    %v7773 = vadd.f32 %v7621, %v7772
    %7774 = vmatprep.mubr.bf16.mxu0 0
    %7775 = vmatmul.mubr.bf16.gmra.mrb[0].mxu0 %v7691
    %v7776 = vpop.f32.mrb[0].mxu0
    %v7777 = vadd.f32 %v7622, %v7776
    %v7778 = vpop.f32.mrb[0].mxu0
    %v7779 = vadd.f32 %v7623, %v7778
    %v7780 = vpop.f32.mrb[0].mxu0
    %v7781 = vadd.f32 %v7624, %v7780
    %v7782 = vpop.f32.mrb[0].mxu0
    %v7783 = vadd.f32 %v7625, %v7782
    %7784 = vmatprep.mubr.bf16.mxu0 0
    %7785 = vmatmul.mubr.bf16.gmra.mrb[0].mxu0 %v7694
    %v7786 = vpop.f32.mrb[0].mxu0
    %v7787 = vadd.f32 %v7626, %v7786
    %v7788 = vpop.f32.mrb[0].mxu0
    %v7789 = vadd.f32 %v7627, %v7788
    %v7790 = vpop.f32.mrb[0].mxu0
    %v7791 = vadd.f32 %v7628, %v7790
    %v7792 = vpop.f32.mrb[0].mxu0
    %v7793 = vadd.f32 %v7629, %v7792
    %7794 = vmatprep.mubr.bf16.mxu0 0
    %7795 = vmatmul.mubr.bf16.gmra.mrb[0].mxu0 %v7697
    %v7796 = vpop.f32.mrb[0].mxu0
    %v7797 = vadd.f32 %v7630, %v7796
    %v7798 = vpop.f32.mrb[0].mxu0
    %v7799 = vadd.f32 %v7631, %v7798
    %v7800 = vpop.f32.mrb[0].mxu0
    %v7801 = vadd.f32 %v7632, %v7800
    %v7802 = vpop.f32.mrb[0].mxu0
    %v7803 = vadd.f32 %v7633, %v7802
    %7804 = vmatprep.mubr.bf16.mxu0 0
    %7805 = vmatmul.mubr.bf16.gmra.mrb[0].mxu0 %v7700
    %v7806 = vpop.f32.mrb[0].mxu0
    %v7807 = vadd.f32 %v7634, %v7806
    %v7808 = vpop.f32.mrb[0].mxu0
    %v7809 = vadd.f32 %v7635, %v7808
    %v7810 = vpop.f32.mrb[0].mxu0
    %v7811 = vadd.f32 %v7636, %v7810
    %v7812 = vpop.f32.mrb[0].mxu0
    %v7813 = vadd.f32 %v7637, %v7812
    %7814 = vdwg.mxu0
    %v7815 = vmax.f32 %v7737, 0.0
    %v7816 = vmax.f32 %v7739, 0.0
    %v7817 = vmax.f32 %v7741, 0.0
    %v7818 = vmax.f32 %v7743, 0.0
    %v7819 = vmax.f32 %v7747, 0.0
    %v7820 = vmax.f32 %v7749, 0.0
    %v7821 = vmax.f32 %v7751, 0.0
    %v7822 = vmax.f32 %v7753, 0.0
    %v7823 = vmax.f32 %v7757, 0.0
    %v7824 = vmax.f32 %v7759, 0.0
    %v7825 = vmax.f32 %v7761, 0.0
    %v7826 = vmax.f32 %v7763, 0.0
    %v7827 = vmax.f32 %v7767, 0.0
    %v7828 = vmax.f32 %v7769, 0.0
    %v7829 = vmax.f32 %v7771, 0.0
    %v7830 = vmax.f32 %v7773, 0.0
    %v7831 = vmax.f32 %v7777, 0.0
    %v7832 = vmax.f32 %v7779, 0.0
    %v7833 = vmax.f32 %v7781, 0.0
    %v7834 = vmax.f32 %v7783, 0.0
    %v7835 = vmax.f32 %v7787, 0.0
    %v7836 = vmax.f32 %v7789, 0.0
    %v7837 = vmax.f32 %v7791, 0.0
    %v7838 = vmax.f32 %v7793, 0.0
    %v7839 = vmax.f32 %v7797, 0.0
    %v7840 = vmax.f32 %v7799, 0.0
    %v7841 = vmax.f32 %v7801, 0.0
    %v7842 = vmax.f32 %v7803, 0.0
    %v7843 = vmax.f32 %v7807, 0.0
    %v7844 = vmax.f32 %v7809, 0.0
    %v7845 = vmax.f32 %v7811, 0.0
    %v7846 = vmax.f32 %v7813, 0.0
    %v7847 = vpack.c.bf16 %v7817, %v7815
    %v7848 = vpack.c.bf16 %v7818, %v7816
    %v7849 = vpack.c.bf16 %v7821, %v7819
    %v7850 = vpack.c.bf16 %v7822, %v7820
    %v7851 = vpack.c.bf16 %v7825, %v7823
    %v7852 = vpack.c.bf16 %v7826, %v7824
    %v7853 = vpack.c.bf16 %v7829, %v7827
    %v7854 = vpack.c.bf16 %v7830, %v7828
    %v7855 = vpack.c.bf16 %v7833, %v7831
    %v7856 = vpack.c.bf16 %v7834, %v7832
    %v7857 = vpack.c.bf16 %v7837, %v7835
    %v7858 = vpack.c.bf16 %v7838, %v7836
    %v7859 = vpack.c.bf16 %v7841, %v7839
    %v7860 = vpack.c.bf16 %v7842, %v7840
    %v7861 = vpack.c.bf16 %v7845, %v7843
    %v7862 = vpack.c.bf16 %v7846, %v7844
    %v7879 = vunpack.c.l.b16 %v7847
    %v7880 = vunpack.c.l.b16 %v7848
    %v7881 = vunpack.c.h.b16 %v7847
    %v7882 = vunpack.c.h.b16 %v7848
    %v7883 = vunpack.c.l.b16 %v7849
    %v7884 = vunpack.c.l.b16 %v7850
    %v7885 = vunpack.c.h.b16 %v7849
    %v7886 = vunpack.c.h.b16 %v7850
    %v7887 = vunpack.c.l.b16 %v7851
    %v7888 = vunpack.c.l.b16 %v7852
    %v7889 = vunpack.c.h.b16 %v7851
    %v7890 = vunpack.c.h.b16 %v7852
    %v7891 = vunpack.c.l.b16 %v7853
    %v7892 = vunpack.c.l.b16 %v7854
    %v7893 = vunpack.c.h.b16 %v7853
    %v7894 = vunpack.c.h.b16 %v7854
    %v7895 = vunpack.c.l.b16 %v7855
    %v7896 = vunpack.c.l.b16 %v7856
    %v7897 = vunpack.c.h.b16 %v7855
    %v7898 = vunpack.c.h.b16 %v7856
    %v7899 = vunpack.c.l.b16 %v7857
    %v7900 = vunpack.c.l.b16 %v7858
    %v7901 = vunpack.c.h.b16 %v7857
    %v7902 = vunpack.c.h.b16 %v7858
    %v7903 = vunpack.c.l.b16 %v7859
    %v7904 = vunpack.c.l.b16 %v7860
    %v7905 = vunpack.c.h.b16 %v7859
    %v7906 = vunpack.c.h.b16 %v7860
    %v7907 = vunpack.c.l.b16 %v7861
    %v7908 = vunpack.c.l.b16 %v7862
    %v7909 = vunpack.c.h.b16 %v7861
    %v7910 = vunpack.c.h.b16 %v7862
    %v7911 = vpack.c.b16 %v7880, %v7879
    %v7912 = vpack.c.b16 %v7882, %v7881
    %v7913 = vpack.c.b16 %v7884, %v7883
    %v7914 = vpack.c.b16 %v7886, %v7885
    %v7915 = vpack.c.b16 %v7888, %v7887
    %v7916 = vpack.c.b16 %v7890, %v7889
    %v7917 = vpack.c.b16 %v7892, %v7891
    %v7918 = vpack.c.b16 %v7894, %v7893
    %v7919 = vpack.c.b16 %v7896, %v7895
    %v7920 = vpack.c.b16 %v7898, %v7897
    %v7921 = vpack.c.b16 %v7900, %v7899
    %v7922 = vpack.c.b16 %v7902, %v7901
    %v7923 = vpack.c.b16 %v7904, %v7903
    %v7924 = vpack.c.b16 %v7906, %v7905
    %v7925 = vpack.c.b16 %v7908, %v7907
    %v7926 = vpack.c.b16 %v7910, %v7909
    %7943 = vst [vmem:[#allocation4] sm:$0xff] %v7911
    %7944 = vst [vmem:[#allocation4 + $0x8] sm:$0xff] %v7912
    %7945 = vst [vmem:[#allocation4 + $0x10] sm:$0xff] %v7913
    %7946 = vst [vmem:[#allocation4 + $0x18] sm:$0xff] %v7914
    %7947 = vst [vmem:[#allocation4 + $0x20] sm:$0xff] %v7915
    %7948 = vst [vmem:[#allocation4 + $0x28] sm:$0xff] %v7916
    %7949 = vst [vmem:[#allocation4 + $0x30] sm:$0xff] %v7917
    %7950 = vst [vmem:[#allocation4 + $0x38] sm:$0xff] %v7918
    %7951 = vst [vmem:[#allocation4 + $0x40] sm:$0xff] %v7919
    %7952 = vst [vmem:[#allocation4 + $0x48] sm:$0xff] %v7920
    %7953 = vst [vmem:[#allocation4 + $0x50] sm:$0xff] %v7921
    %7954 = vst [vmem:[#allocation4 + $0x58] sm:$0xff] %v7922
    %7955 = vst [vmem:[#allocation4 + $0x60] sm:$0xff] %v7923
    %7956 = vst [vmem:[#allocation4 + $0x68] sm:$0xff] %v7924
    %7957 = vst [vmem:[#allocation4 + $0x70] sm:$0xff] %v7925
    %7958 = vst [vmem:[#allocation4 + $0x78] sm:$0xff] %v7926
    %v7959 = vpack.c.bf16 %v7741, %v7737
    %v7960 = vpack.c.bf16 %v7743, %v7739
    %v7961 = vpack.c.bf16 %v7751, %v7747
    %v7962 = vpack.c.bf16 %v7753, %v7749
    %v7963 = vpack.c.bf16 %v7761, %v7757
    %v7964 = vpack.c.bf16 %v7763, %v7759
    %v7965 = vpack.c.bf16 %v7771, %v7767
    %v7966 = vpack.c.bf16 %v7773, %v7769
    %v7967 = vpack.c.bf16 %v7781, %v7777
    %v7968 = vpack.c.bf16 %v7783, %v7779
    %v7969 = vpack.c.bf16 %v7791, %v7787
    %v7970 = vpack.c.bf16 %v7793, %v7789
    %v7971 = vpack.c.bf16 %v7801, %v7797
    %v7972 = vpack.c.bf16 %v7803, %v7799
    %v7973 = vpack.c.bf16 %v7811, %v7807
    %v7974 = vpack.c.bf16 %v7813, %v7809
    %v7991 = vunpack.c.l.b16 %v7959
    %v7992 = vunpack.c.l.b16 %v7960
    %v7993 = vunpack.c.h.b16 %v7959
    %v7994 = vunpack.c.h.b16 %v7960
    %v7995 = vunpack.c.l.b16 %v7961
    %v7996 = vunpack.c.l.b16 %v7962
    %v7997 = vunpack.c.h.b16 %v7961
    %v7998 = vunpack.c.h.b16 %v7962
    %v7999 = vunpack.c.l.b16 %v7963
    %v8000 = vunpack.c.l.b16 %v7964
    %v8001 = vunpack.c.h.b16 %v7963
    %v8002 = vunpack.c.h.b16 %v7964
    %v8003 = vunpack.c.l.b16 %v7965
    %v8004 = vunpack.c.l.b16 %v7966
    %v8005 = vunpack.c.h.b16 %v7965
    %v8006 = vunpack.c.h.b16 %v7966
    %v8007 = vunpack.c.l.b16 %v7967
    %v8008 = vunpack.c.l.b16 %v7968
    %v8009 = vunpack.c.h.b16 %v7967
    %v8010 = vunpack.c.h.b16 %v7968
    %v8011 = vunpack.c.l.b16 %v7969
    %v8012 = vunpack.c.l.b16 %v7970
    %v8013 = vunpack.c.h.b16 %v7969
    %v8014 = vunpack.c.h.b16 %v7970
    %v8015 = vunpack.c.l.b16 %v7971
    %v8016 = vunpack.c.l.b16 %v7972
    %v8017 = vunpack.c.h.b16 %v7971
    %v8018 = vunpack.c.h.b16 %v7972
    %v8019 = vunpack.c.l.b16 %v7973
    %v8020 = vunpack.c.l.b16 %v7974
    %v8021 = vunpack.c.h.b16 %v7973
    %v8022 = vunpack.c.h.b16 %v7974
    %v8023 = vpack.c.b16 %v7992, %v7991
    %v8024 = vpack.c.b16 %v7994, %v7993
    %v8025 = vpack.c.b16 %v7996, %v7995
    %v8026 = vpack.c.b16 %v7998, %v7997
    %v8027 = vpack.c.b16 %v8000, %v7999
    %v8028 = vpack.c.b16 %v8002, %v8001
    %v8029 = vpack.c.b16 %v8004, %v8003
    %v8030 = vpack.c.b16 %v8006, %v8005
    %v8031 = vpack.c.b16 %v8008, %v8007
    %v8032 = vpack.c.b16 %v8010, %v8009
    %v8033 = vpack.c.b16 %v8012, %v8011
    %v8034 = vpack.c.b16 %v8014, %v8013
    %v8035 = vpack.c.b16 %v8016, %v8015
    %v8036 = vpack.c.b16 %v8018, %v8017
    %v8037 = vpack.c.b16 %v8020, %v8019
    %v8038 = vpack.c.b16 %v8022, %v8021
    %8055 = vst [vmem:[#allocation6] sm:$0xff] %v8023
    %8056 = vst [vmem:[#allocation6 + $0x8] sm:$0xff] %v8024
    %8057 = vst [vmem:[#allocation6 + $0x10] sm:$0xff] %v8025
    %8058 = vst [vmem:[#allocation6 + $0x18] sm:$0xff] %v8026
    %8059 = vst [vmem:[#allocation6 + $0x20] sm:$0xff] %v8027
    %8060 = vst [vmem:[#allocation6 + $0x28] sm:$0xff] %v8028
    %8061 = vst [vmem:[#allocation6 + $0x30] sm:$0xff] %v8029
    %8062 = vst [vmem:[#allocation6 + $0x38] sm:$0xff] %v8030
    %8063 = vst [vmem:[#allocation6 + $0x40] sm:$0xff] %v8031
    %8064 = vst [vmem:[#allocation6 + $0x48] sm:$0xff] %v8032
    %8065 = vst [vmem:[#allocation6 + $0x50] sm:$0xff] %v8033
    %8066 = vst [vmem:[#allocation6 + $0x58] sm:$0xff] %v8034
    %8067 = vst [vmem:[#allocation6 + $0x60] sm:$0xff] %v8035
    %8068 = vst [vmem:[#allocation6 + $0x68] sm:$0xff] %v8036
    %8069 = vst [vmem:[#allocation6 + $0x70] sm:$0xff] %v8037
    %8070 = vst [vmem:[#allocation6 + $0x78] sm:$0xff] %v8038
    // Predicated region
    $region46: #{residual_block2_forward.1} parent=1 // pred_check
      _
    $region47: #{residual_block2_forward.1} parent=1 // pred_check_branch
      %8072 = sbr.rel (0) target = $region49
    $region48: #{residual_block2_forward.1} parent=1 // pred_region
      %s8074 = ssub.s32 2048, 2048
      %8075 = vsyncadd [#allocation5], %s8074
      %s8076 = sshll.u32 [#allocation4], 4
      %s8077 = int_to_ptr.vmem [resolvable:$true] %s8076
      %8082 = dma.vmem_to_hbm [thread:$0]  %s8077, 2048, %s11, [#allocation5], 128, 128, 8
    $region49: #{residual_block2_forward.1} parent=1 // pred_fallthru
      _
    // Predicated region
    $region50: #{residual_block2_forward.1} parent=1 // pred_check
      _
    $region51: #{residual_block2_forward.1} parent=1 // pred_check_branch
      %8084 = sbr.rel (0) target = $region53
    $region52: #{residual_block2_forward.1} parent=1 // pred_region
      %s8086 = ssub.s32 2048, 2048
      %8087 = vsyncadd [#allocation7], %s8086
      %s8088 = sshll.u32 [#allocation6], 4
      %s8089 = int_to_ptr.vmem [resolvable:$true] %s8088
      %8094 = dma.vmem_to_hbm [thread:$0]  %s8089, 2048, %s12, [#allocation7], 128, 128, 8
    $region53: #{residual_block2_forward.1} parent=1 // pred_fallthru
      _
    // Predicated region
    $region54: #{residual_block2_forward.1} parent=1 // pred_check
      _
    $region55: #{residual_block2_forward.1} parent=1 // pred_check_branch
      %8096 = sbr.rel (0) target = $region57
    $region56: #{residual_block2_forward.1} parent=1 // pred_region
      %8097 = dma.done [#allocation5], 2048
    $region57: #{residual_block2_forward.1} parent=1 // pred_fallthru
      _
    // Predicated region
    $region58: #{residual_block2_forward.1} parent=1 // pred_check
      _
    $region59: #{residual_block2_forward.1} parent=1 // pred_check_branch
      %8099 = sbr.rel (0) target = $region61
    $region60: #{residual_block2_forward.1} parent=1 // pred_region
      %8100 = dma.done [#allocation7], 2048
    $region61: #{residual_block2_forward.1} parent=1 // pred_fallthru
      _
    %8101 = vsyncpa [#allocation5], 1
    %8102 = vsyncpa [#allocation7], 1

</llo_original>
